<compile_context>
chip_gen: v6e
topology: v6e:2x2x1
jax: 0.10.0
libtpu: 0.0.40
codegen_flags: <defaults>
</compile_context>

<pallas_src>
import functools
import math

import jax
import jax.numpy as jnp
from jax import lax
from jax.experimental import pallas as pl
from jax.experimental.pallas import tpu as pltpu


def _pick_tile(n, candidates=(8, 4, 2, 1)):
    for c in candidates:
        if n % c == 0:
            return c
    return 1


# --------------------- Kernel 1: Conv(7x7,s2,p3) + BN + ReLU (packed output) ---------------------

def _conv_bn_relu_kernel(p00, p01, p02, p03, p10, p11, p12, p13,
                         w_ref, b_ref, o_ref, *, th, wpo, cin, cout):
    # p{rp}{cc}: padded input planes, shape (1, cin, Hr, Wc): row parity rp, col class cc (mod 4).
    planes = ((p00, p01, p02, p03), (p10, p11, p12, p13))
    r = pl.program_id(1)
    row_base = r * th                       # first conv-output row of this band
    k = 49 * cin
    m = th * wpo
    halves = []
    for p in range(2):                      # output-column parity (packed on lanes)
        pieces = []
        for dy in range(7):
            rp, a = dy % 2, dy // 2         # row-parity plane / offset within plane
            row_start = row_base + a
            for dx in range(7):
                q = 2 * p + dx
                cc, s = q % 4, q // 4       # column class / offset within class
                ref = planes[rp][cc]
                # unit-stride (cin, th, wpo) slice of the padded input
                pieces.append(ref[0, :, pl.ds(row_start, th), pl.ds(s, wpo)])
        patch = jnp.concatenate(pieces, axis=0)           # (49*cin, th, wpo), major-axis concat
        patch = patch.reshape(k, m).astype(jnp.bfloat16)  # bf16 MXU operand
        acc = lax.dot_general(                            # (m, cout), f32 accumulation
            patch, w_ref[...],
            dimension_numbers=(((0,), (0,)), ((), ())),
            preferred_element_type=jnp.float32)
        y = jnp.maximum(acc + b_ref[...], 0.0)            # BN bias + ReLU in f32
        halves.append(y.reshape(th, wpo, cout))
    packed = jnp.concatenate(halves, axis=-1)             # (th, wpo, 2*cout) lane-dense
    o_ref[...] = packed[None]


def conv_bn_relu_packed(x_nhwc, w_oihw, gamma, beta, mean, var, eps=1e-5):
    """7x7/s2/p3 conv + eval-mode BN + ReLU.

    Returns a packed NHWC activation (N, Ho, Wo//2, 2*Cout):
    [..., :Cout] = even output columns, [..., Cout:] = odd output columns.
    """
    n, h, w, cin = x_nhwc.shape
    cout = w_oihw.shape[0]
    # TODO(synk): general H/W; the even/odd packed layout assumes H % 4 == W % 4 == 0.
    assert h % 4 == 0 and w % 4 == 0, "stem kernels assume H, W multiples of 4"
    ho, wo = h // 2, w // 2
    wpo = wo // 2
    th = _pick_tile(ho)

    # Zero-pad (3 top/left, a little extra bottom/right so every plane slice stays in
    # bounds), then split into 8 tiny parity planes.  This is the only XLA-side data
    # movement and is ~the size of the 3-channel input (no im2col in HBM).
    hp, wp = 2 * ho + 8, 2 * wo + 12
    xpad = jnp.pad(x_nhwc, ((0, 0), (3, hp - 3 - h), (3, wp - 3 - w), (0, 0)))
    xpad = jnp.transpose(xpad, (0, 3, 1, 2))              # (N, Cin, Hp, Wp)
    planes = [xpad[:, :, rp::2, cc::4] for rp in range(2) for cc in range(4)]

    # Fold the BN scale into the bf16 weights; keep only the bias for the epilogue.
    inv_std = 1.0 / jnp.sqrt(var + eps)
    scale = gamma * inv_std
    bias = (beta - mean * scale).reshape(1, cout).astype(jnp.float32)
    w2d = jnp.transpose(w_oihw, (2, 3, 1, 0)).reshape(49 * cin, cout)  # (dy,dx,ci) x cout
    w_eff = (w2d * scale[None, :]).astype(jnp.bfloat16)

    kernel = functools.partial(_conv_bn_relu_kernel,
                               th=th, wpo=wpo, cin=cin, cout=cout)
    plane_specs = [pl.BlockSpec((1,) + pln.shape[1:], lambda i, r: (i, 0, 0, 0))
                   for pln in planes]
    out = pl.pallas_call(
        kernel,
        out_shape=jax.ShapeDtypeStruct((n, ho, wpo, 2 * cout), jnp.float32),
        grid=(n, ho // th),
        in_specs=plane_specs + [
            pl.BlockSpec((49 * cin, cout), lambda i, r: (0, 0)),   # weights stay resident
            pl.BlockSpec((1, cout), lambda i, r: (0, 0)),
        ],
        out_specs=pl.BlockSpec((1, th, wpo, 2 * cout), lambda i, r: (i, r, 0, 0)),
        compiler_params=pltpu.CompilerParams(
            dimension_semantics=("parallel", "parallel")),
    )(*planes, w_eff, bias)
    return out


# --------------------- Kernel 2: MaxPool 3x3 / stride 2 / pad 1 (packed input) ---------------------

def _maxpool_kernel(y_ref, o_ref, *, tj, cout):
    jb = pl.program_id(1)
    j0 = jb * tj                                            # first pool-output row of band
    c2 = 2 * cout
    # conv rows 2j and 2j+1 for the tj pool rows of this band (unit-stride band read)
    band = y_ref[0, pl.ds(2 * j0, 2 * tj), :, :]            # (2*tj, wpo, 2*cout)
    br = band.reshape(tj, 2, band.shape[1], c2)             # major-dim reshape (free)
    be, bo = br[:, 0], br[:, 1]                             # conv rows 2j / 2j+1
    # conv row 2j-1: previous odd row; 0-fill == -inf pool padding since inputs are post-ReLU
    prev = y_ref[0, pl.ds(jnp.maximum(2 * j0 - 1, 0), 1), :, :]
    prev = prev * (jb > 0).astype(jnp.float32)
    bo_prev = prev if tj == 1 else jnp.concatenate([prev, bo[:tj - 1]], axis=0)
    rowmax = jnp.maximum(jnp.maximum(be, bo), bo_prev)      # H direction done
    # W direction: even col 2i / odd col 2i+1 are packed on the lane dim; col 2i-1 is the
    # odd half shifted by one along W (zero-filled at i == 0).
    ce = rowmax[:, :, :cout]
    co = rowmax[:, :, cout:]
    co_shift = pltpu.roll(co, shift=1, axis=1)
    keep = lax.broadcasted_iota(jnp.int32, co.shape, 1) >= 1
    co_prev = jnp.where(keep, co_shift, 0.0)
    out = jnp.maximum(jnp.maximum(ce, co), co_prev)         # (tj, wpo, cout)
    o_ref[...] = out[None]


def maxpool_3x3_s2_p1_packed(y_packed, cout):
    n, ho, wpo, c2 = y_packed.shape
    assert c2 == 2 * cout and ho % 2 == 0
    hpo = ho // 2
    tj = _pick_tile(hpo, (4, 2, 1))
    out = pl.pallas_call(
        functools.partial(_maxpool_kernel, tj=tj, cout=cout),
        out_shape=jax.ShapeDtypeStruct((n, hpo, wpo, cout), jnp.float32),
        grid=(n, hpo // tj),
        in_specs=[pl.BlockSpec((1, ho, wpo, c2), lambda i, jb: (i, 0, 0, 0))],
        out_specs=pl.BlockSpec((1, tj, wpo, cout), lambda i, jb: (i, jb, 0, 0)),
        compiler_params=pltpu.CompilerParams(
            dimension_semantics=("parallel", "parallel")),
    )(y_packed)
    return out


# ------------------------------- Module wrapper -------------------------------

def init_thermal_params(key):
    # ResNet-50 stem: conv1 (64, 3, 7, 7), bn1 over 64 channels (eval mode).
    # TODO(synk): pretrained ResNet-50 weights are not reproduced; deterministic random init.
    k1, k2, k3, k4, k5 = jax.random.split(key, 5)
    w = jax.random.normal(k1, (64, 3, 7, 7), jnp.float32) / math.sqrt(3 * 7 * 7)
    gamma = jax.random.uniform(k2, (64,), jnp.float32, 0.5, 1.5)
    beta = jax.random.normal(k3, (64,), jnp.float32) * 0.1
    mean = jax.random.normal(k4, (64,), jnp.float32) * 0.1
    var = jax.random.uniform(k5, (64,), jnp.float32, 0.5, 1.5)
    return w, gamma, beta, mean, var


@jax.jit
def thermal_module_forward(x_nchw, params):
    w, gamma, beta, mean, var = params
    cout = w.shape[0]
    x = jnp.transpose(x_nchw, (0, 2, 3, 1))                    # NCHW -> NHWC
    yp = conv_bn_relu_packed(x, w, gamma, beta, mean, var)     # (N, H/2, W/4, 2*Cout)
    z = maxpool_3x3_s2_p1_packed(yp, cout)                     # (N, H/4, W/4, Cout)
    return jnp.transpose(z, (0, 3, 1, 2))                      # NHWC -> NCHW


# -------------------------------- Reference -----------------------------------

def _reference(x_nchw, params, eps=1e-5):
    # Mirrors the kernel's precision choices (bf16 matmul operands with the BN scale
    # folded into the weights, f32 accumulation / epilogue); otherwise the exact
    # conv1 -> bn1(eval) -> relu -> maxpool semantics of the PyTorch module.
    w, gamma, beta, mean, var = params
    inv_std = 1.0 / jnp.sqrt(var + eps)
    scale = gamma * inv_std
    bias = beta - mean * scale
    w_fold = (w * scale[:, None, None, None]).astype(jnp.bfloat16).astype(jnp.float32)
    x_b = x_nchw.astype(jnp.bfloat16).astype(jnp.float32)
    y = lax.conv_general_dilated(
        x_b, w_fold, window_strides=(2, 2), padding=[(3, 3), (3, 3)],
        dimension_numbers=("NCHW", "OIHW", "NCHW"),
        precision=lax.Precision.HIGHEST)
    y = jnp.maximum(y + bias[None, :, None, None], 0.0)
    z = lax.reduce_window(
        y, -jnp.inf, lax.max, (1, 1, 3, 3), (1, 1, 2, 2),
        [(0, 0), (0, 0), (1, 1), (1, 1)])
    return z


if __name__ == "__main__":
    key = jax.random.PRNGKey(0)
    kx, kp = jax.random.split(key)
    x = jax.random.normal(kx, (2, 3, 16, 16), jnp.float32)   # NCHW like PyTorch
    params = init_thermal_params(kp)

    out = jax.block_until_ready(thermal_module_forward(x, params))
    ref = jax.block_until_ready(_reference(x, params))

    assert out.shape == (2, 64, 4, 4), out.shape
    max_err = float(jnp.max(jnp.abs(out - ref)))
    assert jnp.allclose(out, ref, atol=2e-2, rtol=2e-2), f"mismatch vs reference: {max_err}"
    print("KERNEL_OK")
</pallas_src>

<mosaic_0001>
module attributes {stable_mosaic.version = 11 : i64} {
  func.func @_maxpool_kernel(%arg0: i32, %arg1: i32, %arg2: memref<1x8x4x128xf32, #tpu.memory_space<vmem>>, %arg3: memref<1x4x4x64xf32, #tpu.memory_space<vmem>>) attributes {dimension_semantics = [#tpu.dimension_semantics<parallel>, #tpu.dimension_semantics<parallel>], iteration_bounds = array<i64: 2, 1>, scalar_prefetch = 0 : i64, scratch_operands = 0 : i64, tpu.core_type = #tpu.core_type<tc>, window_params = [{transform_indices = @transform_0, window_bounds = array<i64: 1, 8, 4, 128>}, {transform_indices = @transform_1, window_bounds = array<i64: 1, 4, 4, 64>}]} {
    %c4_i32 = arith.constant 4 : i32
    %0 = arith.muli %arg1, %c4_i32 : i32
    %c2_i32 = arith.constant 2 : i32
    %1 = arith.muli %c2_i32, %0 : i32
    %c0 = arith.constant 0 : index
    %2 = arith.index_cast %1 : i32 to index
    %c0_0 = arith.constant 0 : index
    %c0_1 = arith.constant 0 : index
    %3 = vector.load %arg2[%c0, %2, %c0_0, %c0_1] : memref<1x8x4x128xf32, #tpu.memory_space<vmem>>, vector<1x8x4x128xf32>
    %4 = vector.shape_cast %3 : vector<1x8x4x128xf32> to vector<8x4x128xf32>
    %5 = vector.shape_cast %4 : vector<8x4x128xf32> to vector<4x2x4x128xf32>
    %6 = vector.extract_strided_slice %5 {offsets = [0, 0, 0, 0], sizes = [4, 1, 4, 128], strides = [1, 1, 1, 1]} : vector<4x2x4x128xf32> to vector<4x1x4x128xf32>
    %7 = vector.shape_cast %6 : vector<4x1x4x128xf32> to vector<4x4x128xf32>
    %8 = vector.extract_strided_slice %5 {offsets = [0, 1, 0, 0], sizes = [4, 1, 4, 128], strides = [1, 1, 1, 1]} : vector<4x2x4x128xf32> to vector<4x1x4x128xf32>
    %9 = vector.shape_cast %8 : vector<4x1x4x128xf32> to vector<4x4x128xf32>
    %c2_i32_2 = arith.constant 2 : i32
    %10 = arith.muli %c2_i32_2, %0 : i32
    %c1_i32 = arith.constant 1 : i32
    %11 = arith.subi %10, %c1_i32 : i32
    %c0_i32 = arith.constant 0 : i32
    %12 = arith.maxsi %11, %c0_i32 : i32
    %c0_3 = arith.constant 0 : index
    %13 = arith.index_cast %12 : i32 to index
    %c0_4 = arith.constant 0 : index
    %c0_5 = arith.constant 0 : index
    %14 = vector.load %arg2[%c0_3, %13, %c0_4, %c0_5] : memref<1x8x4x128xf32, #tpu.memory_space<vmem>>, vector<1x1x4x128xf32>
    %15 = vector.shape_cast %14 : vector<1x1x4x128xf32> to vector<1x4x128xf32>
    %c0_i32_6 = arith.constant 0 : i32
    %16 = arith.cmpi sgt, %arg1, %c0_i32_6 : i32
    %17 = arith.extui %16 : i1 to i32
    %18 = arith.sitofp %17 : i32 to f32
    %19 = vector.broadcast %18 : f32 to vector<1x4x128xf32>
    %20 = arith.mulf %15, %19 : vector<1x4x128xf32>
    %21 = vector.extract_strided_slice %9 {offsets = [0, 0, 0], sizes = [3, 4, 128], strides = [1, 1, 1]} : vector<4x4x128xf32> to vector<3x4x128xf32>
    %22 = tpu.concatenate %20, %21 in 0 : vector<1x4x128xf32>, vector<3x4x128xf32> -> vector<4x4x128xf32>
    %23 = arith.maximumf %7, %9 : vector<4x4x128xf32>
    %24 = arith.maximumf %23, %22 : vector<4x4x128xf32>
    %25 = vector.extract_strided_slice %24 {offsets = [0, 0, 0], sizes = [4, 4, 64], strides = [1, 1, 1]} : vector<4x4x128xf32> to vector<4x4x64xf32>
    %26 = vector.extract_strided_slice %24 {offsets = [0, 0, 64], sizes = [4, 4, 64], strides = [1, 1, 1]} : vector<4x4x128xf32> to vector<4x4x64xf32>
    %c1_i32_7 = arith.constant 1 : i32
    %27 = tpu.dynamic_rotate %26 by %c1_i32_7 dim 1 : vector<4x4x64xf32>, i32 -> vector<4x4x64xf32>
    %28 = tpu.iota {dimensions = array<i32: 1>} : vector<4x4x64xi32>
    %c1_i32_8 = arith.constant 1 : i32
    %29 = vector.broadcast %c1_i32_8 : i32 to vector<4x4x64xi32>
    %30 = arith.cmpi sge, %28, %29 : vector<4x4x64xi32>
    %cst = arith.constant 0.000000e+00 : f32
    %31 = vector.broadcast %cst : f32 to vector<4x4x64xf32>
    %32 = arith.select %30, %27, %31 : vector<4x4x64xi1>, vector<4x4x64xf32>
    %33 = arith.maximumf %25, %26 : vector<4x4x64xf32>
    %34 = arith.maximumf %33, %32 : vector<4x4x64xf32>
    %35 = vector.shape_cast %34 : vector<4x4x64xf32> to vector<1x4x4x64xf32>
    %c0_9 = arith.constant 0 : index
    %c0_10 = arith.constant 0 : index
    %c0_11 = arith.constant 0 : index
    %c0_12 = arith.constant 0 : index
    %36 = vector.load %arg3[%c0_9, %c0_10, %c0_11, %c0_12] : memref<1x4x4x64xf32, #tpu.memory_space<vmem>>, vector<1x4x4x64xf32>
    tpu.vector_store %arg3[%c0_9, %c0_10, %c0_11, %c0_12], %35 {strides = array<i32>} : memref<1x4x4x64xf32, #tpu.memory_space<vmem>>, vector<1x4x4x64xf32>,
    return
  }
  func.func @transform_0(%arg0: i32, %arg1: i32) -> (i32, i32, i32, i32) {
    %c0_i32 = arith.constant 0 : i32
    %c0_i32_0 = arith.constant 0 : i32
    %c0_i32_1 = arith.constant 0 : i32
    %c0_i32_2 = arith.constant 0 : i32
    return %arg0, %c0_i32, %c0_i32_0, %c0_i32_1 : i32, i32, i32, i32
  }
  func.func @transform_1(%arg0: i32, %arg1: i32) -> (i32, i32, i32, i32) {
    %c0_i32 = arith.constant 0 : i32
    %c0_i32_0 = arith.constant 0 : i32
    %c0_i32_1 = arith.constant 0 : i32
    return %arg0, %arg1, %c0_i32, %c0_i32_0 : i32, i32, i32, i32
  }
}

module attributes {stable_mosaic.version = 11 : i64} {
  func.func @_conv_bn_relu_kernel(%arg0: i32, %arg1: i32, %arg2: memref<1x3x12x7xf32, #tpu.memory_space<vmem>>, %arg3: memref<1x3x12x7xf32, #tpu.memory_space<vmem>>, %arg4: memref<1x3x12x7xf32, #tpu.memory_space<vmem>>, %arg5: memref<1x3x12x7xf32, #tpu.memory_space<vmem>>, %arg6: memref<1x3x12x7xf32, #tpu.memory_space<vmem>>, %arg7: memref<1x3x12x7xf32, #tpu.memory_space<vmem>>, %arg8: memref<1x3x12x7xf32, #tpu.memory_space<vmem>>, %arg9: memref<1x3x12x7xf32, #tpu.memory_space<vmem>>, %arg10: memref<147x64xbf16, #tpu.memory_space<vmem>>, %arg11: memref<1x64xf32, #tpu.memory_space<vmem>>, %arg12: memref<1x8x4x128xf32, #tpu.memory_space<vmem>>) attributes {dimension_semantics = [#tpu.dimension_semantics<parallel>, #tpu.dimension_semantics<parallel>], iteration_bounds = array<i64: 2, 1>, scalar_prefetch = 0 : i64, scratch_operands = 0 : i64, tpu.core_type = #tpu.core_type<tc>, window_params = [{transform_indices = @transform_0, window_bounds = array<i64: 1, 3, 12, 7>}, {transform_indices = @transform_1, window_bounds = array<i64: 1, 3, 12, 7>}, {transform_indices = @transform_2, window_bounds = array<i64: 1, 3, 12, 7>}, {transform_indices = @transform_3, window_bounds = array<i64: 1, 3, 12, 7>}, {transform_indices = @transform_4, window_bounds = array<i64: 1, 3, 12, 7>}, {transform_indices = @transform_5, window_bounds = array<i64: 1, 3, 12, 7>}, {transform_indices = @transform_6, window_bounds = array<i64: 1, 3, 12, 7>}, {transform_indices = @transform_7, window_bounds = array<i64: 1, 3, 12, 7>}, {pipeline_mode = #tpu.pipeline_mode<synchronous>, transform_indices = @transform_8, window_bounds = array<i64: 147, 64>}, {pipeline_mode = #tpu.pipeline_mode<synchronous>, transform_indices = @transform_9, window_bounds = array<i64: 1, 64>}, {transform_indices = @transform_10, window_bounds = array<i64: 1, 8, 4, 128>}]} {
    %c8_i32 = arith.constant 8 : i32
    %0 = arith.muli %arg1, %c8_i32 : i32
    %c0_i32 = arith.constant 0 : i32
    %1 = arith.addi %0, %c0_i32 : i32
    %c0 = arith.constant 0 : index
    %c0_0 = arith.constant 0 : index
    %2 = arith.index_cast %1 : i32 to index
    %c0_1 = arith.constant 0 : index
    %3 = vector.load %arg2[%c0, %c0_0, %2, %c0_1] : memref<1x3x12x7xf32, #tpu.memory_space<vmem>>, vector<1x3x8x4xf32>
    %4 = vector.shape_cast %3 : vector<1x3x8x4xf32> to vector<3x8x4xf32>
    %c0_2 = arith.constant 0 : index
    %c0_3 = arith.constant 0 : index
    %5 = arith.index_cast %1 : i32 to index
    %c0_4 = arith.constant 0 : index
    %6 = vector.load %arg3[%c0_2, %c0_3, %5, %c0_4] : memref<1x3x12x7xf32, #tpu.memory_space<vmem>>, vector<1x3x8x4xf32>
    %7 = vector.shape_cast %6 : vector<1x3x8x4xf32> to vector<3x8x4xf32>
    %c0_5 = arith.constant 0 : index
    %c0_6 = arith.constant 0 : index
    %8 = arith.index_cast %1 : i32 to index
    %c0_7 = arith.constant 0 : index
    %9 = vector.load %arg4[%c0_5, %c0_6, %8, %c0_7] : memref<1x3x12x7xf32, #tpu.memory_space<vmem>>, vector<1x3x8x4xf32>
    %10 = vector.shape_cast %9 : vector<1x3x8x4xf32> to vector<3x8x4xf32>
    %c0_8 = arith.constant 0 : index
    %c0_9 = arith.constant 0 : index
    %11 = arith.index_cast %1 : i32 to index
    %c0_10 = arith.constant 0 : index
    %12 = vector.load %arg5[%c0_8, %c0_9, %11, %c0_10] : memref<1x3x12x7xf32, #tpu.memory_space<vmem>>, vector<1x3x8x4xf32>
    %13 = vector.shape_cast %12 : vector<1x3x8x4xf32> to vector<3x8x4xf32>
    %c0_11 = arith.constant 0 : index
    %c0_12 = arith.constant 0 : index
    %14 = arith.index_cast %1 : i32 to index
    %c1 = arith.constant 1 : index
    %15 = vector.load %arg2[%c0_11, %c0_12, %14, %c1] : memref<1x3x12x7xf32, #tpu.memory_space<vmem>>, vector<1x3x8x4xf32>
    %16 = vector.shape_cast %15 : vector<1x3x8x4xf32> to vector<3x8x4xf32>
    %c0_13 = arith.constant 0 : index
    %c0_14 = arith.constant 0 : index
    %17 = arith.index_cast %1 : i32 to index
    %c1_15 = arith.constant 1 : index
    %18 = vector.load %arg3[%c0_13, %c0_14, %17, %c1_15] : memref<1x3x12x7xf32, #tpu.memory_space<vmem>>, vector<1x3x8x4xf32>
    %19 = vector.shape_cast %18 : vector<1x3x8x4xf32> to vector<3x8x4xf32>
    %c0_16 = arith.constant 0 : index
    %c0_17 = arith.constant 0 : index
    %20 = arith.index_cast %1 : i32 to index
    %c1_18 = arith.constant 1 : index
    %21 = vector.load %arg4[%c0_16, %c0_17, %20, %c1_18] : memref<1x3x12x7xf32, #tpu.memory_space<vmem>>, vector<1x3x8x4xf32>
    %22 = vector.shape_cast %21 : vector<1x3x8x4xf32> to vector<3x8x4xf32>
    %c0_i32_19 = arith.constant 0 : i32
    %23 = arith.addi %0, %c0_i32_19 : i32
    %c0_20 = arith.constant 0 : index
    %c0_21 = arith.constant 0 : index
    %24 = arith.index_cast %23 : i32 to index
    %c0_22 = arith.constant 0 : index
    %25 = vector.load %arg6[%c0_20, %c0_21, %24, %c0_22] : memref<1x3x12x7xf32, #tpu.memory_space<vmem>>, vector<1x3x8x4xf32>
    %26 = vector.shape_cast %25 : vector<1x3x8x4xf32> to vector<3x8x4xf32>
    %c0_23 = arith.constant 0 : index
    %c0_24 = arith.constant 0 : index
    %27 = arith.index_cast %23 : i32 to index
    %c0_25 = arith.constant 0 : index
    %28 = vector.load %arg7[%c0_23, %c0_24, %27, %c0_25] : memref<1x3x12x7xf32, #tpu.memory_space<vmem>>, vector<1x3x8x4xf32>
    %29 = vector.shape_cast %28 : vector<1x3x8x4xf32> to vector<3x8x4xf32>
    %c0_26 = arith.constant 0 : index
    %c0_27 = arith.constant 0 : index
    %30 = arith.index_cast %23 : i32 to index
    %c0_28 = arith.constant 0 : index
    %31 = vector.load %arg8[%c0_26, %c0_27, %30, %c0_28] : memref<1x3x12x7xf32, #tpu.memory_space<vmem>>, vector<1x3x8x4xf32>
    %32 = vector.shape_cast %31 : vector<1x3x8x4xf32> to vector<3x8x4xf32>
    %c0_29 = arith.constant 0 : index
    %c0_30 = arith.constant 0 : index
    %33 = arith.index_cast %23 : i32 to index
    %c0_31 = arith.constant 0 : index
    %34 = vector.load %arg9[%c0_29, %c0_30, %33, %c0_31] : memref<1x3x12x7xf32, #tpu.memory_space<vmem>>, vector<1x3x8x4xf32>
    %35 = vector.shape_cast %34 : vector<1x3x8x4xf32> to vector<3x8x4xf32>
    %c0_32 = arith.constant 0 : index
    %c0_33 = arith.constant 0 : index
    %36 = arith.index_cast %23 : i32 to index
    %c1_34 = arith.constant 1 : index
    %37 = vector.load %arg6[%c0_32, %c0_33, %36, %c1_34] : memref<1x3x12x7xf32, #tpu.memory_space<vmem>>, vector<1x3x8x4xf32>
    %38 = vector.shape_cast %37 : vector<1x3x8x4xf32> to vector<3x8x4xf32>
    %c0_35 = arith.constant 0 : index
    %c0_36 = arith.constant 0 : index
    %39 = arith.index_cast %23 : i32 to index
    %c1_37 = arith.constant 1 : index
    %40 = vector.load %arg7[%c0_35, %c0_36, %39, %c1_37] : memref<1x3x12x7xf32, #tpu.memory_space<vmem>>, vector<1x3x8x4xf32>
    %41 = vector.shape_cast %40 : vector<1x3x8x4xf32> to vector<3x8x4xf32>
    %c0_38 = arith.constant 0 : index
    %c0_39 = arith.constant 0 : index
    %42 = arith.index_cast %23 : i32 to index
    %c1_40 = arith.constant 1 : index
    %43 = vector.load %arg8[%c0_38, %c0_39, %42, %c1_40] : memref<1x3x12x7xf32, #tpu.memory_space<vmem>>, vector<1x3x8x4xf32>
    %44 = vector.shape_cast %43 : vector<1x3x8x4xf32> to vector<3x8x4xf32>
    %c1_i32 = arith.constant 1 : i32
    %45 = arith.addi %0, %c1_i32 : i32
    %c0_41 = arith.constant 0 : index
    %c0_42 = arith.constant 0 : index
    %46 = arith.index_cast %45 : i32 to index
    %c0_43 = arith.constant 0 : index
    %47 = vector.load %arg2[%c0_41, %c0_42, %46, %c0_43] : memref<1x3x12x7xf32, #tpu.memory_space<vmem>>, vector<1x3x8x4xf32>
    %48 = vector.shape_cast %47 : vector<1x3x8x4xf32> to vector<3x8x4xf32>
    %c0_44 = arith.constant 0 : index
    %c0_45 = arith.constant 0 : index
    %49 = arith.index_cast %45 : i32 to index
    %c0_46 = arith.constant 0 : index
    %50 = vector.load %arg3[%c0_44, %c0_45, %49, %c0_46] : memref<1x3x12x7xf32, #tpu.memory_space<vmem>>, vector<1x3x8x4xf32>
    %51 = vector.shape_cast %50 : vector<1x3x8x4xf32> to vector<3x8x4xf32>
    %c0_47 = arith.constant 0 : index
    %c0_48 = arith.constant 0 : index
    %52 = arith.index_cast %45 : i32 to index
    %c0_49 = arith.constant 0 : index
    %53 = vector.load %arg4[%c0_47, %c0_48, %52, %c0_49] : memref<1x3x12x7xf32, #tpu.memory_space<vmem>>, vector<1x3x8x4xf32>
    %54 = vector.shape_cast %53 : vector<1x3x8x4xf32> to vector<3x8x4xf32>
    %c0_50 = arith.constant 0 : index
    %c0_51 = arith.constant 0 : index
    %55 = arith.index_cast %45 : i32 to index
    %c0_52 = arith.constant 0 : index
    %56 = vector.load %arg5[%c0_50, %c0_51, %55, %c0_52] : memref<1x3x12x7xf32, #tpu.memory_space<vmem>>, vector<1x3x8x4xf32>
    %57 = vector.shape_cast %56 : vector<1x3x8x4xf32> to vector<3x8x4xf32>
    %c0_53 = arith.constant 0 : index
    %c0_54 = arith.constant 0 : index
    %58 = arith.index_cast %45 : i32 to index
    %c1_55 = arith.constant 1 : index
    %59 = vector.load %arg2[%c0_53, %c0_54, %58, %c1_55] : memref<1x3x12x7xf32, #tpu.memory_space<vmem>>, vector<1x3x8x4xf32>
    %60 = vector.shape_cast %59 : vector<1x3x8x4xf32> to vector<3x8x4xf32>
    %c0_56 = arith.constant 0 : index
    %c0_57 = arith.constant 0 : index
    %61 = arith.index_cast %45 : i32 to index
    %c1_58 = arith.constant 1 : index
    %62 = vector.load %arg3[%c0_56, %c0_57, %61, %c1_58] : memref<1x3x12x7xf32, #tpu.memory_space<vmem>>, vector<1x3x8x4xf32>
    %63 = vector.shape_cast %62 : vector<1x3x8x4xf32> to vector<3x8x4xf32>
    %c0_59 = arith.constant 0 : index
    %c0_60 = arith.constant 0 : index
    %64 = arith.index_cast %45 : i32 to index
    %c1_61 = arith.constant 1 : index
    %65 = vector.load %arg4[%c0_59, %c0_60, %64, %c1_61] : memref<1x3x12x7xf32, #tpu.memory_space<vmem>>, vector<1x3x8x4xf32>
    %66 = vector.shape_cast %65 : vector<1x3x8x4xf32> to vector<3x8x4xf32>
    %c1_i32_62 = arith.constant 1 : i32
    %67 = arith.addi %0, %c1_i32_62 : i32
    %c0_63 = arith.constant 0 : index
    %c0_64 = arith.constant 0 : index
    %68 = arith.index_cast %67 : i32 to index
    %c0_65 = arith.constant 0 : index
    %69 = vector.load %arg6[%c0_63, %c0_64, %68, %c0_65] : memref<1x3x12x7xf32, #tpu.memory_space<vmem>>, vector<1x3x8x4xf32>
    %70 = vector.shape_cast %69 : vector<1x3x8x4xf32> to vector<3x8x4xf32>
    %c0_66 = arith.constant 0 : index
    %c0_67 = arith.constant 0 : index
    %71 = arith.index_cast %67 : i32 to index
    %c0_68 = arith.constant 0 : index
    %72 = vector.load %arg7[%c0_66, %c0_67, %71, %c0_68] : memref<1x3x12x7xf32, #tpu.memory_space<vmem>>, vector<1x3x8x4xf32>
    %73 = vector.shape_cast %72 : vector<1x3x8x4xf32> to vector<3x8x4xf32>
    %c0_69 = arith.constant 0 : index
    %c0_70 = arith.constant 0 : index
    %74 = arith.index_cast %67 : i32 to index
    %c0_71 = arith.constant 0 : index
    %75 = vector.load %arg8[%c0_69, %c0_70, %74, %c0_71] : memref<1x3x12x7xf32, #tpu.memory_space<vmem>>, vector<1x3x8x4xf32>
    %76 = vector.shape_cast %75 : vector<1x3x8x4xf32> to vector<3x8x4xf32>
    %c0_72 = arith.constant 0 : index
    %c0_73 = arith.constant 0 : index
    %77 = arith.index_cast %67 : i32 to index
    %c0_74 = arith.constant 0 : index
    %78 = vector.load %arg9[%c0_72, %c0_73, %77, %c0_74] : memref<1x3x12x7xf32, #tpu.memory_space<vmem>>, vector<1x3x8x4xf32>
    %79 = vector.shape_cast %78 : vector<1x3x8x4xf32> to vector<3x8x4xf32>
    %c0_75 = arith.constant 0 : index
    %c0_76 = arith.constant 0 : index
    %80 = arith.index_cast %67 : i32 to index
    %c1_77 = arith.constant 1 : index
    %81 = vector.load %arg6[%c0_75, %c0_76, %80, %c1_77] : memref<1x3x12x7xf32, #tpu.memory_space<vmem>>, vector<1x3x8x4xf32>
    %82 = vector.shape_cast %81 : vector<1x3x8x4xf32> to vector<3x8x4xf32>
    %c0_78 = arith.constant 0 : index
    %c0_79 = arith.constant 0 : index
    %83 = arith.index_cast %67 : i32 to index
    %c1_80 = arith.constant 1 : index
    %84 = vector.load %arg7[%c0_78, %c0_79, %83, %c1_80] : memref<1x3x12x7xf32, #tpu.memory_space<vmem>>, vector<1x3x8x4xf32>
    %85 = vector.shape_cast %84 : vector<1x3x8x4xf32> to vector<3x8x4xf32>
    %c0_81 = arith.constant 0 : index
    %c0_82 = arith.constant 0 : index
    %86 = arith.index_cast %67 : i32 to index
    %c1_83 = arith.constant 1 : index
    %87 = vector.load %arg8[%c0_81, %c0_82, %86, %c1_83] : memref<1x3x12x7xf32, #tpu.memory_space<vmem>>, vector<1x3x8x4xf32>
    %88 = vector.shape_cast %87 : vector<1x3x8x4xf32> to vector<3x8x4xf32>
    %c2_i32 = arith.constant 2 : i32
    %89 = arith.addi %0, %c2_i32 : i32
    %c0_84 = arith.constant 0 : index
    %c0_85 = arith.constant 0 : index
    %90 = arith.index_cast %89 : i32 to index
    %c0_86 = arith.constant 0 : index
    %91 = vector.load %arg2[%c0_84, %c0_85, %90, %c0_86] : memref<1x3x12x7xf32, #tpu.memory_space<vmem>>, vector<1x3x8x4xf32>
    %92 = vector.shape_cast %91 : vector<1x3x8x4xf32> to vector<3x8x4xf32>
    %c0_87 = arith.constant 0 : index
    %c0_88 = arith.constant 0 : index
    %93 = arith.index_cast %89 : i32 to index
    %c0_89 = arith.constant 0 : index
    %94 = vector.load %arg3[%c0_87, %c0_88, %93, %c0_89] : memref<1x3x12x7xf32, #tpu.memory_space<vmem>>, vector<1x3x8x4xf32>
    %95 = vector.shape_cast %94 : vector<1x3x8x4xf32> to vector<3x8x4xf32>
    %c0_90 = arith.constant 0 : index
    %c0_91 = arith.constant 0 : index
    %96 = arith.index_cast %89 : i32 to index
    %c0_92 = arith.constant 0 : index
    %97 = vector.load %arg4[%c0_90, %c0_91, %96, %c0_92] : memref<1x3x12x7xf32, #tpu.memory_space<vmem>>, vector<1x3x8x4xf32>
    %98 = vector.shape_cast %97 : vector<1x3x8x4xf32> to vector<3x8x4xf32>
    %c0_93 = arith.constant 0 : index
    %c0_94 = arith.constant 0 : index
    %99 = arith.index_cast %89 : i32 to index
    %c0_95 = arith.constant 0 : index
    %100 = vector.load %arg5[%c0_93, %c0_94, %99, %c0_95] : memref<1x3x12x7xf32, #tpu.memory_space<vmem>>, vector<1x3x8x4xf32>
    %101 = vector.shape_cast %100 : vector<1x3x8x4xf32> to vector<3x8x4xf32>
    %c0_96 = arith.constant 0 : index
    %c0_97 = arith.constant 0 : index
    %102 = arith.index_cast %89 : i32 to index
    %c1_98 = arith.constant 1 : index
    %103 = vector.load %arg2[%c0_96, %c0_97, %102, %c1_98] : memref<1x3x12x7xf32, #tpu.memory_space<vmem>>, vector<1x3x8x4xf32>
    %104 = vector.shape_cast %103 : vector<1x3x8x4xf32> to vector<3x8x4xf32>
    %c0_99 = arith.constant 0 : index
    %c0_100 = arith.constant 0 : index
    %105 = arith.index_cast %89 : i32 to index
    %c1_101 = arith.constant 1 : index
    %106 = vector.load %arg3[%c0_99, %c0_100, %105, %c1_101] : memref<1x3x12x7xf32, #tpu.memory_space<vmem>>, vector<1x3x8x4xf32>
    %107 = vector.shape_cast %106 : vector<1x3x8x4xf32> to vector<3x8x4xf32>
    %c0_102 = arith.constant 0 : index
    %c0_103 = arith.constant 0 : index
    %108 = arith.index_cast %89 : i32 to index
    %c1_104 = arith.constant 1 : index
    %109 = vector.load %arg4[%c0_102, %c0_103, %108, %c1_104] : memref<1x3x12x7xf32, #tpu.memory_space<vmem>>, vector<1x3x8x4xf32>
    %110 = vector.shape_cast %109 : vector<1x3x8x4xf32> to vector<3x8x4xf32>
    %c2_i32_105 = arith.constant 2 : i32
    %111 = arith.addi %0, %c2_i32_105 : i32
    %c0_106 = arith.constant 0 : index
    %c0_107 = arith.constant 0 : index
    %112 = arith.index_cast %111 : i32 to index
    %c0_108 = arith.constant 0 : index
    %113 = vector.load %arg6[%c0_106, %c0_107, %112, %c0_108] : memref<1x3x12x7xf32, #tpu.memory_space<vmem>>, vector<1x3x8x4xf32>
    %114 = vector.shape_cast %113 : vector<1x3x8x4xf32> to vector<3x8x4xf32>
    %c0_109 = arith.constant 0 : index
    %c0_110 = arith.constant 0 : index
    %115 = arith.index_cast %111 : i32 to index
    %c0_111 = arith.constant 0 : index
    %116 = vector.load %arg7[%c0_109, %c0_110, %115, %c0_111] : memref<1x3x12x7xf32, #tpu.memory_space<vmem>>, vector<1x3x8x4xf32>
    %117 = vector.shape_cast %116 : vector<1x3x8x4xf32> to vector<3x8x4xf32>
    %c0_112 = arith.constant 0 : index
    %c0_113 = arith.constant 0 : index
    %118 = arith.index_cast %111 : i32 to index
    %c0_114 = arith.constant 0 : index
    %119 = vector.load %arg8[%c0_112, %c0_113, %118, %c0_114] : memref<1x3x12x7xf32, #tpu.memory_space<vmem>>, vector<1x3x8x4xf32>
    %120 = vector.shape_cast %119 : vector<1x3x8x4xf32> to vector<3x8x4xf32>
    %c0_115 = arith.constant 0 : index
    %c0_116 = arith.constant 0 : index
    %121 = arith.index_cast %111 : i32 to index
    %c0_117 = arith.constant 0 : index
    %122 = vector.load %arg9[%c0_115, %c0_116, %121, %c0_117] : memref<1x3x12x7xf32, #tpu.memory_space<vmem>>, vector<1x3x8x4xf32>
    %123 = vector.shape_cast %122 : vector<1x3x8x4xf32> to vector<3x8x4xf32>
    %c0_118 = arith.constant 0 : index
    %c0_119 = arith.constant 0 : index
    %124 = arith.index_cast %111 : i32 to index
    %c1_120 = arith.constant 1 : index
    %125 = vector.load %arg6[%c0_118, %c0_119, %124, %c1_120] : memref<1x3x12x7xf32, #tpu.memory_space<vmem>>, vector<1x3x8x4xf32>
    %126 = vector.shape_cast %125 : vector<1x3x8x4xf32> to vector<3x8x4xf32>
    %c0_121 = arith.constant 0 : index
    %c0_122 = arith.constant 0 : index
    %127 = arith.index_cast %111 : i32 to index
    %c1_123 = arith.constant 1 : index
    %128 = vector.load %arg7[%c0_121, %c0_122, %127, %c1_123] : memref<1x3x12x7xf32, #tpu.memory_space<vmem>>, vector<1x3x8x4xf32>
    %129 = vector.shape_cast %128 : vector<1x3x8x4xf32> to vector<3x8x4xf32>
    %c0_124 = arith.constant 0 : index
    %c0_125 = arith.constant 0 : index
    %130 = arith.index_cast %111 : i32 to index
    %c1_126 = arith.constant 1 : index
    %131 = vector.load %arg8[%c0_124, %c0_125, %130, %c1_126] : memref<1x3x12x7xf32, #tpu.memory_space<vmem>>, vector<1x3x8x4xf32>
    %132 = vector.shape_cast %131 : vector<1x3x8x4xf32> to vector<3x8x4xf32>
    %c3_i32 = arith.constant 3 : i32
    %133 = arith.addi %0, %c3_i32 : i32
    %c0_127 = arith.constant 0 : index
    %c0_128 = arith.constant 0 : index
    %134 = arith.index_cast %133 : i32 to index
    %c0_129 = arith.constant 0 : index
    %135 = vector.load %arg2[%c0_127, %c0_128, %134, %c0_129] : memref<1x3x12x7xf32, #tpu.memory_space<vmem>>, vector<1x3x8x4xf32>
    %136 = vector.shape_cast %135 : vector<1x3x8x4xf32> to vector<3x8x4xf32>
    %c0_130 = arith.constant 0 : index
    %c0_131 = arith.constant 0 : index
    %137 = arith.index_cast %133 : i32 to index
    %c0_132 = arith.constant 0 : index
    %138 = vector.load %arg3[%c0_130, %c0_131, %137, %c0_132] : memref<1x3x12x7xf32, #tpu.memory_space<vmem>>, vector<1x3x8x4xf32>
    %139 = vector.shape_cast %138 : vector<1x3x8x4xf32> to vector<3x8x4xf32>
    %c0_133 = arith.constant 0 : index
    %c0_134 = arith.constant 0 : index
    %140 = arith.index_cast %133 : i32 to index
    %c0_135 = arith.constant 0 : index
    %141 = vector.load %arg4[%c0_133, %c0_134, %140, %c0_135] : memref<1x3x12x7xf32, #tpu.memory_space<vmem>>, vector<1x3x8x4xf32>
    %142 = vector.shape_cast %141 : vector<1x3x8x4xf32> to vector<3x8x4xf32>
    %c0_136 = arith.constant 0 : index
    %c0_137 = arith.constant 0 : index
    %143 = arith.index_cast %133 : i32 to index
    %c0_138 = arith.constant 0 : index
    %144 = vector.load %arg5[%c0_136, %c0_137, %143, %c0_138] : memref<1x3x12x7xf32, #tpu.memory_space<vmem>>, vector<1x3x8x4xf32>
    %145 = vector.shape_cast %144 : vector<1x3x8x4xf32> to vector<3x8x4xf32>
    %c0_139 = arith.constant 0 : index
    %c0_140 = arith.constant 0 : index
    %146 = arith.index_cast %133 : i32 to index
    %c1_141 = arith.constant 1 : index
    %147 = vector.load %arg2[%c0_139, %c0_140, %146, %c1_141] : memref<1x3x12x7xf32, #tpu.memory_space<vmem>>, vector<1x3x8x4xf32>
    %148 = vector.shape_cast %147 : vector<1x3x8x4xf32> to vector<3x8x4xf32>
    %c0_142 = arith.constant 0 : index
    %c0_143 = arith.constant 0 : index
    %149 = arith.index_cast %133 : i32 to index
    %c1_144 = arith.constant 1 : index
    %150 = vector.load %arg3[%c0_142, %c0_143, %149, %c1_144] : memref<1x3x12x7xf32, #tpu.memory_space<vmem>>, vector<1x3x8x4xf32>
    %151 = vector.shape_cast %150 : vector<1x3x8x4xf32> to vector<3x8x4xf32>
    %c0_145 = arith.constant 0 : index
    %c0_146 = arith.constant 0 : index
    %152 = arith.index_cast %133 : i32 to index
    %c1_147 = arith.constant 1 : index
    %153 = vector.load %arg4[%c0_145, %c0_146, %152, %c1_147] : memref<1x3x12x7xf32, #tpu.memory_space<vmem>>, vector<1x3x8x4xf32>
    %154 = vector.shape_cast %153 : vector<1x3x8x4xf32> to vector<3x8x4xf32>
    %155 = tpu.concatenate %4, %7, %10, %13, %16, %19, %22, %26, %29, %32, %35, %38, %41, %44, %48, %51 in 0 : vector<3x8x4xf32>, vector<3x8x4xf32>, vector<3x8x4xf32>, vector<3x8x4xf32>, vector<3x8x4xf32>, vector<3x8x4xf32>, vector<3x8x4xf32>, vector<3x8x4xf32>, vector<3x8x4xf32>, vector<3x8x4xf32>, vector<3x8x4xf32>, vector<3x8x4xf32>, vector<3x8x4xf32>, vector<3x8x4xf32>, vector<3x8x4xf32>, vector<3x8x4xf32> -> vector<48x8x4xf32>
    %156 = tpu.concatenate %54, %57, %60, %63, %66, %70, %73, %76, %79, %82, %85, %88, %92, %95, %98, %101 in 0 : vector<3x8x4xf32>, vector<3x8x4xf32>, vector<3x8x4xf32>, vector<3x8x4xf32>, vector<3x8x4xf32>, vector<3x8x4xf32>, vector<3x8x4xf32>, vector<3x8x4xf32>, vector<3x8x4xf32>, vector<3x8x4xf32>, vector<3x8x4xf32>, vector<3x8x4xf32>, vector<3x8x4xf32>, vector<3x8x4xf32>, vector<3x8x4xf32>, vector<3x8x4xf32> -> vector<48x8x4xf32>
    %157 = tpu.concatenate %104, %107, %110, %114, %117, %120, %123, %126, %129, %132, %136, %139, %142, %145, %148, %151 in 0 : vector<3x8x4xf32>, vector<3x8x4xf32>, vector<3x8x4xf32>, vector<3x8x4xf32>, vector<3x8x4xf32>, vector<3x8x4xf32>, vector<3x8x4xf32>, vector<3x8x4xf32>, vector<3x8x4xf32>, vector<3x8x4xf32>, vector<3x8x4xf32>, vector<3x8x4xf32>, vector<3x8x4xf32>, vector<3x8x4xf32>, vector<3x8x4xf32>, vector<3x8x4xf32> -> vector<48x8x4xf32>
    %158 = tpu.concatenate %155, %156, %157, %154 in 0 : vector<48x8x4xf32>, vector<48x8x4xf32>, vector<48x8x4xf32>, vector<3x8x4xf32> -> vector<147x8x4xf32>
    %159 = vector.shape_cast %158 : vector<147x8x4xf32> to vector<147x32xf32>
    %160 = arith.truncf %159 : vector<147x32xf32> to vector<147x32xbf16>
    %c0_148 = arith.constant 0 : index
    %c0_149 = arith.constant 0 : index
    %161 = vector.load %arg10[%c0_148, %c0_149] : memref<147x64xbf16, #tpu.memory_space<vmem>>, vector<147x64xbf16>
    %cst = arith.constant dense<0.000000e+00> : vector<32x64xf32>
    %162 = tpu.matmul %160, %161, %cst {dimension_numbers = #tpu.dot_dimension_numbers<[0], [0], [1], [1], [0, 1, 1, 1], [], []>} : vector<147x32xbf16>, vector<147x64xbf16>, vector<32x64xf32> -> vector<32x64xf32>
    %c0_150 = arith.constant 0 : index
    %c0_151 = arith.constant 0 : index
    %163 = vector.load %arg11[%c0_150, %c0_151] : memref<1x64xf32, #tpu.memory_space<vmem>>, vector<1x64xf32>
    %164 = vector.broadcast %163 : vector<1x64xf32> to vector<32x64xf32>
    %165 = arith.addf %162, %164 : vector<32x64xf32>
    %cst_152 = arith.constant 0.000000e+00 : f32
    %166 = vector.broadcast %cst_152 : f32 to vector<32x64xf32>
    %167 = arith.maximumf %165, %166 : vector<32x64xf32>
    %168 = vector.shape_cast %167 : vector<32x64xf32> to vector<8x4x64xf32>
    %c0_i32_153 = arith.constant 0 : i32
    %169 = arith.addi %0, %c0_i32_153 : i32
    %c0_154 = arith.constant 0 : index
    %c0_155 = arith.constant 0 : index
    %170 = arith.index_cast %169 : i32 to index
    %c0_156 = arith.constant 0 : index
    %171 = vector.load %arg4[%c0_154, %c0_155, %170, %c0_156] : memref<1x3x12x7xf32, #tpu.memory_space<vmem>>, vector<1x3x8x4xf32>
    %172 = vector.shape_cast %171 : vector<1x3x8x4xf32> to vector<3x8x4xf32>
    %c0_157 = arith.constant 0 : index
    %c0_158 = arith.constant 0 : index
    %173 = arith.index_cast %169 : i32 to index
    %c0_159 = arith.constant 0 : index
    %174 = vector.load %arg5[%c0_157, %c0_158, %173, %c0_159] : memref<1x3x12x7xf32, #tpu.memory_space<vmem>>, vector<1x3x8x4xf32>
    %175 = vector.shape_cast %174 : vector<1x3x8x4xf32> to vector<3x8x4xf32>
    %c0_160 = arith.constant 0 : index
    %c0_161 = arith.constant 0 : index
    %176 = arith.index_cast %169 : i32 to index
    %c1_162 = arith.constant 1 : index
    %177 = vector.load %arg2[%c0_160, %c0_161, %176, %c1_162] : memref<1x3x12x7xf32, #tpu.memory_space<vmem>>, vector<1x3x8x4xf32>
    %178 = vector.shape_cast %177 : vector<1x3x8x4xf32> to vector<3x8x4xf32>
    %c0_163 = arith.constant 0 : index
    %c0_164 = arith.constant 0 : index
    %179 = arith.index_cast %169 : i32 to index
    %c1_165 = arith.constant 1 : index
    %180 = vector.load %arg3[%c0_163, %c0_164, %179, %c1_165] : memref<1x3x12x7xf32, #tpu.memory_space<vmem>>, vector<1x3x8x4xf32>
    %181 = vector.shape_cast %180 : vector<1x3x8x4xf32> to vector<3x8x4xf32>
    %c0_166 = arith.constant 0 : index
    %c0_167 = arith.constant 0 : index
    %182 = arith.index_cast %169 : i32 to index
    %c1_168 = arith.constant 1 : index
    %183 = vector.load %arg4[%c0_166, %c0_167, %182, %c1_168] : memref<1x3x12x7xf32, #tpu.memory_space<vmem>>, vector<1x3x8x4xf32>
    %184 = vector.shape_cast %183 : vector<1x3x8x4xf32> to vector<3x8x4xf32>
    %c0_169 = arith.constant 0 : index
    %c0_170 = arith.constant 0 : index
    %185 = arith.index_cast %169 : i32 to index
    %c1_171 = arith.constant 1 : index
    %186 = vector.load %arg5[%c0_169, %c0_170, %185, %c1_171] : memref<1x3x12x7xf32, #tpu.memory_space<vmem>>, vector<1x3x8x4xf32>
    %187 = vector.shape_cast %186 : vector<1x3x8x4xf32> to vector<3x8x4xf32>
    %c0_172 = arith.constant 0 : index
    %c0_173 = arith.constant 0 : index
    %188 = arith.index_cast %169 : i32 to index
    %c2 = arith.constant 2 : index
    %189 = vector.load %arg2[%c0_172, %c0_173, %188, %c2] : memref<1x3x12x7xf32, #tpu.memory_space<vmem>>, vector<1x3x8x4xf32>
    %190 = vector.shape_cast %189 : vector<1x3x8x4xf32> to vector<3x8x4xf32>
    %c0_i32_174 = arith.constant 0 : i32
    %191 = arith.addi %0, %c0_i32_174 : i32
    %c0_175 = arith.constant 0 : index
    %c0_176 = arith.constant 0 : index
    %192 = arith.index_cast %191 : i32 to index
    %c0_177 = arith.constant 0 : index
    %193 = vector.load %arg8[%c0_175, %c0_176, %192, %c0_177] : memref<1x3x12x7xf32, #tpu.memory_space<vmem>>, vector<1x3x8x4xf32>
    %194 = vector.shape_cast %193 : vector<1x3x8x4xf32> to vector<3x8x4xf32>
    %c0_178 = arith.constant 0 : index
    %c0_179 = arith.constant 0 : index
    %195 = arith.index_cast %191 : i32 to index
    %c0_180 = arith.constant 0 : index
    %196 = vector.load %arg9[%c0_178, %c0_179, %195, %c0_180] : memref<1x3x12x7xf32, #tpu.memory_space<vmem>>, vector<1x3x8x4xf32>
    %197 = vector.shape_cast %196 : vector<1x3x8x4xf32> to vector<3x8x4xf32>
    %c0_181 = arith.constant 0 : index
    %c0_182 = arith.constant 0 : index
    %198 = arith.index_cast %191 : i32 to index
    %c1_183 = arith.constant 1 : index
    %199 = vector.load %arg6[%c0_181, %c0_182, %198, %c1_183] : memref<1x3x12x7xf32, #tpu.memory_space<vmem>>, vector<1x3x8x4xf32>
    %200 = vector.shape_cast %199 : vector<1x3x8x4xf32> to vector<3x8x4xf32>
    %c0_184 = arith.constant 0 : index
    %c0_185 = arith.constant 0 : index
    %201 = arith.index_cast %191 : i32 to index
    %c1_186 = arith.constant 1 : index
    %202 = vector.load %arg7[%c0_184, %c0_185, %201, %c1_186] : memref<1x3x12x7xf32, #tpu.memory_space<vmem>>, vector<1x3x8x4xf32>
    %203 = vector.shape_cast %202 : vector<1x3x8x4xf32> to vector<3x8x4xf32>
    %c0_187 = arith.constant 0 : index
    %c0_188 = arith.constant 0 : index
    %204 = arith.index_cast %191 : i32 to index
    %c1_189 = arith.constant 1 : index
    %205 = vector.load %arg8[%c0_187, %c0_188, %204, %c1_189] : memref<1x3x12x7xf32, #tpu.memory_space<vmem>>, vector<1x3x8x4xf32>
    %206 = vector.shape_cast %205 : vector<1x3x8x4xf32> to vector<3x8x4xf32>
    %c0_190 = arith.constant 0 : index
    %c0_191 = arith.constant 0 : index
    %207 = arith.index_cast %191 : i32 to index
    %c1_192 = arith.constant 1 : index
    %208 = vector.load %arg9[%c0_190, %c0_191, %207, %c1_192] : memref<1x3x12x7xf32, #tpu.memory_space<vmem>>, vector<1x3x8x4xf32>
    %209 = vector.shape_cast %208 : vector<1x3x8x4xf32> to vector<3x8x4xf32>
    %c0_193 = arith.constant 0 : index
    %c0_194 = arith.constant 0 : index
    %210 = arith.index_cast %191 : i32 to index
    %c2_195 = arith.constant 2 : index
    %211 = vector.load %arg6[%c0_193, %c0_194, %210, %c2_195] : memref<1x3x12x7xf32, #tpu.memory_space<vmem>>, vector<1x3x8x4xf32>
    %212 = vector.shape_cast %211 : vector<1x3x8x4xf32> to vector<3x8x4xf32>
    %c1_i32_196 = arith.constant 1 : i32
    %213 = arith.addi %0, %c1_i32_196 : i32
    %c0_197 = arith.constant 0 : index
    %c0_198 = arith.constant 0 : index
    %214 = arith.index_cast %213 : i32 to index
    %c0_199 = arith.constant 0 : index
    %215 = vector.load %arg4[%c0_197, %c0_198, %214, %c0_199] : memref<1x3x12x7xf32, #tpu.memory_space<vmem>>, vector<1x3x8x4xf32>
    %216 = vector.shape_cast %215 : vector<1x3x8x4xf32> to vector<3x8x4xf32>
    %c0_200 = arith.constant 0 : index
    %c0_201 = arith.constant 0 : index
    %217 = arith.index_cast %213 : i32 to index
    %c0_202 = arith.constant 0 : index
    %218 = vector.load %arg5[%c0_200, %c0_201, %217, %c0_202] : memref<1x3x12x7xf32, #tpu.memory_space<vmem>>, vector<1x3x8x4xf32>
    %219 = vector.shape_cast %218 : vector<1x3x8x4xf32> to vector<3x8x4xf32>
    %c0_203 = arith.constant 0 : index
    %c0_204 = arith.constant 0 : index
    %220 = arith.index_cast %213 : i32 to index
    %c1_205 = arith.constant 1 : index
    %221 = vector.load %arg2[%c0_203, %c0_204, %220, %c1_205] : memref<1x3x12x7xf32, #tpu.memory_space<vmem>>, vector<1x3x8x4xf32>
    %222 = vector.shape_cast %221 : vector<1x3x8x4xf32> to vector<3x8x4xf32>
    %c0_206 = arith.constant 0 : index
    %c0_207 = arith.constant 0 : index
    %223 = arith.index_cast %213 : i32 to index
    %c1_208 = arith.constant 1 : index
    %224 = vector.load %arg3[%c0_206, %c0_207, %223, %c1_208] : memref<1x3x12x7xf32, #tpu.memory_space<vmem>>, vector<1x3x8x4xf32>
    %225 = vector.shape_cast %224 : vector<1x3x8x4xf32> to vector<3x8x4xf32>
    %c0_209 = arith.constant 0 : index
    %c0_210 = arith.constant 0 : index
    %226 = arith.index_cast %213 : i32 to index
    %c1_211 = arith.constant 1 : index
    %227 = vector.load %arg4[%c0_209, %c0_210, %226, %c1_211] : memref<1x3x12x7xf32, #tpu.memory_space<vmem>>, vector<1x3x8x4xf32>
    %228 = vector.shape_cast %227 : vector<1x3x8x4xf32> to vector<3x8x4xf32>
    %c0_212 = arith.constant 0 : index
    %c0_213 = arith.constant 0 : index
    %229 = arith.index_cast %213 : i32 to index
    %c1_214 = arith.constant 1 : index
    %230 = vector.load %arg5[%c0_212, %c0_213, %229, %c1_214] : memref<1x3x12x7xf32, #tpu.memory_space<vmem>>, vector<1x3x8x4xf32>
    %231 = vector.shape_cast %230 : vector<1x3x8x4xf32> to vector<3x8x4xf32>
    %c0_215 = arith.constant 0 : index
    %c0_216 = arith.constant 0 : index
    %232 = arith.index_cast %213 : i32 to index
    %c2_217 = arith.constant 2 : index
    %233 = vector.load %arg2[%c0_215, %c0_216, %232, %c2_217] : memref<1x3x12x7xf32, #tpu.memory_space<vmem>>, vector<1x3x8x4xf32>
    %234 = vector.shape_cast %233 : vector<1x3x8x4xf32> to vector<3x8x4xf32>
    %c1_i32_218 = arith.constant 1 : i32
    %235 = arith.addi %0, %c1_i32_218 : i32
    %c0_219 = arith.constant 0 : index
    %c0_220 = arith.constant 0 : index
    %236 = arith.index_cast %235 : i32 to index
    %c0_221 = arith.constant 0 : index
    %237 = vector.load %arg8[%c0_219, %c0_220, %236, %c0_221] : memref<1x3x12x7xf32, #tpu.memory_space<vmem>>, vector<1x3x8x4xf32>
    %238 = vector.shape_cast %237 : vector<1x3x8x4xf32> to vector<3x8x4xf32>
    %c0_222 = arith.constant 0 : index
    %c0_223 = arith.constant 0 : index
    %239 = arith.index_cast %235 : i32 to index
    %c0_224 = arith.constant 0 : index
    %240 = vector.load %arg9[%c0_222, %c0_223, %239, %c0_224] : memref<1x3x12x7xf32, #tpu.memory_space<vmem>>, vector<1x3x8x4xf32>
    %241 = vector.shape_cast %240 : vector<1x3x8x4xf32> to vector<3x8x4xf32>
    %c0_225 = arith.constant 0 : index
    %c0_226 = arith.constant 0 : index
    %242 = arith.index_cast %235 : i32 to index
    %c1_227 = arith.constant 1 : index
    %243 = vector.load %arg6[%c0_225, %c0_226, %242, %c1_227] : memref<1x3x12x7xf32, #tpu.memory_space<vmem>>, vector<1x3x8x4xf32>
    %244 = vector.shape_cast %243 : vector<1x3x8x4xf32> to vector<3x8x4xf32>
    %c0_228 = arith.constant 0 : index
    %c0_229 = arith.constant 0 : index
    %245 = arith.index_cast %235 : i32 to index
    %c1_230 = arith.constant 1 : index
    %246 = vector.load %arg7[%c0_228, %c0_229, %245, %c1_230] : memref<1x3x12x7xf32, #tpu.memory_space<vmem>>, vector<1x3x8x4xf32>
    %247 = vector.shape_cast %246 : vector<1x3x8x4xf32> to vector<3x8x4xf32>
    %c0_231 = arith.constant 0 : index
    %c0_232 = arith.constant 0 : index
    %248 = arith.index_cast %235 : i32 to index
    %c1_233 = arith.constant 1 : index
    %249 = vector.load %arg8[%c0_231, %c0_232, %248, %c1_233] : memref<1x3x12x7xf32, #tpu.memory_space<vmem>>, vector<1x3x8x4xf32>
    %250 = vector.shape_cast %249 : vector<1x3x8x4xf32> to vector<3x8x4xf32>
    %c0_234 = arith.constant 0 : index
    %c0_235 = arith.constant 0 : index
    %251 = arith.index_cast %235 : i32 to index
    %c1_236 = arith.constant 1 : index
    %252 = vector.load %arg9[%c0_234, %c0_235, %251, %c1_236] : memref<1x3x12x7xf32, #tpu.memory_space<vmem>>, vector<1x3x8x4xf32>
    %253 = vector.shape_cast %252 : vector<1x3x8x4xf32> to vector<3x8x4xf32>
    %c0_237 = arith.constant 0 : index
    %c0_238 = arith.constant 0 : index
    %254 = arith.index_cast %235 : i32 to index
    %c2_239 = arith.constant 2 : index
    %255 = vector.load %arg6[%c0_237, %c0_238, %254, %c2_239] : memref<1x3x12x7xf32, #tpu.memory_space<vmem>>, vector<1x3x8x4xf32>
    %256 = vector.shape_cast %255 : vector<1x3x8x4xf32> to vector<3x8x4xf32>
    %c2_i32_240 = arith.constant 2 : i32
    %257 = arith.addi %0, %c2_i32_240 : i32
    %c0_241 = arith.constant 0 : index
    %c0_242 = arith.constant 0 : index
    %258 = arith.index_cast %257 : i32 to index
    %c0_243 = arith.constant 0 : index
    %259 = vector.load %arg4[%c0_241, %c0_242, %258, %c0_243] : memref<1x3x12x7xf32, #tpu.memory_space<vmem>>, vector<1x3x8x4xf32>
    %260 = vector.shape_cast %259 : vector<1x3x8x4xf32> to vector<3x8x4xf32>
    %c0_244 = arith.constant 0 : index
    %c0_245 = arith.constant 0 : index
    %261 = arith.index_cast %257 : i32 to index
    %c0_246 = arith.constant 0 : index
    %262 = vector.load %arg5[%c0_244, %c0_245, %261, %c0_246] : memref<1x3x12x7xf32, #tpu.memory_space<vmem>>, vector<1x3x8x4xf32>
    %263 = vector.shape_cast %262 : vector<1x3x8x4xf32> to vector<3x8x4xf32>
    %c0_247 = arith.constant 0 : index
    %c0_248 = arith.constant 0 : index
    %264 = arith.index_cast %257 : i32 to index
    %c1_249 = arith.constant 1 : index
    %265 = vector.load %arg2[%c0_247, %c0_248, %264, %c1_249] : memref<1x3x12x7xf32, #tpu.memory_space<vmem>>, vector<1x3x8x4xf32>
    %266 = vector.shape_cast %265 : vector<1x3x8x4xf32> to vector<3x8x4xf32>
    %c0_250 = arith.constant 0 : index
    %c0_251 = arith.constant 0 : index
    %267 = arith.index_cast %257 : i32 to index
    %c1_252 = arith.constant 1 : index
    %268 = vector.load %arg3[%c0_250, %c0_251, %267, %c1_252] : memref<1x3x12x7xf32, #tpu.memory_space<vmem>>, vector<1x3x8x4xf32>
    %269 = vector.shape_cast %268 : vector<1x3x8x4xf32> to vector<3x8x4xf32>
    %c0_253 = arith.constant 0 : index
    %c0_254 = arith.constant 0 : index
    %270 = arith.index_cast %257 : i32 to index
    %c1_255 = arith.constant 1 : index
    %271 = vector.load %arg4[%c0_253, %c0_254, %270, %c1_255] : memref<1x3x12x7xf32, #tpu.memory_space<vmem>>, vector<1x3x8x4xf32>
    %272 = vector.shape_cast %271 : vector<1x3x8x4xf32> to vector<3x8x4xf32>
    %c0_256 = arith.constant 0 : index
    %c0_257 = arith.constant 0 : index
    %273 = arith.index_cast %257 : i32 to index
    %c1_258 = arith.constant 1 : index
    %274 = vector.load %arg5[%c0_256, %c0_257, %273, %c1_258] : memref<1x3x12x7xf32, #tpu.memory_space<vmem>>, vector<1x3x8x4xf32>
    %275 = vector.shape_cast %274 : vector<1x3x8x4xf32> to vector<3x8x4xf32>
    %c0_259 = arith.constant 0 : index
    %c0_260 = arith.constant 0 : index
    %276 = arith.index_cast %257 : i32 to index
    %c2_261 = arith.constant 2 : index
    %277 = vector.load %arg2[%c0_259, %c0_260, %276, %c2_261] : memref<1x3x12x7xf32, #tpu.memory_space<vmem>>, vector<1x3x8x4xf32>
    %278 = vector.shape_cast %277 : vector<1x3x8x4xf32> to vector<3x8x4xf32>
    %c2_i32_262 = arith.constant 2 : i32
    %279 = arith.addi %0, %c2_i32_262 : i32
    %c0_263 = arith.constant 0 : index
    %c0_264 = arith.constant 0 : index
    %280 = arith.index_cast %279 : i32 to index
    %c0_265 = arith.constant 0 : index
    %281 = vector.load %arg8[%c0_263, %c0_264, %280, %c0_265] : memref<1x3x12x7xf32, #tpu.memory_space<vmem>>, vector<1x3x8x4xf32>
    %282 = vector.shape_cast %281 : vector<1x3x8x4xf32> to vector<3x8x4xf32>
    %c0_266 = arith.constant 0 : index
    %c0_267 = arith.constant 0 : index
    %283 = arith.index_cast %279 : i32 to index
    %c0_268 = arith.constant 0 : index
    %284 = vector.load %arg9[%c0_266, %c0_267, %283, %c0_268] : memref<1x3x12x7xf32, #tpu.memory_space<vmem>>, vector<1x3x8x4xf32>
    %285 = vector.shape_cast %284 : vector<1x3x8x4xf32> to vector<3x8x4xf32>
    %c0_269 = arith.constant 0 : index
    %c0_270 = arith.constant 0 : index
    %286 = arith.index_cast %279 : i32 to index
    %c1_271 = arith.constant 1 : index
    %287 = vector.load %arg6[%c0_269, %c0_270, %286, %c1_271] : memref<1x3x12x7xf32, #tpu.memory_space<vmem>>, vector<1x3x8x4xf32>
    %288 = vector.shape_cast %287 : vector<1x3x8x4xf32> to vector<3x8x4xf32>
    %c0_272 = arith.constant 0 : index
    %c0_273 = arith.constant 0 : index
    %289 = arith.index_cast %279 : i32 to index
    %c1_274 = arith.constant 1 : index
    %290 = vector.load %arg7[%c0_272, %c0_273, %289, %c1_274] : memref<1x3x12x7xf32, #tpu.memory_space<vmem>>, vector<1x3x8x4xf32>
    %291 = vector.shape_cast %290 : vector<1x3x8x4xf32> to vector<3x8x4xf32>
    %c0_275 = arith.constant 0 : index
    %c0_276 = arith.constant 0 : index
    %292 = arith.index_cast %279 : i32 to index
    %c1_277 = arith.constant 1 : index
    %293 = vector.load %arg8[%c0_275, %c0_276, %292, %c1_277] : memref<1x3x12x7xf32, #tpu.memory_space<vmem>>, vector<1x3x8x4xf32>
    %294 = vector.shape_cast %293 : vector<1x3x8x4xf32> to vector<3x8x4xf32>
    %c0_278 = arith.constant 0 : index
    %c0_279 = arith.constant 0 : index
    %295 = arith.index_cast %279 : i32 to index
    %c1_280 = arith.constant 1 : index
    %296 = vector.load %arg9[%c0_278, %c0_279, %295, %c1_280] : memref<1x3x12x7xf32, #tpu.memory_space<vmem>>, vector<1x3x8x4xf32>
    %297 = vector.shape_cast %296 : vector<1x3x8x4xf32> to vector<3x8x4xf32>
    %c0_281 = arith.constant 0 : index
    %c0_282 = arith.constant 0 : index
    %298 = arith.index_cast %279 : i32 to index
    %c2_283 = arith.constant 2 : index
    %299 = vector.load %arg6[%c0_281, %c0_282, %298, %c2_283] : memref<1x3x12x7xf32, #tpu.memory_space<vmem>>, vector<1x3x8x4xf32>
    %300 = vector.shape_cast %299 : vector<1x3x8x4xf32> to vector<3x8x4xf32>
    %c3_i32_284 = arith.constant 3 : i32
    %301 = arith.addi %0, %c3_i32_284 : i32
    %c0_285 = arith.constant 0 : index
    %c0_286 = arith.constant 0 : index
    %302 = arith.index_cast %301 : i32 to index
    %c0_287 = arith.constant 0 : index
    %303 = vector.load %arg4[%c0_285, %c0_286, %302, %c0_287] : memref<1x3x12x7xf32, #tpu.memory_space<vmem>>, vector<1x3x8x4xf32>
    %304 = vector.shape_cast %303 : vector<1x3x8x4xf32> to vector<3x8x4xf32>
    %c0_288 = arith.constant 0 : index
    %c0_289 = arith.constant 0 : index
    %305 = arith.index_cast %301 : i32 to index
    %c0_290 = arith.constant 0 : index
    %306 = vector.load %arg5[%c0_288, %c0_289, %305, %c0_290] : memref<1x3x12x7xf32, #tpu.memory_space<vmem>>, vector<1x3x8x4xf32>
    %307 = vector.shape_cast %306 : vector<1x3x8x4xf32> to vector<3x8x4xf32>
    %c0_291 = arith.constant 0 : index
    %c0_292 = arith.constant 0 : index
    %308 = arith.index_cast %301 : i32 to index
    %c1_293 = arith.constant 1 : index
    %309 = vector.load %arg2[%c0_291, %c0_292, %308, %c1_293] : memref<1x3x12x7xf32, #tpu.memory_space<vmem>>, vector<1x3x8x4xf32>
    %310 = vector.shape_cast %309 : vector<1x3x8x4xf32> to vector<3x8x4xf32>
    %c0_294 = arith.constant 0 : index
    %c0_295 = arith.constant 0 : index
    %311 = arith.index_cast %301 : i32 to index
    %c1_296 = arith.constant 1 : index
    %312 = vector.load %arg3[%c0_294, %c0_295, %311, %c1_296] : memref<1x3x12x7xf32, #tpu.memory_space<vmem>>, vector<1x3x8x4xf32>
    %313 = vector.shape_cast %312 : vector<1x3x8x4xf32> to vector<3x8x4xf32>
    %c0_297 = arith.constant 0 : index
    %c0_298 = arith.constant 0 : index
    %314 = arith.index_cast %301 : i32 to index
    %c1_299 = arith.constant 1 : index
    %315 = vector.load %arg4[%c0_297, %c0_298, %314, %c1_299] : memref<1x3x12x7xf32, #tpu.memory_space<vmem>>, vector<1x3x8x4xf32>
    %316 = vector.shape_cast %315 : vector<1x3x8x4xf32> to vector<3x8x4xf32>
    %c0_300 = arith.constant 0 : index
    %c0_301 = arith.constant 0 : index
    %317 = arith.index_cast %301 : i32 to index
    %c1_302 = arith.constant 1 : index
    %318 = vector.load %arg5[%c0_300, %c0_301, %317, %c1_302] : memref<1x3x12x7xf32, #tpu.memory_space<vmem>>, vector<1x3x8x4xf32>
    %319 = vector.shape_cast %318 : vector<1x3x8x4xf32> to vector<3x8x4xf32>
    %c0_303 = arith.constant 0 : index
    %c0_304 = arith.constant 0 : index
    %320 = arith.index_cast %301 : i32 to index
    %c2_305 = arith.constant 2 : index
    %321 = vector.load %arg2[%c0_303, %c0_304, %320, %c2_305] : memref<1x3x12x7xf32, #tpu.memory_space<vmem>>, vector<1x3x8x4xf32>
    %322 = vector.shape_cast %321 : vector<1x3x8x4xf32> to vector<3x8x4xf32>
    %323 = tpu.concatenate %172, %175, %178, %181, %184, %187, %190, %194, %197, %200, %203, %206, %209, %212, %216, %219 in 0 : vector<3x8x4xf32>, vector<3x8x4xf32>, vector<3x8x4xf32>, vector<3x8x4xf32>, vector<3x8x4xf32>, vector<3x8x4xf32>, vector<3x8x4xf32>, vector<3x8x4xf32>, vector<3x8x4xf32>, vector<3x8x4xf32>, vector<3x8x4xf32>, vector<3x8x4xf32>, vector<3x8x4xf32>, vector<3x8x4xf32>, vector<3x8x4xf32>, vector<3x8x4xf32> -> vector<48x8x4xf32>
    %324 = tpu.concatenate %222, %225, %228, %231, %234, %238, %241, %244, %247, %250, %253, %256, %260, %263, %266, %269 in 0 : vector<3x8x4xf32>, vector<3x8x4xf32>, vector<3x8x4xf32>, vector<3x8x4xf32>, vector<3x8x4xf32>, vector<3x8x4xf32>, vector<3x8x4xf32>, vector<3x8x4xf32>, vector<3x8x4xf32>, vector<3x8x4xf32>, vector<3x8x4xf32>, vector<3x8x4xf32>, vector<3x8x4xf32>, vector<3x8x4xf32>, vector<3x8x4xf32>, vector<3x8x4xf32> -> vector<48x8x4xf32>
    %325 = tpu.concatenate %272, %275, %278, %282, %285, %288, %291, %294, %297, %300, %304, %307, %310, %313, %316, %319 in 0 : vector<3x8x4xf32>, vector<3x8x4xf32>, vector<3x8x4xf32>, vector<3x8x4xf32>, vector<3x8x4xf32>, vector<3x8x4xf32>, vector<3x8x4xf32>, vector<3x8x4xf32>, vector<3x8x4xf32>, vector<3x8x4xf32>, vector<3x8x4xf32>, vector<3x8x4xf32>, vector<3x8x4xf32>, vector<3x8x4xf32>, vector<3x8x4xf32>, vector<3x8x4xf32> -> vector<48x8x4xf32>
    %326 = tpu.concatenate %323, %324, %325, %322 in 0 : vector<48x8x4xf32>, vector<48x8x4xf32>, vector<48x8x4xf32>, vector<3x8x4xf32> -> vector<147x8x4xf32>
    %327 = vector.shape_cast %326 : vector<147x8x4xf32> to vector<147x32xf32>
    %328 = arith.truncf %327 : vector<147x32xf32> to vector<147x32xbf16>
    %c0_306 = arith.constant 0 : index
    %c0_307 = arith.constant 0 : index
    %329 = vector.load %arg10[%c0_306, %c0_307] : memref<147x64xbf16, #tpu.memory_space<vmem>>, vector<147x64xbf16>
    %cst_308 = arith.constant dense<0.000000e+00> : vector<32x64xf32>
    %330 = tpu.matmul %328, %329, %cst_308 {dimension_numbers = #tpu.dot_dimension_numbers<[0], [0], [1], [1], [0, 1, 1, 1], [], []>} : vector<147x32xbf16>, vector<147x64xbf16>, vector<32x64xf32> -> vector<32x64xf32>
    %c0_309 = arith.constant 0 : index
    %c0_310 = arith.constant 0 : index
    %331 = vector.load %arg11[%c0_309, %c0_310] : memref<1x64xf32, #tpu.memory_space<vmem>>, vector<1x64xf32>
    %332 = vector.broadcast %331 : vector<1x64xf32> to vector<32x64xf32>
    %333 = arith.addf %330, %332 : vector<32x64xf32>
    %cst_311 = arith.constant 0.000000e+00 : f32
    %334 = vector.broadcast %cst_311 : f32 to vector<32x64xf32>
    %335 = arith.maximumf %333, %334 : vector<32x64xf32>
    %336 = vector.shape_cast %335 : vector<32x64xf32> to vector<8x4x64xf32>
    %337 = tpu.concatenate %168, %336 in 2 : vector<8x4x64xf32>, vector<8x4x64xf32> -> vector<8x4x128xf32>
    %338 = vector.shape_cast %337 : vector<8x4x128xf32> to vector<1x8x4x128xf32>
    %c0_312 = arith.constant 0 : index
    %c0_313 = arith.constant 0 : index
    %c0_314 = arith.constant 0 : index
    %c0_315 = arith.constant 0 : index
    %339 = vector.load %arg12[%c0_312, %c0_313, %c0_314, %c0_315] : memref<1x8x4x128xf32, #tpu.memory_space<vmem>>, vector<1x8x4x128xf32>
    tpu.vector_store %arg12[%c0_312, %c0_313, %c0_314, %c0_315], %338 {strides = array<i32>} : memref<1x8x4x128xf32, #tpu.memory_space<vmem>>, vector<1x8x4x128xf32>,
    return
  }
  func.func @transform_0(%arg0: i32, %arg1: i32) -> (i32, i32, i32, i32) {
    %c0_i32 = arith.constant 0 : i32
    %c0_i32_0 = arith.constant 0 : i32
    %c0_i32_1 = arith.constant 0 : i32
    %c0_i32_2 = arith.constant 0 : i32
    return %arg0, %c0_i32, %c0_i32_0, %c0_i32_1 : i32, i32, i32, i32
  }
  func.func @transform_1(%arg0: i32, %arg1: i32) -> (i32, i32, i32, i32) {
    %c0_i32 = arith.constant 0 : i32
    %c0_i32_0 = arith.constant 0 : i32
    %c0_i32_1 = arith.constant 0 : i32
    %c0_i32_2 = arith.constant 0 : i32
    return %arg0, %c0_i32, %c0_i32_0, %c0_i32_1 : i32, i32, i32, i32
  }
  func.func @transform_2(%arg0: i32, %arg1: i32) -> (i32, i32, i32, i32) {
    %c0_i32 = arith.constant 0 : i32
    %c0_i32_0 = arith.constant 0 : i32
    %c0_i32_1 = arith.constant 0 : i32
    %c0_i32_2 = arith.constant 0 : i32
    return %arg0, %c0_i32, %c0_i32_0, %c0_i32_1 : i32, i32, i32, i32
  }
  func.func @transform_3(%arg0: i32, %arg1: i32) -> (i32, i32, i32, i32) {
    %c0_i32 = arith.constant 0 : i32
    %c0_i32_0 = arith.constant 0 : i32
    %c0_i32_1 = arith.constant 0 : i32
    %c0_i32_2 = arith.constant 0 : i32
    return %arg0, %c0_i32, %c0_i32_0, %c0_i32_1 : i32, i32, i32, i32
  }
  func.func @transform_4(%arg0: i32, %arg1: i32) -> (i32, i32, i32, i32) {
    %c0_i32 = arith.constant 0 : i32
    %c0_i32_0 = arith.constant 0 : i32
    %c0_i32_1 = arith.constant 0 : i32
    %c0_i32_2 = arith.constant 0 : i32
    return %arg0, %c0_i32, %c0_i32_0, %c0_i32_1 : i32, i32, i32, i32
  }
  func.func @transform_5(%arg0: i32, %arg1: i32) -> (i32, i32, i32, i32) {
    %c0_i32 = arith.constant 0 : i32
    %c0_i32_0 = arith.constant 0 : i32
    %c0_i32_1 = arith.constant 0 : i32
    %c0_i32_2 = arith.constant 0 : i32
    return %arg0, %c0_i32, %c0_i32_0, %c0_i32_1 : i32, i32, i32, i32
  }
  func.func @transform_6(%arg0: i32, %arg1: i32) -> (i32, i32, i32, i32) {
    %c0_i32 = arith.constant 0 : i32
    %c0_i32_0 = arith.constant 0 : i32
    %c0_i32_1 = arith.constant 0 : i32
    %c0_i32_2 = arith.constant 0 : i32
    return %arg0, %c0_i32, %c0_i32_0, %c0_i32_1 : i32, i32, i32, i32
  }
  func.func @transform_7(%arg0: i32, %arg1: i32) -> (i32, i32, i32, i32) {
    %c0_i32 = arith.constant 0 : i32
    %c0_i32_0 = arith.constant 0 : i32
    %c0_i32_1 = arith.constant 0 : i32
    %c0_i32_2 = arith.constant 0 : i32
    return %arg0, %c0_i32, %c0_i32_0, %c0_i32_1 : i32, i32, i32, i32
  }
  func.func @transform_8(%arg0: i32, %arg1: i32) -> (i32, i32) {
    %c0_i32 = arith.constant 0 : i32
    %c0_i32_0 = arith.constant 0 : i32
    %c0_i32_1 = arith.constant 0 : i32
    return %c0_i32, %c0_i32_0 : i32, i32
  }
  func.func @transform_9(%arg0: i32, %arg1: i32) -> (i32, i32) {
    %c0_i32 = arith.constant 0 : i32
    %c0_i32_0 = arith.constant 0 : i32
    %c0_i32_1 = arith.constant 0 : i32
    return %c0_i32, %c0_i32_0 : i32, i32
  }
  func.func @transform_10(%arg0: i32, %arg1: i32) -> (i32, i32, i32, i32) {
    %c0_i32 = arith.constant 0 : i32
    %c0_i32_0 = arith.constant 0 : i32
    %c0_i32_1 = arith.constant 0 : i32
    return %arg0, %arg1, %c0_i32, %c0_i32_0 : i32, i32, i32, i32
  }
}

</mosaic_0001>

<llo_original>
// kernel: thermal_module_forward.3
$region0: #{thermal_module_forward.3}
  #allocation0 [shape = 'u32[]', space=smem, size = 0x4, offset = 0x4, fixed_abs, tag = 'smem constant byte address 0x4 - core index']
  #allocation1 [shape = 'u32[144,128]{1,0:T(1,128)}', space=vmem, size = 0x12000, scoped, tag = 'internal scratch']
  %s0 = inlined_call_operand.vmem [shape: f32[2,8,4,128], index: 0, kind: input, shape index: {}]
  %s1 = inlined_call_operand.hbm [shape: f32[2,4,4,64], index: 1, kind: output, shape index: {}]
  %s2 = sld [smem:[#allocation0]]
  $region37: #{thermal_module_forward.3} parent=0
    _
  %s4 = ssub.s32 1, %s2
  %s5 = scalar_select 0, %s4, %s2
  $region1: #{thermal_module_forward.3} parent=0
    #allocation2 [shape = 'u8[16384]{0}', space=vmem, size = 0x4000, scoped, tag = 'output window, operand 0']
    #allocation3 [shape = 's32[2]{0}', space=sflag, size = 0x8, scoped, tag = 'scoped memory for thermal_module_forward.3']
    %6 = vsyncpa [#allocation3], 0
    %s7 = scalar_lea.sflag [#allocation3], 1
    %8 = vsyncpa %s7, 0
    loop: start=0, step=1, limit=4
    $region2: #{thermal_module_forward.3} parent=1 // loop_pre_header
      _
    $region3: #{thermal_module_forward.3} parent=1 // loop_header
      %s10 = sphi 0, %s14
      %p11 = scmp.ge.s32.totalorder %s10, 4
      %s17 = sphi 0, %s29
      %s18 = sphi 0, %s25
      %s19 = sphi 0, %s17
      %s20 = sphi 0, %s18
      %s21 = sphi 0, %s19
      %s22 = sphi 0, %s20
      %s32 = sphi 0, %s34
      %s35 = sphi 0, %s32
      %s36 = sphi 0, %s35
      %s52 = sphi 0, %s36
      %s60 = sphi 0, %s62
      %s63 = sphi 0, %s60
      %s64 = sphi 0, %s63
      %s80 = sphi 0, %s64
    $region4: #{thermal_module_forward.3} parent=1 // loop_header_branch
      %13 = sbr.rel (%p11) target = $region8
    $region5: #{thermal_module_forward.3} parent=1 // loop_body
      %s15 = ssub.s32 %s10, 1
      %s16 = ssub.s32 %s10, 2
      %s23 = sadd.s32 1, %s18
      %p24 = scmp.ge.s32.totalorder %s23, 1
      %s25 = scalar_select %p24, 0, %s23
      %s26 = sadd.s32 1, %s17
      %s27 = scalar_select %p24, %s26, %s17
      %p28 = scmp.ge.s32.totalorder %s27, 2
      %s29 = scalar_select %p28, 0, %s27
      %s30 = ssub.s32 %s17, %s29
      %p31 = scmp.eq.s32.totalorder %s30, 0
      %s33 = sadd.s32 %s32, 1
      %s34 = scalar_select %p31, %s32, %s33
      %p37 = pneg %p31
      %p38 = scmp.eq.s32.totalorder %s10, 1
      %p39 = por %p37, %p38
      %p40 = scmp.ne.s32.totalorder %s32, %s35
      %p41 = scmp.eq.s32.totalorder %s10, 0
      %p42 = por %p40, %p41
      %p43 = scmp.ne.s32.totalorder %s32, %s35
      %p44 = scmp.eq.s32.totalorder %s15, 1
      %p45 = por %p43, %p44
      %p46 = scmp.ne.s32.totalorder %s35, %s36
      %p47 = scmp.eq.s32.totalorder %s15, 0
      %p48 = por %p46, %p47
      %p49 = scmp.ne.s32.totalorder %s35, %s36
      %p50 = scmp.eq.s32.totalorder %s16, 1
      %p51 = por %p49, %p50
      %p53 = scmp.ne.s32.totalorder %s36, %s52
      %p54 = scmp.eq.s32.totalorder %s16, 0
      %p55 = por %p53, %p54
      %s56 = ssub.s32 %s17, %s29
      %s57 = ssub.s32 %s18, %s25
      %s58 = sor.u32 %s56, %s57
      %p59 = scmp.eq.s32.totalorder %s58, 0
      %s61 = sadd.s32 %s60, 1
      %s62 = scalar_select %p59, %s60, %s61
      %p65 = pneg %p59
      %p66 = scmp.eq.s32.totalorder %s10, 1
      %p67 = por %p65, %p66
      %p68 = scmp.ne.s32.totalorder %s60, %s63
      %p69 = scmp.eq.s32.totalorder %s10, 0
      %p70 = por %p68, %p69
      %p71 = scmp.ne.s32.totalorder %s60, %s63
      %p72 = scmp.eq.s32.totalorder %s15, 1
      %p73 = por %p71, %p72
      %p74 = scmp.ne.s32.totalorder %s63, %s64
      %p75 = scmp.eq.s32.totalorder %s15, 0
      %p76 = por %p74, %p75
      %p77 = scmp.ne.s32.totalorder %s63, %s64
      %p78 = scmp.eq.s32.totalorder %s16, 1
      %p79 = por %p77, %p78
      %p81 = scmp.ne.s32.totalorder %s64, %s80
      %p82 = scmp.eq.s32.totalorder %s16, 0
      %p83 = por %p81, %p82
      %p84 = scmp.le.s32.totalorder 1, %s10
      %p85 = scmp.lt.s32.totalorder %s10, 3
      %p86 = pnand %p84, %p85
      %p87 = pneg %p86
      // Predicated region
      $region9: #{thermal_module_forward.3} parent=5 // pred_check
        _
      $region10: #{thermal_module_forward.3} parent=5 // pred_check_branch
        %89 = sbr.rel (%p86) target = $region12
      $region11: #{thermal_module_forward.3} parent=5 // pred_region
        %s90 = ssub.s32 %s10, 1
      $region12: #{thermal_module_forward.3} parent=5 // pred_fallthru
        _
      %p91 = scmp.lt.s32.totalorder %s10, 2
      // Predicated region
      $region13: #{thermal_module_forward.3} parent=5 // pred_check
        %p92 = pneg %p91
      $region14: #{thermal_module_forward.3} parent=5 // pred_check_branch
        %94 = sbr.rel (%p92) target = $region16
      $region15: #{thermal_module_forward.3} parent=5 // pred_region
        // Predicated region
        $region17: #{thermal_module_forward.3} parent=15 // pred_check
          %p95 = pneg %p42
        $region18: #{thermal_module_forward.3} parent=15 // pred_check_branch
          %97 = sbr.rel (%p95) target = $region20
        $region19: #{thermal_module_forward.3} parent=15 // pred_region
          %p98 = scmp.lt.s32.totalorder %s17, 1
          %s99 = scalar_select %p98, %s17, 1
          %s100 = smul.addr %s99, 8
          %s101 = smul.addr %s100, 4
          %s102 = scalar_lea.vmem %s0, %s101
        $region20: #{thermal_module_forward.3} parent=15 // pred_fallthru
          _
      $region16: #{thermal_module_forward.3} parent=5 // pred_fallthru
        _
      %p103 = scmp.le.s32.totalorder 1, %s10
      %p104 = scmp.lt.s32.totalorder %s10, 3
      %p105 = pnand %p103, %p104
      %p106 = pneg %p105
      // Predicated region
      $region21: #{thermal_module_forward.3} parent=5 // pred_check
        _
      $region22: #{thermal_module_forward.3} parent=5 // pred_check_branch
        %108 = sbr.rel (%p105) target = $region24
      $region23: #{thermal_module_forward.3} parent=5 // pred_region
        %s109 = ssub.s32 %s10, 1
        %p110 = scmp.lt.s32.totalorder %s19, 1
        %s111 = scalar_select %p110, %s19, 1
        %s112 = smul.addr %s111, 8
        %s113 = smul.addr %s112, 4
        %s114 = scalar_lea.vmem %s0, %s113
        %p115 = pneg %p48
        %p116 = pneg %p45
        %p117 = pneg %p76
        %p118 = pneg %p73
        %s119 = sand.u32 %s63, 1
        %s120 = scalar_lea.sflag [#allocation3], %s119
        %s121 = sand.u32 %s63, 1
        %s122 = smul.addr %s121, 16
        %s123 = scalar_lea.vmem [#allocation2], %s122
        %p124 = scmp.lt.s32.totalorder %s19, 1
        %s125 = scalar_select %p124, %s19, 1
        %s126 = smul.addr %s125, 8
        %s127 = smul.addr %s126, 4
        %s128 = scalar_lea.vmem %s0, %s127
        %s129 = smul.u32 4, %s20
        %s130 = smul.u32 %s20, 8
        %s131 = smul.u32 %s130, 4
        %s132 = scalar_lea.vmem %s128, %s131
        %v133 = vld [vmem:[%s132] sm:$0xf]
        %v134 = vld [vmem:[%s132 + $0x4] sm:$0xf]
        %v135 = vld [vmem:[%s132 + $0x8] sm:$0xf]
        %v136 = vld [vmem:[%s132 + $0xc] sm:$0xf]
        %v137 = vld [vmem:[%s132 + $0x10] sm:$0xf]
        %v138 = vld [vmem:[%s132 + $0x14] sm:$0xf]
        %v139 = vld [vmem:[%s132 + $0x18] sm:$0xf]
        %v140 = vld [vmem:[%s132 + $0x1c] sm:$0xf]
        %s141 = ssub.s32 %s130, 1
        %p142 = scmp.gt.s32.totalorder %s141, 0
        %s143 = scalar_select %p142, %s141, 0
        %s144 = smul.u32 %s143, 4
        %s145 = scalar_lea.vmem %s128, %s144
        %v146 = vld [vmem:[%s145] sm:$0xf]
        %p147 = scmp.gt.s32.totalorder %s20, 0
        %s148 = scalar_select %p147, 1, 0
        %s149 = scvt.s32.f32 %s148
        %v150 = vstv %s149
        %v151 = vmul.f32 %v146, %v150
        %v152 = vmax.f32 %v133, %v134
        %v153 = vmax.f32 %v135, %v136
        %v154 = vmax.f32 %v137, %v138
        %v155 = vmax.f32 %v139, %v140
        %v156 = vmax.f32 %v152, %v151
        %v157 = vmax.f32 %v153, %v134
        %v158 = vmax.f32 %v154, %v136
        %v159 = vmax.f32 %v155, %v138
        %164 = vrot.lane.b32.xlu0 %v156, 64
        %v165 = vpop.permute.xlu0 %164
        %166 = vrot.lane.b32.xlu0 %v157, 64
        %v167 = vpop.permute.xlu0 %166
        %168 = vrot.lane.b32.xlu0 %v158, 64
        %v169 = vpop.permute.xlu0 %168
        %170 = vrot.lane.b32.xlu0 %v159, 64
        %v171 = vpop.permute.xlu0 %170
        %vm176 = vcmask 1047556
        %v177 = vrot.slane %v165, 4
        %v178 = vsel %vm176, %v177, %v165
        %v179 = vrot.slane %v167, 4
        %v180 = vsel %vm176, %v179, %v167
        %v181 = vrot.slane %v169, 4
        %v182 = vsel %vm176, %v181, %v169
        %v183 = vrot.slane %v171, 4
        %v184 = vsel %vm176, %v183, %v171
        %v185 = vrot.slane %v178, 4
        %v186 = vrot.slane %v180, 4
        %v187 = vrot.slane %v182, 4
        %v188 = vrot.slane %v184, 4
        %v189 = vsel %vm176, %v185, %v165
        %v190 = vsel %vm176, %v186, %v167
        %v191 = vsel %vm176, %v187, %v169
        %v192 = vsel %vm176, %v188, %v171
        %v193 = vlaneseq
        %v194 = vshrl.u32 %v193, 7
        %vm195 = vcmp.ge.s32.totalorder %v194, 1
        %v200 = vrot.slane %v189, 3
        %v201 = vrot.slane %v190, 3
        %v202 = vrot.slane %v191, 3
        %v203 = vrot.slane %v192, 3
        %v208 = vsel %vm195, %v200, 0.0
        %v209 = vsel %vm195, %v201, 0.0
        %v210 = vsel %vm195, %v202, 0.0
        %v211 = vsel %vm195, %v203, 0.0
        %v212 = vmax.f32 %v156, %v165
        %v213 = vmax.f32 %v157, %v167
        %v214 = vmax.f32 %v158, %v169
        %v215 = vmax.f32 %v159, %v171
        %v216 = vmax.f32 %v212, %v208
        %v217 = vmax.f32 %v213, %v209
        %v218 = vmax.f32 %v214, %v210
        %v219 = vmax.f32 %v215, %v211
        %vm220 = vcmask 519168
        %221 = vst.msk [vmem:[%s123] sm:$0xf] %vm220, %v216
        %222 = vst.msk [vmem:[%s123 + $0x4] sm:$0xf] %vm220, %v217
        %223 = vst.msk [vmem:[%s123 + $0x8] sm:$0xf] %vm220, %v218
        %224 = vst.msk [vmem:[%s123 + $0xc] sm:$0xf] %vm220, %v219
        %s225 = sand.u32 %s63, 1
        %s226 = scalar_lea.sflag [#allocation3], %s225
        %s227 = sand.u32 %s63, 1
        %s228 = smul.addr %s227, 16
        %s229 = scalar_lea.vmem [#allocation2], %s228
        // Predicated region
        $region25: #{thermal_module_forward.3} parent=23 // pred_check
          %p230 = pneg %p73
        $region26: #{thermal_module_forward.3} parent=23 // pred_check_branch
          %232 = sbr.rel (%p230) target = $region28
        $region27: #{thermal_module_forward.3} parent=23 // pred_region
          %s233 = smul.u32 4, %s20
          %s235 = ssub.s32 256, 256
          %236 = vsyncadd %s226, %s235
          %s237 = smul.addr %s19, 4
          %s238 = sadd.s32 %s233, %s237
          %s239 = smul.addr %s238, 64
          %s240 = scalar_lea.hbm %s1, %s239
          %s241 = sshll.u32 %s229, 4
          %s242 = int_to_ptr.vmem [resolvable:$true] %s241
          %247 = dma.vmem_to_hbm [thread:$0]  %s242, 256, %s240, %s226, 64, 64, 4
        $region28: #{thermal_module_forward.3} parent=23 // pred_fallthru
          _
      $region24: #{thermal_module_forward.3} parent=5 // pred_fallthru
        _
      %p248 = scmp.le.s32.totalorder 2, %s10
      // Predicated region
      $region29: #{thermal_module_forward.3} parent=5 // pred_check
        %p249 = pneg %p248
      $region30: #{thermal_module_forward.3} parent=5 // pred_check_branch
        %251 = sbr.rel (%p249) target = $region32
      $region31: #{thermal_module_forward.3} parent=5 // pred_region
        %s252 = ssub.s32 %s10, 2
        // Predicated region
        $region33: #{thermal_module_forward.3} parent=31 // pred_check
          %p253 = pneg %p79
        $region34: #{thermal_module_forward.3} parent=31 // pred_check_branch
          %255 = sbr.rel (%p253) target = $region36
        $region35: #{thermal_module_forward.3} parent=31 // pred_region
          %s256 = sand.u32 %s64, 1
          %s257 = scalar_lea.sflag [#allocation3], %s256
          %s258 = sand.u32 %s64, 1
          %s259 = smul.addr %s258, 16
          %s260 = scalar_lea.vmem [#allocation2], %s259
          %261 = dma.done %s257, 256
        $region36: #{thermal_module_forward.3} parent=31 // pred_fallthru
          _
      $region32: #{thermal_module_forward.3} parent=5 // pred_fallthru
        _
    $region6: #{thermal_module_forward.3} parent=1 // loop_footer
      %s14 = sadd.s32 1, %s10
    $region7: #{thermal_module_forward.3} parent=1 // loop_footer_branch
      %9 = sbr.rel target = $region3
    $region8: #{thermal_module_forward.3} parent=1 // loop_exit
      _
    %262 = vsyncpa [#allocation3], 1
    %s263 = scalar_lea.sflag [#allocation3], 1
    %264 = vsyncpa %s263, 1

// kernel: thermal_module_forward.2
$region0: #{thermal_module_forward.2}
  #allocation0 [shape = 'u32[]', space=smem, size = 0x4, offset = 0x4, fixed_abs, tag = 'smem constant byte address 0x4 - core index']
  #allocation1 [shape = 'u32[144,128]{1,0:T(1,128)}', space=vmem, size = 0x12000, scoped, tag = 'internal scratch']
  %s0 = inlined_call_operand.vmem [shape: f32[2,3,12,7], index: 0, kind: input, shape index: {}]
  %s1 = inlined_call_operand.vmem [shape: f32[2,3,12,7], index: 1, kind: input, shape index: {}]
  %s2 = inlined_call_operand.vmem [shape: f32[2,3,12,7], index: 2, kind: input, shape index: {}]
  %s3 = inlined_call_operand.vmem [shape: f32[2,3,12,7], index: 3, kind: input, shape index: {}]
  %s4 = inlined_call_operand.vmem [shape: f32[2,3,12,7], index: 4, kind: input, shape index: {}]
  %s5 = inlined_call_operand.vmem [shape: f32[2,3,12,7], index: 5, kind: input, shape index: {}]
  %s6 = inlined_call_operand.vmem [shape: f32[2,3,12,7], index: 6, kind: input, shape index: {}]
  %s7 = inlined_call_operand.vmem [shape: f32[2,3,12,7], index: 7, kind: input, shape index: {}]
  %s8 = inlined_call_operand.vmem [shape: bf16[147,64], index: 8, kind: input, shape index: {}]
  %s9 = inlined_call_operand.vmem [shape: f32[1,64], index: 9, kind: input, shape index: {}]
  %s10 = inlined_call_operand.vmem [shape: f32[2,8,4,128], index: 10, kind: output, shape index: {}]
  %s11 = sld [smem:[#allocation0]]
  $region73: #{thermal_module_forward.2} parent=0
    _
  %s13 = ssub.s32 1, %s11
  %s14 = scalar_select 0, %s13, %s11
  loop: start=0, step=1, limit=4
  $region2: #{thermal_module_forward.2} parent=0 // loop_pre_header
    _
  $region3: #{thermal_module_forward.2} parent=0 // loop_header
    %s16 = sphi 0, %s20
    %p17 = scmp.ge.s32.totalorder %s16, 4
    %s23 = sphi 0, %s35
    %s24 = sphi 0, %s31
    %s25 = sphi 0, %s23
    %s26 = sphi 0, %s24
    %s27 = sphi 0, %s25
    %s28 = sphi 0, %s26
    %s38 = sphi 0, %s40
    %s41 = sphi 0, %s38
    %s42 = sphi 0, %s41
    %s58 = sphi 0, %s42
    %s64 = sphi 0, %s66
    %s67 = sphi 0, %s64
    %s68 = sphi 0, %s67
    %s84 = sphi 0, %s68
    %s90 = sphi 0, %s92
    %s93 = sphi 0, %s90
    %s94 = sphi 0, %s93
    %s110 = sphi 0, %s94
    %s116 = sphi 0, %s118
    %s119 = sphi 0, %s116
    %s120 = sphi 0, %s119
    %s136 = sphi 0, %s120
    %s142 = sphi 0, %s144
    %s145 = sphi 0, %s142
    %s146 = sphi 0, %s145
    %s162 = sphi 0, %s146
    %s168 = sphi 0, %s170
    %s171 = sphi 0, %s168
    %s172 = sphi 0, %s171
    %s188 = sphi 0, %s172
    %s194 = sphi 0, %s196
    %s197 = sphi 0, %s194
    %s198 = sphi 0, %s197
    %s214 = sphi 0, %s198
    %s220 = sphi 0, %s222
    %s223 = sphi 0, %s220
    %s224 = sphi 0, %s223
    %s240 = sphi 0, %s224
    %s244 = sphi 0, %s244
    %s246 = sphi 0, %s244
    %s247 = sphi 0, %s246
    %s261 = sphi 0, %s247
    %s265 = sphi 0, %s265
    %s267 = sphi 0, %s265
    %s268 = sphi 0, %s267
    %s282 = sphi 0, %s268
    %s290 = sphi 0, %s292
    %s293 = sphi 0, %s290
    %s294 = sphi 0, %s293
    %s310 = sphi 0, %s294
  $region4: #{thermal_module_forward.2} parent=0 // loop_header_branch
    %19 = sbr.rel (%p17) target = $region8
  $region5: #{thermal_module_forward.2} parent=0 // loop_body
    %s21 = ssub.s32 %s16, 1
    %s22 = ssub.s32 %s16, 2
    %s29 = sadd.s32 1, %s24
    %p30 = scmp.ge.s32.totalorder %s29, 1
    %s31 = scalar_select %p30, 0, %s29
    %s32 = sadd.s32 1, %s23
    %s33 = scalar_select %p30, %s32, %s23
    %p34 = scmp.ge.s32.totalorder %s33, 2
    %s35 = scalar_select %p34, 0, %s33
    %s36 = ssub.s32 %s23, %s35
    %p37 = scmp.eq.s32.totalorder %s36, 0
    %s39 = sadd.s32 %s38, 1
    %s40 = scalar_select %p37, %s38, %s39
    %p43 = pneg %p37
    %p44 = scmp.eq.s32.totalorder %s16, 1
    %p45 = por %p43, %p44
    %p46 = scmp.ne.s32.totalorder %s38, %s41
    %p47 = scmp.eq.s32.totalorder %s16, 0
    %p48 = por %p46, %p47
    %p49 = scmp.ne.s32.totalorder %s38, %s41
    %p50 = scmp.eq.s32.totalorder %s21, 1
    %p51 = por %p49, %p50
    %p52 = scmp.ne.s32.totalorder %s41, %s42
    %p53 = scmp.eq.s32.totalorder %s21, 0
    %p54 = por %p52, %p53
    %p55 = scmp.ne.s32.totalorder %s41, %s42
    %p56 = scmp.eq.s32.totalorder %s22, 1
    %p57 = por %p55, %p56
    %p59 = scmp.ne.s32.totalorder %s42, %s58
    %p60 = scmp.eq.s32.totalorder %s22, 0
    %p61 = por %p59, %p60
    %s62 = ssub.s32 %s23, %s35
    %p63 = scmp.eq.s32.totalorder %s62, 0
    %s65 = sadd.s32 %s64, 1
    %s66 = scalar_select %p63, %s64, %s65
    %p69 = pneg %p63
    %p70 = scmp.eq.s32.totalorder %s16, 1
    %p71 = por %p69, %p70
    %p72 = scmp.ne.s32.totalorder %s64, %s67
    %p73 = scmp.eq.s32.totalorder %s16, 0
    %p74 = por %p72, %p73
    %p75 = scmp.ne.s32.totalorder %s64, %s67
    %p76 = scmp.eq.s32.totalorder %s21, 1
    %p77 = por %p75, %p76
    %p78 = scmp.ne.s32.totalorder %s67, %s68
    %p79 = scmp.eq.s32.totalorder %s21, 0
    %p80 = por %p78, %p79
    %p81 = scmp.ne.s32.totalorder %s67, %s68
    %p82 = scmp.eq.s32.totalorder %s22, 1
    %p83 = por %p81, %p82
    %p85 = scmp.ne.s32.totalorder %s68, %s84
    %p86 = scmp.eq.s32.totalorder %s22, 0
    %p87 = por %p85, %p86
    %s88 = ssub.s32 %s23, %s35
    %p89 = scmp.eq.s32.totalorder %s88, 0
    %s91 = sadd.s32 %s90, 1
    %s92 = scalar_select %p89, %s90, %s91
    %p95 = pneg %p89
    %p96 = scmp.eq.s32.totalorder %s16, 1
    %p97 = por %p95, %p96
    %p98 = scmp.ne.s32.totalorder %s90, %s93
    %p99 = scmp.eq.s32.totalorder %s16, 0
    %p100 = por %p98, %p99
    %p101 = scmp.ne.s32.totalorder %s90, %s93
    %p102 = scmp.eq.s32.totalorder %s21, 1
    %p103 = por %p101, %p102
    %p104 = scmp.ne.s32.totalorder %s93, %s94
    %p105 = scmp.eq.s32.totalorder %s21, 0
    %p106 = por %p104, %p105
    %p107 = scmp.ne.s32.totalorder %s93, %s94
    %p108 = scmp.eq.s32.totalorder %s22, 1
    %p109 = por %p107, %p108
    %p111 = scmp.ne.s32.totalorder %s94, %s110
    %p112 = scmp.eq.s32.totalorder %s22, 0
    %p113 = por %p111, %p112
    %s114 = ssub.s32 %s23, %s35
    %p115 = scmp.eq.s32.totalorder %s114, 0
    %s117 = sadd.s32 %s116, 1
    %s118 = scalar_select %p115, %s116, %s117
    %p121 = pneg %p115
    %p122 = scmp.eq.s32.totalorder %s16, 1
    %p123 = por %p121, %p122
    %p124 = scmp.ne.s32.totalorder %s116, %s119
    %p125 = scmp.eq.s32.totalorder %s16, 0
    %p126 = por %p124, %p125
    %p127 = scmp.ne.s32.totalorder %s116, %s119
    %p128 = scmp.eq.s32.totalorder %s21, 1
    %p129 = por %p127, %p128
    %p130 = scmp.ne.s32.totalorder %s119, %s120
    %p131 = scmp.eq.s32.totalorder %s21, 0
    %p132 = por %p130, %p131
    %p133 = scmp.ne.s32.totalorder %s119, %s120
    %p134 = scmp.eq.s32.totalorder %s22, 1
    %p135 = por %p133, %p134
    %p137 = scmp.ne.s32.totalorder %s120, %s136
    %p138 = scmp.eq.s32.totalorder %s22, 0
    %p139 = por %p137, %p138
    %s140 = ssub.s32 %s23, %s35
    %p141 = scmp.eq.s32.totalorder %s140, 0
    %s143 = sadd.s32 %s142, 1
    %s144 = scalar_select %p141, %s142, %s143
    %p147 = pneg %p141
    %p148 = scmp.eq.s32.totalorder %s16, 1
    %p149 = por %p147, %p148
    %p150 = scmp.ne.s32.totalorder %s142, %s145
    %p151 = scmp.eq.s32.totalorder %s16, 0
    %p152 = por %p150, %p151
    %p153 = scmp.ne.s32.totalorder %s142, %s145
    %p154 = scmp.eq.s32.totalorder %s21, 1
    %p155 = por %p153, %p154
    %p156 = scmp.ne.s32.totalorder %s145, %s146
    %p157 = scmp.eq.s32.totalorder %s21, 0
    %p158 = por %p156, %p157
    %p159 = scmp.ne.s32.totalorder %s145, %s146
    %p160 = scmp.eq.s32.totalorder %s22, 1
    %p161 = por %p159, %p160
    %p163 = scmp.ne.s32.totalorder %s146, %s162
    %p164 = scmp.eq.s32.totalorder %s22, 0
    %p165 = por %p163, %p164
    %s166 = ssub.s32 %s23, %s35
    %p167 = scmp.eq.s32.totalorder %s166, 0
    %s169 = sadd.s32 %s168, 1
    %s170 = scalar_select %p167, %s168, %s169
    %p173 = pneg %p167
    %p174 = scmp.eq.s32.totalorder %s16, 1
    %p175 = por %p173, %p174
    %p176 = scmp.ne.s32.totalorder %s168, %s171
    %p177 = scmp.eq.s32.totalorder %s16, 0
    %p178 = por %p176, %p177
    %p179 = scmp.ne.s32.totalorder %s168, %s171
    %p180 = scmp.eq.s32.totalorder %s21, 1
    %p181 = por %p179, %p180
    %p182 = scmp.ne.s32.totalorder %s171, %s172
    %p183 = scmp.eq.s32.totalorder %s21, 0
    %p184 = por %p182, %p183
    %p185 = scmp.ne.s32.totalorder %s171, %s172
    %p186 = scmp.eq.s32.totalorder %s22, 1
    %p187 = por %p185, %p186
    %p189 = scmp.ne.s32.totalorder %s172, %s188
    %p190 = scmp.eq.s32.totalorder %s22, 0
    %p191 = por %p189, %p190
    %s192 = ssub.s32 %s23, %s35
    %p193 = scmp.eq.s32.totalorder %s192, 0
    %s195 = sadd.s32 %s194, 1
    %s196 = scalar_select %p193, %s194, %s195
    %p199 = pneg %p193
    %p200 = scmp.eq.s32.totalorder %s16, 1
    %p201 = por %p199, %p200
    %p202 = scmp.ne.s32.totalorder %s194, %s197
    %p203 = scmp.eq.s32.totalorder %s16, 0
    %p204 = por %p202, %p203
    %p205 = scmp.ne.s32.totalorder %s194, %s197
    %p206 = scmp.eq.s32.totalorder %s21, 1
    %p207 = por %p205, %p206
    %p208 = scmp.ne.s32.totalorder %s197, %s198
    %p209 = scmp.eq.s32.totalorder %s21, 0
    %p210 = por %p208, %p209
    %p211 = scmp.ne.s32.totalorder %s197, %s198
    %p212 = scmp.eq.s32.totalorder %s22, 1
    %p213 = por %p211, %p212
    %p215 = scmp.ne.s32.totalorder %s198, %s214
    %p216 = scmp.eq.s32.totalorder %s22, 0
    %p217 = por %p215, %p216
    %s218 = ssub.s32 %s23, %s35
    %p219 = scmp.eq.s32.totalorder %s218, 0
    %s221 = sadd.s32 %s220, 1
    %s222 = scalar_select %p219, %s220, %s221
    %p225 = pneg %p219
    %p226 = scmp.eq.s32.totalorder %s16, 1
    %p227 = por %p225, %p226
    %p228 = scmp.ne.s32.totalorder %s220, %s223
    %p229 = scmp.eq.s32.totalorder %s16, 0
    %p230 = por %p228, %p229
    %p231 = scmp.ne.s32.totalorder %s220, %s223
    %p232 = scmp.eq.s32.totalorder %s21, 1
    %p233 = por %p231, %p232
    %p234 = scmp.ne.s32.totalorder %s223, %s224
    %p235 = scmp.eq.s32.totalorder %s21, 0
    %p236 = por %p234, %p235
    %p237 = scmp.ne.s32.totalorder %s223, %s224
    %p238 = scmp.eq.s32.totalorder %s22, 1
    %p239 = por %p237, %p238
    %p241 = scmp.ne.s32.totalorder %s224, %s240
    %p242 = scmp.eq.s32.totalorder %s22, 0
    %p243 = por %p241, %p242
    %s245 = sadd.s32 %s244, 1
    %p248 = scmp.eq.s32.totalorder %s16, 1
    %p249 = scmp.ne.s32.totalorder %s244, %s246
    %p250 = scmp.eq.s32.totalorder %s16, 0
    %p251 = por %p249, %p250
    %p252 = scmp.ne.s32.totalorder %s244, %s246
    %p253 = scmp.eq.s32.totalorder %s21, 1
    %p254 = por %p252, %p253
    %p255 = scmp.ne.s32.totalorder %s246, %s247
    %p256 = scmp.eq.s32.totalorder %s21, 0
    %p257 = por %p255, %p256
    %p258 = scmp.ne.s32.totalorder %s246, %s247
    %p259 = scmp.eq.s32.totalorder %s22, 1
    %p260 = por %p258, %p259
    %p262 = scmp.ne.s32.totalorder %s247, %s261
    %p263 = scmp.eq.s32.totalorder %s22, 0
    %p264 = por %p262, %p263
    %s266 = sadd.s32 %s265, 1
    %p269 = scmp.eq.s32.totalorder %s16, 1
    %p270 = scmp.ne.s32.totalorder %s265, %s267
    %p271 = scmp.eq.s32.totalorder %s16, 0
    %p272 = por %p270, %p271
    %p273 = scmp.ne.s32.totalorder %s265, %s267
    %p274 = scmp.eq.s32.totalorder %s21, 1
    %p275 = por %p273, %p274
    %p276 = scmp.ne.s32.totalorder %s267, %s268
    %p277 = scmp.eq.s32.totalorder %s21, 0
    %p278 = por %p276, %p277
    %p279 = scmp.ne.s32.totalorder %s267, %s268
    %p280 = scmp.eq.s32.totalorder %s22, 1
    %p281 = por %p279, %p280
    %p283 = scmp.ne.s32.totalorder %s268, %s282
    %p284 = scmp.eq.s32.totalorder %s22, 0
    %p285 = por %p283, %p284
    %s286 = ssub.s32 %s23, %s35
    %s287 = ssub.s32 %s24, %s31
    %s288 = sor.u32 %s286, %s287
    %p289 = scmp.eq.s32.totalorder %s288, 0
    %s291 = sadd.s32 %s290, 1
    %s292 = scalar_select %p289, %s290, %s291
    %p295 = pneg %p289
    %p296 = scmp.eq.s32.totalorder %s16, 1
    %p297 = por %p295, %p296
    %p298 = scmp.ne.s32.totalorder %s290, %s293
    %p299 = scmp.eq.s32.totalorder %s16, 0
    %p300 = por %p298, %p299
    %p301 = scmp.ne.s32.totalorder %s290, %s293
    %p302 = scmp.eq.s32.totalorder %s21, 1
    %p303 = por %p301, %p302
    %p304 = scmp.ne.s32.totalorder %s293, %s294
    %p305 = scmp.eq.s32.totalorder %s21, 0
    %p306 = por %p304, %p305
    %p307 = scmp.ne.s32.totalorder %s293, %s294
    %p308 = scmp.eq.s32.totalorder %s22, 1
    %p309 = por %p307, %p308
    %p311 = scmp.ne.s32.totalorder %s294, %s310
    %p312 = scmp.eq.s32.totalorder %s22, 0
    %p313 = por %p311, %p312
    %p314 = scmp.le.s32.totalorder 1, %s16
    %p315 = scmp.lt.s32.totalorder %s16, 3
    %p316 = pnand %p314, %p315
    %p317 = pneg %p316
    // Predicated region
    $region9: #{thermal_module_forward.2} parent=5 // pred_check
      _
    $region10: #{thermal_module_forward.2} parent=5 // pred_check_branch
      %319 = sbr.rel (%p316) target = $region12
    $region11: #{thermal_module_forward.2} parent=5 // pred_region
      %s320 = ssub.s32 %s16, 1
      // Predicated region
      $region13: #{thermal_module_forward.2} parent=11 // pred_check
        %p321 = pneg %p257
      $region14: #{thermal_module_forward.2} parent=11 // pred_check_branch
        %323 = sbr.rel (%p321) target = $region16
      $region15: #{thermal_module_forward.2} parent=11 // pred_region
        _
      $region16: #{thermal_module_forward.2} parent=11 // pred_fallthru
        _
      // Predicated region
      $region17: #{thermal_module_forward.2} parent=11 // pred_check
        %p324 = pneg %p278
      $region18: #{thermal_module_forward.2} parent=11 // pred_check_branch
        %326 = sbr.rel (%p324) target = $region20
      $region19: #{thermal_module_forward.2} parent=11 // pred_region
        _
      $region20: #{thermal_module_forward.2} parent=11 // pred_fallthru
        _
    $region12: #{thermal_module_forward.2} parent=5 // pred_fallthru
      _
    %p327 = scmp.lt.s32.totalorder %s16, 2
    // Predicated region
    $region21: #{thermal_module_forward.2} parent=5 // pred_check
      %p328 = pneg %p327
    $region22: #{thermal_module_forward.2} parent=5 // pred_check_branch
      %330 = sbr.rel (%p328) target = $region24
    $region23: #{thermal_module_forward.2} parent=5 // pred_region
      // Predicated region
      $region25: #{thermal_module_forward.2} parent=23 // pred_check
        %p331 = pneg %p48
      $region26: #{thermal_module_forward.2} parent=23 // pred_check_branch
        %333 = sbr.rel (%p331) target = $region28
      $region27: #{thermal_module_forward.2} parent=23 // pred_region
        %p334 = scmp.lt.s32.totalorder %s23, 1
        %s335 = scalar_select %p334, %s23, 1
        %s336 = smul.addr %s335, 6
        %s337 = smul.addr %s336, 8
        %s338 = scalar_lea.vmem %s0, %s337
      $region28: #{thermal_module_forward.2} parent=23 // pred_fallthru
        _
      // Predicated region
      $region29: #{thermal_module_forward.2} parent=23 // pred_check
        %p339 = pneg %p74
      $region30: #{thermal_module_forward.2} parent=23 // pred_check_branch
        %341 = sbr.rel (%p339) target = $region32
      $region31: #{thermal_module_forward.2} parent=23 // pred_region
        %p342 = scmp.lt.s32.totalorder %s23, 1
        %s343 = scalar_select %p342, %s23, 1
        %s344 = smul.addr %s343, 6
        %s345 = smul.addr %s344, 8
        %s346 = scalar_lea.vmem %s1, %s345
      $region32: #{thermal_module_forward.2} parent=23 // pred_fallthru
        _
      // Predicated region
      $region33: #{thermal_module_forward.2} parent=23 // pred_check
        %p347 = pneg %p100
      $region34: #{thermal_module_forward.2} parent=23 // pred_check_branch
        %349 = sbr.rel (%p347) target = $region36
      $region35: #{thermal_module_forward.2} parent=23 // pred_region
        %p350 = scmp.lt.s32.totalorder %s23, 1
        %s351 = scalar_select %p350, %s23, 1
        %s352 = smul.addr %s351, 6
        %s353 = smul.addr %s352, 8
        %s354 = scalar_lea.vmem %s2, %s353
      $region36: #{thermal_module_forward.2} parent=23 // pred_fallthru
        _
      // Predicated region
      $region37: #{thermal_module_forward.2} parent=23 // pred_check
        %p355 = pneg %p126
      $region38: #{thermal_module_forward.2} parent=23 // pred_check_branch
        %357 = sbr.rel (%p355) target = $region40
      $region39: #{thermal_module_forward.2} parent=23 // pred_region
        %p358 = scmp.lt.s32.totalorder %s23, 1
        %s359 = scalar_select %p358, %s23, 1
        %s360 = smul.addr %s359, 6
        %s361 = smul.addr %s360, 8
        %s362 = scalar_lea.vmem %s3, %s361
      $region40: #{thermal_module_forward.2} parent=23 // pred_fallthru
        _
      // Predicated region
      $region41: #{thermal_module_forward.2} parent=23 // pred_check
        %p363 = pneg %p152
      $region42: #{thermal_module_forward.2} parent=23 // pred_check_branch
        %365 = sbr.rel (%p363) target = $region44
      $region43: #{thermal_module_forward.2} parent=23 // pred_region
        %p366 = scmp.lt.s32.totalorder %s23, 1
        %s367 = scalar_select %p366, %s23, 1
        %s368 = smul.addr %s367, 6
        %s369 = smul.addr %s368, 8
        %s370 = scalar_lea.vmem %s4, %s369
      $region44: #{thermal_module_forward.2} parent=23 // pred_fallthru
        _
      // Predicated region
      $region45: #{thermal_module_forward.2} parent=23 // pred_check
        %p371 = pneg %p178
      $region46: #{thermal_module_forward.2} parent=23 // pred_check_branch
        %373 = sbr.rel (%p371) target = $region48
      $region47: #{thermal_module_forward.2} parent=23 // pred_region
        %p374 = scmp.lt.s32.totalorder %s23, 1
        %s375 = scalar_select %p374, %s23, 1
        %s376 = smul.addr %s375, 6
        %s377 = smul.addr %s376, 8
        %s378 = scalar_lea.vmem %s5, %s377
      $region48: #{thermal_module_forward.2} parent=23 // pred_fallthru
        _
      // Predicated region
      $region49: #{thermal_module_forward.2} parent=23 // pred_check
        %p379 = pneg %p204
      $region50: #{thermal_module_forward.2} parent=23 // pred_check_branch
        %381 = sbr.rel (%p379) target = $region52
      $region51: #{thermal_module_forward.2} parent=23 // pred_region
        %p382 = scmp.lt.s32.totalorder %s23, 1
        %s383 = scalar_select %p382, %s23, 1
        %s384 = smul.addr %s383, 6
        %s385 = smul.addr %s384, 8
        %s386 = scalar_lea.vmem %s6, %s385
      $region52: #{thermal_module_forward.2} parent=23 // pred_fallthru
        _
      // Predicated region
      $region53: #{thermal_module_forward.2} parent=23 // pred_check
        %p387 = pneg %p230
      $region54: #{thermal_module_forward.2} parent=23 // pred_check_branch
        %389 = sbr.rel (%p387) target = $region56
      $region55: #{thermal_module_forward.2} parent=23 // pred_region
        %p390 = scmp.lt.s32.totalorder %s23, 1
        %s391 = scalar_select %p390, %s23, 1
        %s392 = smul.addr %s391, 6
        %s393 = smul.addr %s392, 8
        %s394 = scalar_lea.vmem %s7, %s393
      $region56: #{thermal_module_forward.2} parent=23 // pred_fallthru
        _
    $region24: #{thermal_module_forward.2} parent=5 // pred_fallthru
      _
    %p395 = scmp.le.s32.totalorder 1, %s16
    %p396 = scmp.lt.s32.totalorder %s16, 3
    %p397 = pnand %p395, %p396
    %p398 = pneg %p397
    // Predicated region
    $region57: #{thermal_module_forward.2} parent=5 // pred_check
      _
    $region58: #{thermal_module_forward.2} parent=5 // pred_check_branch
      %400 = sbr.rel (%p397) target = $region60
    $region59: #{thermal_module_forward.2} parent=5 // pred_region
      %s401 = ssub.s32 %s16, 1
      %p402 = scmp.lt.s32.totalorder %s25, 1
      %s403 = scalar_select %p402, %s25, 1
      %s404 = smul.addr %s403, 6
      %s405 = smul.addr %s404, 8
      %s406 = scalar_lea.vmem %s0, %s405
      %p407 = pneg %p54
      %p408 = pneg %p51
      %p409 = scmp.lt.s32.totalorder %s25, 1
      %s410 = scalar_select %p409, %s25, 1
      %s411 = smul.addr %s410, 6
      %s412 = smul.addr %s411, 8
      %s413 = scalar_lea.vmem %s1, %s412
      %p414 = pneg %p80
      %p415 = pneg %p77
      %p416 = scmp.lt.s32.totalorder %s25, 1
      %s417 = scalar_select %p416, %s25, 1
      %s418 = smul.addr %s417, 6
      %s419 = smul.addr %s418, 8
      %s420 = scalar_lea.vmem %s2, %s419
      %p421 = pneg %p106
      %p422 = pneg %p103
      %p423 = scmp.lt.s32.totalorder %s25, 1
      %s424 = scalar_select %p423, %s25, 1
      %s425 = smul.addr %s424, 6
      %s426 = smul.addr %s425, 8
      %s427 = scalar_lea.vmem %s3, %s426
      %p428 = pneg %p132
      %p429 = pneg %p129
      %p430 = scmp.lt.s32.totalorder %s25, 1
      %s431 = scalar_select %p430, %s25, 1
      %s432 = smul.addr %s431, 6
      %s433 = smul.addr %s432, 8
      %s434 = scalar_lea.vmem %s4, %s433
      %p435 = pneg %p158
      %p436 = pneg %p155
      %p437 = scmp.lt.s32.totalorder %s25, 1
      %s438 = scalar_select %p437, %s25, 1
      %s439 = smul.addr %s438, 6
      %s440 = smul.addr %s439, 8
      %s441 = scalar_lea.vmem %s5, %s440
      %p442 = pneg %p184
      %p443 = pneg %p181
      %p444 = scmp.lt.s32.totalorder %s25, 1
      %s445 = scalar_select %p444, %s25, 1
      %s446 = smul.addr %s445, 6
      %s447 = smul.addr %s446, 8
      %s448 = scalar_lea.vmem %s6, %s447
      %p449 = pneg %p210
      %p450 = pneg %p207
      %p451 = scmp.lt.s32.totalorder %s25, 1
      %s452 = scalar_select %p451, %s25, 1
      %s453 = smul.addr %s452, 6
      %s454 = smul.addr %s453, 8
      %s455 = scalar_lea.vmem %s7, %s454
      %p456 = pneg %p236
      %p457 = pneg %p233
      %p458 = pneg %p257
      %p459 = pneg %p254
      %p460 = pneg %p278
      %p461 = pneg %p275
      %p462 = pneg %p306
      %p463 = pneg %p303
      %s464 = smul.u32 8, %s26
      %p465 = scmp.lt.s32.totalorder %s25, 1
      %s466 = scalar_select %p465, %s25, 1
      %p467 = scmp.lt.s32.totalorder %s464, 7
      %s468 = scalar_select %p467, %s464, 7
      %s469 = smul.addr %s466, 8
      %s470 = sadd.s32 %s468, %s469
      %s471 = smul.addr %s470, 4
      %s472 = scalar_lea.vmem %s10, %s471
      %p473 = scmp.lt.s32.totalorder %s25, 1
      %s474 = scalar_select %p473, %s25, 1
      %s475 = smul.addr %s474, 6
      %s476 = smul.addr %s475, 8
      %s477 = scalar_lea.vmem %s0, %s476
      %p478 = scmp.lt.s32.totalorder %s25, 1
      %s479 = scalar_select %p478, %s25, 1
      %s480 = smul.addr %s479, 6
      %s481 = smul.addr %s480, 8
      %s482 = scalar_lea.vmem %s1, %s481
      %p483 = scmp.lt.s32.totalorder %s25, 1
      %s484 = scalar_select %p483, %s25, 1
      %s485 = smul.addr %s484, 6
      %s486 = smul.addr %s485, 8
      %s487 = scalar_lea.vmem %s2, %s486
      %p488 = scmp.lt.s32.totalorder %s25, 1
      %s489 = scalar_select %p488, %s25, 1
      %s490 = smul.addr %s489, 6
      %s491 = smul.addr %s490, 8
      %s492 = scalar_lea.vmem %s3, %s491
      %p493 = scmp.lt.s32.totalorder %s25, 1
      %s494 = scalar_select %p493, %s25, 1
      %s495 = smul.addr %s494, 6
      %s496 = smul.addr %s495, 8
      %s497 = scalar_lea.vmem %s4, %s496
      %p498 = scmp.lt.s32.totalorder %s25, 1
      %s499 = scalar_select %p498, %s25, 1
      %s500 = smul.addr %s499, 6
      %s501 = smul.addr %s500, 8
      %s502 = scalar_lea.vmem %s5, %s501
      %p503 = scmp.lt.s32.totalorder %s25, 1
      %s504 = scalar_select %p503, %s25, 1
      %s505 = smul.addr %s504, 6
      %s506 = smul.addr %s505, 8
      %s507 = scalar_lea.vmem %s6, %s506
      %p508 = scmp.lt.s32.totalorder %s25, 1
      %s509 = scalar_select %p508, %s25, 1
      %s510 = smul.addr %s509, 6
      %s511 = smul.addr %s510, 8
      %s512 = scalar_lea.vmem %s7, %s511
      %s513 = smul.u32 8, %s26
      %p514 = scmp.lt.s32.totalorder %s25, 1
      %s515 = scalar_select %p514, %s25, 1
      %p516 = scmp.lt.s32.totalorder %s513, 7
      %s517 = scalar_select %p516, %s513, 7
      %s518 = smul.addr %s515, 8
      %s519 = sadd.s32 %s517, %s518
      %s520 = smul.addr %s519, 4
      %s521 = scalar_lea.vmem %s10, %s520
      %s522 = smul.u32 8, %s26
      %s524 = smul.u32 %s26, 8
      %s525 = scalar_lea.vmem %s477, %s524
      %v526 = vld [vmem:[%s525] sm:$0xff]
      %v527 = vld [vmem:[%s525 + $0x10] sm:$0xff]
      %v528 = vld [vmem:[%s525 + $0x20] sm:$0xff]
      %s529 = scalar_lea.vmem %s482, %s524
      %v530 = vld [vmem:[%s529] sm:$0xff]
      %v531 = vld [vmem:[%s529 + $0x10] sm:$0xff]
      %v532 = vld [vmem:[%s529 + $0x20] sm:$0xff]
      %s533 = scalar_lea.vmem %s487, %s524
      %v534 = vld [vmem:[%s533] sm:$0xff]
      %v535 = vld [vmem:[%s533 + $0x10] sm:$0xff]
      %v536 = vld [vmem:[%s533 + $0x20] sm:$0xff]
      %s537 = scalar_lea.vmem %s492, %s524
      %v538 = vld [vmem:[%s537] sm:$0xff]
      %v539 = vld [vmem:[%s537 + $0x10] sm:$0xff]
      %v540 = vld [vmem:[%s537 + $0x20] sm:$0xff]
      %s541 = scalar_lea.vmem %s497, %s524
      %v542 = vld [vmem:[%s541] sm:$0xff]
      %v543 = vld [vmem:[%s541 + $0x10] sm:$0xff]
      %v544 = vld [vmem:[%s541 + $0x20] sm:$0xff]
      %s545 = scalar_lea.vmem %s502, %s524
      %v546 = vld [vmem:[%s545] sm:$0xff]
      %v547 = vld [vmem:[%s545 + $0x10] sm:$0xff]
      %v548 = vld [vmem:[%s545 + $0x20] sm:$0xff]
      %s549 = scalar_lea.vmem %s507, %s524
      %v550 = vld [vmem:[%s549] sm:$0xff]
      %v551 = vld [vmem:[%s549 + $0x10] sm:$0xff]
      %v552 = vld [vmem:[%s549 + $0x20] sm:$0xff]
      %s553 = scalar_lea.vmem %s512, %s524
      %v554 = vld [vmem:[%s553] sm:$0xff]
      %v555 = vld [vmem:[%s553 + $0x10] sm:$0xff]
      %v556 = vld [vmem:[%s553 + $0x20] sm:$0xff]
      %s557 = sadd.s32 %s524, 1
      %s558 = scalar_lea.vmem %s477, %s557
      %v559 = vld [vmem:[%s558] sm:$0xff]
      %v560 = vld [vmem:[%s558 + $0x10] sm:$0xff]
      %v561 = vld [vmem:[%s558 + $0x20] sm:$0xff]
      %s562 = scalar_lea.vmem %s482, %s557
      %v563 = vld [vmem:[%s562] sm:$0xff]
      %v564 = vld [vmem:[%s562 + $0x10] sm:$0xff]
      %v565 = vld [vmem:[%s562 + $0x20] sm:$0xff]
      %s566 = scalar_lea.vmem %s487, %s557
      %v567 = vld [vmem:[%s566] sm:$0xff]
      %v568 = vld [vmem:[%s566 + $0x10] sm:$0xff]
      %v569 = vld [vmem:[%s566 + $0x20] sm:$0xff]
      %s570 = scalar_lea.vmem %s492, %s557
      %v571 = vld [vmem:[%s570] sm:$0xff]
      %v572 = vld [vmem:[%s570 + $0x10] sm:$0xff]
      %v573 = vld [vmem:[%s570 + $0x20] sm:$0xff]
      %s574 = scalar_lea.vmem %s497, %s557
      %v575 = vld [vmem:[%s574] sm:$0xff]
      %v576 = vld [vmem:[%s574 + $0x10] sm:$0xff]
      %v577 = vld [vmem:[%s574 + $0x20] sm:$0xff]
      %s578 = scalar_lea.vmem %s502, %s557
      %v579 = vld [vmem:[%s578] sm:$0xff]
      %v580 = vld [vmem:[%s578 + $0x10] sm:$0xff]
      %v581 = vld [vmem:[%s578 + $0x20] sm:$0xff]
      %s582 = scalar_lea.vmem %s507, %s557
      %v583 = vld [vmem:[%s582] sm:$0xff]
      %v584 = vld [vmem:[%s582 + $0x10] sm:$0xff]
      %v585 = vld [vmem:[%s582 + $0x20] sm:$0xff]
      %s586 = scalar_lea.vmem %s512, %s557
      %v587 = vld [vmem:[%s586] sm:$0xff]
      %v588 = vld [vmem:[%s586 + $0x10] sm:$0xff]
      %v589 = vld [vmem:[%s586 + $0x20] sm:$0xff]
      %s590 = sadd.s32 %s524, 2
      %s591 = scalar_lea.vmem %s477, %s590
      %v592 = vld [vmem:[%s591] sm:$0xff]
      %v593 = vld [vmem:[%s591 + $0x10] sm:$0xff]
      %v594 = vld [vmem:[%s591 + $0x20] sm:$0xff]
      %s595 = scalar_lea.vmem %s482, %s590
      %v596 = vld [vmem:[%s595] sm:$0xff]
      %v597 = vld [vmem:[%s595 + $0x10] sm:$0xff]
      %v598 = vld [vmem:[%s595 + $0x20] sm:$0xff]
      %s599 = scalar_lea.vmem %s487, %s590
      %v600 = vld [vmem:[%s599] sm:$0xff]
      %v601 = vld [vmem:[%s599 + $0x10] sm:$0xff]
      %v602 = vld [vmem:[%s599 + $0x20] sm:$0xff]
      %s603 = scalar_lea.vmem %s492, %s590
      %v604 = vld [vmem:[%s603] sm:$0xff]
      %v605 = vld [vmem:[%s603 + $0x10] sm:$0xff]
      %v606 = vld [vmem:[%s603 + $0x20] sm:$0xff]
      %s607 = scalar_lea.vmem %s497, %s590
      %v608 = vld [vmem:[%s607] sm:$0xff]
      %v609 = vld [vmem:[%s607 + $0x10] sm:$0xff]
      %v610 = vld [vmem:[%s607 + $0x20] sm:$0xff]
      %s611 = scalar_lea.vmem %s502, %s590
      %v612 = vld [vmem:[%s611] sm:$0xff]
      %v613 = vld [vmem:[%s611 + $0x10] sm:$0xff]
      %v614 = vld [vmem:[%s611 + $0x20] sm:$0xff]
      %s615 = scalar_lea.vmem %s507, %s590
      %v616 = vld [vmem:[%s615] sm:$0xff]
      %v617 = vld [vmem:[%s615 + $0x10] sm:$0xff]
      %v618 = vld [vmem:[%s615 + $0x20] sm:$0xff]
      %s619 = scalar_lea.vmem %s512, %s590
      %v620 = vld [vmem:[%s619] sm:$0xff]
      %v621 = vld [vmem:[%s619 + $0x10] sm:$0xff]
      %v622 = vld [vmem:[%s619 + $0x20] sm:$0xff]
      %s623 = sadd.s32 %s524, 3
      %s624 = scalar_lea.vmem %s477, %s623
      %v625 = vld [vmem:[%s624] sm:$0xff]
      %v626 = vld [vmem:[%s624 + $0x10] sm:$0xff]
      %v627 = vld [vmem:[%s624 + $0x20] sm:$0xff]
      %s628 = scalar_lea.vmem %s482, %s623
      %v629 = vld [vmem:[%s628] sm:$0xff]
      %v630 = vld [vmem:[%s628 + $0x10] sm:$0xff]
      %v631 = vld [vmem:[%s628 + $0x20] sm:$0xff]
      %s632 = scalar_lea.vmem %s487, %s623
      %v633 = vld [vmem:[%s632] sm:$0xff]
      %v634 = vld [vmem:[%s632 + $0x10] sm:$0xff]
      %v635 = vld [vmem:[%s632 + $0x20] sm:$0xff]
      %s636 = scalar_lea.vmem %s492, %s623
      %v637 = vld [vmem:[%s636] sm:$0xff]
      %v638 = vld [vmem:[%s636 + $0x10] sm:$0xff]
      %v639 = vld [vmem:[%s636 + $0x20] sm:$0xff]
      %643 = vrot.lane.b32.xlu0 %v526, 127
      %v644 = vpop.permute.xlu0 %643
      %645 = vrot.lane.b32.xlu0 %v527, 127
      %v646 = vpop.permute.xlu0 %645
      %647 = vrot.lane.b32.xlu0 %v528, 127
      %v648 = vpop.permute.xlu0 %647
      %655 = vrot.lane.b32.xlu0 %v530, 127
      %v656 = vpop.permute.xlu0 %655
      %657 = vrot.lane.b32.xlu0 %v531, 127
      %v658 = vpop.permute.xlu0 %657
      %659 = vrot.lane.b32.xlu0 %v532, 127
      %v660 = vpop.permute.xlu0 %659
      %667 = vrot.lane.b32.xlu0 %v534, 127
      %v668 = vpop.permute.xlu0 %667
      %669 = vrot.lane.b32.xlu0 %v535, 127
      %v670 = vpop.permute.xlu0 %669
      %671 = vrot.lane.b32.xlu0 %v536, 127
      %v672 = vpop.permute.xlu0 %671
      %679 = vrot.lane.b32.xlu0 %v542, 127
      %v680 = vpop.permute.xlu0 %679
      %681 = vrot.lane.b32.xlu0 %v543, 127
      %v682 = vpop.permute.xlu0 %681
      %683 = vrot.lane.b32.xlu0 %v544, 127
      %v684 = vpop.permute.xlu0 %683
      %691 = vrot.lane.b32.xlu0 %v546, 127
      %v692 = vpop.permute.xlu0 %691
      %693 = vrot.lane.b32.xlu0 %v547, 127
      %v694 = vpop.permute.xlu0 %693
      %695 = vrot.lane.b32.xlu0 %v548, 127
      %v696 = vpop.permute.xlu0 %695
      %703 = vrot.lane.b32.xlu0 %v550, 127
      %v704 = vpop.permute.xlu0 %703
      %705 = vrot.lane.b32.xlu0 %v551, 127
      %v706 = vpop.permute.xlu0 %705
      %707 = vrot.lane.b32.xlu0 %v552, 127
      %v708 = vpop.permute.xlu0 %707
      %715 = vrot.lane.b32.xlu0 %v559, 127
      %v716 = vpop.permute.xlu0 %715
      %717 = vrot.lane.b32.xlu0 %v560, 127
      %v718 = vpop.permute.xlu0 %717
      %719 = vrot.lane.b32.xlu0 %v561, 127
      %v720 = vpop.permute.xlu0 %719
      %727 = vrot.lane.b32.xlu0 %v563, 127
      %v728 = vpop.permute.xlu0 %727
      %729 = vrot.lane.b32.xlu0 %v564, 127
      %v730 = vpop.permute.xlu0 %729
      %731 = vrot.lane.b32.xlu0 %v565, 127
      %v732 = vpop.permute.xlu0 %731
      %739 = vrot.lane.b32.xlu0 %v567, 127
      %v740 = vpop.permute.xlu0 %739
      %741 = vrot.lane.b32.xlu0 %v568, 127
      %v742 = vpop.permute.xlu0 %741
      %743 = vrot.lane.b32.xlu0 %v569, 127
      %v744 = vpop.permute.xlu0 %743
      %751 = vrot.lane.b32.xlu0 %v575, 127
      %v752 = vpop.permute.xlu0 %751
      %753 = vrot.lane.b32.xlu0 %v576, 127
      %v754 = vpop.permute.xlu0 %753
      %755 = vrot.lane.b32.xlu0 %v577, 127
      %v756 = vpop.permute.xlu0 %755
      %763 = vrot.lane.b32.xlu0 %v579, 127
      %v764 = vpop.permute.xlu0 %763
      %765 = vrot.lane.b32.xlu0 %v580, 127
      %v766 = vpop.permute.xlu0 %765
      %767 = vrot.lane.b32.xlu0 %v581, 127
      %v768 = vpop.permute.xlu0 %767
      %775 = vrot.lane.b32.xlu0 %v583, 127
      %v776 = vpop.permute.xlu0 %775
      %777 = vrot.lane.b32.xlu0 %v584, 127
      %v778 = vpop.permute.xlu0 %777
      %779 = vrot.lane.b32.xlu0 %v585, 127
      %v780 = vpop.permute.xlu0 %779
      %787 = vrot.lane.b32.xlu0 %v608, 1
      %v788 = vpop.permute.xlu0 %787
      %789 = vrot.lane.b32.xlu0 %v609, 1
      %v790 = vpop.permute.xlu0 %789
      %791 = vrot.lane.b32.xlu0 %v610, 1
      %v792 = vpop.permute.xlu0 %791
      %796 = vrot.lane.b32.xlu0 %v612, 1
      %v797 = vpop.permute.xlu0 %796
      %798 = vrot.lane.b32.xlu0 %v613, 1
      %v799 = vpop.permute.xlu0 %798
      %800 = vrot.lane.b32.xlu0 %v614, 1
      %v801 = vpop.permute.xlu0 %800
      %805 = vrot.lane.b32.xlu0 %v616, 1
      %v806 = vpop.permute.xlu0 %805
      %807 = vrot.lane.b32.xlu0 %v617, 1
      %v808 = vpop.permute.xlu0 %807
      %809 = vrot.lane.b32.xlu0 %v618, 1
      %v810 = vpop.permute.xlu0 %809
      %814 = vrot.lane.b32.xlu0 %v620, 1
      %v815 = vpop.permute.xlu0 %814
      %816 = vrot.lane.b32.xlu0 %v621, 1
      %v817 = vpop.permute.xlu0 %816
      %818 = vrot.lane.b32.xlu0 %v622, 1
      %v819 = vpop.permute.xlu0 %818
      %823 = vrot.lane.b32.xlu0 %v625, 1
      %v824 = vpop.permute.xlu0 %823
      %825 = vrot.lane.b32.xlu0 %v626, 1
      %v826 = vpop.permute.xlu0 %825
      %827 = vrot.lane.b32.xlu0 %v627, 1
      %v828 = vpop.permute.xlu0 %827
      %832 = vrot.lane.b32.xlu0 %v629, 1
      %v833 = vpop.permute.xlu0 %832
      %834 = vrot.lane.b32.xlu0 %v630, 1
      %v835 = vpop.permute.xlu0 %834
      %836 = vrot.lane.b32.xlu0 %v631, 1
      %v837 = vpop.permute.xlu0 %836
      %841 = vrot.lane.b32.xlu0 %v633, 1
      %v842 = vpop.permute.xlu0 %841
      %843 = vrot.lane.b32.xlu0 %v634, 1
      %v844 = vpop.permute.xlu0 %843
      %845 = vrot.lane.b32.xlu0 %v635, 1
      %v846 = vpop.permute.xlu0 %845
      %850 = vrot.lane.b32.xlu0 %v637, 1
      %v851 = vpop.permute.xlu0 %850
      %852 = vrot.lane.b32.xlu0 %v638, 1
      %v853 = vpop.permute.xlu0 %852
      %854 = vrot.lane.b32.xlu0 %v639, 1
      %v855 = vpop.permute.xlu0 %854
      %865 = vrot.lane.b32.xlu0 %v592, 127
      %v866 = vpop.permute.xlu0 %865
      %867 = vrot.lane.b32.xlu0 %v593, 127
      %v868 = vpop.permute.xlu0 %867
      %869 = vrot.lane.b32.xlu0 %v594, 127
      %v870 = vpop.permute.xlu0 %869
      %871 = vrot.lane.b32.xlu0 %v596, 127
      %v872 = vpop.permute.xlu0 %871
      %873 = vrot.lane.b32.xlu0 %v597, 127
      %v874 = vpop.permute.xlu0 %873
      %875 = vrot.lane.b32.xlu0 %v598, 127
      %v876 = vpop.permute.xlu0 %875
      %877 = vrot.lane.b32.xlu0 %v600, 127
      %v878 = vpop.permute.xlu0 %877
      %879 = vrot.lane.b32.xlu0 %v601, 127
      %v880 = vpop.permute.xlu0 %879
      %881 = vrot.lane.b32.xlu0 %v602, 127
      %v882 = vpop.permute.xlu0 %881
      %883 = vrot.lane.b32.xlu0 %v788, 127
      %v884 = vpop.permute.xlu0 %883
      %885 = vrot.lane.b32.xlu0 %v790, 127
      %v886 = vpop.permute.xlu0 %885
      %887 = vrot.lane.b32.xlu0 %v792, 127
      %v888 = vpop.permute.xlu0 %887
      %889 = vrot.lane.b32.xlu0 %v797, 127
      %v890 = vpop.permute.xlu0 %889
      %891 = vrot.lane.b32.xlu0 %v799, 127
      %v892 = vpop.permute.xlu0 %891
      %893 = vrot.lane.b32.xlu0 %v801, 127
      %v894 = vpop.permute.xlu0 %893
      %895 = vrot.lane.b32.xlu0 %v806, 127
      %v896 = vpop.permute.xlu0 %895
      %897 = vrot.lane.b32.xlu0 %v808, 127
      %v898 = vpop.permute.xlu0 %897
      %899 = vrot.lane.b32.xlu0 %v810, 127
      %v900 = vpop.permute.xlu0 %899
      %901 = vrot.lane.b32.xlu0 %v815, 127
      %v902 = vpop.permute.xlu0 %901
      %903 = vrot.lane.b32.xlu0 %v817, 127
      %v904 = vpop.permute.xlu0 %903
      %905 = vrot.lane.b32.xlu0 %v819, 127
      %v906 = vpop.permute.xlu0 %905
      %907 = vrot.lane.b32.xlu0 %v608, 127
      %v908 = vpop.permute.xlu0 %907
      %909 = vrot.lane.b32.xlu0 %v609, 127
      %v910 = vpop.permute.xlu0 %909
      %911 = vrot.lane.b32.xlu0 %v610, 127
      %v912 = vpop.permute.xlu0 %911
      %913 = vrot.lane.b32.xlu0 %v612, 127
      %v914 = vpop.permute.xlu0 %913
      %915 = vrot.lane.b32.xlu0 %v613, 127
      %v916 = vpop.permute.xlu0 %915
      %917 = vrot.lane.b32.xlu0 %v614, 127
      %v918 = vpop.permute.xlu0 %917
      %919 = vrot.lane.b32.xlu0 %v616, 127
      %v920 = vpop.permute.xlu0 %919
      %921 = vrot.lane.b32.xlu0 %v617, 127
      %v922 = vpop.permute.xlu0 %921
      %923 = vrot.lane.b32.xlu0 %v618, 127
      %v924 = vpop.permute.xlu0 %923
      %925 = vrot.lane.b32.xlu0 %v824, 127
      %v926 = vpop.permute.xlu0 %925
      %927 = vrot.lane.b32.xlu0 %v826, 127
      %v928 = vpop.permute.xlu0 %927
      %929 = vrot.lane.b32.xlu0 %v828, 127
      %v930 = vpop.permute.xlu0 %929
      %931 = vrot.lane.b32.xlu0 %v833, 127
      %v932 = vpop.permute.xlu0 %931
      %933 = vrot.lane.b32.xlu0 %v835, 127
      %v934 = vpop.permute.xlu0 %933
      %935 = vrot.lane.b32.xlu0 %v837, 127
      %v936 = vpop.permute.xlu0 %935
      %937 = vrot.lane.b32.xlu0 %v842, 127
      %v938 = vpop.permute.xlu0 %937
      %939 = vrot.lane.b32.xlu0 %v844, 127
      %v940 = vpop.permute.xlu0 %939
      %941 = vrot.lane.b32.xlu0 %v846, 127
      %v942 = vpop.permute.xlu0 %941
      %943 = vrot.lane.b32.xlu0 %v851, 127
      %v944 = vpop.permute.xlu0 %943
      %945 = vrot.lane.b32.xlu0 %v853, 127
      %v946 = vpop.permute.xlu0 %945
      %947 = vrot.lane.b32.xlu0 %v855, 127
      %v948 = vpop.permute.xlu0 %947
      %949 = vrot.lane.b32.xlu0 %v625, 127
      %v950 = vpop.permute.xlu0 %949
      %951 = vrot.lane.b32.xlu0 %v626, 127
      %v952 = vpop.permute.xlu0 %951
      %953 = vrot.lane.b32.xlu0 %v627, 127
      %v954 = vpop.permute.xlu0 %953
      %955 = vrot.lane.b32.xlu0 %v629, 127
      %v956 = vpop.permute.xlu0 %955
      %957 = vrot.lane.b32.xlu0 %v630, 127
      %v958 = vpop.permute.xlu0 %957
      %959 = vrot.lane.b32.xlu0 %v631, 127
      %v960 = vpop.permute.xlu0 %959
      %1009 = vrot.lane.b32.xlu0 %v633, 127
      %v1010 = vpop.permute.xlu0 %1009
      %1011 = vrot.lane.b32.xlu0 %v634, 127
      %v1012 = vpop.permute.xlu0 %1011
      %1013 = vrot.lane.b32.xlu0 %v635, 127
      %v1014 = vpop.permute.xlu0 %1013
      %v1018 = vcombine.low %v526, %v528
      %v1019 = vcombine.high %v526, %v528
      %v1021 = vunpack.c.l.s4 1983009808
      %v1022 = vunpack.c.0.s8 %v1021
      %v1023 = vlaneseq
      %v1024 = vshrl.u32 %v1023, 7
      %v1025 = vsub.s32 %v1022, %v1024
      %v1026 = vrot.slane %v1018, %v1025
      %v1028 = vunpack.c.l.s4 1983009808
      %v1029 = vunpack.c.0.s8 %v1028
      %v1030 = vlaneseq
      %v1031 = vshrl.u32 %v1030, 7
      %v1032 = vsub.s32 %v1029, %v1031
      %v1033 = vrot.slane %v1019, %v1032
      %v1034 = vcombine.low %v527, %v530
      %v1035 = vcombine.high %v527, %v530
      %v1037 = vunpack.c.l.s4 1983009808
      %v1038 = vunpack.c.0.s8 %v1037
      %v1039 = vlaneseq
      %v1040 = vshrl.u32 %v1039, 7
      %v1041 = vsub.s32 %v1038, %v1040
      %v1042 = vrot.slane %v1034, %v1041
      %v1044 = vunpack.c.l.s4 1983009808
      %v1045 = vunpack.c.0.s8 %v1044
      %v1046 = vlaneseq
      %v1047 = vshrl.u32 %v1046, 7
      %v1048 = vsub.s32 %v1045, %v1047
      %v1049 = vrot.slane %v1035, %v1048
      %v1050 = vcombine.low %v531, %v534
      %v1051 = vcombine.high %v531, %v534
      %v1053 = vunpack.c.l.s4 1983009808
      %v1054 = vunpack.c.0.s8 %v1053
      %v1055 = vlaneseq
      %v1056 = vshrl.u32 %v1055, 7
      %v1057 = vsub.s32 %v1054, %v1056
      %v1058 = vrot.slane %v1050, %v1057
      %v1060 = vunpack.c.l.s4 1983009808
      %v1061 = vunpack.c.0.s8 %v1060
      %v1062 = vlaneseq
      %v1063 = vshrl.u32 %v1062, 7
      %v1064 = vsub.s32 %v1061, %v1063
      %v1065 = vrot.slane %v1051, %v1064
      %v1066 = vcombine.low %v532, %v535
      %v1067 = vcombine.high %v532, %v535
      %v1069 = vunpack.c.l.s4 1983009808
      %v1070 = vunpack.c.0.s8 %v1069
      %v1071 = vlaneseq
      %v1072 = vshrl.u32 %v1071, 7
      %v1073 = vsub.s32 %v1070, %v1072
      %v1074 = vrot.slane %v1066, %v1073
      %v1076 = vunpack.c.l.s4 1983009808
      %v1077 = vunpack.c.0.s8 %v1076
      %v1078 = vlaneseq
      %v1079 = vshrl.u32 %v1078, 7
      %v1080 = vsub.s32 %v1077, %v1079
      %v1081 = vrot.slane %v1067, %v1080
      %v1082 = vcombine.low %v1026, %v1042
      %v1083 = vcombine.high %v1026, %v1042
      %v1085 = vunpack.c.l.s4 1934713408
      %v1086 = vunpack.c.0.s8 %v1085
      %v1087 = vlaneseq
      %v1088 = vshrl.u32 %v1087, 7
      %v1089 = vsub.s32 %v1086, %v1088
      %v1090 = vrot.slane %v1082, %v1089
      %v1092 = vunpack.c.l.s4 1934713408
      %v1093 = vunpack.c.0.s8 %v1092
      %v1094 = vlaneseq
      %v1095 = vshrl.u32 %v1094, 7
      %v1096 = vsub.s32 %v1093, %v1095
      %v1097 = vrot.slane %v1083, %v1096
      %v1098 = vcombine.low %v1033, %v1049
      %v1099 = vcombine.high %v1033, %v1049
      %v1101 = vunpack.c.l.s4 1934713408
      %v1102 = vunpack.c.0.s8 %v1101
      %v1103 = vlaneseq
      %v1104 = vshrl.u32 %v1103, 7
      %v1105 = vsub.s32 %v1102, %v1104
      %v1106 = vrot.slane %v1098, %v1105
      %v1108 = vunpack.c.l.s4 1934713408
      %v1109 = vunpack.c.0.s8 %v1108
      %v1110 = vlaneseq
      %v1111 = vshrl.u32 %v1110, 7
      %v1112 = vsub.s32 %v1109, %v1111
      %v1113 = vrot.slane %v1099, %v1112
      %v1114 = vcombine.low %v1058, %v1074
      %v1115 = vcombine.high %v1058, %v1074
      %v1117 = vunpack.c.l.s4 1934713408
      %v1118 = vunpack.c.0.s8 %v1117
      %v1119 = vlaneseq
      %v1120 = vshrl.u32 %v1119, 7
      %v1121 = vsub.s32 %v1118, %v1120
      %v1122 = vrot.slane %v1114, %v1121
      %v1124 = vunpack.c.l.s4 1934713408
      %v1125 = vunpack.c.0.s8 %v1124
      %v1126 = vlaneseq
      %v1127 = vshrl.u32 %v1126, 7
      %v1128 = vsub.s32 %v1125, %v1127
      %v1129 = vrot.slane %v1115, %v1128
      %v1130 = vcombine.low %v1065, %v1081
      %v1131 = vcombine.high %v1065, %v1081
      %v1133 = vunpack.c.l.s4 1934713408
      %v1134 = vunpack.c.0.s8 %v1133
      %v1135 = vlaneseq
      %v1136 = vshrl.u32 %v1135, 7
      %v1137 = vsub.s32 %v1134, %v1136
      %v1138 = vrot.slane %v1130, %v1137
      %v1140 = vunpack.c.l.s4 1934713408
      %v1141 = vunpack.c.0.s8 %v1140
      %v1142 = vlaneseq
      %v1143 = vshrl.u32 %v1142, 7
      %v1144 = vsub.s32 %v1141, %v1143
      %v1145 = vrot.slane %v1131, %v1144
      %v1146 = vcombine.low %v1090, %v1122
      %v1147 = vcombine.high %v1090, %v1122
      %v1148 = vcombine.low %v1097, %v1129
      %v1149 = vcombine.high %v1097, %v1129
      %v1150 = vcombine.low %v1106, %v1138
      %v1151 = vcombine.high %v1106, %v1138
      %v1152 = vcombine.low %v1113, %v1145
      %v1153 = vcombine.high %v1113, %v1145
      %v1154 = vcombine.low %v536, %v539
      %v1155 = vcombine.high %v536, %v539
      %v1157 = vunpack.c.l.s4 1983009808
      %v1158 = vunpack.c.0.s8 %v1157
      %v1159 = vlaneseq
      %v1160 = vshrl.u32 %v1159, 7
      %v1161 = vsub.s32 %v1158, %v1160
      %v1162 = vrot.slane %v1154, %v1161
      %v1164 = vunpack.c.l.s4 1983009808
      %v1165 = vunpack.c.0.s8 %v1164
      %v1166 = vlaneseq
      %v1167 = vshrl.u32 %v1166, 7
      %v1168 = vsub.s32 %v1165, %v1167
      %v1169 = vrot.slane %v1155, %v1168
      %v1170 = vcombine.low %v538, %v540
      %v1171 = vcombine.high %v538, %v540
      %v1173 = vunpack.c.l.s4 1983009808
      %v1174 = vunpack.c.0.s8 %v1173
      %v1175 = vlaneseq
      %v1176 = vshrl.u32 %v1175, 7
      %v1177 = vsub.s32 %v1174, %v1176
      %v1178 = vrot.slane %v1170, %v1177
      %v1180 = vunpack.c.l.s4 1983009808
      %v1181 = vunpack.c.0.s8 %v1180
      %v1182 = vlaneseq
      %v1183 = vshrl.u32 %v1182, 7
      %v1184 = vsub.s32 %v1181, %v1183
      %v1185 = vrot.slane %v1171, %v1184
      %v1186 = vcombine.low %v644, %v648
      %v1187 = vcombine.high %v644, %v648
      %v1189 = vunpack.c.l.s4 1983009808
      %v1190 = vunpack.c.0.s8 %v1189
      %v1191 = vlaneseq
      %v1192 = vshrl.u32 %v1191, 7
      %v1193 = vsub.s32 %v1190, %v1192
      %v1194 = vrot.slane %v1186, %v1193
      %v1196 = vunpack.c.l.s4 1983009808
      %v1197 = vunpack.c.0.s8 %v1196
      %v1198 = vlaneseq
      %v1199 = vshrl.u32 %v1198, 7
      %v1200 = vsub.s32 %v1197, %v1199
      %v1201 = vrot.slane %v1187, %v1200
      %v1202 = vcombine.low %v646, %v656
      %v1203 = vcombine.high %v646, %v656
      %v1205 = vunpack.c.l.s4 1983009808
      %v1206 = vunpack.c.0.s8 %v1205
      %v1207 = vlaneseq
      %v1208 = vshrl.u32 %v1207, 7
      %v1209 = vsub.s32 %v1206, %v1208
      %v1210 = vrot.slane %v1202, %v1209
      %v1212 = vunpack.c.l.s4 1983009808
      %v1213 = vunpack.c.0.s8 %v1212
      %v1214 = vlaneseq
      %v1215 = vshrl.u32 %v1214, 7
      %v1216 = vsub.s32 %v1213, %v1215
      %v1217 = vrot.slane %v1203, %v1216
      %v1218 = vcombine.low %v1162, %v1178
      %v1219 = vcombine.high %v1162, %v1178
      %v1221 = vunpack.c.l.s4 1934713408
      %v1222 = vunpack.c.0.s8 %v1221
      %v1223 = vlaneseq
      %v1224 = vshrl.u32 %v1223, 7
      %v1225 = vsub.s32 %v1222, %v1224
      %v1226 = vrot.slane %v1218, %v1225
      %v1228 = vunpack.c.l.s4 1934713408
      %v1229 = vunpack.c.0.s8 %v1228
      %v1230 = vlaneseq
      %v1231 = vshrl.u32 %v1230, 7
      %v1232 = vsub.s32 %v1229, %v1231
      %v1233 = vrot.slane %v1219, %v1232
      %v1234 = vcombine.low %v1169, %v1185
      %v1235 = vcombine.high %v1169, %v1185
      %v1237 = vunpack.c.l.s4 1934713408
      %v1238 = vunpack.c.0.s8 %v1237
      %v1239 = vlaneseq
      %v1240 = vshrl.u32 %v1239, 7
      %v1241 = vsub.s32 %v1238, %v1240
      %v1242 = vrot.slane %v1234, %v1241
      %v1244 = vunpack.c.l.s4 1934713408
      %v1245 = vunpack.c.0.s8 %v1244
      %v1246 = vlaneseq
      %v1247 = vshrl.u32 %v1246, 7
      %v1248 = vsub.s32 %v1245, %v1247
      %v1249 = vrot.slane %v1235, %v1248
      %v1250 = vcombine.low %v1194, %v1210
      %v1251 = vcombine.high %v1194, %v1210
      %v1253 = vunpack.c.l.s4 1934713408
      %v1254 = vunpack.c.0.s8 %v1253
      %v1255 = vlaneseq
      %v1256 = vshrl.u32 %v1255, 7
      %v1257 = vsub.s32 %v1254, %v1256
      %v1258 = vrot.slane %v1250, %v1257
      %v1260 = vunpack.c.l.s4 1934713408
      %v1261 = vunpack.c.0.s8 %v1260
      %v1262 = vlaneseq
      %v1263 = vshrl.u32 %v1262, 7
      %v1264 = vsub.s32 %v1261, %v1263
      %v1265 = vrot.slane %v1251, %v1264
      %v1266 = vcombine.low %v1201, %v1217
      %v1267 = vcombine.high %v1201, %v1217
      %v1269 = vunpack.c.l.s4 1934713408
      %v1270 = vunpack.c.0.s8 %v1269
      %v1271 = vlaneseq
      %v1272 = vshrl.u32 %v1271, 7
      %v1273 = vsub.s32 %v1270, %v1272
      %v1274 = vrot.slane %v1266, %v1273
      %v1276 = vunpack.c.l.s4 1934713408
      %v1277 = vunpack.c.0.s8 %v1276
      %v1278 = vlaneseq
      %v1279 = vshrl.u32 %v1278, 7
      %v1280 = vsub.s32 %v1277, %v1279
      %v1281 = vrot.slane %v1267, %v1280
      %v1282 = vcombine.low %v1226, %v1258
      %v1283 = vcombine.high %v1226, %v1258
      %v1284 = vcombine.low %v1233, %v1265
      %v1285 = vcombine.high %v1233, %v1265
      %v1286 = vcombine.low %v1242, %v1274
      %v1287 = vcombine.high %v1242, %v1274
      %v1288 = vcombine.low %v1249, %v1281
      %v1289 = vcombine.high %v1249, %v1281
      %v1290 = vcombine.low %v658, %v668
      %v1291 = vcombine.high %v658, %v668
      %v1293 = vunpack.c.l.s4 1983009808
      %v1294 = vunpack.c.0.s8 %v1293
      %v1295 = vlaneseq
      %v1296 = vshrl.u32 %v1295, 7
      %v1297 = vsub.s32 %v1294, %v1296
      %v1298 = vrot.slane %v1290, %v1297
      %v1300 = vunpack.c.l.s4 1983009808
      %v1301 = vunpack.c.0.s8 %v1300
      %v1302 = vlaneseq
      %v1303 = vshrl.u32 %v1302, 7
      %v1304 = vsub.s32 %v1301, %v1303
      %v1305 = vrot.slane %v1291, %v1304
      %v1306 = vcombine.low %v660, %v670
      %v1307 = vcombine.high %v660, %v670
      %v1309 = vunpack.c.l.s4 1983009808
      %v1310 = vunpack.c.0.s8 %v1309
      %v1311 = vlaneseq
      %v1312 = vshrl.u32 %v1311, 7
      %v1313 = vsub.s32 %v1310, %v1312
      %v1314 = vrot.slane %v1306, %v1313
      %v1316 = vunpack.c.l.s4 1983009808
      %v1317 = vunpack.c.0.s8 %v1316
      %v1318 = vlaneseq
      %v1319 = vshrl.u32 %v1318, 7
      %v1320 = vsub.s32 %v1317, %v1319
      %v1321 = vrot.slane %v1307, %v1320
      %v1322 = vcombine.low %v672, %v543
      %v1323 = vcombine.high %v672, %v543
      %v1325 = vunpack.c.l.s4 1983009808
      %v1326 = vunpack.c.0.s8 %v1325
      %v1327 = vlaneseq
      %v1328 = vshrl.u32 %v1327, 7
      %v1329 = vsub.s32 %v1326, %v1328
      %v1330 = vrot.slane %v1322, %v1329
      %v1332 = vunpack.c.l.s4 1983009808
      %v1333 = vunpack.c.0.s8 %v1332
      %v1334 = vlaneseq
      %v1335 = vshrl.u32 %v1334, 7
      %v1336 = vsub.s32 %v1333, %v1335
      %v1337 = vrot.slane %v1323, %v1336
      %v1338 = vcombine.low %v542, %v544
      %v1339 = vcombine.high %v542, %v544
      %v1341 = vunpack.c.l.s4 1983009808
      %v1342 = vunpack.c.0.s8 %v1341
      %v1343 = vlaneseq
      %v1344 = vshrl.u32 %v1343, 7
      %v1345 = vsub.s32 %v1342, %v1344
      %v1346 = vrot.slane %v1338, %v1345
      %v1348 = vunpack.c.l.s4 1983009808
      %v1349 = vunpack.c.0.s8 %v1348
      %v1350 = vlaneseq
      %v1351 = vshrl.u32 %v1350, 7
      %v1352 = vsub.s32 %v1349, %v1351
      %v1353 = vrot.slane %v1339, %v1352
      %v1354 = vcombine.low %v1298, %v1314
      %v1355 = vcombine.high %v1298, %v1314
      %v1357 = vunpack.c.l.s4 1934713408
      %v1358 = vunpack.c.0.s8 %v1357
      %v1359 = vlaneseq
      %v1360 = vshrl.u32 %v1359, 7
      %v1361 = vsub.s32 %v1358, %v1360
      %v1362 = vrot.slane %v1354, %v1361
      %v1364 = vunpack.c.l.s4 1934713408
      %v1365 = vunpack.c.0.s8 %v1364
      %v1366 = vlaneseq
      %v1367 = vshrl.u32 %v1366, 7
      %v1368 = vsub.s32 %v1365, %v1367
      %v1369 = vrot.slane %v1355, %v1368
      %v1370 = vcombine.low %v1305, %v1321
      %v1371 = vcombine.high %v1305, %v1321
      %v1373 = vunpack.c.l.s4 1934713408
      %v1374 = vunpack.c.0.s8 %v1373
      %v1375 = vlaneseq
      %v1376 = vshrl.u32 %v1375, 7
      %v1377 = vsub.s32 %v1374, %v1376
      %v1378 = vrot.slane %v1370, %v1377
      %v1380 = vunpack.c.l.s4 1934713408
      %v1381 = vunpack.c.0.s8 %v1380
      %v1382 = vlaneseq
      %v1383 = vshrl.u32 %v1382, 7
      %v1384 = vsub.s32 %v1381, %v1383
      %v1385 = vrot.slane %v1371, %v1384
      %v1386 = vcombine.low %v1330, %v1346
      %v1387 = vcombine.high %v1330, %v1346
      %v1389 = vunpack.c.l.s4 1934713408
      %v1390 = vunpack.c.0.s8 %v1389
      %v1391 = vlaneseq
      %v1392 = vshrl.u32 %v1391, 7
      %v1393 = vsub.s32 %v1390, %v1392
      %v1394 = vrot.slane %v1386, %v1393
      %v1396 = vunpack.c.l.s4 1934713408
      %v1397 = vunpack.c.0.s8 %v1396
      %v1398 = vlaneseq
      %v1399 = vshrl.u32 %v1398, 7
      %v1400 = vsub.s32 %v1397, %v1399
      %v1401 = vrot.slane %v1387, %v1400
      %v1402 = vcombine.low %v1337, %v1353
      %v1403 = vcombine.high %v1337, %v1353
      %v1405 = vunpack.c.l.s4 1934713408
      %v1406 = vunpack.c.0.s8 %v1405
      %v1407 = vlaneseq
      %v1408 = vshrl.u32 %v1407, 7
      %v1409 = vsub.s32 %v1406, %v1408
      %v1410 = vrot.slane %v1402, %v1409
      %v1412 = vunpack.c.l.s4 1934713408
      %v1413 = vunpack.c.0.s8 %v1412
      %v1414 = vlaneseq
      %v1415 = vshrl.u32 %v1414, 7
      %v1416 = vsub.s32 %v1413, %v1415
      %v1417 = vrot.slane %v1403, %v1416
      %v1418 = vcombine.low %v1362, %v1394
      %v1419 = vcombine.high %v1362, %v1394
      %v1420 = vcombine.low %v1369, %v1401
      %v1421 = vcombine.high %v1369, %v1401
      %v1422 = vcombine.low %v1378, %v1410
      %v1423 = vcombine.high %v1378, %v1410
      %v1424 = vcombine.low %v1385, %v1417
      %v1425 = vcombine.high %v1385, %v1417
      %v1426 = vcombine.low %v546, %v548
      %v1427 = vcombine.high %v546, %v548
      %v1429 = vunpack.c.l.s4 1983009808
      %v1430 = vunpack.c.0.s8 %v1429
      %v1431 = vlaneseq
      %v1432 = vshrl.u32 %v1431, 7
      %v1433 = vsub.s32 %v1430, %v1432
      %v1434 = vrot.slane %v1426, %v1433
      %v1436 = vunpack.c.l.s4 1983009808
      %v1437 = vunpack.c.0.s8 %v1436
      %v1438 = vlaneseq
      %v1439 = vshrl.u32 %v1438, 7
      %v1440 = vsub.s32 %v1437, %v1439
      %v1441 = vrot.slane %v1427, %v1440
      %v1442 = vcombine.low %v547, %v550
      %v1443 = vcombine.high %v547, %v550
      %v1445 = vunpack.c.l.s4 1983009808
      %v1446 = vunpack.c.0.s8 %v1445
      %v1447 = vlaneseq
      %v1448 = vshrl.u32 %v1447, 7
      %v1449 = vsub.s32 %v1446, %v1448
      %v1450 = vrot.slane %v1442, %v1449
      %v1452 = vunpack.c.l.s4 1983009808
      %v1453 = vunpack.c.0.s8 %v1452
      %v1454 = vlaneseq
      %v1455 = vshrl.u32 %v1454, 7
      %v1456 = vsub.s32 %v1453, %v1455
      %v1457 = vrot.slane %v1443, %v1456
      %v1458 = vcombine.low %v551, %v554
      %v1459 = vcombine.high %v551, %v554
      %v1461 = vunpack.c.l.s4 1983009808
      %v1462 = vunpack.c.0.s8 %v1461
      %v1463 = vlaneseq
      %v1464 = vshrl.u32 %v1463, 7
      %v1465 = vsub.s32 %v1462, %v1464
      %v1466 = vrot.slane %v1458, %v1465
      %v1468 = vunpack.c.l.s4 1983009808
      %v1469 = vunpack.c.0.s8 %v1468
      %v1470 = vlaneseq
      %v1471 = vshrl.u32 %v1470, 7
      %v1472 = vsub.s32 %v1469, %v1471
      %v1473 = vrot.slane %v1459, %v1472
      %v1474 = vcombine.low %v552, %v555
      %v1475 = vcombine.high %v552, %v555
      %v1477 = vunpack.c.l.s4 1983009808
      %v1478 = vunpack.c.0.s8 %v1477
      %v1479 = vlaneseq
      %v1480 = vshrl.u32 %v1479, 7
      %v1481 = vsub.s32 %v1478, %v1480
      %v1482 = vrot.slane %v1474, %v1481
      %v1484 = vunpack.c.l.s4 1983009808
      %v1485 = vunpack.c.0.s8 %v1484
      %v1486 = vlaneseq
      %v1487 = vshrl.u32 %v1486, 7
      %v1488 = vsub.s32 %v1485, %v1487
      %v1489 = vrot.slane %v1475, %v1488
      %v1490 = vcombine.low %v1434, %v1450
      %v1491 = vcombine.high %v1434, %v1450
      %v1493 = vunpack.c.l.s4 1934713408
      %v1494 = vunpack.c.0.s8 %v1493
      %v1495 = vlaneseq
      %v1496 = vshrl.u32 %v1495, 7
      %v1497 = vsub.s32 %v1494, %v1496
      %v1498 = vrot.slane %v1490, %v1497
      %v1500 = vunpack.c.l.s4 1934713408
      %v1501 = vunpack.c.0.s8 %v1500
      %v1502 = vlaneseq
      %v1503 = vshrl.u32 %v1502, 7
      %v1504 = vsub.s32 %v1501, %v1503
      %v1505 = vrot.slane %v1491, %v1504
      %v1506 = vcombine.low %v1441, %v1457
      %v1507 = vcombine.high %v1441, %v1457
      %v1509 = vunpack.c.l.s4 1934713408
      %v1510 = vunpack.c.0.s8 %v1509
      %v1511 = vlaneseq
      %v1512 = vshrl.u32 %v1511, 7
      %v1513 = vsub.s32 %v1510, %v1512
      %v1514 = vrot.slane %v1506, %v1513
      %v1516 = vunpack.c.l.s4 1934713408
      %v1517 = vunpack.c.0.s8 %v1516
      %v1518 = vlaneseq
      %v1519 = vshrl.u32 %v1518, 7
      %v1520 = vsub.s32 %v1517, %v1519
      %v1521 = vrot.slane %v1507, %v1520
      %v1522 = vcombine.low %v1466, %v1482
      %v1523 = vcombine.high %v1466, %v1482
      %v1525 = vunpack.c.l.s4 1934713408
      %v1526 = vunpack.c.0.s8 %v1525
      %v1527 = vlaneseq
      %v1528 = vshrl.u32 %v1527, 7
      %v1529 = vsub.s32 %v1526, %v1528
      %v1530 = vrot.slane %v1522, %v1529
      %v1532 = vunpack.c.l.s4 1934713408
      %v1533 = vunpack.c.0.s8 %v1532
      %v1534 = vlaneseq
      %v1535 = vshrl.u32 %v1534, 7
      %v1536 = vsub.s32 %v1533, %v1535
      %v1537 = vrot.slane %v1523, %v1536
      %v1538 = vcombine.low %v1473, %v1489
      %v1539 = vcombine.high %v1473, %v1489
      %v1541 = vunpack.c.l.s4 1934713408
      %v1542 = vunpack.c.0.s8 %v1541
      %v1543 = vlaneseq
      %v1544 = vshrl.u32 %v1543, 7
      %v1545 = vsub.s32 %v1542, %v1544
      %v1546 = vrot.slane %v1538, %v1545
      %v1548 = vunpack.c.l.s4 1934713408
      %v1549 = vunpack.c.0.s8 %v1548
      %v1550 = vlaneseq
      %v1551 = vshrl.u32 %v1550, 7
      %v1552 = vsub.s32 %v1549, %v1551
      %v1553 = vrot.slane %v1539, %v1552
      %v1554 = vcombine.low %v1498, %v1530
      %v1555 = vcombine.high %v1498, %v1530
      %v1556 = vcombine.low %v1505, %v1537
      %v1557 = vcombine.high %v1505, %v1537
      %v1558 = vcombine.low %v1514, %v1546
      %v1559 = vcombine.high %v1514, %v1546
      %v1560 = vcombine.low %v1521, %v1553
      %v1561 = vcombine.high %v1521, %v1553
      %v1562 = vcombine.low %v556, %v682
      %v1563 = vcombine.high %v556, %v682
      %v1565 = vunpack.c.l.s4 1983009808
      %v1566 = vunpack.c.0.s8 %v1565
      %v1567 = vlaneseq
      %v1568 = vshrl.u32 %v1567, 7
      %v1569 = vsub.s32 %v1566, %v1568
      %v1570 = vrot.slane %v1562, %v1569
      %v1572 = vunpack.c.l.s4 1983009808
      %v1573 = vunpack.c.0.s8 %v1572
      %v1574 = vlaneseq
      %v1575 = vshrl.u32 %v1574, 7
      %v1576 = vsub.s32 %v1573, %v1575
      %v1577 = vrot.slane %v1563, %v1576
      %v1578 = vcombine.low %v680, %v684
      %v1579 = vcombine.high %v680, %v684
      %v1581 = vunpack.c.l.s4 1983009808
      %v1582 = vunpack.c.0.s8 %v1581
      %v1583 = vlaneseq
      %v1584 = vshrl.u32 %v1583, 7
      %v1585 = vsub.s32 %v1582, %v1584
      %v1586 = vrot.slane %v1578, %v1585
      %v1588 = vunpack.c.l.s4 1983009808
      %v1589 = vunpack.c.0.s8 %v1588
      %v1590 = vlaneseq
      %v1591 = vshrl.u32 %v1590, 7
      %v1592 = vsub.s32 %v1589, %v1591
      %v1593 = vrot.slane %v1579, %v1592
      %v1594 = vcombine.low %v692, %v696
      %v1595 = vcombine.high %v692, %v696
      %v1597 = vunpack.c.l.s4 1983009808
      %v1598 = vunpack.c.0.s8 %v1597
      %v1599 = vlaneseq
      %v1600 = vshrl.u32 %v1599, 7
      %v1601 = vsub.s32 %v1598, %v1600
      %v1602 = vrot.slane %v1594, %v1601
      %v1604 = vunpack.c.l.s4 1983009808
      %v1605 = vunpack.c.0.s8 %v1604
      %v1606 = vlaneseq
      %v1607 = vshrl.u32 %v1606, 7
      %v1608 = vsub.s32 %v1605, %v1607
      %v1609 = vrot.slane %v1595, %v1608
      %v1610 = vcombine.low %v694, %v704
      %v1611 = vcombine.high %v694, %v704
      %v1613 = vunpack.c.l.s4 1983009808
      %v1614 = vunpack.c.0.s8 %v1613
      %v1615 = vlaneseq
      %v1616 = vshrl.u32 %v1615, 7
      %v1617 = vsub.s32 %v1614, %v1616
      %v1618 = vrot.slane %v1610, %v1617
      %v1620 = vunpack.c.l.s4 1983009808
      %v1621 = vunpack.c.0.s8 %v1620
      %v1622 = vlaneseq
      %v1623 = vshrl.u32 %v1622, 7
      %v1624 = vsub.s32 %v1621, %v1623
      %v1625 = vrot.slane %v1611, %v1624
      %v1626 = vcombine.low %v1570, %v1586
      %v1627 = vcombine.high %v1570, %v1586
      %v1629 = vunpack.c.l.s4 1934713408
      %v1630 = vunpack.c.0.s8 %v1629
      %v1631 = vlaneseq
      %v1632 = vshrl.u32 %v1631, 7
      %v1633 = vsub.s32 %v1630, %v1632
      %v1634 = vrot.slane %v1626, %v1633
      %v1636 = vunpack.c.l.s4 1934713408
      %v1637 = vunpack.c.0.s8 %v1636
      %v1638 = vlaneseq
      %v1639 = vshrl.u32 %v1638, 7
      %v1640 = vsub.s32 %v1637, %v1639
      %v1641 = vrot.slane %v1627, %v1640
      %v1642 = vcombine.low %v1577, %v1593
      %v1643 = vcombine.high %v1577, %v1593
      %v1645 = vunpack.c.l.s4 1934713408
      %v1646 = vunpack.c.0.s8 %v1645
      %v1647 = vlaneseq
      %v1648 = vshrl.u32 %v1647, 7
      %v1649 = vsub.s32 %v1646, %v1648
      %v1650 = vrot.slane %v1642, %v1649
      %v1652 = vunpack.c.l.s4 1934713408
      %v1653 = vunpack.c.0.s8 %v1652
      %v1654 = vlaneseq
      %v1655 = vshrl.u32 %v1654, 7
      %v1656 = vsub.s32 %v1653, %v1655
      %v1657 = vrot.slane %v1643, %v1656
      %v1658 = vcombine.low %v1602, %v1618
      %v1659 = vcombine.high %v1602, %v1618
      %v1661 = vunpack.c.l.s4 1934713408
      %v1662 = vunpack.c.0.s8 %v1661
      %v1663 = vlaneseq
      %v1664 = vshrl.u32 %v1663, 7
      %v1665 = vsub.s32 %v1662, %v1664
      %v1666 = vrot.slane %v1658, %v1665
      %v1668 = vunpack.c.l.s4 1934713408
      %v1669 = vunpack.c.0.s8 %v1668
      %v1670 = vlaneseq
      %v1671 = vshrl.u32 %v1670, 7
      %v1672 = vsub.s32 %v1669, %v1671
      %v1673 = vrot.slane %v1659, %v1672
      %v1674 = vcombine.low %v1609, %v1625
      %v1675 = vcombine.high %v1609, %v1625
      %v1677 = vunpack.c.l.s4 1934713408
      %v1678 = vunpack.c.0.s8 %v1677
      %v1679 = vlaneseq
      %v1680 = vshrl.u32 %v1679, 7
      %v1681 = vsub.s32 %v1678, %v1680
      %v1682 = vrot.slane %v1674, %v1681
      %v1684 = vunpack.c.l.s4 1934713408
      %v1685 = vunpack.c.0.s8 %v1684
      %v1686 = vlaneseq
      %v1687 = vshrl.u32 %v1686, 7
      %v1688 = vsub.s32 %v1685, %v1687
      %v1689 = vrot.slane %v1675, %v1688
      %v1690 = vcombine.low %v1634, %v1666
      %v1691 = vcombine.high %v1634, %v1666
      %v1692 = vcombine.low %v1641, %v1673
      %v1693 = vcombine.high %v1641, %v1673
      %v1694 = vcombine.low %v1650, %v1682
      %v1695 = vcombine.high %v1650, %v1682
      %v1696 = vcombine.low %v1657, %v1689
      %v1697 = vcombine.high %v1657, %v1689
      %v1698 = vcombine.low %v706, %v559
      %v1699 = vcombine.high %v706, %v559
      %v1701 = vunpack.c.l.s4 1983009808
      %v1702 = vunpack.c.0.s8 %v1701
      %v1703 = vlaneseq
      %v1704 = vshrl.u32 %v1703, 7
      %v1705 = vsub.s32 %v1702, %v1704
      %v1706 = vrot.slane %v1698, %v1705
      %v1708 = vunpack.c.l.s4 1983009808
      %v1709 = vunpack.c.0.s8 %v1708
      %v1710 = vlaneseq
      %v1711 = vshrl.u32 %v1710, 7
      %v1712 = vsub.s32 %v1709, %v1711
      %v1713 = vrot.slane %v1699, %v1712
      %v1714 = vcombine.low %v708, %v560
      %v1715 = vcombine.high %v708, %v560
      %v1717 = vunpack.c.l.s4 1983009808
      %v1718 = vunpack.c.0.s8 %v1717
      %v1719 = vlaneseq
      %v1720 = vshrl.u32 %v1719, 7
      %v1721 = vsub.s32 %v1718, %v1720
      %v1722 = vrot.slane %v1714, %v1721
      %v1724 = vunpack.c.l.s4 1983009808
      %v1725 = vunpack.c.0.s8 %v1724
      %v1726 = vlaneseq
      %v1727 = vshrl.u32 %v1726, 7
      %v1728 = vsub.s32 %v1725, %v1727
      %v1729 = vrot.slane %v1715, %v1728
      %v1730 = vcombine.low %v561, %v564
      %v1731 = vcombine.high %v561, %v564
      %v1733 = vunpack.c.l.s4 1983009808
      %v1734 = vunpack.c.0.s8 %v1733
      %v1735 = vlaneseq
      %v1736 = vshrl.u32 %v1735, 7
      %v1737 = vsub.s32 %v1734, %v1736
      %v1738 = vrot.slane %v1730, %v1737
      %v1740 = vunpack.c.l.s4 1983009808
      %v1741 = vunpack.c.0.s8 %v1740
      %v1742 = vlaneseq
      %v1743 = vshrl.u32 %v1742, 7
      %v1744 = vsub.s32 %v1741, %v1743
      %v1745 = vrot.slane %v1731, %v1744
      %v1746 = vcombine.low %v563, %v565
      %v1747 = vcombine.high %v563, %v565
      %v1749 = vunpack.c.l.s4 1983009808
      %v1750 = vunpack.c.0.s8 %v1749
      %v1751 = vlaneseq
      %v1752 = vshrl.u32 %v1751, 7
      %v1753 = vsub.s32 %v1750, %v1752
      %v1754 = vrot.slane %v1746, %v1753
      %v1756 = vunpack.c.l.s4 1983009808
      %v1757 = vunpack.c.0.s8 %v1756
      %v1758 = vlaneseq
      %v1759 = vshrl.u32 %v1758, 7
      %v1760 = vsub.s32 %v1757, %v1759
      %v1761 = vrot.slane %v1747, %v1760
      %v1762 = vcombine.low %v1706, %v1722
      %v1763 = vcombine.high %v1706, %v1722
      %v1765 = vunpack.c.l.s4 1934713408
      %v1766 = vunpack.c.0.s8 %v1765
      %v1767 = vlaneseq
      %v1768 = vshrl.u32 %v1767, 7
      %v1769 = vsub.s32 %v1766, %v1768
      %v1770 = vrot.slane %v1762, %v1769
      %v1772 = vunpack.c.l.s4 1934713408
      %v1773 = vunpack.c.0.s8 %v1772
      %v1774 = vlaneseq
      %v1775 = vshrl.u32 %v1774, 7
      %v1776 = vsub.s32 %v1773, %v1775
      %v1777 = vrot.slane %v1763, %v1776
      %v1778 = vcombine.low %v1713, %v1729
      %v1779 = vcombine.high %v1713, %v1729
      %v1781 = vunpack.c.l.s4 1934713408
      %v1782 = vunpack.c.0.s8 %v1781
      %v1783 = vlaneseq
      %v1784 = vshrl.u32 %v1783, 7
      %v1785 = vsub.s32 %v1782, %v1784
      %v1786 = vrot.slane %v1778, %v1785
      %v1788 = vunpack.c.l.s4 1934713408
      %v1789 = vunpack.c.0.s8 %v1788
      %v1790 = vlaneseq
      %v1791 = vshrl.u32 %v1790, 7
      %v1792 = vsub.s32 %v1789, %v1791
      %v1793 = vrot.slane %v1779, %v1792
      %v1794 = vcombine.low %v1738, %v1754
      %v1795 = vcombine.high %v1738, %v1754
      %v1797 = vunpack.c.l.s4 1934713408
      %v1798 = vunpack.c.0.s8 %v1797
      %v1799 = vlaneseq
      %v1800 = vshrl.u32 %v1799, 7
      %v1801 = vsub.s32 %v1798, %v1800
      %v1802 = vrot.slane %v1794, %v1801
      %v1804 = vunpack.c.l.s4 1934713408
      %v1805 = vunpack.c.0.s8 %v1804
      %v1806 = vlaneseq
      %v1807 = vshrl.u32 %v1806, 7
      %v1808 = vsub.s32 %v1805, %v1807
      %v1809 = vrot.slane %v1795, %v1808
      %v1810 = vcombine.low %v1745, %v1761
      %v1811 = vcombine.high %v1745, %v1761
      %v1813 = vunpack.c.l.s4 1934713408
      %v1814 = vunpack.c.0.s8 %v1813
      %v1815 = vlaneseq
      %v1816 = vshrl.u32 %v1815, 7
      %v1817 = vsub.s32 %v1814, %v1816
      %v1818 = vrot.slane %v1810, %v1817
      %v1820 = vunpack.c.l.s4 1934713408
      %v1821 = vunpack.c.0.s8 %v1820
      %v1822 = vlaneseq
      %v1823 = vshrl.u32 %v1822, 7
      %v1824 = vsub.s32 %v1821, %v1823
      %v1825 = vrot.slane %v1811, %v1824
      %v1826 = vcombine.low %v1770, %v1802
      %v1827 = vcombine.high %v1770, %v1802
      %v1828 = vcombine.low %v1777, %v1809
      %v1829 = vcombine.high %v1777, %v1809
      %v1830 = vcombine.low %v1786, %v1818
      %v1831 = vcombine.high %v1786, %v1818
      %v1832 = vcombine.low %v1793, %v1825
      %v1833 = vcombine.high %v1793, %v1825
      %v1834 = vcombine.low %v567, %v569
      %v1835 = vcombine.high %v567, %v569
      %v1837 = vunpack.c.l.s4 1983009808
      %v1838 = vunpack.c.0.s8 %v1837
      %v1839 = vlaneseq
      %v1840 = vshrl.u32 %v1839, 7
      %v1841 = vsub.s32 %v1838, %v1840
      %v1842 = vrot.slane %v1834, %v1841
      %v1844 = vunpack.c.l.s4 1983009808
      %v1845 = vunpack.c.0.s8 %v1844
      %v1846 = vlaneseq
      %v1847 = vshrl.u32 %v1846, 7
      %v1848 = vsub.s32 %v1845, %v1847
      %v1849 = vrot.slane %v1835, %v1848
      %v1850 = vcombine.low %v568, %v571
      %v1851 = vcombine.high %v568, %v571
      %v1853 = vunpack.c.l.s4 1983009808
      %v1854 = vunpack.c.0.s8 %v1853
      %v1855 = vlaneseq
      %v1856 = vshrl.u32 %v1855, 7
      %v1857 = vsub.s32 %v1854, %v1856
      %v1858 = vrot.slane %v1850, %v1857
      %v1860 = vunpack.c.l.s4 1983009808
      %v1861 = vunpack.c.0.s8 %v1860
      %v1862 = vlaneseq
      %v1863 = vshrl.u32 %v1862, 7
      %v1864 = vsub.s32 %v1861, %v1863
      %v1865 = vrot.slane %v1851, %v1864
      %v1866 = vcombine.low %v572, %v716
      %v1867 = vcombine.high %v572, %v716
      %v1869 = vunpack.c.l.s4 1983009808
      %v1870 = vunpack.c.0.s8 %v1869
      %v1871 = vlaneseq
      %v1872 = vshrl.u32 %v1871, 7
      %v1873 = vsub.s32 %v1870, %v1872
      %v1874 = vrot.slane %v1866, %v1873
      %v1876 = vunpack.c.l.s4 1983009808
      %v1877 = vunpack.c.0.s8 %v1876
      %v1878 = vlaneseq
      %v1879 = vshrl.u32 %v1878, 7
      %v1880 = vsub.s32 %v1877, %v1879
      %v1881 = vrot.slane %v1867, %v1880
      %v1882 = vcombine.low %v573, %v718
      %v1883 = vcombine.high %v573, %v718
      %v1885 = vunpack.c.l.s4 1983009808
      %v1886 = vunpack.c.0.s8 %v1885
      %v1887 = vlaneseq
      %v1888 = vshrl.u32 %v1887, 7
      %v1889 = vsub.s32 %v1886, %v1888
      %v1890 = vrot.slane %v1882, %v1889
      %v1892 = vunpack.c.l.s4 1983009808
      %v1893 = vunpack.c.0.s8 %v1892
      %v1894 = vlaneseq
      %v1895 = vshrl.u32 %v1894, 7
      %v1896 = vsub.s32 %v1893, %v1895
      %v1897 = vrot.slane %v1883, %v1896
      %v1898 = vcombine.low %v1842, %v1858
      %v1899 = vcombine.high %v1842, %v1858
      %v1901 = vunpack.c.l.s4 1934713408
      %v1902 = vunpack.c.0.s8 %v1901
      %v1903 = vlaneseq
      %v1904 = vshrl.u32 %v1903, 7
      %v1905 = vsub.s32 %v1902, %v1904
      %v1906 = vrot.slane %v1898, %v1905
      %v1908 = vunpack.c.l.s4 1934713408
      %v1909 = vunpack.c.0.s8 %v1908
      %v1910 = vlaneseq
      %v1911 = vshrl.u32 %v1910, 7
      %v1912 = vsub.s32 %v1909, %v1911
      %v1913 = vrot.slane %v1899, %v1912
      %v1914 = vcombine.low %v1849, %v1865
      %v1915 = vcombine.high %v1849, %v1865
      %v1917 = vunpack.c.l.s4 1934713408
      %v1918 = vunpack.c.0.s8 %v1917
      %v1919 = vlaneseq
      %v1920 = vshrl.u32 %v1919, 7
      %v1921 = vsub.s32 %v1918, %v1920
      %v1922 = vrot.slane %v1914, %v1921
      %v1924 = vunpack.c.l.s4 1934713408
      %v1925 = vunpack.c.0.s8 %v1924
      %v1926 = vlaneseq
      %v1927 = vshrl.u32 %v1926, 7
      %v1928 = vsub.s32 %v1925, %v1927
      %v1929 = vrot.slane %v1915, %v1928
      %v1930 = vcombine.low %v1874, %v1890
      %v1931 = vcombine.high %v1874, %v1890
      %v1933 = vunpack.c.l.s4 1934713408
      %v1934 = vunpack.c.0.s8 %v1933
      %v1935 = vlaneseq
      %v1936 = vshrl.u32 %v1935, 7
      %v1937 = vsub.s32 %v1934, %v1936
      %v1938 = vrot.slane %v1930, %v1937
      %v1940 = vunpack.c.l.s4 1934713408
      %v1941 = vunpack.c.0.s8 %v1940
      %v1942 = vlaneseq
      %v1943 = vshrl.u32 %v1942, 7
      %v1944 = vsub.s32 %v1941, %v1943
      %v1945 = vrot.slane %v1931, %v1944
      %v1946 = vcombine.low %v1881, %v1897
      %v1947 = vcombine.high %v1881, %v1897
      %v1949 = vunpack.c.l.s4 1934713408
      %v1950 = vunpack.c.0.s8 %v1949
      %v1951 = vlaneseq
      %v1952 = vshrl.u32 %v1951, 7
      %v1953 = vsub.s32 %v1950, %v1952
      %v1954 = vrot.slane %v1946, %v1953
      %v1956 = vunpack.c.l.s4 1934713408
      %v1957 = vunpack.c.0.s8 %v1956
      %v1958 = vlaneseq
      %v1959 = vshrl.u32 %v1958, 7
      %v1960 = vsub.s32 %v1957, %v1959
      %v1961 = vrot.slane %v1947, %v1960
      %v1962 = vcombine.low %v1906, %v1938
      %v1963 = vcombine.high %v1906, %v1938
      %v1964 = vcombine.low %v1913, %v1945
      %v1965 = vcombine.high %v1913, %v1945
      %v1966 = vcombine.low %v1922, %v1954
      %v1967 = vcombine.high %v1922, %v1954
      %v1968 = vcombine.low %v1929, %v1961
      %v1969 = vcombine.high %v1929, %v1961
      %v1970 = vcombine.low %v720, %v730
      %v1971 = vcombine.high %v720, %v730
      %v1973 = vunpack.c.l.s4 1983009808
      %v1974 = vunpack.c.0.s8 %v1973
      %v1975 = vlaneseq
      %v1976 = vshrl.u32 %v1975, 7
      %v1977 = vsub.s32 %v1974, %v1976
      %v1978 = vrot.slane %v1970, %v1977
      %v1980 = vunpack.c.l.s4 1983009808
      %v1981 = vunpack.c.0.s8 %v1980
      %v1982 = vlaneseq
      %v1983 = vshrl.u32 %v1982, 7
      %v1984 = vsub.s32 %v1981, %v1983
      %v1985 = vrot.slane %v1971, %v1984
      %v1986 = vcombine.low %v728, %v732
      %v1987 = vcombine.high %v728, %v732
      %v1989 = vunpack.c.l.s4 1983009808
      %v1990 = vunpack.c.0.s8 %v1989
      %v1991 = vlaneseq
      %v1992 = vshrl.u32 %v1991, 7
      %v1993 = vsub.s32 %v1990, %v1992
      %v1994 = vrot.slane %v1986, %v1993
      %v1996 = vunpack.c.l.s4 1983009808
      %v1997 = vunpack.c.0.s8 %v1996
      %v1998 = vlaneseq
      %v1999 = vshrl.u32 %v1998, 7
      %v2000 = vsub.s32 %v1997, %v1999
      %v2001 = vrot.slane %v1987, %v2000
      %v2002 = vcombine.low %v740, %v744
      %v2003 = vcombine.high %v740, %v744
      %v2005 = vunpack.c.l.s4 1983009808
      %v2006 = vunpack.c.0.s8 %v2005
      %v2007 = vlaneseq
      %v2008 = vshrl.u32 %v2007, 7
      %v2009 = vsub.s32 %v2006, %v2008
      %v2010 = vrot.slane %v2002, %v2009
      %v2012 = vunpack.c.l.s4 1983009808
      %v2013 = vunpack.c.0.s8 %v2012
      %v2014 = vlaneseq
      %v2015 = vshrl.u32 %v2014, 7
      %v2016 = vsub.s32 %v2013, %v2015
      %v2017 = vrot.slane %v2003, %v2016
      %v2018 = vcombine.low %v742, %v575
      %v2019 = vcombine.high %v742, %v575
      %v2021 = vunpack.c.l.s4 1983009808
      %v2022 = vunpack.c.0.s8 %v2021
      %v2023 = vlaneseq
      %v2024 = vshrl.u32 %v2023, 7
      %v2025 = vsub.s32 %v2022, %v2024
      %v2026 = vrot.slane %v2018, %v2025
      %v2028 = vunpack.c.l.s4 1983009808
      %v2029 = vunpack.c.0.s8 %v2028
      %v2030 = vlaneseq
      %v2031 = vshrl.u32 %v2030, 7
      %v2032 = vsub.s32 %v2029, %v2031
      %v2033 = vrot.slane %v2019, %v2032
      %v2034 = vcombine.low %v1978, %v1994
      %v2035 = vcombine.high %v1978, %v1994
      %v2037 = vunpack.c.l.s4 1934713408
      %v2038 = vunpack.c.0.s8 %v2037
      %v2039 = vlaneseq
      %v2040 = vshrl.u32 %v2039, 7
      %v2041 = vsub.s32 %v2038, %v2040
      %v2042 = vrot.slane %v2034, %v2041
      %v2044 = vunpack.c.l.s4 1934713408
      %v2045 = vunpack.c.0.s8 %v2044
      %v2046 = vlaneseq
      %v2047 = vshrl.u32 %v2046, 7
      %v2048 = vsub.s32 %v2045, %v2047
      %v2049 = vrot.slane %v2035, %v2048
      %v2050 = vcombine.low %v1985, %v2001
      %v2051 = vcombine.high %v1985, %v2001
      %v2053 = vunpack.c.l.s4 1934713408
      %v2054 = vunpack.c.0.s8 %v2053
      %v2055 = vlaneseq
      %v2056 = vshrl.u32 %v2055, 7
      %v2057 = vsub.s32 %v2054, %v2056
      %v2058 = vrot.slane %v2050, %v2057
      %v2060 = vunpack.c.l.s4 1934713408
      %v2061 = vunpack.c.0.s8 %v2060
      %v2062 = vlaneseq
      %v2063 = vshrl.u32 %v2062, 7
      %v2064 = vsub.s32 %v2061, %v2063
      %v2065 = vrot.slane %v2051, %v2064
      %v2066 = vcombine.low %v2010, %v2026
      %v2067 = vcombine.high %v2010, %v2026
      %v2069 = vunpack.c.l.s4 1934713408
      %v2070 = vunpack.c.0.s8 %v2069
      %v2071 = vlaneseq
      %v2072 = vshrl.u32 %v2071, 7
      %v2073 = vsub.s32 %v2070, %v2072
      %v2074 = vrot.slane %v2066, %v2073
      %v2076 = vunpack.c.l.s4 1934713408
      %v2077 = vunpack.c.0.s8 %v2076
      %v2078 = vlaneseq
      %v2079 = vshrl.u32 %v2078, 7
      %v2080 = vsub.s32 %v2077, %v2079
      %v2081 = vrot.slane %v2067, %v2080
      %v2082 = vcombine.low %v2017, %v2033
      %v2083 = vcombine.high %v2017, %v2033
      %v2085 = vunpack.c.l.s4 1934713408
      %v2086 = vunpack.c.0.s8 %v2085
      %v2087 = vlaneseq
      %v2088 = vshrl.u32 %v2087, 7
      %v2089 = vsub.s32 %v2086, %v2088
      %v2090 = vrot.slane %v2082, %v2089
      %v2092 = vunpack.c.l.s4 1934713408
      %v2093 = vunpack.c.0.s8 %v2092
      %v2094 = vlaneseq
      %v2095 = vshrl.u32 %v2094, 7
      %v2096 = vsub.s32 %v2093, %v2095
      %v2097 = vrot.slane %v2083, %v2096
      %v2098 = vcombine.low %v2042, %v2074
      %v2099 = vcombine.high %v2042, %v2074
      %v2100 = vcombine.low %v2049, %v2081
      %v2101 = vcombine.high %v2049, %v2081
      %v2102 = vcombine.low %v2058, %v2090
      %v2103 = vcombine.high %v2058, %v2090
      %v2104 = vcombine.low %v2065, %v2097
      %v2105 = vcombine.high %v2065, %v2097
      %v2106 = vcombine.low %v576, %v579
      %v2107 = vcombine.high %v576, %v579
      %v2109 = vunpack.c.l.s4 1983009808
      %v2110 = vunpack.c.0.s8 %v2109
      %v2111 = vlaneseq
      %v2112 = vshrl.u32 %v2111, 7
      %v2113 = vsub.s32 %v2110, %v2112
      %v2114 = vrot.slane %v2106, %v2113
      %v2116 = vunpack.c.l.s4 1983009808
      %v2117 = vunpack.c.0.s8 %v2116
      %v2118 = vlaneseq
      %v2119 = vshrl.u32 %v2118, 7
      %v2120 = vsub.s32 %v2117, %v2119
      %v2121 = vrot.slane %v2107, %v2120
      %v2122 = vcombine.low %v577, %v580
      %v2123 = vcombine.high %v577, %v580
      %v2125 = vunpack.c.l.s4 1983009808
      %v2126 = vunpack.c.0.s8 %v2125
      %v2127 = vlaneseq
      %v2128 = vshrl.u32 %v2127, 7
      %v2129 = vsub.s32 %v2126, %v2128
      %v2130 = vrot.slane %v2122, %v2129
      %v2132 = vunpack.c.l.s4 1983009808
      %v2133 = vunpack.c.0.s8 %v2132
      %v2134 = vlaneseq
      %v2135 = vshrl.u32 %v2134, 7
      %v2136 = vsub.s32 %v2133, %v2135
      %v2137 = vrot.slane %v2123, %v2136
      %v2138 = vcombine.low %v581, %v584
      %v2139 = vcombine.high %v581, %v584
      %v2141 = vunpack.c.l.s4 1983009808
      %v2142 = vunpack.c.0.s8 %v2141
      %v2143 = vlaneseq
      %v2144 = vshrl.u32 %v2143, 7
      %v2145 = vsub.s32 %v2142, %v2144
      %v2146 = vrot.slane %v2138, %v2145
      %v2148 = vunpack.c.l.s4 1983009808
      %v2149 = vunpack.c.0.s8 %v2148
      %v2150 = vlaneseq
      %v2151 = vshrl.u32 %v2150, 7
      %v2152 = vsub.s32 %v2149, %v2151
      %v2153 = vrot.slane %v2139, %v2152
      %v2154 = vcombine.low %v583, %v585
      %v2155 = vcombine.high %v583, %v585
      %v2157 = vunpack.c.l.s4 1983009808
      %v2158 = vunpack.c.0.s8 %v2157
      %v2159 = vlaneseq
      %v2160 = vshrl.u32 %v2159, 7
      %v2161 = vsub.s32 %v2158, %v2160
      %v2162 = vrot.slane %v2154, %v2161
      %v2164 = vunpack.c.l.s4 1983009808
      %v2165 = vunpack.c.0.s8 %v2164
      %v2166 = vlaneseq
      %v2167 = vshrl.u32 %v2166, 7
      %v2168 = vsub.s32 %v2165, %v2167
      %v2169 = vrot.slane %v2155, %v2168
      %v2170 = vcombine.low %v2114, %v2130
      %v2171 = vcombine.high %v2114, %v2130
      %v2173 = vunpack.c.l.s4 1934713408
      %v2174 = vunpack.c.0.s8 %v2173
      %v2175 = vlaneseq
      %v2176 = vshrl.u32 %v2175, 7
      %v2177 = vsub.s32 %v2174, %v2176
      %v2178 = vrot.slane %v2170, %v2177
      %v2180 = vunpack.c.l.s4 1934713408
      %v2181 = vunpack.c.0.s8 %v2180
      %v2182 = vlaneseq
      %v2183 = vshrl.u32 %v2182, 7
      %v2184 = vsub.s32 %v2181, %v2183
      %v2185 = vrot.slane %v2171, %v2184
      %v2186 = vcombine.low %v2121, %v2137
      %v2187 = vcombine.high %v2121, %v2137
      %v2189 = vunpack.c.l.s4 1934713408
      %v2190 = vunpack.c.0.s8 %v2189
      %v2191 = vlaneseq
      %v2192 = vshrl.u32 %v2191, 7
      %v2193 = vsub.s32 %v2190, %v2192
      %v2194 = vrot.slane %v2186, %v2193
      %v2196 = vunpack.c.l.s4 1934713408
      %v2197 = vunpack.c.0.s8 %v2196
      %v2198 = vlaneseq
      %v2199 = vshrl.u32 %v2198, 7
      %v2200 = vsub.s32 %v2197, %v2199
      %v2201 = vrot.slane %v2187, %v2200
      %v2202 = vcombine.low %v2146, %v2162
      %v2203 = vcombine.high %v2146, %v2162
      %v2205 = vunpack.c.l.s4 1934713408
      %v2206 = vunpack.c.0.s8 %v2205
      %v2207 = vlaneseq
      %v2208 = vshrl.u32 %v2207, 7
      %v2209 = vsub.s32 %v2206, %v2208
      %v2210 = vrot.slane %v2202, %v2209
      %v2212 = vunpack.c.l.s4 1934713408
      %v2213 = vunpack.c.0.s8 %v2212
      %v2214 = vlaneseq
      %v2215 = vshrl.u32 %v2214, 7
      %v2216 = vsub.s32 %v2213, %v2215
      %v2217 = vrot.slane %v2203, %v2216
      %v2218 = vcombine.low %v2153, %v2169
      %v2219 = vcombine.high %v2153, %v2169
      %v2221 = vunpack.c.l.s4 1934713408
      %v2222 = vunpack.c.0.s8 %v2221
      %v2223 = vlaneseq
      %v2224 = vshrl.u32 %v2223, 7
      %v2225 = vsub.s32 %v2222, %v2224
      %v2226 = vrot.slane %v2218, %v2225
      %v2228 = vunpack.c.l.s4 1934713408
      %v2229 = vunpack.c.0.s8 %v2228
      %v2230 = vlaneseq
      %v2231 = vshrl.u32 %v2230, 7
      %v2232 = vsub.s32 %v2229, %v2231
      %v2233 = vrot.slane %v2219, %v2232
      %v2234 = vcombine.low %v2178, %v2210
      %v2235 = vcombine.high %v2178, %v2210
      %v2236 = vcombine.low %v2185, %v2217
      %v2237 = vcombine.high %v2185, %v2217
      %v2238 = vcombine.low %v2194, %v2226
      %v2239 = vcombine.high %v2194, %v2226
      %v2240 = vcombine.low %v2201, %v2233
      %v2241 = vcombine.high %v2201, %v2233
      %v2242 = vcombine.low %v587, %v589
      %v2243 = vcombine.high %v587, %v589
      %v2245 = vunpack.c.l.s4 1983009808
      %v2246 = vunpack.c.0.s8 %v2245
      %v2247 = vlaneseq
      %v2248 = vshrl.u32 %v2247, 7
      %v2249 = vsub.s32 %v2246, %v2248
      %v2250 = vrot.slane %v2242, %v2249
      %v2252 = vunpack.c.l.s4 1983009808
      %v2253 = vunpack.c.0.s8 %v2252
      %v2254 = vlaneseq
      %v2255 = vshrl.u32 %v2254, 7
      %v2256 = vsub.s32 %v2253, %v2255
      %v2257 = vrot.slane %v2243, %v2256
      %v2258 = vcombine.low %v588, %v752
      %v2259 = vcombine.high %v588, %v752
      %v2261 = vunpack.c.l.s4 1983009808
      %v2262 = vunpack.c.0.s8 %v2261
      %v2263 = vlaneseq
      %v2264 = vshrl.u32 %v2263, 7
      %v2265 = vsub.s32 %v2262, %v2264
      %v2266 = vrot.slane %v2258, %v2265
      %v2268 = vunpack.c.l.s4 1983009808
      %v2269 = vunpack.c.0.s8 %v2268
      %v2270 = vlaneseq
      %v2271 = vshrl.u32 %v2270, 7
      %v2272 = vsub.s32 %v2269, %v2271
      %v2273 = vrot.slane %v2259, %v2272
      %v2274 = vcombine.low %v754, %v764
      %v2275 = vcombine.high %v754, %v764
      %v2277 = vunpack.c.l.s4 1983009808
      %v2278 = vunpack.c.0.s8 %v2277
      %v2279 = vlaneseq
      %v2280 = vshrl.u32 %v2279, 7
      %v2281 = vsub.s32 %v2278, %v2280
      %v2282 = vrot.slane %v2274, %v2281
      %v2284 = vunpack.c.l.s4 1983009808
      %v2285 = vunpack.c.0.s8 %v2284
      %v2286 = vlaneseq
      %v2287 = vshrl.u32 %v2286, 7
      %v2288 = vsub.s32 %v2285, %v2287
      %v2289 = vrot.slane %v2275, %v2288
      %v2290 = vcombine.low %v756, %v766
      %v2291 = vcombine.high %v756, %v766
      %v2293 = vunpack.c.l.s4 1983009808
      %v2294 = vunpack.c.0.s8 %v2293
      %v2295 = vlaneseq
      %v2296 = vshrl.u32 %v2295, 7
      %v2297 = vsub.s32 %v2294, %v2296
      %v2298 = vrot.slane %v2290, %v2297
      %v2300 = vunpack.c.l.s4 1983009808
      %v2301 = vunpack.c.0.s8 %v2300
      %v2302 = vlaneseq
      %v2303 = vshrl.u32 %v2302, 7
      %v2304 = vsub.s32 %v2301, %v2303
      %v2305 = vrot.slane %v2291, %v2304
      %v2306 = vcombine.low %v2250, %v2266
      %v2307 = vcombine.high %v2250, %v2266
      %v2309 = vunpack.c.l.s4 1934713408
      %v2310 = vunpack.c.0.s8 %v2309
      %v2311 = vlaneseq
      %v2312 = vshrl.u32 %v2311, 7
      %v2313 = vsub.s32 %v2310, %v2312
      %v2314 = vrot.slane %v2306, %v2313
      %v2316 = vunpack.c.l.s4 1934713408
      %v2317 = vunpack.c.0.s8 %v2316
      %v2318 = vlaneseq
      %v2319 = vshrl.u32 %v2318, 7
      %v2320 = vsub.s32 %v2317, %v2319
      %v2321 = vrot.slane %v2307, %v2320
      %v2322 = vcombine.low %v2257, %v2273
      %v2323 = vcombine.high %v2257, %v2273
      %v2325 = vunpack.c.l.s4 1934713408
      %v2326 = vunpack.c.0.s8 %v2325
      %v2327 = vlaneseq
      %v2328 = vshrl.u32 %v2327, 7
      %v2329 = vsub.s32 %v2326, %v2328
      %v2330 = vrot.slane %v2322, %v2329
      %v2332 = vunpack.c.l.s4 1934713408
      %v2333 = vunpack.c.0.s8 %v2332
      %v2334 = vlaneseq
      %v2335 = vshrl.u32 %v2334, 7
      %v2336 = vsub.s32 %v2333, %v2335
      %v2337 = vrot.slane %v2323, %v2336
      %v2338 = vcombine.low %v2282, %v2298
      %v2339 = vcombine.high %v2282, %v2298
      %v2341 = vunpack.c.l.s4 1934713408
      %v2342 = vunpack.c.0.s8 %v2341
      %v2343 = vlaneseq
      %v2344 = vshrl.u32 %v2343, 7
      %v2345 = vsub.s32 %v2342, %v2344
      %v2346 = vrot.slane %v2338, %v2345
      %v2348 = vunpack.c.l.s4 1934713408
      %v2349 = vunpack.c.0.s8 %v2348
      %v2350 = vlaneseq
      %v2351 = vshrl.u32 %v2350, 7
      %v2352 = vsub.s32 %v2349, %v2351
      %v2353 = vrot.slane %v2339, %v2352
      %v2354 = vcombine.low %v2289, %v2305
      %v2355 = vcombine.high %v2289, %v2305
      %v2357 = vunpack.c.l.s4 1934713408
      %v2358 = vunpack.c.0.s8 %v2357
      %v2359 = vlaneseq
      %v2360 = vshrl.u32 %v2359, 7
      %v2361 = vsub.s32 %v2358, %v2360
      %v2362 = vrot.slane %v2354, %v2361
      %v2364 = vunpack.c.l.s4 1934713408
      %v2365 = vunpack.c.0.s8 %v2364
      %v2366 = vlaneseq
      %v2367 = vshrl.u32 %v2366, 7
      %v2368 = vsub.s32 %v2365, %v2367
      %v2369 = vrot.slane %v2355, %v2368
      %v2370 = vcombine.low %v2314, %v2346
      %v2371 = vcombine.high %v2314, %v2346
      %v2372 = vcombine.low %v2321, %v2353
      %v2373 = vcombine.high %v2321, %v2353
      %v2374 = vcombine.low %v2330, %v2362
      %v2375 = vcombine.high %v2330, %v2362
      %v2376 = vcombine.low %v2337, %v2369
      %v2377 = vcombine.high %v2337, %v2369
      %v2378 = vcombine.low %v768, %v778
      %v2379 = vcombine.high %v768, %v778
      %v2381 = vunpack.c.l.s4 1983009808
      %v2382 = vunpack.c.0.s8 %v2381
      %v2383 = vlaneseq
      %v2384 = vshrl.u32 %v2383, 7
      %v2385 = vsub.s32 %v2382, %v2384
      %v2386 = vrot.slane %v2378, %v2385
      %v2388 = vunpack.c.l.s4 1983009808
      %v2389 = vunpack.c.0.s8 %v2388
      %v2390 = vlaneseq
      %v2391 = vshrl.u32 %v2390, 7
      %v2392 = vsub.s32 %v2389, %v2391
      %v2393 = vrot.slane %v2379, %v2392
      %v2394 = vcombine.low %v776, %v780
      %v2395 = vcombine.high %v776, %v780
      %v2397 = vunpack.c.l.s4 1983009808
      %v2398 = vunpack.c.0.s8 %v2397
      %v2399 = vlaneseq
      %v2400 = vshrl.u32 %v2399, 7
      %v2401 = vsub.s32 %v2398, %v2400
      %v2402 = vrot.slane %v2394, %v2401
      %v2404 = vunpack.c.l.s4 1983009808
      %v2405 = vunpack.c.0.s8 %v2404
      %v2406 = vlaneseq
      %v2407 = vshrl.u32 %v2406, 7
      %v2408 = vsub.s32 %v2405, %v2407
      %v2409 = vrot.slane %v2395, %v2408
      %v2410 = vcombine.low %v592, %v594
      %v2411 = vcombine.high %v592, %v594
      %v2413 = vunpack.c.l.s4 1983009808
      %v2414 = vunpack.c.0.s8 %v2413
      %v2415 = vlaneseq
      %v2416 = vshrl.u32 %v2415, 7
      %v2417 = vsub.s32 %v2414, %v2416
      %v2418 = vrot.slane %v2410, %v2417
      %v2420 = vunpack.c.l.s4 1983009808
      %v2421 = vunpack.c.0.s8 %v2420
      %v2422 = vlaneseq
      %v2423 = vshrl.u32 %v2422, 7
      %v2424 = vsub.s32 %v2421, %v2423
      %v2425 = vrot.slane %v2411, %v2424
      %v2426 = vcombine.low %v593, %v596
      %v2427 = vcombine.high %v593, %v596
      %v2429 = vunpack.c.l.s4 1983009808
      %v2430 = vunpack.c.0.s8 %v2429
      %v2431 = vlaneseq
      %v2432 = vshrl.u32 %v2431, 7
      %v2433 = vsub.s32 %v2430, %v2432
      %v2434 = vrot.slane %v2426, %v2433
      %v2436 = vunpack.c.l.s4 1983009808
      %v2437 = vunpack.c.0.s8 %v2436
      %v2438 = vlaneseq
      %v2439 = vshrl.u32 %v2438, 7
      %v2440 = vsub.s32 %v2437, %v2439
      %v2441 = vrot.slane %v2427, %v2440
      %v2442 = vcombine.low %v2386, %v2402
      %v2443 = vcombine.high %v2386, %v2402
      %v2445 = vunpack.c.l.s4 1934713408
      %v2446 = vunpack.c.0.s8 %v2445
      %v2447 = vlaneseq
      %v2448 = vshrl.u32 %v2447, 7
      %v2449 = vsub.s32 %v2446, %v2448
      %v2450 = vrot.slane %v2442, %v2449
      %v2452 = vunpack.c.l.s4 1934713408
      %v2453 = vunpack.c.0.s8 %v2452
      %v2454 = vlaneseq
      %v2455 = vshrl.u32 %v2454, 7
      %v2456 = vsub.s32 %v2453, %v2455
      %v2457 = vrot.slane %v2443, %v2456
      %v2458 = vcombine.low %v2393, %v2409
      %v2459 = vcombine.high %v2393, %v2409
      %v2461 = vunpack.c.l.s4 1934713408
      %v2462 = vunpack.c.0.s8 %v2461
      %v2463 = vlaneseq
      %v2464 = vshrl.u32 %v2463, 7
      %v2465 = vsub.s32 %v2462, %v2464
      %v2466 = vrot.slane %v2458, %v2465
      %v2468 = vunpack.c.l.s4 1934713408
      %v2469 = vunpack.c.0.s8 %v2468
      %v2470 = vlaneseq
      %v2471 = vshrl.u32 %v2470, 7
      %v2472 = vsub.s32 %v2469, %v2471
      %v2473 = vrot.slane %v2459, %v2472
      %v2474 = vcombine.low %v2418, %v2434
      %v2475 = vcombine.high %v2418, %v2434
      %v2477 = vunpack.c.l.s4 1934713408
      %v2478 = vunpack.c.0.s8 %v2477
      %v2479 = vlaneseq
      %v2480 = vshrl.u32 %v2479, 7
      %v2481 = vsub.s32 %v2478, %v2480
      %v2482 = vrot.slane %v2474, %v2481
      %v2484 = vunpack.c.l.s4 1934713408
      %v2485 = vunpack.c.0.s8 %v2484
      %v2486 = vlaneseq
      %v2487 = vshrl.u32 %v2486, 7
      %v2488 = vsub.s32 %v2485, %v2487
      %v2489 = vrot.slane %v2475, %v2488
      %v2490 = vcombine.low %v2425, %v2441
      %v2491 = vcombine.high %v2425, %v2441
      %v2493 = vunpack.c.l.s4 1934713408
      %v2494 = vunpack.c.0.s8 %v2493
      %v2495 = vlaneseq
      %v2496 = vshrl.u32 %v2495, 7
      %v2497 = vsub.s32 %v2494, %v2496
      %v2498 = vrot.slane %v2490, %v2497
      %v2500 = vunpack.c.l.s4 1934713408
      %v2501 = vunpack.c.0.s8 %v2500
      %v2502 = vlaneseq
      %v2503 = vshrl.u32 %v2502, 7
      %v2504 = vsub.s32 %v2501, %v2503
      %v2505 = vrot.slane %v2491, %v2504
      %v2506 = vcombine.low %v2450, %v2482
      %v2507 = vcombine.high %v2450, %v2482
      %v2508 = vcombine.low %v2457, %v2489
      %v2509 = vcombine.high %v2457, %v2489
      %v2510 = vcombine.low %v2466, %v2498
      %v2511 = vcombine.high %v2466, %v2498
      %v2512 = vcombine.low %v2473, %v2505
      %v2513 = vcombine.high %v2473, %v2505
      %v2514 = vcombine.low %v597, %v600
      %v2515 = vcombine.high %v597, %v600
      %v2517 = vunpack.c.l.s4 1983009808
      %v2518 = vunpack.c.0.s8 %v2517
      %v2519 = vlaneseq
      %v2520 = vshrl.u32 %v2519, 7
      %v2521 = vsub.s32 %v2518, %v2520
      %v2522 = vrot.slane %v2514, %v2521
      %v2524 = vunpack.c.l.s4 1983009808
      %v2525 = vunpack.c.0.s8 %v2524
      %v2526 = vlaneseq
      %v2527 = vshrl.u32 %v2526, 7
      %v2528 = vsub.s32 %v2525, %v2527
      %v2529 = vrot.slane %v2515, %v2528
      %v2530 = vcombine.low %v598, %v601
      %v2531 = vcombine.high %v598, %v601
      %v2533 = vunpack.c.l.s4 1983009808
      %v2534 = vunpack.c.0.s8 %v2533
      %v2535 = vlaneseq
      %v2536 = vshrl.u32 %v2535, 7
      %v2537 = vsub.s32 %v2534, %v2536
      %v2538 = vrot.slane %v2530, %v2537
      %v2540 = vunpack.c.l.s4 1983009808
      %v2541 = vunpack.c.0.s8 %v2540
      %v2542 = vlaneseq
      %v2543 = vshrl.u32 %v2542, 7
      %v2544 = vsub.s32 %v2541, %v2543
      %v2545 = vrot.slane %v2531, %v2544
      %v2546 = vcombine.low %v602, %v605
      %v2547 = vcombine.high %v602, %v605
      %v2549 = vunpack.c.l.s4 1983009808
      %v2550 = vunpack.c.0.s8 %v2549
      %v2551 = vlaneseq
      %v2552 = vshrl.u32 %v2551, 7
      %v2553 = vsub.s32 %v2550, %v2552
      %v2554 = vrot.slane %v2546, %v2553
      %v2556 = vunpack.c.l.s4 1983009808
      %v2557 = vunpack.c.0.s8 %v2556
      %v2558 = vlaneseq
      %v2559 = vshrl.u32 %v2558, 7
      %v2560 = vsub.s32 %v2557, %v2559
      %v2561 = vrot.slane %v2547, %v2560
      %v2562 = vcombine.low %v604, %v606
      %v2563 = vcombine.high %v604, %v606
      %v2565 = vunpack.c.l.s4 1983009808
      %v2566 = vunpack.c.0.s8 %v2565
      %v2567 = vlaneseq
      %v2568 = vshrl.u32 %v2567, 7
      %v2569 = vsub.s32 %v2566, %v2568
      %v2570 = vrot.slane %v2562, %v2569
      %v2572 = vunpack.c.l.s4 1983009808
      %v2573 = vunpack.c.0.s8 %v2572
      %v2574 = vlaneseq
      %v2575 = vshrl.u32 %v2574, 7
      %v2576 = vsub.s32 %v2573, %v2575
      %v2577 = vrot.slane %v2563, %v2576
      %v2578 = vcombine.low %v2522, %v2538
      %v2579 = vcombine.high %v2522, %v2538
      %v2581 = vunpack.c.l.s4 1934713408
      %v2582 = vunpack.c.0.s8 %v2581
      %v2583 = vlaneseq
      %v2584 = vshrl.u32 %v2583, 7
      %v2585 = vsub.s32 %v2582, %v2584
      %v2586 = vrot.slane %v2578, %v2585
      %v2588 = vunpack.c.l.s4 1934713408
      %v2589 = vunpack.c.0.s8 %v2588
      %v2590 = vlaneseq
      %v2591 = vshrl.u32 %v2590, 7
      %v2592 = vsub.s32 %v2589, %v2591
      %v2593 = vrot.slane %v2579, %v2592
      %v2594 = vcombine.low %v2529, %v2545
      %v2595 = vcombine.high %v2529, %v2545
      %v2597 = vunpack.c.l.s4 1934713408
      %v2598 = vunpack.c.0.s8 %v2597
      %v2599 = vlaneseq
      %v2600 = vshrl.u32 %v2599, 7
      %v2601 = vsub.s32 %v2598, %v2600
      %v2602 = vrot.slane %v2594, %v2601
      %v2604 = vunpack.c.l.s4 1934713408
      %v2605 = vunpack.c.0.s8 %v2604
      %v2606 = vlaneseq
      %v2607 = vshrl.u32 %v2606, 7
      %v2608 = vsub.s32 %v2605, %v2607
      %v2609 = vrot.slane %v2595, %v2608
      %v2610 = vcombine.low %v2554, %v2570
      %v2611 = vcombine.high %v2554, %v2570
      %v2613 = vunpack.c.l.s4 1934713408
      %v2614 = vunpack.c.0.s8 %v2613
      %v2615 = vlaneseq
      %v2616 = vshrl.u32 %v2615, 7
      %v2617 = vsub.s32 %v2614, %v2616
      %v2618 = vrot.slane %v2610, %v2617
      %v2620 = vunpack.c.l.s4 1934713408
      %v2621 = vunpack.c.0.s8 %v2620
      %v2622 = vlaneseq
      %v2623 = vshrl.u32 %v2622, 7
      %v2624 = vsub.s32 %v2621, %v2623
      %v2625 = vrot.slane %v2611, %v2624
      %v2626 = vcombine.low %v2561, %v2577
      %v2627 = vcombine.high %v2561, %v2577
      %v2629 = vunpack.c.l.s4 1934713408
      %v2630 = vunpack.c.0.s8 %v2629
      %v2631 = vlaneseq
      %v2632 = vshrl.u32 %v2631, 7
      %v2633 = vsub.s32 %v2630, %v2632
      %v2634 = vrot.slane %v2626, %v2633
      %v2636 = vunpack.c.l.s4 1934713408
      %v2637 = vunpack.c.0.s8 %v2636
      %v2638 = vlaneseq
      %v2639 = vshrl.u32 %v2638, 7
      %v2640 = vsub.s32 %v2637, %v2639
      %v2641 = vrot.slane %v2627, %v2640
      %v2642 = vcombine.low %v2586, %v2618
      %v2643 = vcombine.high %v2586, %v2618
      %v2644 = vcombine.low %v2593, %v2625
      %v2645 = vcombine.high %v2593, %v2625
      %v2646 = vcombine.low %v2602, %v2634
      %v2647 = vcombine.high %v2602, %v2634
      %v2648 = vcombine.low %v2609, %v2641
      %v2649 = vcombine.high %v2609, %v2641
      %v2650 = vcombine.low %v866, %v870
      %v2651 = vcombine.high %v866, %v870
      %v2653 = vunpack.c.l.s4 1983009808
      %v2654 = vunpack.c.0.s8 %v2653
      %v2655 = vlaneseq
      %v2656 = vshrl.u32 %v2655, 7
      %v2657 = vsub.s32 %v2654, %v2656
      %v2658 = vrot.slane %v2650, %v2657
      %v2660 = vunpack.c.l.s4 1983009808
      %v2661 = vunpack.c.0.s8 %v2660
      %v2662 = vlaneseq
      %v2663 = vshrl.u32 %v2662, 7
      %v2664 = vsub.s32 %v2661, %v2663
      %v2665 = vrot.slane %v2651, %v2664
      %v2666 = vcombine.low %v868, %v872
      %v2667 = vcombine.high %v868, %v872
      %v2669 = vunpack.c.l.s4 1983009808
      %v2670 = vunpack.c.0.s8 %v2669
      %v2671 = vlaneseq
      %v2672 = vshrl.u32 %v2671, 7
      %v2673 = vsub.s32 %v2670, %v2672
      %v2674 = vrot.slane %v2666, %v2673
      %v2676 = vunpack.c.l.s4 1983009808
      %v2677 = vunpack.c.0.s8 %v2676
      %v2678 = vlaneseq
      %v2679 = vshrl.u32 %v2678, 7
      %v2680 = vsub.s32 %v2677, %v2679
      %v2681 = vrot.slane %v2667, %v2680
      %v2682 = vcombine.low %v874, %v878
      %v2683 = vcombine.high %v874, %v878
      %v2685 = vunpack.c.l.s4 1983009808
      %v2686 = vunpack.c.0.s8 %v2685
      %v2687 = vlaneseq
      %v2688 = vshrl.u32 %v2687, 7
      %v2689 = vsub.s32 %v2686, %v2688
      %v2690 = vrot.slane %v2682, %v2689
      %v2692 = vunpack.c.l.s4 1983009808
      %v2693 = vunpack.c.0.s8 %v2692
      %v2694 = vlaneseq
      %v2695 = vshrl.u32 %v2694, 7
      %v2696 = vsub.s32 %v2693, %v2695
      %v2697 = vrot.slane %v2683, %v2696
      %v2698 = vcombine.low %v876, %v880
      %v2699 = vcombine.high %v876, %v880
      %v2701 = vunpack.c.l.s4 1983009808
      %v2702 = vunpack.c.0.s8 %v2701
      %v2703 = vlaneseq
      %v2704 = vshrl.u32 %v2703, 7
      %v2705 = vsub.s32 %v2702, %v2704
      %v2706 = vrot.slane %v2698, %v2705
      %v2708 = vunpack.c.l.s4 1983009808
      %v2709 = vunpack.c.0.s8 %v2708
      %v2710 = vlaneseq
      %v2711 = vshrl.u32 %v2710, 7
      %v2712 = vsub.s32 %v2709, %v2711
      %v2713 = vrot.slane %v2699, %v2712
      %v2714 = vcombine.low %v2658, %v2674
      %v2715 = vcombine.high %v2658, %v2674
      %v2717 = vunpack.c.l.s4 1934713408
      %v2718 = vunpack.c.0.s8 %v2717
      %v2719 = vlaneseq
      %v2720 = vshrl.u32 %v2719, 7
      %v2721 = vsub.s32 %v2718, %v2720
      %v2722 = vrot.slane %v2714, %v2721
      %v2724 = vunpack.c.l.s4 1934713408
      %v2725 = vunpack.c.0.s8 %v2724
      %v2726 = vlaneseq
      %v2727 = vshrl.u32 %v2726, 7
      %v2728 = vsub.s32 %v2725, %v2727
      %v2729 = vrot.slane %v2715, %v2728
      %v2730 = vcombine.low %v2665, %v2681
      %v2731 = vcombine.high %v2665, %v2681
      %v2733 = vunpack.c.l.s4 1934713408
      %v2734 = vunpack.c.0.s8 %v2733
      %v2735 = vlaneseq
      %v2736 = vshrl.u32 %v2735, 7
      %v2737 = vsub.s32 %v2734, %v2736
      %v2738 = vrot.slane %v2730, %v2737
      %v2740 = vunpack.c.l.s4 1934713408
      %v2741 = vunpack.c.0.s8 %v2740
      %v2742 = vlaneseq
      %v2743 = vshrl.u32 %v2742, 7
      %v2744 = vsub.s32 %v2741, %v2743
      %v2745 = vrot.slane %v2731, %v2744
      %v2746 = vcombine.low %v2690, %v2706
      %v2747 = vcombine.high %v2690, %v2706
      %v2749 = vunpack.c.l.s4 1934713408
      %v2750 = vunpack.c.0.s8 %v2749
      %v2751 = vlaneseq
      %v2752 = vshrl.u32 %v2751, 7
      %v2753 = vsub.s32 %v2750, %v2752
      %v2754 = vrot.slane %v2746, %v2753
      %v2756 = vunpack.c.l.s4 1934713408
      %v2757 = vunpack.c.0.s8 %v2756
      %v2758 = vlaneseq
      %v2759 = vshrl.u32 %v2758, 7
      %v2760 = vsub.s32 %v2757, %v2759
      %v2761 = vrot.slane %v2747, %v2760
      %v2762 = vcombine.low %v2697, %v2713
      %v2763 = vcombine.high %v2697, %v2713
      %v2765 = vunpack.c.l.s4 1934713408
      %v2766 = vunpack.c.0.s8 %v2765
      %v2767 = vlaneseq
      %v2768 = vshrl.u32 %v2767, 7
      %v2769 = vsub.s32 %v2766, %v2768
      %v2770 = vrot.slane %v2762, %v2769
      %v2772 = vunpack.c.l.s4 1934713408
      %v2773 = vunpack.c.0.s8 %v2772
      %v2774 = vlaneseq
      %v2775 = vshrl.u32 %v2774, 7
      %v2776 = vsub.s32 %v2773, %v2775
      %v2777 = vrot.slane %v2763, %v2776
      %v2778 = vcombine.low %v2722, %v2754
      %v2779 = vcombine.high %v2722, %v2754
      %v2780 = vcombine.low %v2729, %v2761
      %v2781 = vcombine.high %v2729, %v2761
      %v2782 = vcombine.low %v2738, %v2770
      %v2783 = vcombine.high %v2738, %v2770
      %v2784 = vcombine.low %v2745, %v2777
      %v2785 = vcombine.high %v2745, %v2777
      %v2786 = vcombine.low %v882, %v886
      %v2787 = vcombine.high %v882, %v886
      %v2789 = vunpack.c.l.s4 1983009808
      %v2790 = vunpack.c.0.s8 %v2789
      %v2791 = vlaneseq
      %v2792 = vshrl.u32 %v2791, 7
      %v2793 = vsub.s32 %v2790, %v2792
      %v2794 = vrot.slane %v2786, %v2793
      %v2796 = vunpack.c.l.s4 1983009808
      %v2797 = vunpack.c.0.s8 %v2796
      %v2798 = vlaneseq
      %v2799 = vshrl.u32 %v2798, 7
      %v2800 = vsub.s32 %v2797, %v2799
      %v2801 = vrot.slane %v2787, %v2800
      %v2802 = vcombine.low %v884, %v888
      %v2803 = vcombine.high %v884, %v888
      %v2805 = vunpack.c.l.s4 1983009808
      %v2806 = vunpack.c.0.s8 %v2805
      %v2807 = vlaneseq
      %v2808 = vshrl.u32 %v2807, 7
      %v2809 = vsub.s32 %v2806, %v2808
      %v2810 = vrot.slane %v2802, %v2809
      %v2812 = vunpack.c.l.s4 1983009808
      %v2813 = vunpack.c.0.s8 %v2812
      %v2814 = vlaneseq
      %v2815 = vshrl.u32 %v2814, 7
      %v2816 = vsub.s32 %v2813, %v2815
      %v2817 = vrot.slane %v2803, %v2816
      %v2818 = vcombine.low %v890, %v894
      %v2819 = vcombine.high %v890, %v894
      %v2821 = vunpack.c.l.s4 1983009808
      %v2822 = vunpack.c.0.s8 %v2821
      %v2823 = vlaneseq
      %v2824 = vshrl.u32 %v2823, 7
      %v2825 = vsub.s32 %v2822, %v2824
      %v2826 = vrot.slane %v2818, %v2825
      %v2828 = vunpack.c.l.s4 1983009808
      %v2829 = vunpack.c.0.s8 %v2828
      %v2830 = vlaneseq
      %v2831 = vshrl.u32 %v2830, 7
      %v2832 = vsub.s32 %v2829, %v2831
      %v2833 = vrot.slane %v2819, %v2832
      %v2834 = vcombine.low %v892, %v896
      %v2835 = vcombine.high %v892, %v896
      %v2837 = vunpack.c.l.s4 1983009808
      %v2838 = vunpack.c.0.s8 %v2837
      %v2839 = vlaneseq
      %v2840 = vshrl.u32 %v2839, 7
      %v2841 = vsub.s32 %v2838, %v2840
      %v2842 = vrot.slane %v2834, %v2841
      %v2844 = vunpack.c.l.s4 1983009808
      %v2845 = vunpack.c.0.s8 %v2844
      %v2846 = vlaneseq
      %v2847 = vshrl.u32 %v2846, 7
      %v2848 = vsub.s32 %v2845, %v2847
      %v2849 = vrot.slane %v2835, %v2848
      %v2850 = vcombine.low %v2794, %v2810
      %v2851 = vcombine.high %v2794, %v2810
      %v2853 = vunpack.c.l.s4 1934713408
      %v2854 = vunpack.c.0.s8 %v2853
      %v2855 = vlaneseq
      %v2856 = vshrl.u32 %v2855, 7
      %v2857 = vsub.s32 %v2854, %v2856
      %v2858 = vrot.slane %v2850, %v2857
      %v2860 = vunpack.c.l.s4 1934713408
      %v2861 = vunpack.c.0.s8 %v2860
      %v2862 = vlaneseq
      %v2863 = vshrl.u32 %v2862, 7
      %v2864 = vsub.s32 %v2861, %v2863
      %v2865 = vrot.slane %v2851, %v2864
      %v2866 = vcombine.low %v2801, %v2817
      %v2867 = vcombine.high %v2801, %v2817
      %v2869 = vunpack.c.l.s4 1934713408
      %v2870 = vunpack.c.0.s8 %v2869
      %v2871 = vlaneseq
      %v2872 = vshrl.u32 %v2871, 7
      %v2873 = vsub.s32 %v2870, %v2872
      %v2874 = vrot.slane %v2866, %v2873
      %v2876 = vunpack.c.l.s4 1934713408
      %v2877 = vunpack.c.0.s8 %v2876
      %v2878 = vlaneseq
      %v2879 = vshrl.u32 %v2878, 7
      %v2880 = vsub.s32 %v2877, %v2879
      %v2881 = vrot.slane %v2867, %v2880
      %v2882 = vcombine.low %v2826, %v2842
      %v2883 = vcombine.high %v2826, %v2842
      %v2885 = vunpack.c.l.s4 1934713408
      %v2886 = vunpack.c.0.s8 %v2885
      %v2887 = vlaneseq
      %v2888 = vshrl.u32 %v2887, 7
      %v2889 = vsub.s32 %v2886, %v2888
      %v2890 = vrot.slane %v2882, %v2889
      %v2892 = vunpack.c.l.s4 1934713408
      %v2893 = vunpack.c.0.s8 %v2892
      %v2894 = vlaneseq
      %v2895 = vshrl.u32 %v2894, 7
      %v2896 = vsub.s32 %v2893, %v2895
      %v2897 = vrot.slane %v2883, %v2896
      %v2898 = vcombine.low %v2833, %v2849
      %v2899 = vcombine.high %v2833, %v2849
      %v2901 = vunpack.c.l.s4 1934713408
      %v2902 = vunpack.c.0.s8 %v2901
      %v2903 = vlaneseq
      %v2904 = vshrl.u32 %v2903, 7
      %v2905 = vsub.s32 %v2902, %v2904
      %v2906 = vrot.slane %v2898, %v2905
      %v2908 = vunpack.c.l.s4 1934713408
      %v2909 = vunpack.c.0.s8 %v2908
      %v2910 = vlaneseq
      %v2911 = vshrl.u32 %v2910, 7
      %v2912 = vsub.s32 %v2909, %v2911
      %v2913 = vrot.slane %v2899, %v2912
      %v2914 = vcombine.low %v2858, %v2890
      %v2915 = vcombine.high %v2858, %v2890
      %v2916 = vcombine.low %v2865, %v2897
      %v2917 = vcombine.high %v2865, %v2897
      %v2918 = vcombine.low %v2874, %v2906
      %v2919 = vcombine.high %v2874, %v2906
      %v2920 = vcombine.low %v2881, %v2913
      %v2921 = vcombine.high %v2881, %v2913
      %v2922 = vcombine.low %v898, %v902
      %v2923 = vcombine.high %v898, %v902
      %v2925 = vunpack.c.l.s4 1983009808
      %v2926 = vunpack.c.0.s8 %v2925
      %v2927 = vlaneseq
      %v2928 = vshrl.u32 %v2927, 7
      %v2929 = vsub.s32 %v2926, %v2928
      %v2930 = vrot.slane %v2922, %v2929
      %v2932 = vunpack.c.l.s4 1983009808
      %v2933 = vunpack.c.0.s8 %v2932
      %v2934 = vlaneseq
      %v2935 = vshrl.u32 %v2934, 7
      %v2936 = vsub.s32 %v2933, %v2935
      %v2937 = vrot.slane %v2923, %v2936
      %v2938 = vcombine.low %v900, %v904
      %v2939 = vcombine.high %v900, %v904
      %v2941 = vunpack.c.l.s4 1983009808
      %v2942 = vunpack.c.0.s8 %v2941
      %v2943 = vlaneseq
      %v2944 = vshrl.u32 %v2943, 7
      %v2945 = vsub.s32 %v2942, %v2944
      %v2946 = vrot.slane %v2938, %v2945
      %v2948 = vunpack.c.l.s4 1983009808
      %v2949 = vunpack.c.0.s8 %v2948
      %v2950 = vlaneseq
      %v2951 = vshrl.u32 %v2950, 7
      %v2952 = vsub.s32 %v2949, %v2951
      %v2953 = vrot.slane %v2939, %v2952
      %v2954 = vcombine.low %v906, %v910
      %v2955 = vcombine.high %v906, %v910
      %v2957 = vunpack.c.l.s4 1983009808
      %v2958 = vunpack.c.0.s8 %v2957
      %v2959 = vlaneseq
      %v2960 = vshrl.u32 %v2959, 7
      %v2961 = vsub.s32 %v2958, %v2960
      %v2962 = vrot.slane %v2954, %v2961
      %v2964 = vunpack.c.l.s4 1983009808
      %v2965 = vunpack.c.0.s8 %v2964
      %v2966 = vlaneseq
      %v2967 = vshrl.u32 %v2966, 7
      %v2968 = vsub.s32 %v2965, %v2967
      %v2969 = vrot.slane %v2955, %v2968
      %v2970 = vcombine.low %v908, %v912
      %v2971 = vcombine.high %v908, %v912
      %v2973 = vunpack.c.l.s4 1983009808
      %v2974 = vunpack.c.0.s8 %v2973
      %v2975 = vlaneseq
      %v2976 = vshrl.u32 %v2975, 7
      %v2977 = vsub.s32 %v2974, %v2976
      %v2978 = vrot.slane %v2970, %v2977
      %v2980 = vunpack.c.l.s4 1983009808
      %v2981 = vunpack.c.0.s8 %v2980
      %v2982 = vlaneseq
      %v2983 = vshrl.u32 %v2982, 7
      %v2984 = vsub.s32 %v2981, %v2983
      %v2985 = vrot.slane %v2971, %v2984
      %v2986 = vcombine.low %v2930, %v2946
      %v2987 = vcombine.high %v2930, %v2946
      %v2989 = vunpack.c.l.s4 1934713408
      %v2990 = vunpack.c.0.s8 %v2989
      %v2991 = vlaneseq
      %v2992 = vshrl.u32 %v2991, 7
      %v2993 = vsub.s32 %v2990, %v2992
      %v2994 = vrot.slane %v2986, %v2993
      %v2996 = vunpack.c.l.s4 1934713408
      %v2997 = vunpack.c.0.s8 %v2996
      %v2998 = vlaneseq
      %v2999 = vshrl.u32 %v2998, 7
      %v3000 = vsub.s32 %v2997, %v2999
      %v3001 = vrot.slane %v2987, %v3000
      %v3002 = vcombine.low %v2937, %v2953
      %v3003 = vcombine.high %v2937, %v2953
      %v3005 = vunpack.c.l.s4 1934713408
      %v3006 = vunpack.c.0.s8 %v3005
      %v3007 = vlaneseq
      %v3008 = vshrl.u32 %v3007, 7
      %v3009 = vsub.s32 %v3006, %v3008
      %v3010 = vrot.slane %v3002, %v3009
      %v3012 = vunpack.c.l.s4 1934713408
      %v3013 = vunpack.c.0.s8 %v3012
      %v3014 = vlaneseq
      %v3015 = vshrl.u32 %v3014, 7
      %v3016 = vsub.s32 %v3013, %v3015
      %v3017 = vrot.slane %v3003, %v3016
      %v3018 = vcombine.low %v2962, %v2978
      %v3019 = vcombine.high %v2962, %v2978
      %v3021 = vunpack.c.l.s4 1934713408
      %v3022 = vunpack.c.0.s8 %v3021
      %v3023 = vlaneseq
      %v3024 = vshrl.u32 %v3023, 7
      %v3025 = vsub.s32 %v3022, %v3024
      %v3026 = vrot.slane %v3018, %v3025
      %v3028 = vunpack.c.l.s4 1934713408
      %v3029 = vunpack.c.0.s8 %v3028
      %v3030 = vlaneseq
      %v3031 = vshrl.u32 %v3030, 7
      %v3032 = vsub.s32 %v3029, %v3031
      %v3033 = vrot.slane %v3019, %v3032
      %v3034 = vcombine.low %v2969, %v2985
      %v3035 = vcombine.high %v2969, %v2985
      %v3037 = vunpack.c.l.s4 1934713408
      %v3038 = vunpack.c.0.s8 %v3037
      %v3039 = vlaneseq
      %v3040 = vshrl.u32 %v3039, 7
      %v3041 = vsub.s32 %v3038, %v3040
      %v3042 = vrot.slane %v3034, %v3041
      %v3044 = vunpack.c.l.s4 1934713408
      %v3045 = vunpack.c.0.s8 %v3044
      %v3046 = vlaneseq
      %v3047 = vshrl.u32 %v3046, 7
      %v3048 = vsub.s32 %v3045, %v3047
      %v3049 = vrot.slane %v3035, %v3048
      %v3050 = vcombine.low %v2994, %v3026
      %v3051 = vcombine.high %v2994, %v3026
      %v3052 = vcombine.low %v3001, %v3033
      %v3053 = vcombine.high %v3001, %v3033
      %v3054 = vcombine.low %v3010, %v3042
      %v3055 = vcombine.high %v3010, %v3042
      %v3056 = vcombine.low %v3017, %v3049
      %v3057 = vcombine.high %v3017, %v3049
      %v3058 = vcombine.low %v914, %v918
      %v3059 = vcombine.high %v914, %v918
      %v3061 = vunpack.c.l.s4 1983009808
      %v3062 = vunpack.c.0.s8 %v3061
      %v3063 = vlaneseq
      %v3064 = vshrl.u32 %v3063, 7
      %v3065 = vsub.s32 %v3062, %v3064
      %v3066 = vrot.slane %v3058, %v3065
      %v3068 = vunpack.c.l.s4 1983009808
      %v3069 = vunpack.c.0.s8 %v3068
      %v3070 = vlaneseq
      %v3071 = vshrl.u32 %v3070, 7
      %v3072 = vsub.s32 %v3069, %v3071
      %v3073 = vrot.slane %v3059, %v3072
      %v3074 = vcombine.low %v916, %v920
      %v3075 = vcombine.high %v916, %v920
      %v3077 = vunpack.c.l.s4 1983009808
      %v3078 = vunpack.c.0.s8 %v3077
      %v3079 = vlaneseq
      %v3080 = vshrl.u32 %v3079, 7
      %v3081 = vsub.s32 %v3078, %v3080
      %v3082 = vrot.slane %v3074, %v3081
      %v3084 = vunpack.c.l.s4 1983009808
      %v3085 = vunpack.c.0.s8 %v3084
      %v3086 = vlaneseq
      %v3087 = vshrl.u32 %v3086, 7
      %v3088 = vsub.s32 %v3085, %v3087
      %v3089 = vrot.slane %v3075, %v3088
      %v3090 = vcombine.low %v922, %v926
      %v3091 = vcombine.high %v922, %v926
      %v3093 = vunpack.c.l.s4 1983009808
      %v3094 = vunpack.c.0.s8 %v3093
      %v3095 = vlaneseq
      %v3096 = vshrl.u32 %v3095, 7
      %v3097 = vsub.s32 %v3094, %v3096
      %v3098 = vrot.slane %v3090, %v3097
      %v3100 = vunpack.c.l.s4 1983009808
      %v3101 = vunpack.c.0.s8 %v3100
      %v3102 = vlaneseq
      %v3103 = vshrl.u32 %v3102, 7
      %v3104 = vsub.s32 %v3101, %v3103
      %v3105 = vrot.slane %v3091, %v3104
      %v3106 = vcombine.low %v924, %v928
      %v3107 = vcombine.high %v924, %v928
      %v3109 = vunpack.c.l.s4 1983009808
      %v3110 = vunpack.c.0.s8 %v3109
      %v3111 = vlaneseq
      %v3112 = vshrl.u32 %v3111, 7
      %v3113 = vsub.s32 %v3110, %v3112
      %v3114 = vrot.slane %v3106, %v3113
      %v3116 = vunpack.c.l.s4 1983009808
      %v3117 = vunpack.c.0.s8 %v3116
      %v3118 = vlaneseq
      %v3119 = vshrl.u32 %v3118, 7
      %v3120 = vsub.s32 %v3117, %v3119
      %v3121 = vrot.slane %v3107, %v3120
      %v3122 = vcombine.low %v3066, %v3082
      %v3123 = vcombine.high %v3066, %v3082
      %v3125 = vunpack.c.l.s4 1934713408
      %v3126 = vunpack.c.0.s8 %v3125
      %v3127 = vlaneseq
      %v3128 = vshrl.u32 %v3127, 7
      %v3129 = vsub.s32 %v3126, %v3128
      %v3130 = vrot.slane %v3122, %v3129
      %v3132 = vunpack.c.l.s4 1934713408
      %v3133 = vunpack.c.0.s8 %v3132
      %v3134 = vlaneseq
      %v3135 = vshrl.u32 %v3134, 7
      %v3136 = vsub.s32 %v3133, %v3135
      %v3137 = vrot.slane %v3123, %v3136
      %v3138 = vcombine.low %v3073, %v3089
      %v3139 = vcombine.high %v3073, %v3089
      %v3141 = vunpack.c.l.s4 1934713408
      %v3142 = vunpack.c.0.s8 %v3141
      %v3143 = vlaneseq
      %v3144 = vshrl.u32 %v3143, 7
      %v3145 = vsub.s32 %v3142, %v3144
      %v3146 = vrot.slane %v3138, %v3145
      %v3148 = vunpack.c.l.s4 1934713408
      %v3149 = vunpack.c.0.s8 %v3148
      %v3150 = vlaneseq
      %v3151 = vshrl.u32 %v3150, 7
      %v3152 = vsub.s32 %v3149, %v3151
      %v3153 = vrot.slane %v3139, %v3152
      %v3154 = vcombine.low %v3098, %v3114
      %v3155 = vcombine.high %v3098, %v3114
      %v3157 = vunpack.c.l.s4 1934713408
      %v3158 = vunpack.c.0.s8 %v3157
      %v3159 = vlaneseq
      %v3160 = vshrl.u32 %v3159, 7
      %v3161 = vsub.s32 %v3158, %v3160
      %v3162 = vrot.slane %v3154, %v3161
      %v3164 = vunpack.c.l.s4 1934713408
      %v3165 = vunpack.c.0.s8 %v3164
      %v3166 = vlaneseq
      %v3167 = vshrl.u32 %v3166, 7
      %v3168 = vsub.s32 %v3165, %v3167
      %v3169 = vrot.slane %v3155, %v3168
      %v3170 = vcombine.low %v3105, %v3121
      %v3171 = vcombine.high %v3105, %v3121
      %v3173 = vunpack.c.l.s4 1934713408
      %v3174 = vunpack.c.0.s8 %v3173
      %v3175 = vlaneseq
      %v3176 = vshrl.u32 %v3175, 7
      %v3177 = vsub.s32 %v3174, %v3176
      %v3178 = vrot.slane %v3170, %v3177
      %v3180 = vunpack.c.l.s4 1934713408
      %v3181 = vunpack.c.0.s8 %v3180
      %v3182 = vlaneseq
      %v3183 = vshrl.u32 %v3182, 7
      %v3184 = vsub.s32 %v3181, %v3183
      %v3185 = vrot.slane %v3171, %v3184
      %v3186 = vcombine.low %v3130, %v3162
      %v3187 = vcombine.high %v3130, %v3162
      %v3188 = vcombine.low %v3137, %v3169
      %v3189 = vcombine.high %v3137, %v3169
      %v3190 = vcombine.low %v3146, %v3178
      %v3191 = vcombine.high %v3146, %v3178
      %v3192 = vcombine.low %v3153, %v3185
      %v3193 = vcombine.high %v3153, %v3185
      %v3194 = vcombine.low %v930, %v934
      %v3195 = vcombine.high %v930, %v934
      %v3197 = vunpack.c.l.s4 1983009808
      %v3198 = vunpack.c.0.s8 %v3197
      %v3199 = vlaneseq
      %v3200 = vshrl.u32 %v3199, 7
      %v3201 = vsub.s32 %v3198, %v3200
      %v3202 = vrot.slane %v3194, %v3201
      %v3204 = vunpack.c.l.s4 1983009808
      %v3205 = vunpack.c.0.s8 %v3204
      %v3206 = vlaneseq
      %v3207 = vshrl.u32 %v3206, 7
      %v3208 = vsub.s32 %v3205, %v3207
      %v3209 = vrot.slane %v3195, %v3208
      %v3210 = vcombine.low %v932, %v936
      %v3211 = vcombine.high %v932, %v936
      %v3213 = vunpack.c.l.s4 1983009808
      %v3214 = vunpack.c.0.s8 %v3213
      %v3215 = vlaneseq
      %v3216 = vshrl.u32 %v3215, 7
      %v3217 = vsub.s32 %v3214, %v3216
      %v3218 = vrot.slane %v3210, %v3217
      %v3220 = vunpack.c.l.s4 1983009808
      %v3221 = vunpack.c.0.s8 %v3220
      %v3222 = vlaneseq
      %v3223 = vshrl.u32 %v3222, 7
      %v3224 = vsub.s32 %v3221, %v3223
      %v3225 = vrot.slane %v3211, %v3224
      %v3226 = vcombine.low %v938, %v942
      %v3227 = vcombine.high %v938, %v942
      %v3229 = vunpack.c.l.s4 1983009808
      %v3230 = vunpack.c.0.s8 %v3229
      %v3231 = vlaneseq
      %v3232 = vshrl.u32 %v3231, 7
      %v3233 = vsub.s32 %v3230, %v3232
      %v3234 = vrot.slane %v3226, %v3233
      %v3236 = vunpack.c.l.s4 1983009808
      %v3237 = vunpack.c.0.s8 %v3236
      %v3238 = vlaneseq
      %v3239 = vshrl.u32 %v3238, 7
      %v3240 = vsub.s32 %v3237, %v3239
      %v3241 = vrot.slane %v3227, %v3240
      %v3242 = vcombine.low %v940, %v944
      %v3243 = vcombine.high %v940, %v944
      %v3245 = vunpack.c.l.s4 1983009808
      %v3246 = vunpack.c.0.s8 %v3245
      %v3247 = vlaneseq
      %v3248 = vshrl.u32 %v3247, 7
      %v3249 = vsub.s32 %v3246, %v3248
      %v3250 = vrot.slane %v3242, %v3249
      %v3252 = vunpack.c.l.s4 1983009808
      %v3253 = vunpack.c.0.s8 %v3252
      %v3254 = vlaneseq
      %v3255 = vshrl.u32 %v3254, 7
      %v3256 = vsub.s32 %v3253, %v3255
      %v3257 = vrot.slane %v3243, %v3256
      %v3258 = vcombine.low %v3202, %v3218
      %v3259 = vcombine.high %v3202, %v3218
      %v3261 = vunpack.c.l.s4 1934713408
      %v3262 = vunpack.c.0.s8 %v3261
      %v3263 = vlaneseq
      %v3264 = vshrl.u32 %v3263, 7
      %v3265 = vsub.s32 %v3262, %v3264
      %v3266 = vrot.slane %v3258, %v3265
      %v3268 = vunpack.c.l.s4 1934713408
      %v3269 = vunpack.c.0.s8 %v3268
      %v3270 = vlaneseq
      %v3271 = vshrl.u32 %v3270, 7
      %v3272 = vsub.s32 %v3269, %v3271
      %v3273 = vrot.slane %v3259, %v3272
      %v3274 = vcombine.low %v3209, %v3225
      %v3275 = vcombine.high %v3209, %v3225
      %v3277 = vunpack.c.l.s4 1934713408
      %v3278 = vunpack.c.0.s8 %v3277
      %v3279 = vlaneseq
      %v3280 = vshrl.u32 %v3279, 7
      %v3281 = vsub.s32 %v3278, %v3280
      %v3282 = vrot.slane %v3274, %v3281
      %v3284 = vunpack.c.l.s4 1934713408
      %v3285 = vunpack.c.0.s8 %v3284
      %v3286 = vlaneseq
      %v3287 = vshrl.u32 %v3286, 7
      %v3288 = vsub.s32 %v3285, %v3287
      %v3289 = vrot.slane %v3275, %v3288
      %v3290 = vcombine.low %v3234, %v3250
      %v3291 = vcombine.high %v3234, %v3250
      %v3293 = vunpack.c.l.s4 1934713408
      %v3294 = vunpack.c.0.s8 %v3293
      %v3295 = vlaneseq
      %v3296 = vshrl.u32 %v3295, 7
      %v3297 = vsub.s32 %v3294, %v3296
      %v3298 = vrot.slane %v3290, %v3297
      %v3300 = vunpack.c.l.s4 1934713408
      %v3301 = vunpack.c.0.s8 %v3300
      %v3302 = vlaneseq
      %v3303 = vshrl.u32 %v3302, 7
      %v3304 = vsub.s32 %v3301, %v3303
      %v3305 = vrot.slane %v3291, %v3304
      %v3306 = vcombine.low %v3241, %v3257
      %v3307 = vcombine.high %v3241, %v3257
      %v3309 = vunpack.c.l.s4 1934713408
      %v3310 = vunpack.c.0.s8 %v3309
      %v3311 = vlaneseq
      %v3312 = vshrl.u32 %v3311, 7
      %v3313 = vsub.s32 %v3310, %v3312
      %v3314 = vrot.slane %v3306, %v3313
      %v3316 = vunpack.c.l.s4 1934713408
      %v3317 = vunpack.c.0.s8 %v3316
      %v3318 = vlaneseq
      %v3319 = vshrl.u32 %v3318, 7
      %v3320 = vsub.s32 %v3317, %v3319
      %v3321 = vrot.slane %v3307, %v3320
      %v3322 = vcombine.low %v3266, %v3298
      %v3323 = vcombine.high %v3266, %v3298
      %v3324 = vcombine.low %v3273, %v3305
      %v3325 = vcombine.high %v3273, %v3305
      %v3326 = vcombine.low %v3282, %v3314
      %v3327 = vcombine.high %v3282, %v3314
      %v3328 = vcombine.low %v3289, %v3321
      %v3329 = vcombine.high %v3289, %v3321
      %v3330 = vcombine.low %v946, %v950
      %v3331 = vcombine.high %v946, %v950
      %v3333 = vunpack.c.l.s4 1983009808
      %v3334 = vunpack.c.0.s8 %v3333
      %v3335 = vlaneseq
      %v3336 = vshrl.u32 %v3335, 7
      %v3337 = vsub.s32 %v3334, %v3336
      %v3338 = vrot.slane %v3330, %v3337
      %v3340 = vunpack.c.l.s4 1983009808
      %v3341 = vunpack.c.0.s8 %v3340
      %v3342 = vlaneseq
      %v3343 = vshrl.u32 %v3342, 7
      %v3344 = vsub.s32 %v3341, %v3343
      %v3345 = vrot.slane %v3331, %v3344
      %v3346 = vcombine.low %v948, %v952
      %v3347 = vcombine.high %v948, %v952
      %v3349 = vunpack.c.l.s4 1983009808
      %v3350 = vunpack.c.0.s8 %v3349
      %v3351 = vlaneseq
      %v3352 = vshrl.u32 %v3351, 7
      %v3353 = vsub.s32 %v3350, %v3352
      %v3354 = vrot.slane %v3346, %v3353
      %v3356 = vunpack.c.l.s4 1983009808
      %v3357 = vunpack.c.0.s8 %v3356
      %v3358 = vlaneseq
      %v3359 = vshrl.u32 %v3358, 7
      %v3360 = vsub.s32 %v3357, %v3359
      %v3361 = vrot.slane %v3347, %v3360
      %v3362 = vcombine.low %v954, %v958
      %v3363 = vcombine.high %v954, %v958
      %v3365 = vunpack.c.l.s4 1983009808
      %v3366 = vunpack.c.0.s8 %v3365
      %v3367 = vlaneseq
      %v3368 = vshrl.u32 %v3367, 7
      %v3369 = vsub.s32 %v3366, %v3368
      %v3370 = vrot.slane %v3362, %v3369
      %v3372 = vunpack.c.l.s4 1983009808
      %v3373 = vunpack.c.0.s8 %v3372
      %v3374 = vlaneseq
      %v3375 = vshrl.u32 %v3374, 7
      %v3376 = vsub.s32 %v3373, %v3375
      %v3377 = vrot.slane %v3363, %v3376
      %v3378 = vcombine.low %v956, %v960
      %v3379 = vcombine.high %v956, %v960
      %v3381 = vunpack.c.l.s4 1983009808
      %v3382 = vunpack.c.0.s8 %v3381
      %v3383 = vlaneseq
      %v3384 = vshrl.u32 %v3383, 7
      %v3385 = vsub.s32 %v3382, %v3384
      %v3386 = vrot.slane %v3378, %v3385
      %v3388 = vunpack.c.l.s4 1983009808
      %v3389 = vunpack.c.0.s8 %v3388
      %v3390 = vlaneseq
      %v3391 = vshrl.u32 %v3390, 7
      %v3392 = vsub.s32 %v3389, %v3391
      %v3393 = vrot.slane %v3379, %v3392
      %v3394 = vcombine.low %v3338, %v3354
      %v3395 = vcombine.high %v3338, %v3354
      %v3397 = vunpack.c.l.s4 1934713408
      %v3398 = vunpack.c.0.s8 %v3397
      %v3399 = vlaneseq
      %v3400 = vshrl.u32 %v3399, 7
      %v3401 = vsub.s32 %v3398, %v3400
      %v3402 = vrot.slane %v3394, %v3401
      %v3404 = vunpack.c.l.s4 1934713408
      %v3405 = vunpack.c.0.s8 %v3404
      %v3406 = vlaneseq
      %v3407 = vshrl.u32 %v3406, 7
      %v3408 = vsub.s32 %v3405, %v3407
      %v3409 = vrot.slane %v3395, %v3408
      %v3410 = vcombine.low %v3345, %v3361
      %v3411 = vcombine.high %v3345, %v3361
      %v3413 = vunpack.c.l.s4 1934713408
      %v3414 = vunpack.c.0.s8 %v3413
      %v3415 = vlaneseq
      %v3416 = vshrl.u32 %v3415, 7
      %v3417 = vsub.s32 %v3414, %v3416
      %v3418 = vrot.slane %v3410, %v3417
      %v3420 = vunpack.c.l.s4 1934713408
      %v3421 = vunpack.c.0.s8 %v3420
      %v3422 = vlaneseq
      %v3423 = vshrl.u32 %v3422, 7
      %v3424 = vsub.s32 %v3421, %v3423
      %v3425 = vrot.slane %v3411, %v3424
      %v3426 = vcombine.low %v3370, %v3386
      %v3427 = vcombine.high %v3370, %v3386
      %v3429 = vunpack.c.l.s4 1934713408
      %v3430 = vunpack.c.0.s8 %v3429
      %v3431 = vlaneseq
      %v3432 = vshrl.u32 %v3431, 7
      %v3433 = vsub.s32 %v3430, %v3432
      %v3434 = vrot.slane %v3426, %v3433
      %v3436 = vunpack.c.l.s4 1934713408
      %v3437 = vunpack.c.0.s8 %v3436
      %v3438 = vlaneseq
      %v3439 = vshrl.u32 %v3438, 7
      %v3440 = vsub.s32 %v3437, %v3439
      %v3441 = vrot.slane %v3427, %v3440
      %v3442 = vcombine.low %v3377, %v3393
      %v3443 = vcombine.high %v3377, %v3393
      %v3445 = vunpack.c.l.s4 1934713408
      %v3446 = vunpack.c.0.s8 %v3445
      %v3447 = vlaneseq
      %v3448 = vshrl.u32 %v3447, 7
      %v3449 = vsub.s32 %v3446, %v3448
      %v3450 = vrot.slane %v3442, %v3449
      %v3452 = vunpack.c.l.s4 1934713408
      %v3453 = vunpack.c.0.s8 %v3452
      %v3454 = vlaneseq
      %v3455 = vshrl.u32 %v3454, 7
      %v3456 = vsub.s32 %v3453, %v3455
      %v3457 = vrot.slane %v3443, %v3456
      %v3458 = vcombine.low %v3402, %v3434
      %v3459 = vcombine.high %v3402, %v3434
      %v3460 = vcombine.low %v3409, %v3441
      %v3461 = vcombine.high %v3409, %v3441
      %v3462 = vcombine.low %v3418, %v3450
      %v3463 = vcombine.high %v3418, %v3450
      %v3464 = vcombine.low %v3425, %v3457
      %v3465 = vcombine.high %v3425, %v3457
      %v3466 = vcombine.low %v1010, %v1014
      %v3467 = vcombine.high %v1010, %v1014
      %v3469 = vunpack.c.l.s4 1983009808
      %v3470 = vunpack.c.0.s8 %v3469
      %v3471 = vlaneseq
      %v3472 = vshrl.u32 %v3471, 7
      %v3473 = vsub.s32 %v3470, %v3472
      %v3474 = vrot.slane %v3466, %v3473
      %v3476 = vunpack.c.l.s4 1983009808
      %v3477 = vunpack.c.0.s8 %v3476
      %v3478 = vlaneseq
      %v3479 = vshrl.u32 %v3478, 7
      %v3480 = vsub.s32 %v3477, %v3479
      %v3481 = vrot.slane %v3467, %v3480
      %v3482 = vcombine.high %v1012, 0.0
      %v3484 = vunpack.c.l.s4 1983009808
      %v3485 = vunpack.c.0.s8 %v3484
      %v3486 = vlaneseq
      %v3487 = vshrl.u32 %v3486, 7
      %v3488 = vsub.s32 %v3485, %v3487
      %v3489 = vrot.slane %v1012, %v3488
      %v3491 = vunpack.c.l.s4 1983009808
      %v3492 = vunpack.c.0.s8 %v3491
      %v3493 = vlaneseq
      %v3494 = vshrl.u32 %v3493, 7
      %v3495 = vsub.s32 %v3492, %v3494
      %v3496 = vrot.slane %v3482, %v3495
      %v3497 = vcombine.low %v3474, %v3489
      %v3498 = vcombine.high %v3474, %v3489
      %v3500 = vunpack.c.l.s4 1934713408
      %v3501 = vunpack.c.0.s8 %v3500
      %v3502 = vlaneseq
      %v3503 = vshrl.u32 %v3502, 7
      %v3504 = vsub.s32 %v3501, %v3503
      %v3505 = vrot.slane %v3497, %v3504
      %v3507 = vunpack.c.l.s4 1934713408
      %v3508 = vunpack.c.0.s8 %v3507
      %v3509 = vlaneseq
      %v3510 = vshrl.u32 %v3509, 7
      %v3511 = vsub.s32 %v3508, %v3510
      %v3512 = vrot.slane %v3498, %v3511
      %v3513 = vcombine.low %v3481, %v3496
      %v3514 = vcombine.high %v3481, %v3496
      %v3516 = vunpack.c.l.s4 1934713408
      %v3517 = vunpack.c.0.s8 %v3516
      %v3518 = vlaneseq
      %v3519 = vshrl.u32 %v3518, 7
      %v3520 = vsub.s32 %v3517, %v3519
      %v3521 = vrot.slane %v3513, %v3520
      %v3523 = vunpack.c.l.s4 1934713408
      %v3524 = vunpack.c.0.s8 %v3523
      %v3525 = vlaneseq
      %v3526 = vshrl.u32 %v3525, 7
      %v3527 = vsub.s32 %v3524, %v3526
      %v3528 = vrot.slane %v3514, %v3527
      %v3529 = vcombine.high %v3505, 0.0
      %v3530 = vcombine.high %v3512, 0.0
      %v3531 = vcombine.high %v3521, 0.0
      %v3532 = vcombine.high %v3528, 0.0
      %3552 = vrot.lane.b32.xlu0 %v1147, 4
      %v3553 = vpop.permute.xlu0 %3552
      %3554 = vrot.lane.b32.xlu0 %v1283, 4
      %v3555 = vpop.permute.xlu0 %3554
      %3556 = vrot.lane.b32.xlu0 %v1419, 4
      %v3557 = vpop.permute.xlu0 %3556
      %3558 = vrot.lane.b32.xlu0 %v1555, 4
      %v3559 = vpop.permute.xlu0 %3558
      %3560 = vrot.lane.b32.xlu0 %v1691, 4
      %v3561 = vpop.permute.xlu0 %3560
      %3562 = vrot.lane.b32.xlu0 %v1827, 4
      %v3563 = vpop.permute.xlu0 %3562
      %3564 = vrot.lane.b32.xlu0 %v1963, 4
      %v3565 = vpop.permute.xlu0 %3564
      %3566 = vrot.lane.b32.xlu0 %v2099, 4
      %v3567 = vpop.permute.xlu0 %3566
      %3568 = vrot.lane.b32.xlu0 %v2235, 4
      %v3569 = vpop.permute.xlu0 %3568
      %3570 = vrot.lane.b32.xlu0 %v2371, 4
      %v3571 = vpop.permute.xlu0 %3570
      %3572 = vrot.lane.b32.xlu0 %v2507, 4
      %v3573 = vpop.permute.xlu0 %3572
      %3574 = vrot.lane.b32.xlu0 %v2643, 4
      %v3575 = vpop.permute.xlu0 %3574
      %3576 = vrot.lane.b32.xlu0 %v2779, 4
      %v3577 = vpop.permute.xlu0 %3576
      %3578 = vrot.lane.b32.xlu0 %v2915, 4
      %v3579 = vpop.permute.xlu0 %3578
      %3580 = vrot.lane.b32.xlu0 %v3051, 4
      %v3581 = vpop.permute.xlu0 %3580
      %3582 = vrot.lane.b32.xlu0 %v3187, 4
      %v3583 = vpop.permute.xlu0 %3582
      %3584 = vrot.lane.b32.xlu0 %v3323, 4
      %v3585 = vpop.permute.xlu0 %3584
      %3586 = vrot.lane.b32.xlu0 %v3459, 4
      %v3587 = vpop.permute.xlu0 %3586
      %3588 = vrot.lane.b32.xlu0 %v3529, 4
      %v3589 = vpop.permute.xlu0 %3588
      %3628 = vrot.lane.b32.xlu0 %v1148, 8
      %v3629 = vpop.permute.xlu0 %3628
      %3630 = vrot.lane.b32.xlu0 %v1284, 8
      %v3631 = vpop.permute.xlu0 %3630
      %3632 = vrot.lane.b32.xlu0 %v1420, 8
      %v3633 = vpop.permute.xlu0 %3632
      %3634 = vrot.lane.b32.xlu0 %v1556, 8
      %v3635 = vpop.permute.xlu0 %3634
      %3636 = vrot.lane.b32.xlu0 %v1692, 8
      %v3637 = vpop.permute.xlu0 %3636
      %3638 = vrot.lane.b32.xlu0 %v1828, 8
      %v3639 = vpop.permute.xlu0 %3638
      %3640 = vrot.lane.b32.xlu0 %v1964, 8
      %v3641 = vpop.permute.xlu0 %3640
      %3642 = vrot.lane.b32.xlu0 %v2100, 8
      %v3643 = vpop.permute.xlu0 %3642
      %3644 = vrot.lane.b32.xlu0 %v2236, 8
      %v3645 = vpop.permute.xlu0 %3644
      %3646 = vrot.lane.b32.xlu0 %v2372, 8
      %v3647 = vpop.permute.xlu0 %3646
      %3648 = vrot.lane.b32.xlu0 %v2508, 8
      %v3649 = vpop.permute.xlu0 %3648
      %3650 = vrot.lane.b32.xlu0 %v2644, 8
      %v3651 = vpop.permute.xlu0 %3650
      %3652 = vrot.lane.b32.xlu0 %v2780, 8
      %v3653 = vpop.permute.xlu0 %3652
      %3654 = vrot.lane.b32.xlu0 %v2916, 8
      %v3655 = vpop.permute.xlu0 %3654
      %3656 = vrot.lane.b32.xlu0 %v3052, 8
      %v3657 = vpop.permute.xlu0 %3656
      %3658 = vrot.lane.b32.xlu0 %v3188, 8
      %v3659 = vpop.permute.xlu0 %3658
      %3660 = vrot.lane.b32.xlu0 %v3324, 8
      %v3661 = vpop.permute.xlu0 %3660
      %3662 = vrot.lane.b32.xlu0 %v3460, 8
      %v3663 = vpop.permute.xlu0 %3662
      %3664 = vrot.lane.b32.xlu0 %v3512, 8
      %v3665 = vpop.permute.xlu0 %3664
      %3704 = vrot.lane.b32.xlu0 %v1149, 12
      %v3705 = vpop.permute.xlu0 %3704
      %3706 = vrot.lane.b32.xlu0 %v1285, 12
      %v3707 = vpop.permute.xlu0 %3706
      %3708 = vrot.lane.b32.xlu0 %v1421, 12
      %v3709 = vpop.permute.xlu0 %3708
      %3710 = vrot.lane.b32.xlu0 %v1557, 12
      %v3711 = vpop.permute.xlu0 %3710
      %3712 = vrot.lane.b32.xlu0 %v1693, 12
      %v3713 = vpop.permute.xlu0 %3712
      %3714 = vrot.lane.b32.xlu0 %v1829, 12
      %v3715 = vpop.permute.xlu0 %3714
      %3716 = vrot.lane.b32.xlu0 %v1965, 12
      %v3717 = vpop.permute.xlu0 %3716
      %3718 = vrot.lane.b32.xlu0 %v2101, 12
      %v3719 = vpop.permute.xlu0 %3718
      %3720 = vrot.lane.b32.xlu0 %v2237, 12
      %v3721 = vpop.permute.xlu0 %3720
      %3722 = vrot.lane.b32.xlu0 %v2373, 12
      %v3723 = vpop.permute.xlu0 %3722
      %3724 = vrot.lane.b32.xlu0 %v2509, 12
      %v3725 = vpop.permute.xlu0 %3724
      %3726 = vrot.lane.b32.xlu0 %v2645, 12
      %v3727 = vpop.permute.xlu0 %3726
      %3728 = vrot.lane.b32.xlu0 %v2781, 12
      %v3729 = vpop.permute.xlu0 %3728
      %3730 = vrot.lane.b32.xlu0 %v2917, 12
      %v3731 = vpop.permute.xlu0 %3730
      %3732 = vrot.lane.b32.xlu0 %v3053, 12
      %v3733 = vpop.permute.xlu0 %3732
      %3734 = vrot.lane.b32.xlu0 %v3189, 12
      %v3735 = vpop.permute.xlu0 %3734
      %3736 = vrot.lane.b32.xlu0 %v3325, 12
      %v3737 = vpop.permute.xlu0 %3736
      %3738 = vrot.lane.b32.xlu0 %v3461, 12
      %v3739 = vpop.permute.xlu0 %3738
      %3740 = vrot.lane.b32.xlu0 %v3530, 12
      %v3741 = vpop.permute.xlu0 %3740
      %3780 = vrot.lane.b32.xlu0 %v1150, 16
      %v3781 = vpop.permute.xlu0 %3780
      %3782 = vrot.lane.b32.xlu0 %v1286, 16
      %v3783 = vpop.permute.xlu0 %3782
      %3784 = vrot.lane.b32.xlu0 %v1422, 16
      %v3785 = vpop.permute.xlu0 %3784
      %3786 = vrot.lane.b32.xlu0 %v1558, 16
      %v3787 = vpop.permute.xlu0 %3786
      %3788 = vrot.lane.b32.xlu0 %v1694, 16
      %v3789 = vpop.permute.xlu0 %3788
      %3790 = vrot.lane.b32.xlu0 %v1830, 16
      %v3791 = vpop.permute.xlu0 %3790
      %3792 = vrot.lane.b32.xlu0 %v1966, 16
      %v3793 = vpop.permute.xlu0 %3792
      %3794 = vrot.lane.b32.xlu0 %v2102, 16
      %v3795 = vpop.permute.xlu0 %3794
      %3796 = vrot.lane.b32.xlu0 %v2238, 16
      %v3797 = vpop.permute.xlu0 %3796
      %3798 = vrot.lane.b32.xlu0 %v2374, 16
      %v3799 = vpop.permute.xlu0 %3798
      %3800 = vrot.lane.b32.xlu0 %v2510, 16
      %v3801 = vpop.permute.xlu0 %3800
      %3802 = vrot.lane.b32.xlu0 %v2646, 16
      %v3803 = vpop.permute.xlu0 %3802
      %3804 = vrot.lane.b32.xlu0 %v2782, 16
      %v3805 = vpop.permute.xlu0 %3804
      %3806 = vrot.lane.b32.xlu0 %v2918, 16
      %v3807 = vpop.permute.xlu0 %3806
      %3808 = vrot.lane.b32.xlu0 %v3054, 16
      %v3809 = vpop.permute.xlu0 %3808
      %3810 = vrot.lane.b32.xlu0 %v3190, 16
      %v3811 = vpop.permute.xlu0 %3810
      %3812 = vrot.lane.b32.xlu0 %v3326, 16
      %v3813 = vpop.permute.xlu0 %3812
      %3814 = vrot.lane.b32.xlu0 %v3462, 16
      %v3815 = vpop.permute.xlu0 %3814
      %3816 = vrot.lane.b32.xlu0 %v3521, 16
      %v3817 = vpop.permute.xlu0 %3816
      %3856 = vrot.lane.b32.xlu0 %v1151, 20
      %v3857 = vpop.permute.xlu0 %3856
      %3858 = vrot.lane.b32.xlu0 %v1287, 20
      %v3859 = vpop.permute.xlu0 %3858
      %3860 = vrot.lane.b32.xlu0 %v1423, 20
      %v3861 = vpop.permute.xlu0 %3860
      %3862 = vrot.lane.b32.xlu0 %v1559, 20
      %v3863 = vpop.permute.xlu0 %3862
      %3864 = vrot.lane.b32.xlu0 %v1695, 20
      %v3865 = vpop.permute.xlu0 %3864
      %3866 = vrot.lane.b32.xlu0 %v1831, 20
      %v3867 = vpop.permute.xlu0 %3866
      %3868 = vrot.lane.b32.xlu0 %v1967, 20
      %v3869 = vpop.permute.xlu0 %3868
      %3870 = vrot.lane.b32.xlu0 %v2103, 20
      %v3871 = vpop.permute.xlu0 %3870
      %3872 = vrot.lane.b32.xlu0 %v2239, 20
      %v3873 = vpop.permute.xlu0 %3872
      %3874 = vrot.lane.b32.xlu0 %v2375, 20
      %v3875 = vpop.permute.xlu0 %3874
      %3876 = vrot.lane.b32.xlu0 %v2511, 20
      %v3877 = vpop.permute.xlu0 %3876
      %3878 = vrot.lane.b32.xlu0 %v2647, 20
      %v3879 = vpop.permute.xlu0 %3878
      %3880 = vrot.lane.b32.xlu0 %v2783, 20
      %v3881 = vpop.permute.xlu0 %3880
      %3882 = vrot.lane.b32.xlu0 %v2919, 20
      %v3883 = vpop.permute.xlu0 %3882
      %3884 = vrot.lane.b32.xlu0 %v3055, 20
      %v3885 = vpop.permute.xlu0 %3884
      %3886 = vrot.lane.b32.xlu0 %v3191, 20
      %v3887 = vpop.permute.xlu0 %3886
      %3888 = vrot.lane.b32.xlu0 %v3327, 20
      %v3889 = vpop.permute.xlu0 %3888
      %3890 = vrot.lane.b32.xlu0 %v3463, 20
      %v3891 = vpop.permute.xlu0 %3890
      %3892 = vrot.lane.b32.xlu0 %v3531, 20
      %v3893 = vpop.permute.xlu0 %3892
      %3932 = vrot.lane.b32.xlu0 %v1152, 24
      %v3933 = vpop.permute.xlu0 %3932
      %3934 = vrot.lane.b32.xlu0 %v1288, 24
      %v3935 = vpop.permute.xlu0 %3934
      %3936 = vrot.lane.b32.xlu0 %v1424, 24
      %v3937 = vpop.permute.xlu0 %3936
      %3938 = vrot.lane.b32.xlu0 %v1560, 24
      %v3939 = vpop.permute.xlu0 %3938
      %3940 = vrot.lane.b32.xlu0 %v1696, 24
      %v3941 = vpop.permute.xlu0 %3940
      %3942 = vrot.lane.b32.xlu0 %v1832, 24
      %v3943 = vpop.permute.xlu0 %3942
      %3944 = vrot.lane.b32.xlu0 %v1968, 24
      %v3945 = vpop.permute.xlu0 %3944
      %3946 = vrot.lane.b32.xlu0 %v2104, 24
      %v3947 = vpop.permute.xlu0 %3946
      %3948 = vrot.lane.b32.xlu0 %v2240, 24
      %v3949 = vpop.permute.xlu0 %3948
      %3950 = vrot.lane.b32.xlu0 %v2376, 24
      %v3951 = vpop.permute.xlu0 %3950
      %3952 = vrot.lane.b32.xlu0 %v2512, 24
      %v3953 = vpop.permute.xlu0 %3952
      %3954 = vrot.lane.b32.xlu0 %v2648, 24
      %v3955 = vpop.permute.xlu0 %3954
      %3956 = vrot.lane.b32.xlu0 %v2784, 24
      %v3957 = vpop.permute.xlu0 %3956
      %3958 = vrot.lane.b32.xlu0 %v2920, 24
      %v3959 = vpop.permute.xlu0 %3958
      %3960 = vrot.lane.b32.xlu0 %v3056, 24
      %v3961 = vpop.permute.xlu0 %3960
      %3962 = vrot.lane.b32.xlu0 %v3192, 24
      %v3963 = vpop.permute.xlu0 %3962
      %3964 = vrot.lane.b32.xlu0 %v3328, 24
      %v3965 = vpop.permute.xlu0 %3964
      %3966 = vrot.lane.b32.xlu0 %v3464, 24
      %v3967 = vpop.permute.xlu0 %3966
      %3968 = vrot.lane.b32.xlu0 %v3528, 24
      %v3969 = vpop.permute.xlu0 %3968
      %4008 = vrot.lane.b32.xlu0 %v1153, 28
      %v4009 = vpop.permute.xlu0 %4008
      %4010 = vrot.lane.b32.xlu0 %v1289, 28
      %v4011 = vpop.permute.xlu0 %4010
      %4012 = vrot.lane.b32.xlu0 %v1425, 28
      %v4013 = vpop.permute.xlu0 %4012
      %4014 = vrot.lane.b32.xlu0 %v1561, 28
      %v4015 = vpop.permute.xlu0 %4014
      %4016 = vrot.lane.b32.xlu0 %v1697, 28
      %v4017 = vpop.permute.xlu0 %4016
      %4018 = vrot.lane.b32.xlu0 %v1833, 28
      %v4019 = vpop.permute.xlu0 %4018
      %4020 = vrot.lane.b32.xlu0 %v1969, 28
      %v4021 = vpop.permute.xlu0 %4020
      %4022 = vrot.lane.b32.xlu0 %v2105, 28
      %v4023 = vpop.permute.xlu0 %4022
      %4024 = vrot.lane.b32.xlu0 %v2241, 28
      %v4025 = vpop.permute.xlu0 %4024
      %4026 = vrot.lane.b32.xlu0 %v2377, 28
      %v4027 = vpop.permute.xlu0 %4026
      %4028 = vrot.lane.b32.xlu0 %v2513, 28
      %v4029 = vpop.permute.xlu0 %4028
      %4030 = vrot.lane.b32.xlu0 %v2649, 28
      %v4031 = vpop.permute.xlu0 %4030
      %4032 = vrot.lane.b32.xlu0 %v2785, 28
      %v4033 = vpop.permute.xlu0 %4032
      %4034 = vrot.lane.b32.xlu0 %v2921, 28
      %v4035 = vpop.permute.xlu0 %4034
      %4036 = vrot.lane.b32.xlu0 %v3057, 28
      %v4037 = vpop.permute.xlu0 %4036
      %4038 = vrot.lane.b32.xlu0 %v3193, 28
      %v4039 = vpop.permute.xlu0 %4038
      %4040 = vrot.lane.b32.xlu0 %v3329, 28
      %v4041 = vpop.permute.xlu0 %4040
      %4042 = vrot.lane.b32.xlu0 %v3465, 28
      %v4043 = vpop.permute.xlu0 %4042
      %4044 = vrot.lane.b32.xlu0 %v3532, 28
      %v4045 = vpop.permute.xlu0 %4044
      %vm4065 = vcmask 31744
      %v4066 = vsel %vm4065, %v1146, %v3553
      %v4067 = vsel %vm4065, %v1282, %v3555
      %v4068 = vsel %vm4065, %v1418, %v3557
      %v4069 = vsel %vm4065, %v1554, %v3559
      %v4070 = vsel %vm4065, %v1690, %v3561
      %v4071 = vsel %vm4065, %v1826, %v3563
      %v4072 = vsel %vm4065, %v1962, %v3565
      %v4073 = vsel %vm4065, %v2098, %v3567
      %v4074 = vsel %vm4065, %v2234, %v3569
      %v4075 = vsel %vm4065, %v2370, %v3571
      %v4076 = vsel %vm4065, %v2506, %v3573
      %v4077 = vsel %vm4065, %v2642, %v3575
      %v4078 = vsel %vm4065, %v2778, %v3577
      %v4079 = vsel %vm4065, %v2914, %v3579
      %v4080 = vsel %vm4065, %v3050, %v3581
      %v4081 = vsel %vm4065, %v3186, %v3583
      %v4082 = vsel %vm4065, %v3322, %v3585
      %v4083 = vsel %vm4065, %v3458, %v3587
      %v4084 = vsel %vm4065, %v3505, %v3589
      %vm4085 = vcmask 64512
      %v4086 = vsel %vm4085, %v4066, %v3629
      %v4087 = vsel %vm4085, %v4067, %v3631
      %v4088 = vsel %vm4085, %v4068, %v3633
      %v4089 = vsel %vm4085, %v4069, %v3635
      %v4090 = vsel %vm4085, %v4070, %v3637
      %v4091 = vsel %vm4085, %v4071, %v3639
      %v4092 = vsel %vm4085, %v4072, %v3641
      %v4093 = vsel %vm4085, %v4073, %v3643
      %v4094 = vsel %vm4085, %v4074, %v3645
      %v4095 = vsel %vm4085, %v4075, %v3647
      %v4096 = vsel %vm4085, %v4076, %v3649
      %v4097 = vsel %vm4085, %v4077, %v3651
      %v4098 = vsel %vm4085, %v4078, %v3653
      %v4099 = vsel %vm4085, %v4079, %v3655
      %v4100 = vsel %vm4085, %v4080, %v3657
      %v4101 = vsel %vm4085, %v4081, %v3659
      %v4102 = vsel %vm4085, %v4082, %v3661
      %v4103 = vsel %vm4085, %v4083, %v3663
      %v4104 = vsel %vm4085, %v4084, %v3665
      %vm4105 = vcmask 97280
      %v4106 = vsel %vm4105, %v4086, %v3705
      %v4107 = vsel %vm4105, %v4087, %v3707
      %v4108 = vsel %vm4105, %v4088, %v3709
      %v4109 = vsel %vm4105, %v4089, %v3711
      %v4110 = vsel %vm4105, %v4090, %v3713
      %v4111 = vsel %vm4105, %v4091, %v3715
      %v4112 = vsel %vm4105, %v4092, %v3717
      %v4113 = vsel %vm4105, %v4093, %v3719
      %v4114 = vsel %vm4105, %v4094, %v3721
      %v4115 = vsel %vm4105, %v4095, %v3723
      %v4116 = vsel %vm4105, %v4096, %v3725
      %v4117 = vsel %vm4105, %v4097, %v3727
      %v4118 = vsel %vm4105, %v4098, %v3729
      %v4119 = vsel %vm4105, %v4099, %v3731
      %v4120 = vsel %vm4105, %v4100, %v3733
      %v4121 = vsel %vm4105, %v4101, %v3735
      %v4122 = vsel %vm4105, %v4102, %v3737
      %v4123 = vsel %vm4105, %v4103, %v3739
      %v4124 = vsel %vm4105, %v4104, %v3741
      %vm4125 = vcmask 130048
      %v4126 = vsel %vm4125, %v4106, %v3781
      %v4127 = vsel %vm4125, %v4107, %v3783
      %v4128 = vsel %vm4125, %v4108, %v3785
      %v4129 = vsel %vm4125, %v4109, %v3787
      %v4130 = vsel %vm4125, %v4110, %v3789
      %v4131 = vsel %vm4125, %v4111, %v3791
      %v4132 = vsel %vm4125, %v4112, %v3793
      %v4133 = vsel %vm4125, %v4113, %v3795
      %v4134 = vsel %vm4125, %v4114, %v3797
      %v4135 = vsel %vm4125, %v4115, %v3799
      %v4136 = vsel %vm4125, %v4116, %v3801
      %v4137 = vsel %vm4125, %v4117, %v3803
      %v4138 = vsel %vm4125, %v4118, %v3805
      %v4139 = vsel %vm4125, %v4119, %v3807
      %v4140 = vsel %vm4125, %v4120, %v3809
      %v4141 = vsel %vm4125, %v4121, %v3811
      %v4142 = vsel %vm4125, %v4122, %v3813
      %v4143 = vsel %vm4125, %v4123, %v3815
      %v4144 = vsel %vm4125, %v4124, %v3817
      %vm4145 = vcmask 162816
      %v4146 = vsel %vm4145, %v4126, %v3857
      %v4147 = vsel %vm4145, %v4127, %v3859
      %v4148 = vsel %vm4145, %v4128, %v3861
      %v4149 = vsel %vm4145, %v4129, %v3863
      %v4150 = vsel %vm4145, %v4130, %v3865
      %v4151 = vsel %vm4145, %v4131, %v3867
      %v4152 = vsel %vm4145, %v4132, %v3869
      %v4153 = vsel %vm4145, %v4133, %v3871
      %v4154 = vsel %vm4145, %v4134, %v3873
      %v4155 = vsel %vm4145, %v4135, %v3875
      %v4156 = vsel %vm4145, %v4136, %v3877
      %v4157 = vsel %vm4145, %v4137, %v3879
      %v4158 = vsel %vm4145, %v4138, %v3881
      %v4159 = vsel %vm4145, %v4139, %v3883
      %v4160 = vsel %vm4145, %v4140, %v3885
      %v4161 = vsel %vm4145, %v4141, %v3887
      %v4162 = vsel %vm4145, %v4142, %v3889
      %v4163 = vsel %vm4145, %v4143, %v3891
      %v4164 = vsel %vm4145, %v4144, %v3893
      %vm4165 = vcmask 195584
      %v4166 = vsel %vm4165, %v4146, %v3933
      %v4167 = vsel %vm4165, %v4147, %v3935
      %v4168 = vsel %vm4165, %v4148, %v3937
      %v4169 = vsel %vm4165, %v4149, %v3939
      %v4170 = vsel %vm4165, %v4150, %v3941
      %v4171 = vsel %vm4165, %v4151, %v3943
      %v4172 = vsel %vm4165, %v4152, %v3945
      %v4173 = vsel %vm4165, %v4153, %v3947
      %v4174 = vsel %vm4165, %v4154, %v3949
      %v4175 = vsel %vm4165, %v4155, %v3951
      %v4176 = vsel %vm4165, %v4156, %v3953
      %v4177 = vsel %vm4165, %v4157, %v3955
      %v4178 = vsel %vm4165, %v4158, %v3957
      %v4179 = vsel %vm4165, %v4159, %v3959
      %v4180 = vsel %vm4165, %v4160, %v3961
      %v4181 = vsel %vm4165, %v4161, %v3963
      %v4182 = vsel %vm4165, %v4162, %v3965
      %v4183 = vsel %vm4165, %v4163, %v3967
      %v4184 = vsel %vm4165, %v4164, %v3969
      %vm4185 = vcmask 228352
      %v4186 = vsel %vm4185, %v4166, %v4009
      %v4187 = vsel %vm4185, %v4167, %v4011
      %v4188 = vsel %vm4185, %v4168, %v4013
      %v4189 = vsel %vm4185, %v4169, %v4015
      %v4190 = vsel %vm4185, %v4170, %v4017
      %v4191 = vsel %vm4185, %v4171, %v4019
      %v4192 = vsel %vm4185, %v4172, %v4021
      %v4193 = vsel %vm4185, %v4173, %v4023
      %v4194 = vsel %vm4185, %v4174, %v4025
      %v4195 = vsel %vm4185, %v4175, %v4027
      %v4196 = vsel %vm4185, %v4176, %v4029
      %v4197 = vsel %vm4185, %v4177, %v4031
      %v4198 = vsel %vm4185, %v4178, %v4033
      %v4199 = vsel %vm4185, %v4179, %v4035
      %v4200 = vsel %vm4185, %v4180, %v4037
      %v4201 = vsel %vm4185, %v4181, %v4039
      %v4202 = vsel %vm4185, %v4182, %v4041
      %v4203 = vsel %vm4185, %v4183, %v4043
      %v4204 = vsel %vm4185, %v4184, %v4045
      %v4205 = vpack.c.bf16 %v4187, %v4186
      %v4206 = vpack.c.bf16 %v4189, %v4188
      %v4207 = vpack.c.bf16 %v4191, %v4190
      %v4208 = vpack.c.bf16 %v4193, %v4192
      %v4209 = vpack.c.bf16 %v4195, %v4194
      %v4210 = vpack.c.bf16 %v4197, %v4196
      %v4211 = vpack.c.bf16 %v4199, %v4198
      %v4212 = vpack.c.bf16 %v4201, %v4200
      %v4213 = vpack.c.bf16 %v4203, %v4202
      %v4214 = vpack.c.bf16 %v4204, %v4204
      %v4215 = vld [vmem:[%s8] sm:$0xf]
      %v4216 = vld [vmem:[%s8 + $0x4] sm:$0xf]
      %v4217 = vld [vmem:[%s8 + $0x8] sm:$0xf]
      %v4218 = vld [vmem:[%s8 + $0xc] sm:$0xf]
      %v4219 = vld [vmem:[%s8 + $0x10] sm:$0xf]
      %v4220 = vld [vmem:[%s8 + $0x14] sm:$0xf]
      %v4221 = vld [vmem:[%s8 + $0x18] sm:$0xf]
      %v4222 = vld [vmem:[%s8 + $0x1c] sm:$0xf]
      %v4223 = vld [vmem:[%s8 + $0x20] sm:$0xf]
      %v4224 = vld [vmem:[%s8 + $0x24] sm:$0xf]
      %v4225 = vld [vmem:[%s8 + $0x28] sm:$0xf]
      %v4226 = vld [vmem:[%s8 + $0x2c] sm:$0xf]
      %v4227 = vld [vmem:[%s8 + $0x30] sm:$0xf]
      %v4228 = vld [vmem:[%s8 + $0x34] sm:$0xf]
      %v4229 = vld [vmem:[%s8 + $0x38] sm:$0xf]
      %v4230 = vld [vmem:[%s8 + $0x3c] sm:$0xf]
      %v4231 = vld [vmem:[%s8 + $0x40] sm:$0xf]
      %v4232 = vld [vmem:[%s8 + $0x44] sm:$0xf]
      %v4233 = vld [vmem:[%s8 + $0x48] sm:$0x3]
      %v4234 = vld [vmem:[%s9] sm:$0x1]
      %v4236 = vlaneseq
      %v4237 = vshrl.u32 %v4236, 7
      %v4238 = vsub.s32 0, %v4237
      %v4239 = vrot.slane %v4234, %v4238
      %4241 = vxpose.xlu0.c.b16.start [1/8] %v4205, 128
      %4242 = vxpose.xlu0.c.b16.cont [2/8] %v4206, 128
      %4243 = vxpose.xlu0.c.b16.cont [3/8] %v4207, 128
      %4244 = vxpose.xlu0.c.b16.cont [4/8] %v4208, 128
      %4245 = vxpose.xlu0.c.b16.cont [5/8] %v4209, 128
      %4246 = vxpose.xlu0.c.b16.cont [6/8] %v4210, 128
      %4247 = vxpose.xlu0.c.b16.cont [7/8] %v4211, 128
      %4248 = vxpose.xlu0.c.b16.end [8/8] %v4212, 128
      %v4249 = vpop.trf.xlu0
      %v4250 = vpop.trf.xlu0
      %v4251 = vpop.trf.xlu0
      %v4252 = vpop.trf.xlu0
      %v4253 = vpop.trf.xlu0
      %v4254 = vpop.trf.xlu0
      %v4255 = vpop.trf.xlu0
      %v4256 = vpop.trf.xlu0
      %4257 = vxpose.xlu0.c.b16.start [1/8] %v4213, 128
      %4258 = vxpose.xlu0.c.b16.cont [2/8] %v4214, 128
      %4259 = vxpose.xlu0.c.b16.cont [3/8] 0, 128
      %4260 = vxpose.xlu0.c.b16.cont [4/8] 0, 128
      %4261 = vxpose.xlu0.c.b16.cont [5/8] 0, 128
      %4262 = vxpose.xlu0.c.b16.cont [6/8] 0, 128
      %4263 = vxpose.xlu0.c.b16.cont [7/8] 0, 128
      %4264 = vxpose.xlu0.c.b16.end [8/8] 0, 128
      %v4265 = vpop.trf.xlu0
      %v4266 = vpop.trf.xlu0
      %v4267 = vpop.trf.xlu0
      %v4268 = vpop.trf.xlu0
      %v4269 = vpop.trf.xlu0
      %v4270 = vpop.trf.xlu0
      %v4271 = vpop.trf.xlu0
      %v4272 = vpop.trf.xlu0
      %v4292 = vunpack.c.l.b16 %v4215
      %v4293 = vunpack.c.l.b16 %v4216
      %v4294 = vunpack.c.l.b16 %v4217
      %v4295 = vunpack.c.l.b16 %v4218
      %v4296 = vunpack.c.l.b16 %v4219
      %v4297 = vunpack.c.l.b16 %v4220
      %v4298 = vunpack.c.l.b16 %v4221
      %v4299 = vunpack.c.l.b16 %v4222
      %v4300 = vunpack.c.l.b16 %v4223
      %v4301 = vunpack.c.l.b16 %v4224
      %v4302 = vunpack.c.l.b16 %v4225
      %v4303 = vunpack.c.l.b16 %v4226
      %v4304 = vunpack.c.l.b16 %v4227
      %v4305 = vunpack.c.l.b16 %v4228
      %v4306 = vunpack.c.l.b16 %v4229
      %v4307 = vunpack.c.l.b16 %v4230
      %v4308 = vunpack.c.l.b16 %v4231
      %v4309 = vunpack.c.l.b16 %v4232
      %v4310 = vunpack.c.l.b16 %v4233
      %v4311 = vpack.c.b16 %v4293, %v4292
      %v4312 = vpack.c.b16 %v4295, %v4294
      %v4313 = vpack.c.b16 %v4297, %v4296
      %v4314 = vpack.c.b16 %v4299, %v4298
      %v4315 = vpack.c.b16 %v4301, %v4300
      %v4316 = vpack.c.b16 %v4303, %v4302
      %v4317 = vpack.c.b16 %v4305, %v4304
      %v4318 = vpack.c.b16 %v4307, %v4306
      %v4319 = vpack.c.b16 %v4309, %v4308
      %v4320 = vpack.c.b16 %v4310, %v4310
      %vm4330 = vcmask 154624
      %v4332 = vsel %vm4330, %v4265, 0
      %v4335 = vsel %vm4330, %v4266, 0
      %vm4337 = vcmask 1040384
      %vm4338 = vcmask 1041408
      %v4339 = vsel %vm4337, 4294967295, 65535
      %v4340 = vsel %vm4338, %v4339, 0
      %v4342 = vand.u32 %v4320, %v4340
      %4344 = vmatprep.subr.bf16.mxu0 0
      %4345 = vmatpush1.bf16.msra.mxu0 %v4318
      %4346 = vmatprep.subr.bf16.mxu0 0
      %4347 = vmatpush1.bf16.msra.mxu0 %v4317
      %4348 = vmatprep.subr.bf16.mxu0 0
      %4349 = vmatpush1.bf16.msra.mxu0 %v4316
      %4350 = vmatprep.subr.bf16.mxu0 0
      %4351 = vmatpush1.bf16.msra.mxu0 %v4315
      %4352 = vmatprep.subr.bf16.mxu0 0
      %4353 = vmatpush1.bf16.msra.mxu0 %v4314
      %4354 = vmatprep.subr.bf16.mxu0 0
      %4355 = vmatpush1.bf16.msra.mxu0 %v4313
      %4356 = vmatprep.subr.bf16.mxu0 0
      %4357 = vmatpush1.bf16.msra.mxu0 %v4312
      %4358 = vmatprep.subr.bf16.mxu0 0
      %4359 = vmatpush1.bf16.msra.mxu0 %v4311
      %4360 = vmatprep.subr.bf16.mxu0 0
      %4361 = vmatpush2.bf16.msra.mxu0 0
      %4362 = vmatprep.subr.bf16.mxu0 0
      %4363 = vmatpush2.bf16.msra.mxu0 0
      %4364 = vmatprep.subr.bf16.mxu0 0
      %4365 = vmatpush2.bf16.msra.mxu0 0
      %4366 = vmatprep.subr.bf16.mxu0 0
      %4367 = vmatpush2.bf16.msra.mxu0 0
      %4368 = vmatprep.subr.bf16.mxu0 0
      %4369 = vmatpush2.bf16.msra.mxu0 0
      %4370 = vmatprep.subr.bf16.mxu0 0
      %4371 = vmatpush2.bf16.msra.mxu0 0
      %4372 = vmatprep.subr.bf16.mxu0 0
      %4373 = vmatpush2.bf16.msra.mxu0 %v4342
      %4374 = vmatprep.subr.bf16.mxu0 0
      %4375 = vmatpush2.bf16.msra.mxu0 %v4319
      %4376 = vmatprep.mubr.bf16.mxu0 %v4332
      %4377 = vmatmul.mubr.bf16.gmra.mxu0 %v4249
      %v4378 = vpop.f32.mrf.mxu0
      %v4379 = vadd.f32 %v4239, %v4378
      %v4380 = vpop.f32.mrf.mxu0
      %v4381 = vpop.f32.mrf.mxu0
      %v4382 = vadd.f32 %v4239, %v4381
      %v4383 = vpop.f32.mrf.mxu0
      %4384 = vmatprep.mubr.bf16.mxu0 %v4335
      %4385 = vmatmul.mubr.bf16.gmra.mxu0 %v4250
      %v4386 = vpop.f32.mrf.mxu0
      %v4387 = vadd.f32 %v4239, %v4386
      %v4388 = vpop.f32.mrf.mxu0
      %v4389 = vpop.f32.mrf.mxu0
      %v4390 = vadd.f32 %v4239, %v4389
      %v4391 = vpop.f32.mrf.mxu0
      %4392 = vdwg.mxu0
      %v4393 = vmax.f32 %v4379, 0.0
      %v4394 = vmax.f32 %v4382, 0.0
      %v4395 = vmax.f32 %v4387, 0.0
      %v4396 = vmax.f32 %v4390, 0.0
      %v4401 = vcombine.high %v4393, %v4393
      %v4402 = vcombine.high %v4394, %v4394
      %v4403 = vcombine.high %v4395, %v4395
      %v4404 = vcombine.high %v4396, %v4396
      %v4409 = vld [vmem:[%s537] sm:$0xff]
      %v4410 = vld [vmem:[%s537 + $0x10] sm:$0xff]
      %v4411 = vld [vmem:[%s537 + $0x20] sm:$0xff]
      %v4412 = vld [vmem:[%s525] sm:$0xff]
      %v4413 = vld [vmem:[%s525 + $0x10] sm:$0xff]
      %v4414 = vld [vmem:[%s525 + $0x20] sm:$0xff]
      %v4415 = vld [vmem:[%s553] sm:$0xff]
      %v4416 = vld [vmem:[%s553 + $0x10] sm:$0xff]
      %v4417 = vld [vmem:[%s553 + $0x20] sm:$0xff]
      %v4418 = vld [vmem:[%s541] sm:$0xff]
      %v4419 = vld [vmem:[%s541 + $0x10] sm:$0xff]
      %v4420 = vld [vmem:[%s541 + $0x20] sm:$0xff]
      %v4421 = vld [vmem:[%s570] sm:$0xff]
      %v4422 = vld [vmem:[%s570 + $0x10] sm:$0xff]
      %v4423 = vld [vmem:[%s570 + $0x20] sm:$0xff]
      %v4424 = vld [vmem:[%s558] sm:$0xff]
      %v4425 = vld [vmem:[%s558 + $0x10] sm:$0xff]
      %v4426 = vld [vmem:[%s558 + $0x20] sm:$0xff]
      %v4427 = vld [vmem:[%s586] sm:$0xff]
      %v4428 = vld [vmem:[%s586 + $0x10] sm:$0xff]
      %v4429 = vld [vmem:[%s586 + $0x20] sm:$0xff]
      %v4430 = vld [vmem:[%s574] sm:$0xff]
      %v4431 = vld [vmem:[%s574 + $0x10] sm:$0xff]
      %v4432 = vld [vmem:[%s574 + $0x20] sm:$0xff]
      %v4433 = vld [vmem:[%s603] sm:$0xff]
      %v4434 = vld [vmem:[%s603 + $0x10] sm:$0xff]
      %v4435 = vld [vmem:[%s603 + $0x20] sm:$0xff]
      %v4436 = vld [vmem:[%s591] sm:$0xff]
      %v4437 = vld [vmem:[%s591 + $0x10] sm:$0xff]
      %v4438 = vld [vmem:[%s591 + $0x20] sm:$0xff]
      %v4439 = vld [vmem:[%s619] sm:$0xff]
      %v4440 = vld [vmem:[%s619 + $0x10] sm:$0xff]
      %v4441 = vld [vmem:[%s619 + $0x20] sm:$0xff]
      %v4442 = vld [vmem:[%s607] sm:$0xff]
      %v4443 = vld [vmem:[%s607 + $0x10] sm:$0xff]
      %v4444 = vld [vmem:[%s607 + $0x20] sm:$0xff]
      %v4445 = vld [vmem:[%s636] sm:$0xff]
      %v4446 = vld [vmem:[%s636 + $0x10] sm:$0xff]
      %v4447 = vld [vmem:[%s636 + $0x20] sm:$0xff]
      %v4448 = vld [vmem:[%s624] sm:$0xff]
      %v4449 = vld [vmem:[%s624 + $0x10] sm:$0xff]
      %v4450 = vld [vmem:[%s624 + $0x20] sm:$0xff]
      %4454 = vrot.lane.b32.xlu0 %v4409, 127
      %v4455 = vpop.permute.xlu0 %4454
      %4456 = vrot.lane.b32.xlu0 %v4410, 127
      %v4457 = vpop.permute.xlu0 %4456
      %4458 = vrot.lane.b32.xlu0 %v4411, 127
      %v4459 = vpop.permute.xlu0 %4458
      %4466 = vrot.lane.b32.xlu0 %v4412, 126
      %v4467 = vpop.permute.xlu0 %4466
      %4468 = vrot.lane.b32.xlu0 %v4413, 126
      %v4469 = vpop.permute.xlu0 %4468
      %4470 = vrot.lane.b32.xlu0 %v4414, 126
      %v4471 = vpop.permute.xlu0 %4470
      %4478 = vrot.lane.b32.xlu0 %v4415, 127
      %v4479 = vpop.permute.xlu0 %4478
      %4480 = vrot.lane.b32.xlu0 %v4416, 127
      %v4481 = vpop.permute.xlu0 %4480
      %4482 = vrot.lane.b32.xlu0 %v4417, 127
      %v4483 = vpop.permute.xlu0 %4482
      %4490 = vrot.lane.b32.xlu0 %v4418, 126
      %v4491 = vpop.permute.xlu0 %4490
      %4492 = vrot.lane.b32.xlu0 %v4419, 126
      %v4493 = vpop.permute.xlu0 %4492
      %4494 = vrot.lane.b32.xlu0 %v4420, 126
      %v4495 = vpop.permute.xlu0 %4494
      %4502 = vrot.lane.b32.xlu0 %v4424, 127
      %v4503 = vpop.permute.xlu0 %4502
      %4504 = vrot.lane.b32.xlu0 %v4425, 127
      %v4505 = vpop.permute.xlu0 %4504
      %4506 = vrot.lane.b32.xlu0 %v4426, 127
      %v4507 = vpop.permute.xlu0 %4506
      %4508 = vrot.lane.b32.xlu0 %v583, 1
      %v4509 = vpop.permute.xlu0 %4508
      %4510 = vrot.lane.b32.xlu0 %v584, 1
      %v4511 = vpop.permute.xlu0 %4510
      %4512 = vrot.lane.b32.xlu0 %v585, 1
      %v4513 = vpop.permute.xlu0 %4512
      %4517 = vrot.lane.b32.xlu0 %v587, 1
      %v4518 = vpop.permute.xlu0 %4517
      %4519 = vrot.lane.b32.xlu0 %v588, 1
      %v4520 = vpop.permute.xlu0 %4519
      %4521 = vrot.lane.b32.xlu0 %v589, 1
      %v4522 = vpop.permute.xlu0 %4521
      %4526 = vrot.lane.b32.xlu0 %v4430, 127
      %v4527 = vpop.permute.xlu0 %4526
      %4528 = vrot.lane.b32.xlu0 %v4431, 127
      %v4529 = vpop.permute.xlu0 %4528
      %4530 = vrot.lane.b32.xlu0 %v4432, 127
      %v4531 = vpop.permute.xlu0 %4530
      %4532 = vrot.lane.b32.xlu0 %v600, 1
      %v4533 = vpop.permute.xlu0 %4532
      %4534 = vrot.lane.b32.xlu0 %v601, 1
      %v4535 = vpop.permute.xlu0 %4534
      %4536 = vrot.lane.b32.xlu0 %v602, 1
      %v4537 = vpop.permute.xlu0 %4536
      %4541 = vrot.lane.b32.xlu0 %v604, 1
      %v4542 = vpop.permute.xlu0 %4541
      %4543 = vrot.lane.b32.xlu0 %v605, 1
      %v4544 = vpop.permute.xlu0 %4543
      %4545 = vrot.lane.b32.xlu0 %v606, 1
      %v4546 = vpop.permute.xlu0 %4545
      %4550 = vrot.lane.b32.xlu0 %v4436, 127
      %v4551 = vpop.permute.xlu0 %4550
      %4552 = vrot.lane.b32.xlu0 %v4437, 127
      %v4553 = vpop.permute.xlu0 %4552
      %4554 = vrot.lane.b32.xlu0 %v4438, 127
      %v4555 = vpop.permute.xlu0 %4554
      %4559 = vrot.lane.b32.xlu0 %v4442, 127
      %v4560 = vpop.permute.xlu0 %4559
      %4561 = vrot.lane.b32.xlu0 %v4443, 127
      %v4562 = vpop.permute.xlu0 %4561
      %4563 = vrot.lane.b32.xlu0 %v4444, 127
      %v4564 = vpop.permute.xlu0 %4563
      %4571 = vrot.lane.b32.xlu0 %v4421, 127
      %v4572 = vpop.permute.xlu0 %4571
      %4573 = vrot.lane.b32.xlu0 %v4422, 127
      %v4574 = vpop.permute.xlu0 %4573
      %4575 = vrot.lane.b32.xlu0 %v4423, 127
      %v4576 = vpop.permute.xlu0 %4575
      %4577 = vrot.lane.b32.xlu0 %v4503, 127
      %v4578 = vpop.permute.xlu0 %4577
      %4579 = vrot.lane.b32.xlu0 %v4505, 127
      %v4580 = vpop.permute.xlu0 %4579
      %4581 = vrot.lane.b32.xlu0 %v4507, 127
      %v4582 = vpop.permute.xlu0 %4581
      %4583 = vrot.lane.b32.xlu0 %v4509, 127
      %v4584 = vpop.permute.xlu0 %4583
      %4585 = vrot.lane.b32.xlu0 %v4511, 127
      %v4586 = vpop.permute.xlu0 %4585
      %4587 = vrot.lane.b32.xlu0 %v4513, 127
      %v4588 = vpop.permute.xlu0 %4587
      %4589 = vrot.lane.b32.xlu0 %v4518, 127
      %v4590 = vpop.permute.xlu0 %4589
      %4591 = vrot.lane.b32.xlu0 %v4520, 127
      %v4592 = vpop.permute.xlu0 %4591
      %4593 = vrot.lane.b32.xlu0 %v4522, 127
      %v4594 = vpop.permute.xlu0 %4593
      %4595 = vrot.lane.b32.xlu0 %v4427, 127
      %v4596 = vpop.permute.xlu0 %4595
      %4597 = vrot.lane.b32.xlu0 %v4428, 127
      %v4598 = vpop.permute.xlu0 %4597
      %4599 = vrot.lane.b32.xlu0 %v4429, 127
      %v4600 = vpop.permute.xlu0 %4599
      %4601 = vrot.lane.b32.xlu0 %v4527, 127
      %v4602 = vpop.permute.xlu0 %4601
      %4603 = vrot.lane.b32.xlu0 %v4529, 127
      %v4604 = vpop.permute.xlu0 %4603
      %4605 = vrot.lane.b32.xlu0 %v4531, 127
      %v4606 = vpop.permute.xlu0 %4605
      %4607 = vrot.lane.b32.xlu0 %v4533, 127
      %v4608 = vpop.permute.xlu0 %4607
      %4609 = vrot.lane.b32.xlu0 %v4535, 127
      %v4610 = vpop.permute.xlu0 %4609
      %4611 = vrot.lane.b32.xlu0 %v4537, 127
      %v4612 = vpop.permute.xlu0 %4611
      %4613 = vrot.lane.b32.xlu0 %v4542, 127
      %v4614 = vpop.permute.xlu0 %4613
      %4615 = vrot.lane.b32.xlu0 %v4544, 127
      %v4616 = vpop.permute.xlu0 %4615
      %4617 = vrot.lane.b32.xlu0 %v4546, 127
      %v4618 = vpop.permute.xlu0 %4617
      %4652 = vrot.lane.b32.xlu0 %v4433, 127
      %v4653 = vpop.permute.xlu0 %4652
      %4654 = vrot.lane.b32.xlu0 %v4434, 127
      %v4655 = vpop.permute.xlu0 %4654
      %4656 = vrot.lane.b32.xlu0 %v4435, 127
      %v4657 = vpop.permute.xlu0 %4656
      %4658 = vrot.lane.b32.xlu0 %v4551, 127
      %v4659 = vpop.permute.xlu0 %4658
      %4660 = vrot.lane.b32.xlu0 %v4553, 127
      %v4661 = vpop.permute.xlu0 %4660
      %4662 = vrot.lane.b32.xlu0 %v4555, 127
      %v4663 = vpop.permute.xlu0 %4662
      %4664 = vrot.lane.b32.xlu0 %v4439, 127
      %v4665 = vpop.permute.xlu0 %4664
      %4666 = vrot.lane.b32.xlu0 %v4440, 127
      %v4667 = vpop.permute.xlu0 %4666
      %4668 = vrot.lane.b32.xlu0 %v4441, 127
      %v4669 = vpop.permute.xlu0 %4668
      %4670 = vrot.lane.b32.xlu0 %v4560, 127
      %v4671 = vpop.permute.xlu0 %4670
      %4672 = vrot.lane.b32.xlu0 %v4562, 127
      %v4673 = vpop.permute.xlu0 %4672
      %4674 = vrot.lane.b32.xlu0 %v4564, 127
      %v4675 = vpop.permute.xlu0 %4674
      %4676 = vrot.lane.b32.xlu0 %v4445, 127
      %v4677 = vpop.permute.xlu0 %4676
      %4678 = vrot.lane.b32.xlu0 %v4446, 127
      %v4679 = vpop.permute.xlu0 %4678
      %4680 = vrot.lane.b32.xlu0 %v4447, 127
      %v4681 = vpop.permute.xlu0 %4680
      %4700 = vrot.lane.b32.xlu0 %v4448, 126
      %v4701 = vpop.permute.xlu0 %4700
      %4702 = vrot.lane.b32.xlu0 %v4449, 126
      %v4703 = vpop.permute.xlu0 %4702
      %4704 = vrot.lane.b32.xlu0 %v4450, 126
      %v4705 = vpop.permute.xlu0 %4704
      %v4709 = vcombine.low %v534, %v536
      %v4710 = vcombine.high %v534, %v536
      %v4712 = vunpack.c.l.s4 1983009808
      %v4713 = vunpack.c.0.s8 %v4712
      %v4714 = vlaneseq
      %v4715 = vshrl.u32 %v4714, 7
      %v4716 = vsub.s32 %v4713, %v4715
      %v4717 = vrot.slane %v4709, %v4716
      %v4719 = vunpack.c.l.s4 1983009808
      %v4720 = vunpack.c.0.s8 %v4719
      %v4721 = vlaneseq
      %v4722 = vshrl.u32 %v4721, 7
      %v4723 = vsub.s32 %v4720, %v4722
      %v4724 = vrot.slane %v4710, %v4723
      %v4725 = vcombine.low %v535, %v538
      %v4726 = vcombine.high %v535, %v538
      %v4728 = vunpack.c.l.s4 1983009808
      %v4729 = vunpack.c.0.s8 %v4728
      %v4730 = vlaneseq
      %v4731 = vshrl.u32 %v4730, 7
      %v4732 = vsub.s32 %v4729, %v4731
      %v4733 = vrot.slane %v4725, %v4732
      %v4735 = vunpack.c.l.s4 1983009808
      %v4736 = vunpack.c.0.s8 %v4735
      %v4737 = vlaneseq
      %v4738 = vshrl.u32 %v4737, 7
      %v4739 = vsub.s32 %v4736, %v4738
      %v4740 = vrot.slane %v4726, %v4739
      %v4741 = vcombine.low %v539, %v644
      %v4742 = vcombine.high %v539, %v644
      %v4744 = vunpack.c.l.s4 1983009808
      %v4745 = vunpack.c.0.s8 %v4744
      %v4746 = vlaneseq
      %v4747 = vshrl.u32 %v4746, 7
      %v4748 = vsub.s32 %v4745, %v4747
      %v4749 = vrot.slane %v4741, %v4748
      %v4751 = vunpack.c.l.s4 1983009808
      %v4752 = vunpack.c.0.s8 %v4751
      %v4753 = vlaneseq
      %v4754 = vshrl.u32 %v4753, 7
      %v4755 = vsub.s32 %v4752, %v4754
      %v4756 = vrot.slane %v4742, %v4755
      %v4757 = vcombine.low %v540, %v646
      %v4758 = vcombine.high %v540, %v646
      %v4760 = vunpack.c.l.s4 1983009808
      %v4761 = vunpack.c.0.s8 %v4760
      %v4762 = vlaneseq
      %v4763 = vshrl.u32 %v4762, 7
      %v4764 = vsub.s32 %v4761, %v4763
      %v4765 = vrot.slane %v4757, %v4764
      %v4767 = vunpack.c.l.s4 1983009808
      %v4768 = vunpack.c.0.s8 %v4767
      %v4769 = vlaneseq
      %v4770 = vshrl.u32 %v4769, 7
      %v4771 = vsub.s32 %v4768, %v4770
      %v4772 = vrot.slane %v4758, %v4771
      %v4773 = vcombine.low %v4717, %v4733
      %v4774 = vcombine.high %v4717, %v4733
      %v4776 = vunpack.c.l.s4 1934713408
      %v4777 = vunpack.c.0.s8 %v4776
      %v4778 = vlaneseq
      %v4779 = vshrl.u32 %v4778, 7
      %v4780 = vsub.s32 %v4777, %v4779
      %v4781 = vrot.slane %v4773, %v4780
      %v4783 = vunpack.c.l.s4 1934713408
      %v4784 = vunpack.c.0.s8 %v4783
      %v4785 = vlaneseq
      %v4786 = vshrl.u32 %v4785, 7
      %v4787 = vsub.s32 %v4784, %v4786
      %v4788 = vrot.slane %v4774, %v4787
      %v4789 = vcombine.low %v4724, %v4740
      %v4790 = vcombine.high %v4724, %v4740
      %v4792 = vunpack.c.l.s4 1934713408
      %v4793 = vunpack.c.0.s8 %v4792
      %v4794 = vlaneseq
      %v4795 = vshrl.u32 %v4794, 7
      %v4796 = vsub.s32 %v4793, %v4795
      %v4797 = vrot.slane %v4789, %v4796
      %v4799 = vunpack.c.l.s4 1934713408
      %v4800 = vunpack.c.0.s8 %v4799
      %v4801 = vlaneseq
      %v4802 = vshrl.u32 %v4801, 7
      %v4803 = vsub.s32 %v4800, %v4802
      %v4804 = vrot.slane %v4790, %v4803
      %v4805 = vcombine.low %v4749, %v4765
      %v4806 = vcombine.high %v4749, %v4765
      %v4808 = vunpack.c.l.s4 1934713408
      %v4809 = vunpack.c.0.s8 %v4808
      %v4810 = vlaneseq
      %v4811 = vshrl.u32 %v4810, 7
      %v4812 = vsub.s32 %v4809, %v4811
      %v4813 = vrot.slane %v4805, %v4812
      %v4815 = vunpack.c.l.s4 1934713408
      %v4816 = vunpack.c.0.s8 %v4815
      %v4817 = vlaneseq
      %v4818 = vshrl.u32 %v4817, 7
      %v4819 = vsub.s32 %v4816, %v4818
      %v4820 = vrot.slane %v4806, %v4819
      %v4821 = vcombine.low %v4756, %v4772
      %v4822 = vcombine.high %v4756, %v4772
      %v4824 = vunpack.c.l.s4 1934713408
      %v4825 = vunpack.c.0.s8 %v4824
      %v4826 = vlaneseq
      %v4827 = vshrl.u32 %v4826, 7
      %v4828 = vsub.s32 %v4825, %v4827
      %v4829 = vrot.slane %v4821, %v4828
      %v4831 = vunpack.c.l.s4 1934713408
      %v4832 = vunpack.c.0.s8 %v4831
      %v4833 = vlaneseq
      %v4834 = vshrl.u32 %v4833, 7
      %v4835 = vsub.s32 %v4832, %v4834
      %v4836 = vrot.slane %v4822, %v4835
      %v4837 = vcombine.low %v4781, %v4813
      %v4838 = vcombine.high %v4781, %v4813
      %v4839 = vcombine.low %v4788, %v4820
      %v4840 = vcombine.high %v4788, %v4820
      %v4841 = vcombine.low %v4797, %v4829
      %v4842 = vcombine.high %v4797, %v4829
      %v4843 = vcombine.low %v4804, %v4836
      %v4844 = vcombine.high %v4804, %v4836
      %v4845 = vcombine.low %v648, %v658
      %v4846 = vcombine.high %v648, %v658
      %v4848 = vunpack.c.l.s4 1983009808
      %v4849 = vunpack.c.0.s8 %v4848
      %v4850 = vlaneseq
      %v4851 = vshrl.u32 %v4850, 7
      %v4852 = vsub.s32 %v4849, %v4851
      %v4853 = vrot.slane %v4845, %v4852
      %v4855 = vunpack.c.l.s4 1983009808
      %v4856 = vunpack.c.0.s8 %v4855
      %v4857 = vlaneseq
      %v4858 = vshrl.u32 %v4857, 7
      %v4859 = vsub.s32 %v4856, %v4858
      %v4860 = vrot.slane %v4846, %v4859
      %v4861 = vcombine.low %v656, %v660
      %v4862 = vcombine.high %v656, %v660
      %v4864 = vunpack.c.l.s4 1983009808
      %v4865 = vunpack.c.0.s8 %v4864
      %v4866 = vlaneseq
      %v4867 = vshrl.u32 %v4866, 7
      %v4868 = vsub.s32 %v4865, %v4867
      %v4869 = vrot.slane %v4861, %v4868
      %v4871 = vunpack.c.l.s4 1983009808
      %v4872 = vunpack.c.0.s8 %v4871
      %v4873 = vlaneseq
      %v4874 = vshrl.u32 %v4873, 7
      %v4875 = vsub.s32 %v4872, %v4874
      %v4876 = vrot.slane %v4862, %v4875
      %v4877 = vcombine.low %v668, %v672
      %v4878 = vcombine.high %v668, %v672
      %v4880 = vunpack.c.l.s4 1983009808
      %v4881 = vunpack.c.0.s8 %v4880
      %v4882 = vlaneseq
      %v4883 = vshrl.u32 %v4882, 7
      %v4884 = vsub.s32 %v4881, %v4883
      %v4885 = vrot.slane %v4877, %v4884
      %v4887 = vunpack.c.l.s4 1983009808
      %v4888 = vunpack.c.0.s8 %v4887
      %v4889 = vlaneseq
      %v4890 = vshrl.u32 %v4889, 7
      %v4891 = vsub.s32 %v4888, %v4890
      %v4892 = vrot.slane %v4878, %v4891
      %v4893 = vcombine.low %v670, %v4455
      %v4894 = vcombine.high %v670, %v4455
      %v4896 = vunpack.c.l.s4 1983009808
      %v4897 = vunpack.c.0.s8 %v4896
      %v4898 = vlaneseq
      %v4899 = vshrl.u32 %v4898, 7
      %v4900 = vsub.s32 %v4897, %v4899
      %v4901 = vrot.slane %v4893, %v4900
      %v4903 = vunpack.c.l.s4 1983009808
      %v4904 = vunpack.c.0.s8 %v4903
      %v4905 = vlaneseq
      %v4906 = vshrl.u32 %v4905, 7
      %v4907 = vsub.s32 %v4904, %v4906
      %v4908 = vrot.slane %v4894, %v4907
      %v4909 = vcombine.low %v4853, %v4869
      %v4910 = vcombine.high %v4853, %v4869
      %v4912 = vunpack.c.l.s4 1934713408
      %v4913 = vunpack.c.0.s8 %v4912
      %v4914 = vlaneseq
      %v4915 = vshrl.u32 %v4914, 7
      %v4916 = vsub.s32 %v4913, %v4915
      %v4917 = vrot.slane %v4909, %v4916
      %v4919 = vunpack.c.l.s4 1934713408
      %v4920 = vunpack.c.0.s8 %v4919
      %v4921 = vlaneseq
      %v4922 = vshrl.u32 %v4921, 7
      %v4923 = vsub.s32 %v4920, %v4922
      %v4924 = vrot.slane %v4910, %v4923
      %v4925 = vcombine.low %v4860, %v4876
      %v4926 = vcombine.high %v4860, %v4876
      %v4928 = vunpack.c.l.s4 1934713408
      %v4929 = vunpack.c.0.s8 %v4928
      %v4930 = vlaneseq
      %v4931 = vshrl.u32 %v4930, 7
      %v4932 = vsub.s32 %v4929, %v4931
      %v4933 = vrot.slane %v4925, %v4932
      %v4935 = vunpack.c.l.s4 1934713408
      %v4936 = vunpack.c.0.s8 %v4935
      %v4937 = vlaneseq
      %v4938 = vshrl.u32 %v4937, 7
      %v4939 = vsub.s32 %v4936, %v4938
      %v4940 = vrot.slane %v4926, %v4939
      %v4941 = vcombine.low %v4885, %v4901
      %v4942 = vcombine.high %v4885, %v4901
      %v4944 = vunpack.c.l.s4 1934713408
      %v4945 = vunpack.c.0.s8 %v4944
      %v4946 = vlaneseq
      %v4947 = vshrl.u32 %v4946, 7
      %v4948 = vsub.s32 %v4945, %v4947
      %v4949 = vrot.slane %v4941, %v4948
      %v4951 = vunpack.c.l.s4 1934713408
      %v4952 = vunpack.c.0.s8 %v4951
      %v4953 = vlaneseq
      %v4954 = vshrl.u32 %v4953, 7
      %v4955 = vsub.s32 %v4952, %v4954
      %v4956 = vrot.slane %v4942, %v4955
      %v4957 = vcombine.low %v4892, %v4908
      %v4958 = vcombine.high %v4892, %v4908
      %v4960 = vunpack.c.l.s4 1934713408
      %v4961 = vunpack.c.0.s8 %v4960
      %v4962 = vlaneseq
      %v4963 = vshrl.u32 %v4962, 7
      %v4964 = vsub.s32 %v4961, %v4963
      %v4965 = vrot.slane %v4957, %v4964
      %v4967 = vunpack.c.l.s4 1934713408
      %v4968 = vunpack.c.0.s8 %v4967
      %v4969 = vlaneseq
      %v4970 = vshrl.u32 %v4969, 7
      %v4971 = vsub.s32 %v4968, %v4970
      %v4972 = vrot.slane %v4958, %v4971
      %v4973 = vcombine.low %v4917, %v4949
      %v4974 = vcombine.high %v4917, %v4949
      %v4975 = vcombine.low %v4924, %v4956
      %v4976 = vcombine.high %v4924, %v4956
      %v4977 = vcombine.low %v4933, %v4965
      %v4978 = vcombine.high %v4933, %v4965
      %v4979 = vcombine.low %v4940, %v4972
      %v4980 = vcombine.high %v4940, %v4972
      %v4981 = vcombine.low %v4457, %v4467
      %v4982 = vcombine.high %v4457, %v4467
      %v4984 = vunpack.c.l.s4 1983009808
      %v4985 = vunpack.c.0.s8 %v4984
      %v4986 = vlaneseq
      %v4987 = vshrl.u32 %v4986, 7
      %v4988 = vsub.s32 %v4985, %v4987
      %v4989 = vrot.slane %v4981, %v4988
      %v4991 = vunpack.c.l.s4 1983009808
      %v4992 = vunpack.c.0.s8 %v4991
      %v4993 = vlaneseq
      %v4994 = vshrl.u32 %v4993, 7
      %v4995 = vsub.s32 %v4992, %v4994
      %v4996 = vrot.slane %v4982, %v4995
      %v4997 = vcombine.low %v4459, %v4469
      %v4998 = vcombine.high %v4459, %v4469
      %v5000 = vunpack.c.l.s4 1983009808
      %v5001 = vunpack.c.0.s8 %v5000
      %v5002 = vlaneseq
      %v5003 = vshrl.u32 %v5002, 7
      %v5004 = vsub.s32 %v5001, %v5003
      %v5005 = vrot.slane %v4997, %v5004
      %v5007 = vunpack.c.l.s4 1983009808
      %v5008 = vunpack.c.0.s8 %v5007
      %v5009 = vlaneseq
      %v5010 = vshrl.u32 %v5009, 7
      %v5011 = vsub.s32 %v5008, %v5010
      %v5012 = vrot.slane %v4998, %v5011
      %v5013 = vcombine.low %v4471, %v551
      %v5014 = vcombine.high %v4471, %v551
      %v5016 = vunpack.c.l.s4 1983009808
      %v5017 = vunpack.c.0.s8 %v5016
      %v5018 = vlaneseq
      %v5019 = vshrl.u32 %v5018, 7
      %v5020 = vsub.s32 %v5017, %v5019
      %v5021 = vrot.slane %v5013, %v5020
      %v5023 = vunpack.c.l.s4 1983009808
      %v5024 = vunpack.c.0.s8 %v5023
      %v5025 = vlaneseq
      %v5026 = vshrl.u32 %v5025, 7
      %v5027 = vsub.s32 %v5024, %v5026
      %v5028 = vrot.slane %v5014, %v5027
      %v5029 = vcombine.low %v550, %v552
      %v5030 = vcombine.high %v550, %v552
      %v5032 = vunpack.c.l.s4 1983009808
      %v5033 = vunpack.c.0.s8 %v5032
      %v5034 = vlaneseq
      %v5035 = vshrl.u32 %v5034, 7
      %v5036 = vsub.s32 %v5033, %v5035
      %v5037 = vrot.slane %v5029, %v5036
      %v5039 = vunpack.c.l.s4 1983009808
      %v5040 = vunpack.c.0.s8 %v5039
      %v5041 = vlaneseq
      %v5042 = vshrl.u32 %v5041, 7
      %v5043 = vsub.s32 %v5040, %v5042
      %v5044 = vrot.slane %v5030, %v5043
      %v5045 = vcombine.low %v4989, %v5005
      %v5046 = vcombine.high %v4989, %v5005
      %v5048 = vunpack.c.l.s4 1934713408
      %v5049 = vunpack.c.0.s8 %v5048
      %v5050 = vlaneseq
      %v5051 = vshrl.u32 %v5050, 7
      %v5052 = vsub.s32 %v5049, %v5051
      %v5053 = vrot.slane %v5045, %v5052
      %v5055 = vunpack.c.l.s4 1934713408
      %v5056 = vunpack.c.0.s8 %v5055
      %v5057 = vlaneseq
      %v5058 = vshrl.u32 %v5057, 7
      %v5059 = vsub.s32 %v5056, %v5058
      %v5060 = vrot.slane %v5046, %v5059
      %v5061 = vcombine.low %v4996, %v5012
      %v5062 = vcombine.high %v4996, %v5012
      %v5064 = vunpack.c.l.s4 1934713408
      %v5065 = vunpack.c.0.s8 %v5064
      %v5066 = vlaneseq
      %v5067 = vshrl.u32 %v5066, 7
      %v5068 = vsub.s32 %v5065, %v5067
      %v5069 = vrot.slane %v5061, %v5068
      %v5071 = vunpack.c.l.s4 1934713408
      %v5072 = vunpack.c.0.s8 %v5071
      %v5073 = vlaneseq
      %v5074 = vshrl.u32 %v5073, 7
      %v5075 = vsub.s32 %v5072, %v5074
      %v5076 = vrot.slane %v5062, %v5075
      %v5077 = vcombine.low %v5021, %v5037
      %v5078 = vcombine.high %v5021, %v5037
      %v5080 = vunpack.c.l.s4 1934713408
      %v5081 = vunpack.c.0.s8 %v5080
      %v5082 = vlaneseq
      %v5083 = vshrl.u32 %v5082, 7
      %v5084 = vsub.s32 %v5081, %v5083
      %v5085 = vrot.slane %v5077, %v5084
      %v5087 = vunpack.c.l.s4 1934713408
      %v5088 = vunpack.c.0.s8 %v5087
      %v5089 = vlaneseq
      %v5090 = vshrl.u32 %v5089, 7
      %v5091 = vsub.s32 %v5088, %v5090
      %v5092 = vrot.slane %v5078, %v5091
      %v5093 = vcombine.low %v5028, %v5044
      %v5094 = vcombine.high %v5028, %v5044
      %v5096 = vunpack.c.l.s4 1934713408
      %v5097 = vunpack.c.0.s8 %v5096
      %v5098 = vlaneseq
      %v5099 = vshrl.u32 %v5098, 7
      %v5100 = vsub.s32 %v5097, %v5099
      %v5101 = vrot.slane %v5093, %v5100
      %v5103 = vunpack.c.l.s4 1934713408
      %v5104 = vunpack.c.0.s8 %v5103
      %v5105 = vlaneseq
      %v5106 = vshrl.u32 %v5105, 7
      %v5107 = vsub.s32 %v5104, %v5106
      %v5108 = vrot.slane %v5094, %v5107
      %v5109 = vcombine.low %v5053, %v5085
      %v5110 = vcombine.high %v5053, %v5085
      %v5111 = vcombine.low %v5060, %v5092
      %v5112 = vcombine.high %v5060, %v5092
      %v5113 = vcombine.low %v5069, %v5101
      %v5114 = vcombine.high %v5069, %v5101
      %v5115 = vcombine.low %v5076, %v5108
      %v5116 = vcombine.high %v5076, %v5108
      %v5117 = vcombine.low %v554, %v556
      %v5118 = vcombine.high %v554, %v556
      %v5120 = vunpack.c.l.s4 1983009808
      %v5121 = vunpack.c.0.s8 %v5120
      %v5122 = vlaneseq
      %v5123 = vshrl.u32 %v5122, 7
      %v5124 = vsub.s32 %v5121, %v5123
      %v5125 = vrot.slane %v5117, %v5124
      %v5127 = vunpack.c.l.s4 1983009808
      %v5128 = vunpack.c.0.s8 %v5127
      %v5129 = vlaneseq
      %v5130 = vshrl.u32 %v5129, 7
      %v5131 = vsub.s32 %v5128, %v5130
      %v5132 = vrot.slane %v5118, %v5131
      %v5133 = vcombine.low %v555, %v680
      %v5134 = vcombine.high %v555, %v680
      %v5136 = vunpack.c.l.s4 1983009808
      %v5137 = vunpack.c.0.s8 %v5136
      %v5138 = vlaneseq
      %v5139 = vshrl.u32 %v5138, 7
      %v5140 = vsub.s32 %v5137, %v5139
      %v5141 = vrot.slane %v5133, %v5140
      %v5143 = vunpack.c.l.s4 1983009808
      %v5144 = vunpack.c.0.s8 %v5143
      %v5145 = vlaneseq
      %v5146 = vshrl.u32 %v5145, 7
      %v5147 = vsub.s32 %v5144, %v5146
      %v5148 = vrot.slane %v5134, %v5147
      %v5149 = vcombine.low %v682, %v692
      %v5150 = vcombine.high %v682, %v692
      %v5152 = vunpack.c.l.s4 1983009808
      %v5153 = vunpack.c.0.s8 %v5152
      %v5154 = vlaneseq
      %v5155 = vshrl.u32 %v5154, 7
      %v5156 = vsub.s32 %v5153, %v5155
      %v5157 = vrot.slane %v5149, %v5156
      %v5159 = vunpack.c.l.s4 1983009808
      %v5160 = vunpack.c.0.s8 %v5159
      %v5161 = vlaneseq
      %v5162 = vshrl.u32 %v5161, 7
      %v5163 = vsub.s32 %v5160, %v5162
      %v5164 = vrot.slane %v5150, %v5163
      %v5165 = vcombine.low %v684, %v694
      %v5166 = vcombine.high %v684, %v694
      %v5168 = vunpack.c.l.s4 1983009808
      %v5169 = vunpack.c.0.s8 %v5168
      %v5170 = vlaneseq
      %v5171 = vshrl.u32 %v5170, 7
      %v5172 = vsub.s32 %v5169, %v5171
      %v5173 = vrot.slane %v5165, %v5172
      %v5175 = vunpack.c.l.s4 1983009808
      %v5176 = vunpack.c.0.s8 %v5175
      %v5177 = vlaneseq
      %v5178 = vshrl.u32 %v5177, 7
      %v5179 = vsub.s32 %v5176, %v5178
      %v5180 = vrot.slane %v5166, %v5179
      %v5181 = vcombine.low %v5125, %v5141
      %v5182 = vcombine.high %v5125, %v5141
      %v5184 = vunpack.c.l.s4 1934713408
      %v5185 = vunpack.c.0.s8 %v5184
      %v5186 = vlaneseq
      %v5187 = vshrl.u32 %v5186, 7
      %v5188 = vsub.s32 %v5185, %v5187
      %v5189 = vrot.slane %v5181, %v5188
      %v5191 = vunpack.c.l.s4 1934713408
      %v5192 = vunpack.c.0.s8 %v5191
      %v5193 = vlaneseq
      %v5194 = vshrl.u32 %v5193, 7
      %v5195 = vsub.s32 %v5192, %v5194
      %v5196 = vrot.slane %v5182, %v5195
      %v5197 = vcombine.low %v5132, %v5148
      %v5198 = vcombine.high %v5132, %v5148
      %v5200 = vunpack.c.l.s4 1934713408
      %v5201 = vunpack.c.0.s8 %v5200
      %v5202 = vlaneseq
      %v5203 = vshrl.u32 %v5202, 7
      %v5204 = vsub.s32 %v5201, %v5203
      %v5205 = vrot.slane %v5197, %v5204
      %v5207 = vunpack.c.l.s4 1934713408
      %v5208 = vunpack.c.0.s8 %v5207
      %v5209 = vlaneseq
      %v5210 = vshrl.u32 %v5209, 7
      %v5211 = vsub.s32 %v5208, %v5210
      %v5212 = vrot.slane %v5198, %v5211
      %v5213 = vcombine.low %v5157, %v5173
      %v5214 = vcombine.high %v5157, %v5173
      %v5216 = vunpack.c.l.s4 1934713408
      %v5217 = vunpack.c.0.s8 %v5216
      %v5218 = vlaneseq
      %v5219 = vshrl.u32 %v5218, 7
      %v5220 = vsub.s32 %v5217, %v5219
      %v5221 = vrot.slane %v5213, %v5220
      %v5223 = vunpack.c.l.s4 1934713408
      %v5224 = vunpack.c.0.s8 %v5223
      %v5225 = vlaneseq
      %v5226 = vshrl.u32 %v5225, 7
      %v5227 = vsub.s32 %v5224, %v5226
      %v5228 = vrot.slane %v5214, %v5227
      %v5229 = vcombine.low %v5164, %v5180
      %v5230 = vcombine.high %v5164, %v5180
      %v5232 = vunpack.c.l.s4 1934713408
      %v5233 = vunpack.c.0.s8 %v5232
      %v5234 = vlaneseq
      %v5235 = vshrl.u32 %v5234, 7
      %v5236 = vsub.s32 %v5233, %v5235
      %v5237 = vrot.slane %v5229, %v5236
      %v5239 = vunpack.c.l.s4 1934713408
      %v5240 = vunpack.c.0.s8 %v5239
      %v5241 = vlaneseq
      %v5242 = vshrl.u32 %v5241, 7
      %v5243 = vsub.s32 %v5240, %v5242
      %v5244 = vrot.slane %v5230, %v5243
      %v5245 = vcombine.low %v5189, %v5221
      %v5246 = vcombine.high %v5189, %v5221
      %v5247 = vcombine.low %v5196, %v5228
      %v5248 = vcombine.high %v5196, %v5228
      %v5249 = vcombine.low %v5205, %v5237
      %v5250 = vcombine.high %v5205, %v5237
      %v5251 = vcombine.low %v5212, %v5244
      %v5252 = vcombine.high %v5212, %v5244
      %v5253 = vcombine.low %v696, %v706
      %v5254 = vcombine.high %v696, %v706
      %v5256 = vunpack.c.l.s4 1983009808
      %v5257 = vunpack.c.0.s8 %v5256
      %v5258 = vlaneseq
      %v5259 = vshrl.u32 %v5258, 7
      %v5260 = vsub.s32 %v5257, %v5259
      %v5261 = vrot.slane %v5253, %v5260
      %v5263 = vunpack.c.l.s4 1983009808
      %v5264 = vunpack.c.0.s8 %v5263
      %v5265 = vlaneseq
      %v5266 = vshrl.u32 %v5265, 7
      %v5267 = vsub.s32 %v5264, %v5266
      %v5268 = vrot.slane %v5254, %v5267
      %v5269 = vcombine.low %v704, %v708
      %v5270 = vcombine.high %v704, %v708
      %v5272 = vunpack.c.l.s4 1983009808
      %v5273 = vunpack.c.0.s8 %v5272
      %v5274 = vlaneseq
      %v5275 = vshrl.u32 %v5274, 7
      %v5276 = vsub.s32 %v5273, %v5275
      %v5277 = vrot.slane %v5269, %v5276
      %v5279 = vunpack.c.l.s4 1983009808
      %v5280 = vunpack.c.0.s8 %v5279
      %v5281 = vlaneseq
      %v5282 = vshrl.u32 %v5281, 7
      %v5283 = vsub.s32 %v5280, %v5282
      %v5284 = vrot.slane %v5270, %v5283
      %v5285 = vcombine.low %v4479, %v4483
      %v5286 = vcombine.high %v4479, %v4483
      %v5288 = vunpack.c.l.s4 1983009808
      %v5289 = vunpack.c.0.s8 %v5288
      %v5290 = vlaneseq
      %v5291 = vshrl.u32 %v5290, 7
      %v5292 = vsub.s32 %v5289, %v5291
      %v5293 = vrot.slane %v5285, %v5292
      %v5295 = vunpack.c.l.s4 1983009808
      %v5296 = vunpack.c.0.s8 %v5295
      %v5297 = vlaneseq
      %v5298 = vshrl.u32 %v5297, 7
      %v5299 = vsub.s32 %v5296, %v5298
      %v5300 = vrot.slane %v5286, %v5299
      %v5301 = vcombine.low %v4481, %v4491
      %v5302 = vcombine.high %v4481, %v4491
      %v5304 = vunpack.c.l.s4 1983009808
      %v5305 = vunpack.c.0.s8 %v5304
      %v5306 = vlaneseq
      %v5307 = vshrl.u32 %v5306, 7
      %v5308 = vsub.s32 %v5305, %v5307
      %v5309 = vrot.slane %v5301, %v5308
      %v5311 = vunpack.c.l.s4 1983009808
      %v5312 = vunpack.c.0.s8 %v5311
      %v5313 = vlaneseq
      %v5314 = vshrl.u32 %v5313, 7
      %v5315 = vsub.s32 %v5312, %v5314
      %v5316 = vrot.slane %v5302, %v5315
      %v5317 = vcombine.low %v5261, %v5277
      %v5318 = vcombine.high %v5261, %v5277
      %v5320 = vunpack.c.l.s4 1934713408
      %v5321 = vunpack.c.0.s8 %v5320
      %v5322 = vlaneseq
      %v5323 = vshrl.u32 %v5322, 7
      %v5324 = vsub.s32 %v5321, %v5323
      %v5325 = vrot.slane %v5317, %v5324
      %v5327 = vunpack.c.l.s4 1934713408
      %v5328 = vunpack.c.0.s8 %v5327
      %v5329 = vlaneseq
      %v5330 = vshrl.u32 %v5329, 7
      %v5331 = vsub.s32 %v5328, %v5330
      %v5332 = vrot.slane %v5318, %v5331
      %v5333 = vcombine.low %v5268, %v5284
      %v5334 = vcombine.high %v5268, %v5284
      %v5336 = vunpack.c.l.s4 1934713408
      %v5337 = vunpack.c.0.s8 %v5336
      %v5338 = vlaneseq
      %v5339 = vshrl.u32 %v5338, 7
      %v5340 = vsub.s32 %v5337, %v5339
      %v5341 = vrot.slane %v5333, %v5340
      %v5343 = vunpack.c.l.s4 1934713408
      %v5344 = vunpack.c.0.s8 %v5343
      %v5345 = vlaneseq
      %v5346 = vshrl.u32 %v5345, 7
      %v5347 = vsub.s32 %v5344, %v5346
      %v5348 = vrot.slane %v5334, %v5347
      %v5349 = vcombine.low %v5293, %v5309
      %v5350 = vcombine.high %v5293, %v5309
      %v5352 = vunpack.c.l.s4 1934713408
      %v5353 = vunpack.c.0.s8 %v5352
      %v5354 = vlaneseq
      %v5355 = vshrl.u32 %v5354, 7
      %v5356 = vsub.s32 %v5353, %v5355
      %v5357 = vrot.slane %v5349, %v5356
      %v5359 = vunpack.c.l.s4 1934713408
      %v5360 = vunpack.c.0.s8 %v5359
      %v5361 = vlaneseq
      %v5362 = vshrl.u32 %v5361, 7
      %v5363 = vsub.s32 %v5360, %v5362
      %v5364 = vrot.slane %v5350, %v5363
      %v5365 = vcombine.low %v5300, %v5316
      %v5366 = vcombine.high %v5300, %v5316
      %v5368 = vunpack.c.l.s4 1934713408
      %v5369 = vunpack.c.0.s8 %v5368
      %v5370 = vlaneseq
      %v5371 = vshrl.u32 %v5370, 7
      %v5372 = vsub.s32 %v5369, %v5371
      %v5373 = vrot.slane %v5365, %v5372
      %v5375 = vunpack.c.l.s4 1934713408
      %v5376 = vunpack.c.0.s8 %v5375
      %v5377 = vlaneseq
      %v5378 = vshrl.u32 %v5377, 7
      %v5379 = vsub.s32 %v5376, %v5378
      %v5380 = vrot.slane %v5366, %v5379
      %v5381 = vcombine.low %v5325, %v5357
      %v5382 = vcombine.high %v5325, %v5357
      %v5383 = vcombine.low %v5332, %v5364
      %v5384 = vcombine.high %v5332, %v5364
      %v5385 = vcombine.low %v5341, %v5373
      %v5386 = vcombine.high %v5341, %v5373
      %v5387 = vcombine.low %v5348, %v5380
      %v5388 = vcombine.high %v5348, %v5380
      %v5389 = vcombine.low %v4493, %v567
      %v5390 = vcombine.high %v4493, %v567
      %v5392 = vunpack.c.l.s4 1983009808
      %v5393 = vunpack.c.0.s8 %v5392
      %v5394 = vlaneseq
      %v5395 = vshrl.u32 %v5394, 7
      %v5396 = vsub.s32 %v5393, %v5395
      %v5397 = vrot.slane %v5389, %v5396
      %v5399 = vunpack.c.l.s4 1983009808
      %v5400 = vunpack.c.0.s8 %v5399
      %v5401 = vlaneseq
      %v5402 = vshrl.u32 %v5401, 7
      %v5403 = vsub.s32 %v5400, %v5402
      %v5404 = vrot.slane %v5390, %v5403
      %v5405 = vcombine.low %v4495, %v568
      %v5406 = vcombine.high %v4495, %v568
      %v5408 = vunpack.c.l.s4 1983009808
      %v5409 = vunpack.c.0.s8 %v5408
      %v5410 = vlaneseq
      %v5411 = vshrl.u32 %v5410, 7
      %v5412 = vsub.s32 %v5409, %v5411
      %v5413 = vrot.slane %v5405, %v5412
      %v5415 = vunpack.c.l.s4 1983009808
      %v5416 = vunpack.c.0.s8 %v5415
      %v5417 = vlaneseq
      %v5418 = vshrl.u32 %v5417, 7
      %v5419 = vsub.s32 %v5416, %v5418
      %v5420 = vrot.slane %v5406, %v5419
      %v5421 = vcombine.low %v569, %v572
      %v5422 = vcombine.high %v569, %v572
      %v5424 = vunpack.c.l.s4 1983009808
      %v5425 = vunpack.c.0.s8 %v5424
      %v5426 = vlaneseq
      %v5427 = vshrl.u32 %v5426, 7
      %v5428 = vsub.s32 %v5425, %v5427
      %v5429 = vrot.slane %v5421, %v5428
      %v5431 = vunpack.c.l.s4 1983009808
      %v5432 = vunpack.c.0.s8 %v5431
      %v5433 = vlaneseq
      %v5434 = vshrl.u32 %v5433, 7
      %v5435 = vsub.s32 %v5432, %v5434
      %v5436 = vrot.slane %v5422, %v5435
      %v5437 = vcombine.low %v571, %v573
      %v5438 = vcombine.high %v571, %v573
      %v5440 = vunpack.c.l.s4 1983009808
      %v5441 = vunpack.c.0.s8 %v5440
      %v5442 = vlaneseq
      %v5443 = vshrl.u32 %v5442, 7
      %v5444 = vsub.s32 %v5441, %v5443
      %v5445 = vrot.slane %v5437, %v5444
      %v5447 = vunpack.c.l.s4 1983009808
      %v5448 = vunpack.c.0.s8 %v5447
      %v5449 = vlaneseq
      %v5450 = vshrl.u32 %v5449, 7
      %v5451 = vsub.s32 %v5448, %v5450
      %v5452 = vrot.slane %v5438, %v5451
      %v5453 = vcombine.low %v5397, %v5413
      %v5454 = vcombine.high %v5397, %v5413
      %v5456 = vunpack.c.l.s4 1934713408
      %v5457 = vunpack.c.0.s8 %v5456
      %v5458 = vlaneseq
      %v5459 = vshrl.u32 %v5458, 7
      %v5460 = vsub.s32 %v5457, %v5459
      %v5461 = vrot.slane %v5453, %v5460
      %v5463 = vunpack.c.l.s4 1934713408
      %v5464 = vunpack.c.0.s8 %v5463
      %v5465 = vlaneseq
      %v5466 = vshrl.u32 %v5465, 7
      %v5467 = vsub.s32 %v5464, %v5466
      %v5468 = vrot.slane %v5454, %v5467
      %v5469 = vcombine.low %v5404, %v5420
      %v5470 = vcombine.high %v5404, %v5420
      %v5472 = vunpack.c.l.s4 1934713408
      %v5473 = vunpack.c.0.s8 %v5472
      %v5474 = vlaneseq
      %v5475 = vshrl.u32 %v5474, 7
      %v5476 = vsub.s32 %v5473, %v5475
      %v5477 = vrot.slane %v5469, %v5476
      %v5479 = vunpack.c.l.s4 1934713408
      %v5480 = vunpack.c.0.s8 %v5479
      %v5481 = vlaneseq
      %v5482 = vshrl.u32 %v5481, 7
      %v5483 = vsub.s32 %v5480, %v5482
      %v5484 = vrot.slane %v5470, %v5483
      %v5485 = vcombine.low %v5429, %v5445
      %v5486 = vcombine.high %v5429, %v5445
      %v5488 = vunpack.c.l.s4 1934713408
      %v5489 = vunpack.c.0.s8 %v5488
      %v5490 = vlaneseq
      %v5491 = vshrl.u32 %v5490, 7
      %v5492 = vsub.s32 %v5489, %v5491
      %v5493 = vrot.slane %v5485, %v5492
      %v5495 = vunpack.c.l.s4 1934713408
      %v5496 = vunpack.c.0.s8 %v5495
      %v5497 = vlaneseq
      %v5498 = vshrl.u32 %v5497, 7
      %v5499 = vsub.s32 %v5496, %v5498
      %v5500 = vrot.slane %v5486, %v5499
      %v5501 = vcombine.low %v5436, %v5452
      %v5502 = vcombine.high %v5436, %v5452
      %v5504 = vunpack.c.l.s4 1934713408
      %v5505 = vunpack.c.0.s8 %v5504
      %v5506 = vlaneseq
      %v5507 = vshrl.u32 %v5506, 7
      %v5508 = vsub.s32 %v5505, %v5507
      %v5509 = vrot.slane %v5501, %v5508
      %v5511 = vunpack.c.l.s4 1934713408
      %v5512 = vunpack.c.0.s8 %v5511
      %v5513 = vlaneseq
      %v5514 = vshrl.u32 %v5513, 7
      %v5515 = vsub.s32 %v5512, %v5514
      %v5516 = vrot.slane %v5502, %v5515
      %v5517 = vcombine.low %v5461, %v5493
      %v5518 = vcombine.high %v5461, %v5493
      %v5519 = vcombine.low %v5468, %v5500
      %v5520 = vcombine.high %v5468, %v5500
      %v5521 = vcombine.low %v5477, %v5509
      %v5522 = vcombine.high %v5477, %v5509
      %v5523 = vcombine.low %v5484, %v5516
      %v5524 = vcombine.high %v5484, %v5516
      %v5525 = vcombine.low %v716, %v720
      %v5526 = vcombine.high %v716, %v720
      %v5528 = vunpack.c.l.s4 1983009808
      %v5529 = vunpack.c.0.s8 %v5528
      %v5530 = vlaneseq
      %v5531 = vshrl.u32 %v5530, 7
      %v5532 = vsub.s32 %v5529, %v5531
      %v5533 = vrot.slane %v5525, %v5532
      %v5535 = vunpack.c.l.s4 1983009808
      %v5536 = vunpack.c.0.s8 %v5535
      %v5537 = vlaneseq
      %v5538 = vshrl.u32 %v5537, 7
      %v5539 = vsub.s32 %v5536, %v5538
      %v5540 = vrot.slane %v5526, %v5539
      %v5541 = vcombine.low %v718, %v728
      %v5542 = vcombine.high %v718, %v728
      %v5544 = vunpack.c.l.s4 1983009808
      %v5545 = vunpack.c.0.s8 %v5544
      %v5546 = vlaneseq
      %v5547 = vshrl.u32 %v5546, 7
      %v5548 = vsub.s32 %v5545, %v5547
      %v5549 = vrot.slane %v5541, %v5548
      %v5551 = vunpack.c.l.s4 1983009808
      %v5552 = vunpack.c.0.s8 %v5551
      %v5553 = vlaneseq
      %v5554 = vshrl.u32 %v5553, 7
      %v5555 = vsub.s32 %v5552, %v5554
      %v5556 = vrot.slane %v5542, %v5555
      %v5557 = vcombine.low %v730, %v740
      %v5558 = vcombine.high %v730, %v740
      %v5560 = vunpack.c.l.s4 1983009808
      %v5561 = vunpack.c.0.s8 %v5560
      %v5562 = vlaneseq
      %v5563 = vshrl.u32 %v5562, 7
      %v5564 = vsub.s32 %v5561, %v5563
      %v5565 = vrot.slane %v5557, %v5564
      %v5567 = vunpack.c.l.s4 1983009808
      %v5568 = vunpack.c.0.s8 %v5567
      %v5569 = vlaneseq
      %v5570 = vshrl.u32 %v5569, 7
      %v5571 = vsub.s32 %v5568, %v5570
      %v5572 = vrot.slane %v5558, %v5571
      %v5573 = vcombine.low %v732, %v742
      %v5574 = vcombine.high %v732, %v742
      %v5576 = vunpack.c.l.s4 1983009808
      %v5577 = vunpack.c.0.s8 %v5576
      %v5578 = vlaneseq
      %v5579 = vshrl.u32 %v5578, 7
      %v5580 = vsub.s32 %v5577, %v5579
      %v5581 = vrot.slane %v5573, %v5580
      %v5583 = vunpack.c.l.s4 1983009808
      %v5584 = vunpack.c.0.s8 %v5583
      %v5585 = vlaneseq
      %v5586 = vshrl.u32 %v5585, 7
      %v5587 = vsub.s32 %v5584, %v5586
      %v5588 = vrot.slane %v5574, %v5587
      %v5589 = vcombine.low %v5533, %v5549
      %v5590 = vcombine.high %v5533, %v5549
      %v5592 = vunpack.c.l.s4 1934713408
      %v5593 = vunpack.c.0.s8 %v5592
      %v5594 = vlaneseq
      %v5595 = vshrl.u32 %v5594, 7
      %v5596 = vsub.s32 %v5593, %v5595
      %v5597 = vrot.slane %v5589, %v5596
      %v5599 = vunpack.c.l.s4 1934713408
      %v5600 = vunpack.c.0.s8 %v5599
      %v5601 = vlaneseq
      %v5602 = vshrl.u32 %v5601, 7
      %v5603 = vsub.s32 %v5600, %v5602
      %v5604 = vrot.slane %v5590, %v5603
      %v5605 = vcombine.low %v5540, %v5556
      %v5606 = vcombine.high %v5540, %v5556
      %v5608 = vunpack.c.l.s4 1934713408
      %v5609 = vunpack.c.0.s8 %v5608
      %v5610 = vlaneseq
      %v5611 = vshrl.u32 %v5610, 7
      %v5612 = vsub.s32 %v5609, %v5611
      %v5613 = vrot.slane %v5605, %v5612
      %v5615 = vunpack.c.l.s4 1934713408
      %v5616 = vunpack.c.0.s8 %v5615
      %v5617 = vlaneseq
      %v5618 = vshrl.u32 %v5617, 7
      %v5619 = vsub.s32 %v5616, %v5618
      %v5620 = vrot.slane %v5606, %v5619
      %v5621 = vcombine.low %v5565, %v5581
      %v5622 = vcombine.high %v5565, %v5581
      %v5624 = vunpack.c.l.s4 1934713408
      %v5625 = vunpack.c.0.s8 %v5624
      %v5626 = vlaneseq
      %v5627 = vshrl.u32 %v5626, 7
      %v5628 = vsub.s32 %v5625, %v5627
      %v5629 = vrot.slane %v5621, %v5628
      %v5631 = vunpack.c.l.s4 1934713408
      %v5632 = vunpack.c.0.s8 %v5631
      %v5633 = vlaneseq
      %v5634 = vshrl.u32 %v5633, 7
      %v5635 = vsub.s32 %v5632, %v5634
      %v5636 = vrot.slane %v5622, %v5635
      %v5637 = vcombine.low %v5572, %v5588
      %v5638 = vcombine.high %v5572, %v5588
      %v5640 = vunpack.c.l.s4 1934713408
      %v5641 = vunpack.c.0.s8 %v5640
      %v5642 = vlaneseq
      %v5643 = vshrl.u32 %v5642, 7
      %v5644 = vsub.s32 %v5641, %v5643
      %v5645 = vrot.slane %v5637, %v5644
      %v5647 = vunpack.c.l.s4 1934713408
      %v5648 = vunpack.c.0.s8 %v5647
      %v5649 = vlaneseq
      %v5650 = vshrl.u32 %v5649, 7
      %v5651 = vsub.s32 %v5648, %v5650
      %v5652 = vrot.slane %v5638, %v5651
      %v5653 = vcombine.low %v5597, %v5629
      %v5654 = vcombine.high %v5597, %v5629
      %v5655 = vcombine.low %v5604, %v5636
      %v5656 = vcombine.high %v5604, %v5636
      %v5657 = vcombine.low %v5613, %v5645
      %v5658 = vcombine.high %v5613, %v5645
      %v5659 = vcombine.low %v5620, %v5652
      %v5660 = vcombine.high %v5620, %v5652
      %v5661 = vcombine.low %v744, %v4574
      %v5662 = vcombine.high %v744, %v4574
      %v5664 = vunpack.c.l.s4 1983009808
      %v5665 = vunpack.c.0.s8 %v5664
      %v5666 = vlaneseq
      %v5667 = vshrl.u32 %v5666, 7
      %v5668 = vsub.s32 %v5665, %v5667
      %v5669 = vrot.slane %v5661, %v5668
      %v5671 = vunpack.c.l.s4 1983009808
      %v5672 = vunpack.c.0.s8 %v5671
      %v5673 = vlaneseq
      %v5674 = vshrl.u32 %v5673, 7
      %v5675 = vsub.s32 %v5672, %v5674
      %v5676 = vrot.slane %v5662, %v5675
      %v5677 = vcombine.low %v4572, %v4576
      %v5678 = vcombine.high %v4572, %v4576
      %v5680 = vunpack.c.l.s4 1983009808
      %v5681 = vunpack.c.0.s8 %v5680
      %v5682 = vlaneseq
      %v5683 = vshrl.u32 %v5682, 7
      %v5684 = vsub.s32 %v5681, %v5683
      %v5685 = vrot.slane %v5677, %v5684
      %v5687 = vunpack.c.l.s4 1983009808
      %v5688 = vunpack.c.0.s8 %v5687
      %v5689 = vlaneseq
      %v5690 = vshrl.u32 %v5689, 7
      %v5691 = vsub.s32 %v5688, %v5690
      %v5692 = vrot.slane %v5678, %v5691
      %v5693 = vcombine.low %v4578, %v4582
      %v5694 = vcombine.high %v4578, %v4582
      %v5696 = vunpack.c.l.s4 1983009808
      %v5697 = vunpack.c.0.s8 %v5696
      %v5698 = vlaneseq
      %v5699 = vshrl.u32 %v5698, 7
      %v5700 = vsub.s32 %v5697, %v5699
      %v5701 = vrot.slane %v5693, %v5700
      %v5703 = vunpack.c.l.s4 1983009808
      %v5704 = vunpack.c.0.s8 %v5703
      %v5705 = vlaneseq
      %v5706 = vshrl.u32 %v5705, 7
      %v5707 = vsub.s32 %v5704, %v5706
      %v5708 = vrot.slane %v5694, %v5707
      %v5709 = vcombine.low %v4580, %v4584
      %v5710 = vcombine.high %v4580, %v4584
      %v5712 = vunpack.c.l.s4 1983009808
      %v5713 = vunpack.c.0.s8 %v5712
      %v5714 = vlaneseq
      %v5715 = vshrl.u32 %v5714, 7
      %v5716 = vsub.s32 %v5713, %v5715
      %v5717 = vrot.slane %v5709, %v5716
      %v5719 = vunpack.c.l.s4 1983009808
      %v5720 = vunpack.c.0.s8 %v5719
      %v5721 = vlaneseq
      %v5722 = vshrl.u32 %v5721, 7
      %v5723 = vsub.s32 %v5720, %v5722
      %v5724 = vrot.slane %v5710, %v5723
      %v5725 = vcombine.low %v5669, %v5685
      %v5726 = vcombine.high %v5669, %v5685
      %v5728 = vunpack.c.l.s4 1934713408
      %v5729 = vunpack.c.0.s8 %v5728
      %v5730 = vlaneseq
      %v5731 = vshrl.u32 %v5730, 7
      %v5732 = vsub.s32 %v5729, %v5731
      %v5733 = vrot.slane %v5725, %v5732
      %v5735 = vunpack.c.l.s4 1934713408
      %v5736 = vunpack.c.0.s8 %v5735
      %v5737 = vlaneseq
      %v5738 = vshrl.u32 %v5737, 7
      %v5739 = vsub.s32 %v5736, %v5738
      %v5740 = vrot.slane %v5726, %v5739
      %v5741 = vcombine.low %v5676, %v5692
      %v5742 = vcombine.high %v5676, %v5692
      %v5744 = vunpack.c.l.s4 1934713408
      %v5745 = vunpack.c.0.s8 %v5744
      %v5746 = vlaneseq
      %v5747 = vshrl.u32 %v5746, 7
      %v5748 = vsub.s32 %v5745, %v5747
      %v5749 = vrot.slane %v5741, %v5748
      %v5751 = vunpack.c.l.s4 1934713408
      %v5752 = vunpack.c.0.s8 %v5751
      %v5753 = vlaneseq
      %v5754 = vshrl.u32 %v5753, 7
      %v5755 = vsub.s32 %v5752, %v5754
      %v5756 = vrot.slane %v5742, %v5755
      %v5757 = vcombine.low %v5701, %v5717
      %v5758 = vcombine.high %v5701, %v5717
      %v5760 = vunpack.c.l.s4 1934713408
      %v5761 = vunpack.c.0.s8 %v5760
      %v5762 = vlaneseq
      %v5763 = vshrl.u32 %v5762, 7
      %v5764 = vsub.s32 %v5761, %v5763
      %v5765 = vrot.slane %v5757, %v5764
      %v5767 = vunpack.c.l.s4 1934713408
      %v5768 = vunpack.c.0.s8 %v5767
      %v5769 = vlaneseq
      %v5770 = vshrl.u32 %v5769, 7
      %v5771 = vsub.s32 %v5768, %v5770
      %v5772 = vrot.slane %v5758, %v5771
      %v5773 = vcombine.low %v5708, %v5724
      %v5774 = vcombine.high %v5708, %v5724
      %v5776 = vunpack.c.l.s4 1934713408
      %v5777 = vunpack.c.0.s8 %v5776
      %v5778 = vlaneseq
      %v5779 = vshrl.u32 %v5778, 7
      %v5780 = vsub.s32 %v5777, %v5779
      %v5781 = vrot.slane %v5773, %v5780
      %v5783 = vunpack.c.l.s4 1934713408
      %v5784 = vunpack.c.0.s8 %v5783
      %v5785 = vlaneseq
      %v5786 = vshrl.u32 %v5785, 7
      %v5787 = vsub.s32 %v5784, %v5786
      %v5788 = vrot.slane %v5774, %v5787
      %v5789 = vcombine.low %v5733, %v5765
      %v5790 = vcombine.high %v5733, %v5765
      %v5791 = vcombine.low %v5740, %v5772
      %v5792 = vcombine.high %v5740, %v5772
      %v5793 = vcombine.low %v5749, %v5781
      %v5794 = vcombine.high %v5749, %v5781
      %v5795 = vcombine.low %v5756, %v5788
      %v5796 = vcombine.high %v5756, %v5788
      %v5797 = vcombine.low %v4586, %v4590
      %v5798 = vcombine.high %v4586, %v4590
      %v5800 = vunpack.c.l.s4 1983009808
      %v5801 = vunpack.c.0.s8 %v5800
      %v5802 = vlaneseq
      %v5803 = vshrl.u32 %v5802, 7
      %v5804 = vsub.s32 %v5801, %v5803
      %v5805 = vrot.slane %v5797, %v5804
      %v5807 = vunpack.c.l.s4 1983009808
      %v5808 = vunpack.c.0.s8 %v5807
      %v5809 = vlaneseq
      %v5810 = vshrl.u32 %v5809, 7
      %v5811 = vsub.s32 %v5808, %v5810
      %v5812 = vrot.slane %v5798, %v5811
      %v5813 = vcombine.low %v4588, %v4592
      %v5814 = vcombine.high %v4588, %v4592
      %v5816 = vunpack.c.l.s4 1983009808
      %v5817 = vunpack.c.0.s8 %v5816
      %v5818 = vlaneseq
      %v5819 = vshrl.u32 %v5818, 7
      %v5820 = vsub.s32 %v5817, %v5819
      %v5821 = vrot.slane %v5813, %v5820
      %v5823 = vunpack.c.l.s4 1983009808
      %v5824 = vunpack.c.0.s8 %v5823
      %v5825 = vlaneseq
      %v5826 = vshrl.u32 %v5825, 7
      %v5827 = vsub.s32 %v5824, %v5826
      %v5828 = vrot.slane %v5814, %v5827
      %v5829 = vcombine.low %v4594, %v754
      %v5830 = vcombine.high %v4594, %v754
      %v5832 = vunpack.c.l.s4 1983009808
      %v5833 = vunpack.c.0.s8 %v5832
      %v5834 = vlaneseq
      %v5835 = vshrl.u32 %v5834, 7
      %v5836 = vsub.s32 %v5833, %v5835
      %v5837 = vrot.slane %v5829, %v5836
      %v5839 = vunpack.c.l.s4 1983009808
      %v5840 = vunpack.c.0.s8 %v5839
      %v5841 = vlaneseq
      %v5842 = vshrl.u32 %v5841, 7
      %v5843 = vsub.s32 %v5840, %v5842
      %v5844 = vrot.slane %v5830, %v5843
      %v5845 = vcombine.low %v752, %v756
      %v5846 = vcombine.high %v752, %v756
      %v5848 = vunpack.c.l.s4 1983009808
      %v5849 = vunpack.c.0.s8 %v5848
      %v5850 = vlaneseq
      %v5851 = vshrl.u32 %v5850, 7
      %v5852 = vsub.s32 %v5849, %v5851
      %v5853 = vrot.slane %v5845, %v5852
      %v5855 = vunpack.c.l.s4 1983009808
      %v5856 = vunpack.c.0.s8 %v5855
      %v5857 = vlaneseq
      %v5858 = vshrl.u32 %v5857, 7
      %v5859 = vsub.s32 %v5856, %v5858
      %v5860 = vrot.slane %v5846, %v5859
      %v5861 = vcombine.low %v5805, %v5821
      %v5862 = vcombine.high %v5805, %v5821
      %v5864 = vunpack.c.l.s4 1934713408
      %v5865 = vunpack.c.0.s8 %v5864
      %v5866 = vlaneseq
      %v5867 = vshrl.u32 %v5866, 7
      %v5868 = vsub.s32 %v5865, %v5867
      %v5869 = vrot.slane %v5861, %v5868
      %v5871 = vunpack.c.l.s4 1934713408
      %v5872 = vunpack.c.0.s8 %v5871
      %v5873 = vlaneseq
      %v5874 = vshrl.u32 %v5873, 7
      %v5875 = vsub.s32 %v5872, %v5874
      %v5876 = vrot.slane %v5862, %v5875
      %v5877 = vcombine.low %v5812, %v5828
      %v5878 = vcombine.high %v5812, %v5828
      %v5880 = vunpack.c.l.s4 1934713408
      %v5881 = vunpack.c.0.s8 %v5880
      %v5882 = vlaneseq
      %v5883 = vshrl.u32 %v5882, 7
      %v5884 = vsub.s32 %v5881, %v5883
      %v5885 = vrot.slane %v5877, %v5884
      %v5887 = vunpack.c.l.s4 1934713408
      %v5888 = vunpack.c.0.s8 %v5887
      %v5889 = vlaneseq
      %v5890 = vshrl.u32 %v5889, 7
      %v5891 = vsub.s32 %v5888, %v5890
      %v5892 = vrot.slane %v5878, %v5891
      %v5893 = vcombine.low %v5837, %v5853
      %v5894 = vcombine.high %v5837, %v5853
      %v5896 = vunpack.c.l.s4 1934713408
      %v5897 = vunpack.c.0.s8 %v5896
      %v5898 = vlaneseq
      %v5899 = vshrl.u32 %v5898, 7
      %v5900 = vsub.s32 %v5897, %v5899
      %v5901 = vrot.slane %v5893, %v5900
      %v5903 = vunpack.c.l.s4 1934713408
      %v5904 = vunpack.c.0.s8 %v5903
      %v5905 = vlaneseq
      %v5906 = vshrl.u32 %v5905, 7
      %v5907 = vsub.s32 %v5904, %v5906
      %v5908 = vrot.slane %v5894, %v5907
      %v5909 = vcombine.low %v5844, %v5860
      %v5910 = vcombine.high %v5844, %v5860
      %v5912 = vunpack.c.l.s4 1934713408
      %v5913 = vunpack.c.0.s8 %v5912
      %v5914 = vlaneseq
      %v5915 = vshrl.u32 %v5914, 7
      %v5916 = vsub.s32 %v5913, %v5915
      %v5917 = vrot.slane %v5909, %v5916
      %v5919 = vunpack.c.l.s4 1934713408
      %v5920 = vunpack.c.0.s8 %v5919
      %v5921 = vlaneseq
      %v5922 = vshrl.u32 %v5921, 7
      %v5923 = vsub.s32 %v5920, %v5922
      %v5924 = vrot.slane %v5910, %v5923
      %v5925 = vcombine.low %v5869, %v5901
      %v5926 = vcombine.high %v5869, %v5901
      %v5927 = vcombine.low %v5876, %v5908
      %v5928 = vcombine.high %v5876, %v5908
      %v5929 = vcombine.low %v5885, %v5917
      %v5930 = vcombine.high %v5885, %v5917
      %v5931 = vcombine.low %v5892, %v5924
      %v5932 = vcombine.high %v5892, %v5924
      %v5933 = vcombine.low %v764, %v768
      %v5934 = vcombine.high %v764, %v768
      %v5936 = vunpack.c.l.s4 1983009808
      %v5937 = vunpack.c.0.s8 %v5936
      %v5938 = vlaneseq
      %v5939 = vshrl.u32 %v5938, 7
      %v5940 = vsub.s32 %v5937, %v5939
      %v5941 = vrot.slane %v5933, %v5940
      %v5943 = vunpack.c.l.s4 1983009808
      %v5944 = vunpack.c.0.s8 %v5943
      %v5945 = vlaneseq
      %v5946 = vshrl.u32 %v5945, 7
      %v5947 = vsub.s32 %v5944, %v5946
      %v5948 = vrot.slane %v5934, %v5947
      %v5949 = vcombine.low %v766, %v776
      %v5950 = vcombine.high %v766, %v776
      %v5952 = vunpack.c.l.s4 1983009808
      %v5953 = vunpack.c.0.s8 %v5952
      %v5954 = vlaneseq
      %v5955 = vshrl.u32 %v5954, 7
      %v5956 = vsub.s32 %v5953, %v5955
      %v5957 = vrot.slane %v5949, %v5956
      %v5959 = vunpack.c.l.s4 1983009808
      %v5960 = vunpack.c.0.s8 %v5959
      %v5961 = vlaneseq
      %v5962 = vshrl.u32 %v5961, 7
      %v5963 = vsub.s32 %v5960, %v5962
      %v5964 = vrot.slane %v5950, %v5963
      %v5965 = vcombine.low %v778, %v4596
      %v5966 = vcombine.high %v778, %v4596
      %v5968 = vunpack.c.l.s4 1983009808
      %v5969 = vunpack.c.0.s8 %v5968
      %v5970 = vlaneseq
      %v5971 = vshrl.u32 %v5970, 7
      %v5972 = vsub.s32 %v5969, %v5971
      %v5973 = vrot.slane %v5965, %v5972
      %v5975 = vunpack.c.l.s4 1983009808
      %v5976 = vunpack.c.0.s8 %v5975
      %v5977 = vlaneseq
      %v5978 = vshrl.u32 %v5977, 7
      %v5979 = vsub.s32 %v5976, %v5978
      %v5980 = vrot.slane %v5966, %v5979
      %v5981 = vcombine.low %v780, %v4598
      %v5982 = vcombine.high %v780, %v4598
      %v5984 = vunpack.c.l.s4 1983009808
      %v5985 = vunpack.c.0.s8 %v5984
      %v5986 = vlaneseq
      %v5987 = vshrl.u32 %v5986, 7
      %v5988 = vsub.s32 %v5985, %v5987
      %v5989 = vrot.slane %v5981, %v5988
      %v5991 = vunpack.c.l.s4 1983009808
      %v5992 = vunpack.c.0.s8 %v5991
      %v5993 = vlaneseq
      %v5994 = vshrl.u32 %v5993, 7
      %v5995 = vsub.s32 %v5992, %v5994
      %v5996 = vrot.slane %v5982, %v5995
      %v5997 = vcombine.low %v5941, %v5957
      %v5998 = vcombine.high %v5941, %v5957
      %v6000 = vunpack.c.l.s4 1934713408
      %v6001 = vunpack.c.0.s8 %v6000
      %v6002 = vlaneseq
      %v6003 = vshrl.u32 %v6002, 7
      %v6004 = vsub.s32 %v6001, %v6003
      %v6005 = vrot.slane %v5997, %v6004
      %v6007 = vunpack.c.l.s4 1934713408
      %v6008 = vunpack.c.0.s8 %v6007
      %v6009 = vlaneseq
      %v6010 = vshrl.u32 %v6009, 7
      %v6011 = vsub.s32 %v6008, %v6010
      %v6012 = vrot.slane %v5998, %v6011
      %v6013 = vcombine.low %v5948, %v5964
      %v6014 = vcombine.high %v5948, %v5964
      %v6016 = vunpack.c.l.s4 1934713408
      %v6017 = vunpack.c.0.s8 %v6016
      %v6018 = vlaneseq
      %v6019 = vshrl.u32 %v6018, 7
      %v6020 = vsub.s32 %v6017, %v6019
      %v6021 = vrot.slane %v6013, %v6020
      %v6023 = vunpack.c.l.s4 1934713408
      %v6024 = vunpack.c.0.s8 %v6023
      %v6025 = vlaneseq
      %v6026 = vshrl.u32 %v6025, 7
      %v6027 = vsub.s32 %v6024, %v6026
      %v6028 = vrot.slane %v6014, %v6027
      %v6029 = vcombine.low %v5973, %v5989
      %v6030 = vcombine.high %v5973, %v5989
      %v6032 = vunpack.c.l.s4 1934713408
      %v6033 = vunpack.c.0.s8 %v6032
      %v6034 = vlaneseq
      %v6035 = vshrl.u32 %v6034, 7
      %v6036 = vsub.s32 %v6033, %v6035
      %v6037 = vrot.slane %v6029, %v6036
      %v6039 = vunpack.c.l.s4 1934713408
      %v6040 = vunpack.c.0.s8 %v6039
      %v6041 = vlaneseq
      %v6042 = vshrl.u32 %v6041, 7
      %v6043 = vsub.s32 %v6040, %v6042
      %v6044 = vrot.slane %v6030, %v6043
      %v6045 = vcombine.low %v5980, %v5996
      %v6046 = vcombine.high %v5980, %v5996
      %v6048 = vunpack.c.l.s4 1934713408
      %v6049 = vunpack.c.0.s8 %v6048
      %v6050 = vlaneseq
      %v6051 = vshrl.u32 %v6050, 7
      %v6052 = vsub.s32 %v6049, %v6051
      %v6053 = vrot.slane %v6045, %v6052
      %v6055 = vunpack.c.l.s4 1934713408
      %v6056 = vunpack.c.0.s8 %v6055
      %v6057 = vlaneseq
      %v6058 = vshrl.u32 %v6057, 7
      %v6059 = vsub.s32 %v6056, %v6058
      %v6060 = vrot.slane %v6046, %v6059
      %v6061 = vcombine.low %v6005, %v6037
      %v6062 = vcombine.high %v6005, %v6037
      %v6063 = vcombine.low %v6012, %v6044
      %v6064 = vcombine.high %v6012, %v6044
      %v6065 = vcombine.low %v6021, %v6053
      %v6066 = vcombine.high %v6021, %v6053
      %v6067 = vcombine.low %v6028, %v6060
      %v6068 = vcombine.high %v6028, %v6060
      %v6069 = vcombine.low %v4600, %v4604
      %v6070 = vcombine.high %v4600, %v4604
      %v6072 = vunpack.c.l.s4 1983009808
      %v6073 = vunpack.c.0.s8 %v6072
      %v6074 = vlaneseq
      %v6075 = vshrl.u32 %v6074, 7
      %v6076 = vsub.s32 %v6073, %v6075
      %v6077 = vrot.slane %v6069, %v6076
      %v6079 = vunpack.c.l.s4 1983009808
      %v6080 = vunpack.c.0.s8 %v6079
      %v6081 = vlaneseq
      %v6082 = vshrl.u32 %v6081, 7
      %v6083 = vsub.s32 %v6080, %v6082
      %v6084 = vrot.slane %v6070, %v6083
      %v6085 = vcombine.low %v4602, %v4606
      %v6086 = vcombine.high %v4602, %v4606
      %v6088 = vunpack.c.l.s4 1983009808
      %v6089 = vunpack.c.0.s8 %v6088
      %v6090 = vlaneseq
      %v6091 = vshrl.u32 %v6090, 7
      %v6092 = vsub.s32 %v6089, %v6091
      %v6093 = vrot.slane %v6085, %v6092
      %v6095 = vunpack.c.l.s4 1983009808
      %v6096 = vunpack.c.0.s8 %v6095
      %v6097 = vlaneseq
      %v6098 = vshrl.u32 %v6097, 7
      %v6099 = vsub.s32 %v6096, %v6098
      %v6100 = vrot.slane %v6086, %v6099
      %v6101 = vcombine.low %v4608, %v4612
      %v6102 = vcombine.high %v4608, %v4612
      %v6104 = vunpack.c.l.s4 1983009808
      %v6105 = vunpack.c.0.s8 %v6104
      %v6106 = vlaneseq
      %v6107 = vshrl.u32 %v6106, 7
      %v6108 = vsub.s32 %v6105, %v6107
      %v6109 = vrot.slane %v6101, %v6108
      %v6111 = vunpack.c.l.s4 1983009808
      %v6112 = vunpack.c.0.s8 %v6111
      %v6113 = vlaneseq
      %v6114 = vshrl.u32 %v6113, 7
      %v6115 = vsub.s32 %v6112, %v6114
      %v6116 = vrot.slane %v6102, %v6115
      %v6117 = vcombine.low %v4610, %v4614
      %v6118 = vcombine.high %v4610, %v4614
      %v6120 = vunpack.c.l.s4 1983009808
      %v6121 = vunpack.c.0.s8 %v6120
      %v6122 = vlaneseq
      %v6123 = vshrl.u32 %v6122, 7
      %v6124 = vsub.s32 %v6121, %v6123
      %v6125 = vrot.slane %v6117, %v6124
      %v6127 = vunpack.c.l.s4 1983009808
      %v6128 = vunpack.c.0.s8 %v6127
      %v6129 = vlaneseq
      %v6130 = vshrl.u32 %v6129, 7
      %v6131 = vsub.s32 %v6128, %v6130
      %v6132 = vrot.slane %v6118, %v6131
      %v6133 = vcombine.low %v6077, %v6093
      %v6134 = vcombine.high %v6077, %v6093
      %v6136 = vunpack.c.l.s4 1934713408
      %v6137 = vunpack.c.0.s8 %v6136
      %v6138 = vlaneseq
      %v6139 = vshrl.u32 %v6138, 7
      %v6140 = vsub.s32 %v6137, %v6139
      %v6141 = vrot.slane %v6133, %v6140
      %v6143 = vunpack.c.l.s4 1934713408
      %v6144 = vunpack.c.0.s8 %v6143
      %v6145 = vlaneseq
      %v6146 = vshrl.u32 %v6145, 7
      %v6147 = vsub.s32 %v6144, %v6146
      %v6148 = vrot.slane %v6134, %v6147
      %v6149 = vcombine.low %v6084, %v6100
      %v6150 = vcombine.high %v6084, %v6100
      %v6152 = vunpack.c.l.s4 1934713408
      %v6153 = vunpack.c.0.s8 %v6152
      %v6154 = vlaneseq
      %v6155 = vshrl.u32 %v6154, 7
      %v6156 = vsub.s32 %v6153, %v6155
      %v6157 = vrot.slane %v6149, %v6156
      %v6159 = vunpack.c.l.s4 1934713408
      %v6160 = vunpack.c.0.s8 %v6159
      %v6161 = vlaneseq
      %v6162 = vshrl.u32 %v6161, 7
      %v6163 = vsub.s32 %v6160, %v6162
      %v6164 = vrot.slane %v6150, %v6163
      %v6165 = vcombine.low %v6109, %v6125
      %v6166 = vcombine.high %v6109, %v6125
      %v6168 = vunpack.c.l.s4 1934713408
      %v6169 = vunpack.c.0.s8 %v6168
      %v6170 = vlaneseq
      %v6171 = vshrl.u32 %v6170, 7
      %v6172 = vsub.s32 %v6169, %v6171
      %v6173 = vrot.slane %v6165, %v6172
      %v6175 = vunpack.c.l.s4 1934713408
      %v6176 = vunpack.c.0.s8 %v6175
      %v6177 = vlaneseq
      %v6178 = vshrl.u32 %v6177, 7
      %v6179 = vsub.s32 %v6176, %v6178
      %v6180 = vrot.slane %v6166, %v6179
      %v6181 = vcombine.low %v6116, %v6132
      %v6182 = vcombine.high %v6116, %v6132
      %v6184 = vunpack.c.l.s4 1934713408
      %v6185 = vunpack.c.0.s8 %v6184
      %v6186 = vlaneseq
      %v6187 = vshrl.u32 %v6186, 7
      %v6188 = vsub.s32 %v6185, %v6187
      %v6189 = vrot.slane %v6181, %v6188
      %v6191 = vunpack.c.l.s4 1934713408
      %v6192 = vunpack.c.0.s8 %v6191
      %v6193 = vlaneseq
      %v6194 = vshrl.u32 %v6193, 7
      %v6195 = vsub.s32 %v6192, %v6194
      %v6196 = vrot.slane %v6182, %v6195
      %v6197 = vcombine.low %v6141, %v6173
      %v6198 = vcombine.high %v6141, %v6173
      %v6199 = vcombine.low %v6148, %v6180
      %v6200 = vcombine.high %v6148, %v6180
      %v6201 = vcombine.low %v6157, %v6189
      %v6202 = vcombine.high %v6157, %v6189
      %v6203 = vcombine.low %v6164, %v6196
      %v6204 = vcombine.high %v6164, %v6196
      %v6205 = vcombine.low %v4616, %v866
      %v6206 = vcombine.high %v4616, %v866
      %v6208 = vunpack.c.l.s4 1983009808
      %v6209 = vunpack.c.0.s8 %v6208
      %v6210 = vlaneseq
      %v6211 = vshrl.u32 %v6210, 7
      %v6212 = vsub.s32 %v6209, %v6211
      %v6213 = vrot.slane %v6205, %v6212
      %v6215 = vunpack.c.l.s4 1983009808
      %v6216 = vunpack.c.0.s8 %v6215
      %v6217 = vlaneseq
      %v6218 = vshrl.u32 %v6217, 7
      %v6219 = vsub.s32 %v6216, %v6218
      %v6220 = vrot.slane %v6206, %v6219
      %v6221 = vcombine.low %v4618, %v868
      %v6222 = vcombine.high %v4618, %v868
      %v6224 = vunpack.c.l.s4 1983009808
      %v6225 = vunpack.c.0.s8 %v6224
      %v6226 = vlaneseq
      %v6227 = vshrl.u32 %v6226, 7
      %v6228 = vsub.s32 %v6225, %v6227
      %v6229 = vrot.slane %v6221, %v6228
      %v6231 = vunpack.c.l.s4 1983009808
      %v6232 = vunpack.c.0.s8 %v6231
      %v6233 = vlaneseq
      %v6234 = vshrl.u32 %v6233, 7
      %v6235 = vsub.s32 %v6232, %v6234
      %v6236 = vrot.slane %v6222, %v6235
      %v6237 = vcombine.low %v870, %v874
      %v6238 = vcombine.high %v870, %v874
      %v6240 = vunpack.c.l.s4 1983009808
      %v6241 = vunpack.c.0.s8 %v6240
      %v6242 = vlaneseq
      %v6243 = vshrl.u32 %v6242, 7
      %v6244 = vsub.s32 %v6241, %v6243
      %v6245 = vrot.slane %v6237, %v6244
      %v6247 = vunpack.c.l.s4 1983009808
      %v6248 = vunpack.c.0.s8 %v6247
      %v6249 = vlaneseq
      %v6250 = vshrl.u32 %v6249, 7
      %v6251 = vsub.s32 %v6248, %v6250
      %v6252 = vrot.slane %v6238, %v6251
      %v6253 = vcombine.low %v872, %v876
      %v6254 = vcombine.high %v872, %v876
      %v6256 = vunpack.c.l.s4 1983009808
      %v6257 = vunpack.c.0.s8 %v6256
      %v6258 = vlaneseq
      %v6259 = vshrl.u32 %v6258, 7
      %v6260 = vsub.s32 %v6257, %v6259
      %v6261 = vrot.slane %v6253, %v6260
      %v6263 = vunpack.c.l.s4 1983009808
      %v6264 = vunpack.c.0.s8 %v6263
      %v6265 = vlaneseq
      %v6266 = vshrl.u32 %v6265, 7
      %v6267 = vsub.s32 %v6264, %v6266
      %v6268 = vrot.slane %v6254, %v6267
      %v6269 = vcombine.low %v6213, %v6229
      %v6270 = vcombine.high %v6213, %v6229
      %v6272 = vunpack.c.l.s4 1934713408
      %v6273 = vunpack.c.0.s8 %v6272
      %v6274 = vlaneseq
      %v6275 = vshrl.u32 %v6274, 7
      %v6276 = vsub.s32 %v6273, %v6275
      %v6277 = vrot.slane %v6269, %v6276
      %v6279 = vunpack.c.l.s4 1934713408
      %v6280 = vunpack.c.0.s8 %v6279
      %v6281 = vlaneseq
      %v6282 = vshrl.u32 %v6281, 7
      %v6283 = vsub.s32 %v6280, %v6282
      %v6284 = vrot.slane %v6270, %v6283
      %v6285 = vcombine.low %v6220, %v6236
      %v6286 = vcombine.high %v6220, %v6236
      %v6288 = vunpack.c.l.s4 1934713408
      %v6289 = vunpack.c.0.s8 %v6288
      %v6290 = vlaneseq
      %v6291 = vshrl.u32 %v6290, 7
      %v6292 = vsub.s32 %v6289, %v6291
      %v6293 = vrot.slane %v6285, %v6292
      %v6295 = vunpack.c.l.s4 1934713408
      %v6296 = vunpack.c.0.s8 %v6295
      %v6297 = vlaneseq
      %v6298 = vshrl.u32 %v6297, 7
      %v6299 = vsub.s32 %v6296, %v6298
      %v6300 = vrot.slane %v6286, %v6299
      %v6301 = vcombine.low %v6245, %v6261
      %v6302 = vcombine.high %v6245, %v6261
      %v6304 = vunpack.c.l.s4 1934713408
      %v6305 = vunpack.c.0.s8 %v6304
      %v6306 = vlaneseq
      %v6307 = vshrl.u32 %v6306, 7
      %v6308 = vsub.s32 %v6305, %v6307
      %v6309 = vrot.slane %v6301, %v6308
      %v6311 = vunpack.c.l.s4 1934713408
      %v6312 = vunpack.c.0.s8 %v6311
      %v6313 = vlaneseq
      %v6314 = vshrl.u32 %v6313, 7
      %v6315 = vsub.s32 %v6312, %v6314
      %v6316 = vrot.slane %v6302, %v6315
      %v6317 = vcombine.low %v6252, %v6268
      %v6318 = vcombine.high %v6252, %v6268
      %v6320 = vunpack.c.l.s4 1934713408
      %v6321 = vunpack.c.0.s8 %v6320
      %v6322 = vlaneseq
      %v6323 = vshrl.u32 %v6322, 7
      %v6324 = vsub.s32 %v6321, %v6323
      %v6325 = vrot.slane %v6317, %v6324
      %v6327 = vunpack.c.l.s4 1934713408
      %v6328 = vunpack.c.0.s8 %v6327
      %v6329 = vlaneseq
      %v6330 = vshrl.u32 %v6329, 7
      %v6331 = vsub.s32 %v6328, %v6330
      %v6332 = vrot.slane %v6318, %v6331
      %v6333 = vcombine.low %v6277, %v6309
      %v6334 = vcombine.high %v6277, %v6309
      %v6335 = vcombine.low %v6284, %v6316
      %v6336 = vcombine.high %v6284, %v6316
      %v6337 = vcombine.low %v6293, %v6325
      %v6338 = vcombine.high %v6293, %v6325
      %v6339 = vcombine.low %v6300, %v6332
      %v6340 = vcombine.high %v6300, %v6332
      %v6341 = vcombine.low %v878, %v882
      %v6342 = vcombine.high %v878, %v882
      %v6344 = vunpack.c.l.s4 1983009808
      %v6345 = vunpack.c.0.s8 %v6344
      %v6346 = vlaneseq
      %v6347 = vshrl.u32 %v6346, 7
      %v6348 = vsub.s32 %v6345, %v6347
      %v6349 = vrot.slane %v6341, %v6348
      %v6351 = vunpack.c.l.s4 1983009808
      %v6352 = vunpack.c.0.s8 %v6351
      %v6353 = vlaneseq
      %v6354 = vshrl.u32 %v6353, 7
      %v6355 = vsub.s32 %v6352, %v6354
      %v6356 = vrot.slane %v6342, %v6355
      %v6357 = vcombine.low %v880, %v4653
      %v6358 = vcombine.high %v880, %v4653
      %v6360 = vunpack.c.l.s4 1983009808
      %v6361 = vunpack.c.0.s8 %v6360
      %v6362 = vlaneseq
      %v6363 = vshrl.u32 %v6362, 7
      %v6364 = vsub.s32 %v6361, %v6363
      %v6365 = vrot.slane %v6357, %v6364
      %v6367 = vunpack.c.l.s4 1983009808
      %v6368 = vunpack.c.0.s8 %v6367
      %v6369 = vlaneseq
      %v6370 = vshrl.u32 %v6369, 7
      %v6371 = vsub.s32 %v6368, %v6370
      %v6372 = vrot.slane %v6358, %v6371
      %v6373 = vcombine.low %v4655, %v4659
      %v6374 = vcombine.high %v4655, %v4659
      %v6376 = vunpack.c.l.s4 1983009808
      %v6377 = vunpack.c.0.s8 %v6376
      %v6378 = vlaneseq
      %v6379 = vshrl.u32 %v6378, 7
      %v6380 = vsub.s32 %v6377, %v6379
      %v6381 = vrot.slane %v6373, %v6380
      %v6383 = vunpack.c.l.s4 1983009808
      %v6384 = vunpack.c.0.s8 %v6383
      %v6385 = vlaneseq
      %v6386 = vshrl.u32 %v6385, 7
      %v6387 = vsub.s32 %v6384, %v6386
      %v6388 = vrot.slane %v6374, %v6387
      %v6389 = vcombine.low %v4657, %v4661
      %v6390 = vcombine.high %v4657, %v4661
      %v6392 = vunpack.c.l.s4 1983009808
      %v6393 = vunpack.c.0.s8 %v6392
      %v6394 = vlaneseq
      %v6395 = vshrl.u32 %v6394, 7
      %v6396 = vsub.s32 %v6393, %v6395
      %v6397 = vrot.slane %v6389, %v6396
      %v6399 = vunpack.c.l.s4 1983009808
      %v6400 = vunpack.c.0.s8 %v6399
      %v6401 = vlaneseq
      %v6402 = vshrl.u32 %v6401, 7
      %v6403 = vsub.s32 %v6400, %v6402
      %v6404 = vrot.slane %v6390, %v6403
      %v6405 = vcombine.low %v6349, %v6365
      %v6406 = vcombine.high %v6349, %v6365
      %v6408 = vunpack.c.l.s4 1934713408
      %v6409 = vunpack.c.0.s8 %v6408
      %v6410 = vlaneseq
      %v6411 = vshrl.u32 %v6410, 7
      %v6412 = vsub.s32 %v6409, %v6411
      %v6413 = vrot.slane %v6405, %v6412
      %v6415 = vunpack.c.l.s4 1934713408
      %v6416 = vunpack.c.0.s8 %v6415
      %v6417 = vlaneseq
      %v6418 = vshrl.u32 %v6417, 7
      %v6419 = vsub.s32 %v6416, %v6418
      %v6420 = vrot.slane %v6406, %v6419
      %v6421 = vcombine.low %v6356, %v6372
      %v6422 = vcombine.high %v6356, %v6372
      %v6424 = vunpack.c.l.s4 1934713408
      %v6425 = vunpack.c.0.s8 %v6424
      %v6426 = vlaneseq
      %v6427 = vshrl.u32 %v6426, 7
      %v6428 = vsub.s32 %v6425, %v6427
      %v6429 = vrot.slane %v6421, %v6428
      %v6431 = vunpack.c.l.s4 1934713408
      %v6432 = vunpack.c.0.s8 %v6431
      %v6433 = vlaneseq
      %v6434 = vshrl.u32 %v6433, 7
      %v6435 = vsub.s32 %v6432, %v6434
      %v6436 = vrot.slane %v6422, %v6435
      %v6437 = vcombine.low %v6381, %v6397
      %v6438 = vcombine.high %v6381, %v6397
      %v6440 = vunpack.c.l.s4 1934713408
      %v6441 = vunpack.c.0.s8 %v6440
      %v6442 = vlaneseq
      %v6443 = vshrl.u32 %v6442, 7
      %v6444 = vsub.s32 %v6441, %v6443
      %v6445 = vrot.slane %v6437, %v6444
      %v6447 = vunpack.c.l.s4 1934713408
      %v6448 = vunpack.c.0.s8 %v6447
      %v6449 = vlaneseq
      %v6450 = vshrl.u32 %v6449, 7
      %v6451 = vsub.s32 %v6448, %v6450
      %v6452 = vrot.slane %v6438, %v6451
      %v6453 = vcombine.low %v6388, %v6404
      %v6454 = vcombine.high %v6388, %v6404
      %v6456 = vunpack.c.l.s4 1934713408
      %v6457 = vunpack.c.0.s8 %v6456
      %v6458 = vlaneseq
      %v6459 = vshrl.u32 %v6458, 7
      %v6460 = vsub.s32 %v6457, %v6459
      %v6461 = vrot.slane %v6453, %v6460
      %v6463 = vunpack.c.l.s4 1934713408
      %v6464 = vunpack.c.0.s8 %v6463
      %v6465 = vlaneseq
      %v6466 = vshrl.u32 %v6465, 7
      %v6467 = vsub.s32 %v6464, %v6466
      %v6468 = vrot.slane %v6454, %v6467
      %v6469 = vcombine.low %v6413, %v6445
      %v6470 = vcombine.high %v6413, %v6445
      %v6471 = vcombine.low %v6420, %v6452
      %v6472 = vcombine.high %v6420, %v6452
      %v6473 = vcombine.low %v6429, %v6461
      %v6474 = vcombine.high %v6429, %v6461
      %v6475 = vcombine.low %v6436, %v6468
      %v6476 = vcombine.high %v6436, %v6468
      %v6477 = vcombine.low %v4663, %v898
      %v6478 = vcombine.high %v4663, %v898
      %v6480 = vunpack.c.l.s4 1983009808
      %v6481 = vunpack.c.0.s8 %v6480
      %v6482 = vlaneseq
      %v6483 = vshrl.u32 %v6482, 7
      %v6484 = vsub.s32 %v6481, %v6483
      %v6485 = vrot.slane %v6477, %v6484
      %v6487 = vunpack.c.l.s4 1983009808
      %v6488 = vunpack.c.0.s8 %v6487
      %v6489 = vlaneseq
      %v6490 = vshrl.u32 %v6489, 7
      %v6491 = vsub.s32 %v6488, %v6490
      %v6492 = vrot.slane %v6478, %v6491
      %v6493 = vcombine.low %v896, %v900
      %v6494 = vcombine.high %v896, %v900
      %v6496 = vunpack.c.l.s4 1983009808
      %v6497 = vunpack.c.0.s8 %v6496
      %v6498 = vlaneseq
      %v6499 = vshrl.u32 %v6498, 7
      %v6500 = vsub.s32 %v6497, %v6499
      %v6501 = vrot.slane %v6493, %v6500
      %v6503 = vunpack.c.l.s4 1983009808
      %v6504 = vunpack.c.0.s8 %v6503
      %v6505 = vlaneseq
      %v6506 = vshrl.u32 %v6505, 7
      %v6507 = vsub.s32 %v6504, %v6506
      %v6508 = vrot.slane %v6494, %v6507
      %v6509 = vcombine.low %v902, %v906
      %v6510 = vcombine.high %v902, %v906
      %v6512 = vunpack.c.l.s4 1983009808
      %v6513 = vunpack.c.0.s8 %v6512
      %v6514 = vlaneseq
      %v6515 = vshrl.u32 %v6514, 7
      %v6516 = vsub.s32 %v6513, %v6515
      %v6517 = vrot.slane %v6509, %v6516
      %v6519 = vunpack.c.l.s4 1983009808
      %v6520 = vunpack.c.0.s8 %v6519
      %v6521 = vlaneseq
      %v6522 = vshrl.u32 %v6521, 7
      %v6523 = vsub.s32 %v6520, %v6522
      %v6524 = vrot.slane %v6510, %v6523
      %v6525 = vcombine.low %v904, %v908
      %v6526 = vcombine.high %v904, %v908
      %v6528 = vunpack.c.l.s4 1983009808
      %v6529 = vunpack.c.0.s8 %v6528
      %v6530 = vlaneseq
      %v6531 = vshrl.u32 %v6530, 7
      %v6532 = vsub.s32 %v6529, %v6531
      %v6533 = vrot.slane %v6525, %v6532
      %v6535 = vunpack.c.l.s4 1983009808
      %v6536 = vunpack.c.0.s8 %v6535
      %v6537 = vlaneseq
      %v6538 = vshrl.u32 %v6537, 7
      %v6539 = vsub.s32 %v6536, %v6538
      %v6540 = vrot.slane %v6526, %v6539
      %v6541 = vcombine.low %v6485, %v6501
      %v6542 = vcombine.high %v6485, %v6501
      %v6544 = vunpack.c.l.s4 1934713408
      %v6545 = vunpack.c.0.s8 %v6544
      %v6546 = vlaneseq
      %v6547 = vshrl.u32 %v6546, 7
      %v6548 = vsub.s32 %v6545, %v6547
      %v6549 = vrot.slane %v6541, %v6548
      %v6551 = vunpack.c.l.s4 1934713408
      %v6552 = vunpack.c.0.s8 %v6551
      %v6553 = vlaneseq
      %v6554 = vshrl.u32 %v6553, 7
      %v6555 = vsub.s32 %v6552, %v6554
      %v6556 = vrot.slane %v6542, %v6555
      %v6557 = vcombine.low %v6492, %v6508
      %v6558 = vcombine.high %v6492, %v6508
      %v6560 = vunpack.c.l.s4 1934713408
      %v6561 = vunpack.c.0.s8 %v6560
      %v6562 = vlaneseq
      %v6563 = vshrl.u32 %v6562, 7
      %v6564 = vsub.s32 %v6561, %v6563
      %v6565 = vrot.slane %v6557, %v6564
      %v6567 = vunpack.c.l.s4 1934713408
      %v6568 = vunpack.c.0.s8 %v6567
      %v6569 = vlaneseq
      %v6570 = vshrl.u32 %v6569, 7
      %v6571 = vsub.s32 %v6568, %v6570
      %v6572 = vrot.slane %v6558, %v6571
      %v6573 = vcombine.low %v6517, %v6533
      %v6574 = vcombine.high %v6517, %v6533
      %v6576 = vunpack.c.l.s4 1934713408
      %v6577 = vunpack.c.0.s8 %v6576
      %v6578 = vlaneseq
      %v6579 = vshrl.u32 %v6578, 7
      %v6580 = vsub.s32 %v6577, %v6579
      %v6581 = vrot.slane %v6573, %v6580
      %v6583 = vunpack.c.l.s4 1934713408
      %v6584 = vunpack.c.0.s8 %v6583
      %v6585 = vlaneseq
      %v6586 = vshrl.u32 %v6585, 7
      %v6587 = vsub.s32 %v6584, %v6586
      %v6588 = vrot.slane %v6574, %v6587
      %v6589 = vcombine.low %v6524, %v6540
      %v6590 = vcombine.high %v6524, %v6540
      %v6592 = vunpack.c.l.s4 1934713408
      %v6593 = vunpack.c.0.s8 %v6592
      %v6594 = vlaneseq
      %v6595 = vshrl.u32 %v6594, 7
      %v6596 = vsub.s32 %v6593, %v6595
      %v6597 = vrot.slane %v6589, %v6596
      %v6599 = vunpack.c.l.s4 1934713408
      %v6600 = vunpack.c.0.s8 %v6599
      %v6601 = vlaneseq
      %v6602 = vshrl.u32 %v6601, 7
      %v6603 = vsub.s32 %v6600, %v6602
      %v6604 = vrot.slane %v6590, %v6603
      %v6605 = vcombine.low %v6549, %v6581
      %v6606 = vcombine.high %v6549, %v6581
      %v6607 = vcombine.low %v6556, %v6588
      %v6608 = vcombine.high %v6556, %v6588
      %v6609 = vcombine.low %v6565, %v6597
      %v6610 = vcombine.high %v6565, %v6597
      %v6611 = vcombine.low %v6572, %v6604
      %v6612 = vcombine.high %v6572, %v6604
      %v6613 = vcombine.low %v910, %v914
      %v6614 = vcombine.high %v910, %v914
      %v6616 = vunpack.c.l.s4 1983009808
      %v6617 = vunpack.c.0.s8 %v6616
      %v6618 = vlaneseq
      %v6619 = vshrl.u32 %v6618, 7
      %v6620 = vsub.s32 %v6617, %v6619
      %v6621 = vrot.slane %v6613, %v6620
      %v6623 = vunpack.c.l.s4 1983009808
      %v6624 = vunpack.c.0.s8 %v6623
      %v6625 = vlaneseq
      %v6626 = vshrl.u32 %v6625, 7
      %v6627 = vsub.s32 %v6624, %v6626
      %v6628 = vrot.slane %v6614, %v6627
      %v6629 = vcombine.low %v912, %v916
      %v6630 = vcombine.high %v912, %v916
      %v6632 = vunpack.c.l.s4 1983009808
      %v6633 = vunpack.c.0.s8 %v6632
      %v6634 = vlaneseq
      %v6635 = vshrl.u32 %v6634, 7
      %v6636 = vsub.s32 %v6633, %v6635
      %v6637 = vrot.slane %v6629, %v6636
      %v6639 = vunpack.c.l.s4 1983009808
      %v6640 = vunpack.c.0.s8 %v6639
      %v6641 = vlaneseq
      %v6642 = vshrl.u32 %v6641, 7
      %v6643 = vsub.s32 %v6640, %v6642
      %v6644 = vrot.slane %v6630, %v6643
      %v6645 = vcombine.low %v918, %v922
      %v6646 = vcombine.high %v918, %v922
      %v6648 = vunpack.c.l.s4 1983009808
      %v6649 = vunpack.c.0.s8 %v6648
      %v6650 = vlaneseq
      %v6651 = vshrl.u32 %v6650, 7
      %v6652 = vsub.s32 %v6649, %v6651
      %v6653 = vrot.slane %v6645, %v6652
      %v6655 = vunpack.c.l.s4 1983009808
      %v6656 = vunpack.c.0.s8 %v6655
      %v6657 = vlaneseq
      %v6658 = vshrl.u32 %v6657, 7
      %v6659 = vsub.s32 %v6656, %v6658
      %v6660 = vrot.slane %v6646, %v6659
      %v6661 = vcombine.low %v920, %v924
      %v6662 = vcombine.high %v920, %v924
      %v6664 = vunpack.c.l.s4 1983009808
      %v6665 = vunpack.c.0.s8 %v6664
      %v6666 = vlaneseq
      %v6667 = vshrl.u32 %v6666, 7
      %v6668 = vsub.s32 %v6665, %v6667
      %v6669 = vrot.slane %v6661, %v6668
      %v6671 = vunpack.c.l.s4 1983009808
      %v6672 = vunpack.c.0.s8 %v6671
      %v6673 = vlaneseq
      %v6674 = vshrl.u32 %v6673, 7
      %v6675 = vsub.s32 %v6672, %v6674
      %v6676 = vrot.slane %v6662, %v6675
      %v6677 = vcombine.low %v6621, %v6637
      %v6678 = vcombine.high %v6621, %v6637
      %v6680 = vunpack.c.l.s4 1934713408
      %v6681 = vunpack.c.0.s8 %v6680
      %v6682 = vlaneseq
      %v6683 = vshrl.u32 %v6682, 7
      %v6684 = vsub.s32 %v6681, %v6683
      %v6685 = vrot.slane %v6677, %v6684
      %v6687 = vunpack.c.l.s4 1934713408
      %v6688 = vunpack.c.0.s8 %v6687
      %v6689 = vlaneseq
      %v6690 = vshrl.u32 %v6689, 7
      %v6691 = vsub.s32 %v6688, %v6690
      %v6692 = vrot.slane %v6678, %v6691
      %v6693 = vcombine.low %v6628, %v6644
      %v6694 = vcombine.high %v6628, %v6644
      %v6696 = vunpack.c.l.s4 1934713408
      %v6697 = vunpack.c.0.s8 %v6696
      %v6698 = vlaneseq
      %v6699 = vshrl.u32 %v6698, 7
      %v6700 = vsub.s32 %v6697, %v6699
      %v6701 = vrot.slane %v6693, %v6700
      %v6703 = vunpack.c.l.s4 1934713408
      %v6704 = vunpack.c.0.s8 %v6703
      %v6705 = vlaneseq
      %v6706 = vshrl.u32 %v6705, 7
      %v6707 = vsub.s32 %v6704, %v6706
      %v6708 = vrot.slane %v6694, %v6707
      %v6709 = vcombine.low %v6653, %v6669
      %v6710 = vcombine.high %v6653, %v6669
      %v6712 = vunpack.c.l.s4 1934713408
      %v6713 = vunpack.c.0.s8 %v6712
      %v6714 = vlaneseq
      %v6715 = vshrl.u32 %v6714, 7
      %v6716 = vsub.s32 %v6713, %v6715
      %v6717 = vrot.slane %v6709, %v6716
      %v6719 = vunpack.c.l.s4 1934713408
      %v6720 = vunpack.c.0.s8 %v6719
      %v6721 = vlaneseq
      %v6722 = vshrl.u32 %v6721, 7
      %v6723 = vsub.s32 %v6720, %v6722
      %v6724 = vrot.slane %v6710, %v6723
      %v6725 = vcombine.low %v6660, %v6676
      %v6726 = vcombine.high %v6660, %v6676
      %v6728 = vunpack.c.l.s4 1934713408
      %v6729 = vunpack.c.0.s8 %v6728
      %v6730 = vlaneseq
      %v6731 = vshrl.u32 %v6730, 7
      %v6732 = vsub.s32 %v6729, %v6731
      %v6733 = vrot.slane %v6725, %v6732
      %v6735 = vunpack.c.l.s4 1934713408
      %v6736 = vunpack.c.0.s8 %v6735
      %v6737 = vlaneseq
      %v6738 = vshrl.u32 %v6737, 7
      %v6739 = vsub.s32 %v6736, %v6738
      %v6740 = vrot.slane %v6726, %v6739
      %v6741 = vcombine.low %v6685, %v6717
      %v6742 = vcombine.high %v6685, %v6717
      %v6743 = vcombine.low %v6692, %v6724
      %v6744 = vcombine.high %v6692, %v6724
      %v6745 = vcombine.low %v6701, %v6733
      %v6746 = vcombine.high %v6701, %v6733
      %v6747 = vcombine.low %v6708, %v6740
      %v6748 = vcombine.high %v6708, %v6740
      %v6749 = vcombine.low %v4665, %v4669
      %v6750 = vcombine.high %v4665, %v4669
      %v6752 = vunpack.c.l.s4 1983009808
      %v6753 = vunpack.c.0.s8 %v6752
      %v6754 = vlaneseq
      %v6755 = vshrl.u32 %v6754, 7
      %v6756 = vsub.s32 %v6753, %v6755
      %v6757 = vrot.slane %v6749, %v6756
      %v6759 = vunpack.c.l.s4 1983009808
      %v6760 = vunpack.c.0.s8 %v6759
      %v6761 = vlaneseq
      %v6762 = vshrl.u32 %v6761, 7
      %v6763 = vsub.s32 %v6760, %v6762
      %v6764 = vrot.slane %v6750, %v6763
      %v6765 = vcombine.low %v4667, %v4671
      %v6766 = vcombine.high %v4667, %v4671
      %v6768 = vunpack.c.l.s4 1983009808
      %v6769 = vunpack.c.0.s8 %v6768
      %v6770 = vlaneseq
      %v6771 = vshrl.u32 %v6770, 7
      %v6772 = vsub.s32 %v6769, %v6771
      %v6773 = vrot.slane %v6765, %v6772
      %v6775 = vunpack.c.l.s4 1983009808
      %v6776 = vunpack.c.0.s8 %v6775
      %v6777 = vlaneseq
      %v6778 = vshrl.u32 %v6777, 7
      %v6779 = vsub.s32 %v6776, %v6778
      %v6780 = vrot.slane %v6766, %v6779
      %v6781 = vcombine.low %v4673, %v938
      %v6782 = vcombine.high %v4673, %v938
      %v6784 = vunpack.c.l.s4 1983009808
      %v6785 = vunpack.c.0.s8 %v6784
      %v6786 = vlaneseq
      %v6787 = vshrl.u32 %v6786, 7
      %v6788 = vsub.s32 %v6785, %v6787
      %v6789 = vrot.slane %v6781, %v6788
      %v6791 = vunpack.c.l.s4 1983009808
      %v6792 = vunpack.c.0.s8 %v6791
      %v6793 = vlaneseq
      %v6794 = vshrl.u32 %v6793, 7
      %v6795 = vsub.s32 %v6792, %v6794
      %v6796 = vrot.slane %v6782, %v6795
      %v6797 = vcombine.low %v4675, %v940
      %v6798 = vcombine.high %v4675, %v940
      %v6800 = vunpack.c.l.s4 1983009808
      %v6801 = vunpack.c.0.s8 %v6800
      %v6802 = vlaneseq
      %v6803 = vshrl.u32 %v6802, 7
      %v6804 = vsub.s32 %v6801, %v6803
      %v6805 = vrot.slane %v6797, %v6804
      %v6807 = vunpack.c.l.s4 1983009808
      %v6808 = vunpack.c.0.s8 %v6807
      %v6809 = vlaneseq
      %v6810 = vshrl.u32 %v6809, 7
      %v6811 = vsub.s32 %v6808, %v6810
      %v6812 = vrot.slane %v6798, %v6811
      %v6813 = vcombine.low %v6757, %v6773
      %v6814 = vcombine.high %v6757, %v6773
      %v6816 = vunpack.c.l.s4 1934713408
      %v6817 = vunpack.c.0.s8 %v6816
      %v6818 = vlaneseq
      %v6819 = vshrl.u32 %v6818, 7
      %v6820 = vsub.s32 %v6817, %v6819
      %v6821 = vrot.slane %v6813, %v6820
      %v6823 = vunpack.c.l.s4 1934713408
      %v6824 = vunpack.c.0.s8 %v6823
      %v6825 = vlaneseq
      %v6826 = vshrl.u32 %v6825, 7
      %v6827 = vsub.s32 %v6824, %v6826
      %v6828 = vrot.slane %v6814, %v6827
      %v6829 = vcombine.low %v6764, %v6780
      %v6830 = vcombine.high %v6764, %v6780
      %v6832 = vunpack.c.l.s4 1934713408
      %v6833 = vunpack.c.0.s8 %v6832
      %v6834 = vlaneseq
      %v6835 = vshrl.u32 %v6834, 7
      %v6836 = vsub.s32 %v6833, %v6835
      %v6837 = vrot.slane %v6829, %v6836
      %v6839 = vunpack.c.l.s4 1934713408
      %v6840 = vunpack.c.0.s8 %v6839
      %v6841 = vlaneseq
      %v6842 = vshrl.u32 %v6841, 7
      %v6843 = vsub.s32 %v6840, %v6842
      %v6844 = vrot.slane %v6830, %v6843
      %v6845 = vcombine.low %v6789, %v6805
      %v6846 = vcombine.high %v6789, %v6805
      %v6848 = vunpack.c.l.s4 1934713408
      %v6849 = vunpack.c.0.s8 %v6848
      %v6850 = vlaneseq
      %v6851 = vshrl.u32 %v6850, 7
      %v6852 = vsub.s32 %v6849, %v6851
      %v6853 = vrot.slane %v6845, %v6852
      %v6855 = vunpack.c.l.s4 1934713408
      %v6856 = vunpack.c.0.s8 %v6855
      %v6857 = vlaneseq
      %v6858 = vshrl.u32 %v6857, 7
      %v6859 = vsub.s32 %v6856, %v6858
      %v6860 = vrot.slane %v6846, %v6859
      %v6861 = vcombine.low %v6796, %v6812
      %v6862 = vcombine.high %v6796, %v6812
      %v6864 = vunpack.c.l.s4 1934713408
      %v6865 = vunpack.c.0.s8 %v6864
      %v6866 = vlaneseq
      %v6867 = vshrl.u32 %v6866, 7
      %v6868 = vsub.s32 %v6865, %v6867
      %v6869 = vrot.slane %v6861, %v6868
      %v6871 = vunpack.c.l.s4 1934713408
      %v6872 = vunpack.c.0.s8 %v6871
      %v6873 = vlaneseq
      %v6874 = vshrl.u32 %v6873, 7
      %v6875 = vsub.s32 %v6872, %v6874
      %v6876 = vrot.slane %v6862, %v6875
      %v6877 = vcombine.low %v6821, %v6853
      %v6878 = vcombine.high %v6821, %v6853
      %v6879 = vcombine.low %v6828, %v6860
      %v6880 = vcombine.high %v6828, %v6860
      %v6881 = vcombine.low %v6837, %v6869
      %v6882 = vcombine.high %v6837, %v6869
      %v6883 = vcombine.low %v6844, %v6876
      %v6884 = vcombine.high %v6844, %v6876
      %v6885 = vcombine.low %v942, %v946
      %v6886 = vcombine.high %v942, %v946
      %v6888 = vunpack.c.l.s4 1983009808
      %v6889 = vunpack.c.0.s8 %v6888
      %v6890 = vlaneseq
      %v6891 = vshrl.u32 %v6890, 7
      %v6892 = vsub.s32 %v6889, %v6891
      %v6893 = vrot.slane %v6885, %v6892
      %v6895 = vunpack.c.l.s4 1983009808
      %v6896 = vunpack.c.0.s8 %v6895
      %v6897 = vlaneseq
      %v6898 = vshrl.u32 %v6897, 7
      %v6899 = vsub.s32 %v6896, %v6898
      %v6900 = vrot.slane %v6886, %v6899
      %v6901 = vcombine.low %v944, %v948
      %v6902 = vcombine.high %v944, %v948
      %v6904 = vunpack.c.l.s4 1983009808
      %v6905 = vunpack.c.0.s8 %v6904
      %v6906 = vlaneseq
      %v6907 = vshrl.u32 %v6906, 7
      %v6908 = vsub.s32 %v6905, %v6907
      %v6909 = vrot.slane %v6901, %v6908
      %v6911 = vunpack.c.l.s4 1983009808
      %v6912 = vunpack.c.0.s8 %v6911
      %v6913 = vlaneseq
      %v6914 = vshrl.u32 %v6913, 7
      %v6915 = vsub.s32 %v6912, %v6914
      %v6916 = vrot.slane %v6902, %v6915
      %v6917 = vcombine.low %v950, %v954
      %v6918 = vcombine.high %v950, %v954
      %v6920 = vunpack.c.l.s4 1983009808
      %v6921 = vunpack.c.0.s8 %v6920
      %v6922 = vlaneseq
      %v6923 = vshrl.u32 %v6922, 7
      %v6924 = vsub.s32 %v6921, %v6923
      %v6925 = vrot.slane %v6917, %v6924
      %v6927 = vunpack.c.l.s4 1983009808
      %v6928 = vunpack.c.0.s8 %v6927
      %v6929 = vlaneseq
      %v6930 = vshrl.u32 %v6929, 7
      %v6931 = vsub.s32 %v6928, %v6930
      %v6932 = vrot.slane %v6918, %v6931
      %v6933 = vcombine.low %v952, %v956
      %v6934 = vcombine.high %v952, %v956
      %v6936 = vunpack.c.l.s4 1983009808
      %v6937 = vunpack.c.0.s8 %v6936
      %v6938 = vlaneseq
      %v6939 = vshrl.u32 %v6938, 7
      %v6940 = vsub.s32 %v6937, %v6939
      %v6941 = vrot.slane %v6933, %v6940
      %v6943 = vunpack.c.l.s4 1983009808
      %v6944 = vunpack.c.0.s8 %v6943
      %v6945 = vlaneseq
      %v6946 = vshrl.u32 %v6945, 7
      %v6947 = vsub.s32 %v6944, %v6946
      %v6948 = vrot.slane %v6934, %v6947
      %v6949 = vcombine.low %v6893, %v6909
      %v6950 = vcombine.high %v6893, %v6909
      %v6952 = vunpack.c.l.s4 1934713408
      %v6953 = vunpack.c.0.s8 %v6952
      %v6954 = vlaneseq
      %v6955 = vshrl.u32 %v6954, 7
      %v6956 = vsub.s32 %v6953, %v6955
      %v6957 = vrot.slane %v6949, %v6956
      %v6959 = vunpack.c.l.s4 1934713408
      %v6960 = vunpack.c.0.s8 %v6959
      %v6961 = vlaneseq
      %v6962 = vshrl.u32 %v6961, 7
      %v6963 = vsub.s32 %v6960, %v6962
      %v6964 = vrot.slane %v6950, %v6963
      %v6965 = vcombine.low %v6900, %v6916
      %v6966 = vcombine.high %v6900, %v6916
      %v6968 = vunpack.c.l.s4 1934713408
      %v6969 = vunpack.c.0.s8 %v6968
      %v6970 = vlaneseq
      %v6971 = vshrl.u32 %v6970, 7
      %v6972 = vsub.s32 %v6969, %v6971
      %v6973 = vrot.slane %v6965, %v6972
      %v6975 = vunpack.c.l.s4 1934713408
      %v6976 = vunpack.c.0.s8 %v6975
      %v6977 = vlaneseq
      %v6978 = vshrl.u32 %v6977, 7
      %v6979 = vsub.s32 %v6976, %v6978
      %v6980 = vrot.slane %v6966, %v6979
      %v6981 = vcombine.low %v6925, %v6941
      %v6982 = vcombine.high %v6925, %v6941
      %v6984 = vunpack.c.l.s4 1934713408
      %v6985 = vunpack.c.0.s8 %v6984
      %v6986 = vlaneseq
      %v6987 = vshrl.u32 %v6986, 7
      %v6988 = vsub.s32 %v6985, %v6987
      %v6989 = vrot.slane %v6981, %v6988
      %v6991 = vunpack.c.l.s4 1934713408
      %v6992 = vunpack.c.0.s8 %v6991
      %v6993 = vlaneseq
      %v6994 = vshrl.u32 %v6993, 7
      %v6995 = vsub.s32 %v6992, %v6994
      %v6996 = vrot.slane %v6982, %v6995
      %v6997 = vcombine.low %v6932, %v6948
      %v6998 = vcombine.high %v6932, %v6948
      %v7000 = vunpack.c.l.s4 1934713408
      %v7001 = vunpack.c.0.s8 %v7000
      %v7002 = vlaneseq
      %v7003 = vshrl.u32 %v7002, 7
      %v7004 = vsub.s32 %v7001, %v7003
      %v7005 = vrot.slane %v6997, %v7004
      %v7007 = vunpack.c.l.s4 1934713408
      %v7008 = vunpack.c.0.s8 %v7007
      %v7009 = vlaneseq
      %v7010 = vshrl.u32 %v7009, 7
      %v7011 = vsub.s32 %v7008, %v7010
      %v7012 = vrot.slane %v6998, %v7011
      %v7013 = vcombine.low %v6957, %v6989
      %v7014 = vcombine.high %v6957, %v6989
      %v7015 = vcombine.low %v6964, %v6996
      %v7016 = vcombine.high %v6964, %v6996
      %v7017 = vcombine.low %v6973, %v7005
      %v7018 = vcombine.high %v6973, %v7005
      %v7019 = vcombine.low %v6980, %v7012
      %v7020 = vcombine.high %v6980, %v7012
      %v7021 = vcombine.low %v958, %v1010
      %v7022 = vcombine.high %v958, %v1010
      %v7024 = vunpack.c.l.s4 1983009808
      %v7025 = vunpack.c.0.s8 %v7024
      %v7026 = vlaneseq
      %v7027 = vshrl.u32 %v7026, 7
      %v7028 = vsub.s32 %v7025, %v7027
      %v7029 = vrot.slane %v7021, %v7028
      %v7031 = vunpack.c.l.s4 1983009808
      %v7032 = vunpack.c.0.s8 %v7031
      %v7033 = vlaneseq
      %v7034 = vshrl.u32 %v7033, 7
      %v7035 = vsub.s32 %v7032, %v7034
      %v7036 = vrot.slane %v7022, %v7035
      %v7037 = vcombine.low %v960, %v1012
      %v7038 = vcombine.high %v960, %v1012
      %v7040 = vunpack.c.l.s4 1983009808
      %v7041 = vunpack.c.0.s8 %v7040
      %v7042 = vlaneseq
      %v7043 = vshrl.u32 %v7042, 7
      %v7044 = vsub.s32 %v7041, %v7043
      %v7045 = vrot.slane %v7037, %v7044
      %v7047 = vunpack.c.l.s4 1983009808
      %v7048 = vunpack.c.0.s8 %v7047
      %v7049 = vlaneseq
      %v7050 = vshrl.u32 %v7049, 7
      %v7051 = vsub.s32 %v7048, %v7050
      %v7052 = vrot.slane %v7038, %v7051
      %v7053 = vcombine.low %v1014, %v4679
      %v7054 = vcombine.high %v1014, %v4679
      %v7056 = vunpack.c.l.s4 1983009808
      %v7057 = vunpack.c.0.s8 %v7056
      %v7058 = vlaneseq
      %v7059 = vshrl.u32 %v7058, 7
      %v7060 = vsub.s32 %v7057, %v7059
      %v7061 = vrot.slane %v7053, %v7060
      %v7063 = vunpack.c.l.s4 1983009808
      %v7064 = vunpack.c.0.s8 %v7063
      %v7065 = vlaneseq
      %v7066 = vshrl.u32 %v7065, 7
      %v7067 = vsub.s32 %v7064, %v7066
      %v7068 = vrot.slane %v7054, %v7067
      %v7069 = vcombine.low %v4677, %v4681
      %v7070 = vcombine.high %v4677, %v4681
      %v7072 = vunpack.c.l.s4 1983009808
      %v7073 = vunpack.c.0.s8 %v7072
      %v7074 = vlaneseq
      %v7075 = vshrl.u32 %v7074, 7
      %v7076 = vsub.s32 %v7073, %v7075
      %v7077 = vrot.slane %v7069, %v7076
      %v7079 = vunpack.c.l.s4 1983009808
      %v7080 = vunpack.c.0.s8 %v7079
      %v7081 = vlaneseq
      %v7082 = vshrl.u32 %v7081, 7
      %v7083 = vsub.s32 %v7080, %v7082
      %v7084 = vrot.slane %v7070, %v7083
      %v7085 = vcombine.low %v7029, %v7045
      %v7086 = vcombine.high %v7029, %v7045
      %v7088 = vunpack.c.l.s4 1934713408
      %v7089 = vunpack.c.0.s8 %v7088
      %v7090 = vlaneseq
      %v7091 = vshrl.u32 %v7090, 7
      %v7092 = vsub.s32 %v7089, %v7091
      %v7093 = vrot.slane %v7085, %v7092
      %v7095 = vunpack.c.l.s4 1934713408
      %v7096 = vunpack.c.0.s8 %v7095
      %v7097 = vlaneseq
      %v7098 = vshrl.u32 %v7097, 7
      %v7099 = vsub.s32 %v7096, %v7098
      %v7100 = vrot.slane %v7086, %v7099
      %v7101 = vcombine.low %v7036, %v7052
      %v7102 = vcombine.high %v7036, %v7052
      %v7104 = vunpack.c.l.s4 1934713408
      %v7105 = vunpack.c.0.s8 %v7104
      %v7106 = vlaneseq
      %v7107 = vshrl.u32 %v7106, 7
      %v7108 = vsub.s32 %v7105, %v7107
      %v7109 = vrot.slane %v7101, %v7108
      %v7111 = vunpack.c.l.s4 1934713408
      %v7112 = vunpack.c.0.s8 %v7111
      %v7113 = vlaneseq
      %v7114 = vshrl.u32 %v7113, 7
      %v7115 = vsub.s32 %v7112, %v7114
      %v7116 = vrot.slane %v7102, %v7115
      %v7117 = vcombine.low %v7061, %v7077
      %v7118 = vcombine.high %v7061, %v7077
      %v7120 = vunpack.c.l.s4 1934713408
      %v7121 = vunpack.c.0.s8 %v7120
      %v7122 = vlaneseq
      %v7123 = vshrl.u32 %v7122, 7
      %v7124 = vsub.s32 %v7121, %v7123
      %v7125 = vrot.slane %v7117, %v7124
      %v7127 = vunpack.c.l.s4 1934713408
      %v7128 = vunpack.c.0.s8 %v7127
      %v7129 = vlaneseq
      %v7130 = vshrl.u32 %v7129, 7
      %v7131 = vsub.s32 %v7128, %v7130
      %v7132 = vrot.slane %v7118, %v7131
      %v7133 = vcombine.low %v7068, %v7084
      %v7134 = vcombine.high %v7068, %v7084
      %v7136 = vunpack.c.l.s4 1934713408
      %v7137 = vunpack.c.0.s8 %v7136
      %v7138 = vlaneseq
      %v7139 = vshrl.u32 %v7138, 7
      %v7140 = vsub.s32 %v7137, %v7139
      %v7141 = vrot.slane %v7133, %v7140
      %v7143 = vunpack.c.l.s4 1934713408
      %v7144 = vunpack.c.0.s8 %v7143
      %v7145 = vlaneseq
      %v7146 = vshrl.u32 %v7145, 7
      %v7147 = vsub.s32 %v7144, %v7146
      %v7148 = vrot.slane %v7134, %v7147
      %v7149 = vcombine.low %v7093, %v7125
      %v7150 = vcombine.high %v7093, %v7125
      %v7151 = vcombine.low %v7100, %v7132
      %v7152 = vcombine.high %v7100, %v7132
      %v7153 = vcombine.low %v7109, %v7141
      %v7154 = vcombine.high %v7109, %v7141
      %v7155 = vcombine.low %v7116, %v7148
      %v7156 = vcombine.high %v7116, %v7148
      %v7157 = vcombine.low %v4701, %v4705
      %v7158 = vcombine.high %v4701, %v4705
      %v7160 = vunpack.c.l.s4 1983009808
      %v7161 = vunpack.c.0.s8 %v7160
      %v7162 = vlaneseq
      %v7163 = vshrl.u32 %v7162, 7
      %v7164 = vsub.s32 %v7161, %v7163
      %v7165 = vrot.slane %v7157, %v7164
      %v7167 = vunpack.c.l.s4 1983009808
      %v7168 = vunpack.c.0.s8 %v7167
      %v7169 = vlaneseq
      %v7170 = vshrl.u32 %v7169, 7
      %v7171 = vsub.s32 %v7168, %v7170
      %v7172 = vrot.slane %v7158, %v7171
      %v7173 = vcombine.high %v4703, 0.0
      %v7175 = vunpack.c.l.s4 1983009808
      %v7176 = vunpack.c.0.s8 %v7175
      %v7177 = vlaneseq
      %v7178 = vshrl.u32 %v7177, 7
      %v7179 = vsub.s32 %v7176, %v7178
      %v7180 = vrot.slane %v4703, %v7179
      %v7182 = vunpack.c.l.s4 1983009808
      %v7183 = vunpack.c.0.s8 %v7182
      %v7184 = vlaneseq
      %v7185 = vshrl.u32 %v7184, 7
      %v7186 = vsub.s32 %v7183, %v7185
      %v7187 = vrot.slane %v7173, %v7186
      %v7188 = vcombine.low %v7165, %v7180
      %v7189 = vcombine.high %v7165, %v7180
      %v7191 = vunpack.c.l.s4 1934713408
      %v7192 = vunpack.c.0.s8 %v7191
      %v7193 = vlaneseq
      %v7194 = vshrl.u32 %v7193, 7
      %v7195 = vsub.s32 %v7192, %v7194
      %v7196 = vrot.slane %v7188, %v7195
      %v7198 = vunpack.c.l.s4 1934713408
      %v7199 = vunpack.c.0.s8 %v7198
      %v7200 = vlaneseq
      %v7201 = vshrl.u32 %v7200, 7
      %v7202 = vsub.s32 %v7199, %v7201
      %v7203 = vrot.slane %v7189, %v7202
      %v7204 = vcombine.low %v7172, %v7187
      %v7205 = vcombine.high %v7172, %v7187
      %v7207 = vunpack.c.l.s4 1934713408
      %v7208 = vunpack.c.0.s8 %v7207
      %v7209 = vlaneseq
      %v7210 = vshrl.u32 %v7209, 7
      %v7211 = vsub.s32 %v7208, %v7210
      %v7212 = vrot.slane %v7204, %v7211
      %v7214 = vunpack.c.l.s4 1934713408
      %v7215 = vunpack.c.0.s8 %v7214
      %v7216 = vlaneseq
      %v7217 = vshrl.u32 %v7216, 7
      %v7218 = vsub.s32 %v7215, %v7217
      %v7219 = vrot.slane %v7205, %v7218
      %v7220 = vcombine.high %v7196, 0.0
      %v7221 = vcombine.high %v7203, 0.0
      %v7222 = vcombine.high %v7212, 0.0
      %v7223 = vcombine.high %v7219, 0.0
      %7243 = vrot.lane.b32.xlu0 %v4838, 4
      %v7244 = vpop.permute.xlu0 %7243
      %7245 = vrot.lane.b32.xlu0 %v4974, 4
      %v7246 = vpop.permute.xlu0 %7245
      %7247 = vrot.lane.b32.xlu0 %v5110, 4
      %v7248 = vpop.permute.xlu0 %7247
      %7249 = vrot.lane.b32.xlu0 %v5246, 4
      %v7250 = vpop.permute.xlu0 %7249
      %7251 = vrot.lane.b32.xlu0 %v5382, 4
      %v7252 = vpop.permute.xlu0 %7251
      %7253 = vrot.lane.b32.xlu0 %v5518, 4
      %v7254 = vpop.permute.xlu0 %7253
      %7255 = vrot.lane.b32.xlu0 %v5654, 4
      %v7256 = vpop.permute.xlu0 %7255
      %7257 = vrot.lane.b32.xlu0 %v5790, 4
      %v7258 = vpop.permute.xlu0 %7257
      %7259 = vrot.lane.b32.xlu0 %v5926, 4
      %v7260 = vpop.permute.xlu0 %7259
      %7261 = vrot.lane.b32.xlu0 %v6062, 4
      %v7262 = vpop.permute.xlu0 %7261
      %7263 = vrot.lane.b32.xlu0 %v6198, 4
      %v7264 = vpop.permute.xlu0 %7263
      %7265 = vrot.lane.b32.xlu0 %v6334, 4
      %v7266 = vpop.permute.xlu0 %7265
      %7267 = vrot.lane.b32.xlu0 %v6470, 4
      %v7268 = vpop.permute.xlu0 %7267
      %7269 = vrot.lane.b32.xlu0 %v6606, 4
      %v7270 = vpop.permute.xlu0 %7269
      %7271 = vrot.lane.b32.xlu0 %v6742, 4
      %v7272 = vpop.permute.xlu0 %7271
      %7273 = vrot.lane.b32.xlu0 %v6878, 4
      %v7274 = vpop.permute.xlu0 %7273
      %7275 = vrot.lane.b32.xlu0 %v7014, 4
      %v7276 = vpop.permute.xlu0 %7275
      %7277 = vrot.lane.b32.xlu0 %v7150, 4
      %v7278 = vpop.permute.xlu0 %7277
      %7279 = vrot.lane.b32.xlu0 %v7220, 4
      %v7280 = vpop.permute.xlu0 %7279
      %7319 = vrot.lane.b32.xlu0 %v4839, 8
      %v7320 = vpop.permute.xlu0 %7319
      %7321 = vrot.lane.b32.xlu0 %v4975, 8
      %v7322 = vpop.permute.xlu0 %7321
      %7323 = vrot.lane.b32.xlu0 %v5111, 8
      %v7324 = vpop.permute.xlu0 %7323
      %7325 = vrot.lane.b32.xlu0 %v5247, 8
      %v7326 = vpop.permute.xlu0 %7325
      %7327 = vrot.lane.b32.xlu0 %v5383, 8
      %v7328 = vpop.permute.xlu0 %7327
      %7329 = vrot.lane.b32.xlu0 %v5519, 8
      %v7330 = vpop.permute.xlu0 %7329
      %7331 = vrot.lane.b32.xlu0 %v5655, 8
      %v7332 = vpop.permute.xlu0 %7331
      %7333 = vrot.lane.b32.xlu0 %v5791, 8
      %v7334 = vpop.permute.xlu0 %7333
      %7335 = vrot.lane.b32.xlu0 %v5927, 8
      %v7336 = vpop.permute.xlu0 %7335
      %7337 = vrot.lane.b32.xlu0 %v6063, 8
      %v7338 = vpop.permute.xlu0 %7337
      %7339 = vrot.lane.b32.xlu0 %v6199, 8
      %v7340 = vpop.permute.xlu0 %7339
      %7341 = vrot.lane.b32.xlu0 %v6335, 8
      %v7342 = vpop.permute.xlu0 %7341
      %7343 = vrot.lane.b32.xlu0 %v6471, 8
      %v7344 = vpop.permute.xlu0 %7343
      %7345 = vrot.lane.b32.xlu0 %v6607, 8
      %v7346 = vpop.permute.xlu0 %7345
      %7347 = vrot.lane.b32.xlu0 %v6743, 8
      %v7348 = vpop.permute.xlu0 %7347
      %7349 = vrot.lane.b32.xlu0 %v6879, 8
      %v7350 = vpop.permute.xlu0 %7349
      %7351 = vrot.lane.b32.xlu0 %v7015, 8
      %v7352 = vpop.permute.xlu0 %7351
      %7353 = vrot.lane.b32.xlu0 %v7151, 8
      %v7354 = vpop.permute.xlu0 %7353
      %7355 = vrot.lane.b32.xlu0 %v7203, 8
      %v7356 = vpop.permute.xlu0 %7355
      %7395 = vrot.lane.b32.xlu0 %v4840, 12
      %v7396 = vpop.permute.xlu0 %7395
      %7397 = vrot.lane.b32.xlu0 %v4976, 12
      %v7398 = vpop.permute.xlu0 %7397
      %7399 = vrot.lane.b32.xlu0 %v5112, 12
      %v7400 = vpop.permute.xlu0 %7399
      %7401 = vrot.lane.b32.xlu0 %v5248, 12
      %v7402 = vpop.permute.xlu0 %7401
      %7403 = vrot.lane.b32.xlu0 %v5384, 12
      %v7404 = vpop.permute.xlu0 %7403
      %7405 = vrot.lane.b32.xlu0 %v5520, 12
      %v7406 = vpop.permute.xlu0 %7405
      %7407 = vrot.lane.b32.xlu0 %v5656, 12
      %v7408 = vpop.permute.xlu0 %7407
      %7409 = vrot.lane.b32.xlu0 %v5792, 12
      %v7410 = vpop.permute.xlu0 %7409
      %7411 = vrot.lane.b32.xlu0 %v5928, 12
      %v7412 = vpop.permute.xlu0 %7411
      %7413 = vrot.lane.b32.xlu0 %v6064, 12
      %v7414 = vpop.permute.xlu0 %7413
      %7415 = vrot.lane.b32.xlu0 %v6200, 12
      %v7416 = vpop.permute.xlu0 %7415
      %7417 = vrot.lane.b32.xlu0 %v6336, 12
      %v7418 = vpop.permute.xlu0 %7417
      %7419 = vrot.lane.b32.xlu0 %v6472, 12
      %v7420 = vpop.permute.xlu0 %7419
      %7421 = vrot.lane.b32.xlu0 %v6608, 12
      %v7422 = vpop.permute.xlu0 %7421
      %7423 = vrot.lane.b32.xlu0 %v6744, 12
      %v7424 = vpop.permute.xlu0 %7423
      %7425 = vrot.lane.b32.xlu0 %v6880, 12
      %v7426 = vpop.permute.xlu0 %7425
      %7427 = vrot.lane.b32.xlu0 %v7016, 12
      %v7428 = vpop.permute.xlu0 %7427
      %7429 = vrot.lane.b32.xlu0 %v7152, 12
      %v7430 = vpop.permute.xlu0 %7429
      %7431 = vrot.lane.b32.xlu0 %v7221, 12
      %v7432 = vpop.permute.xlu0 %7431
      %7471 = vrot.lane.b32.xlu0 %v4841, 16
      %v7472 = vpop.permute.xlu0 %7471
      %7473 = vrot.lane.b32.xlu0 %v4977, 16
      %v7474 = vpop.permute.xlu0 %7473
      %7475 = vrot.lane.b32.xlu0 %v5113, 16
      %v7476 = vpop.permute.xlu0 %7475
      %7477 = vrot.lane.b32.xlu0 %v5249, 16
      %v7478 = vpop.permute.xlu0 %7477
      %7479 = vrot.lane.b32.xlu0 %v5385, 16
      %v7480 = vpop.permute.xlu0 %7479
      %7481 = vrot.lane.b32.xlu0 %v5521, 16
      %v7482 = vpop.permute.xlu0 %7481
      %7483 = vrot.lane.b32.xlu0 %v5657, 16
      %v7484 = vpop.permute.xlu0 %7483
      %7485 = vrot.lane.b32.xlu0 %v5793, 16
      %v7486 = vpop.permute.xlu0 %7485
      %7487 = vrot.lane.b32.xlu0 %v5929, 16
      %v7488 = vpop.permute.xlu0 %7487
      %7489 = vrot.lane.b32.xlu0 %v6065, 16
      %v7490 = vpop.permute.xlu0 %7489
      %7491 = vrot.lane.b32.xlu0 %v6201, 16
      %v7492 = vpop.permute.xlu0 %7491
      %7493 = vrot.lane.b32.xlu0 %v6337, 16
      %v7494 = vpop.permute.xlu0 %7493
      %7495 = vrot.lane.b32.xlu0 %v6473, 16
      %v7496 = vpop.permute.xlu0 %7495
      %7497 = vrot.lane.b32.xlu0 %v6609, 16
      %v7498 = vpop.permute.xlu0 %7497
      %7499 = vrot.lane.b32.xlu0 %v6745, 16
      %v7500 = vpop.permute.xlu0 %7499
      %7501 = vrot.lane.b32.xlu0 %v6881, 16
      %v7502 = vpop.permute.xlu0 %7501
      %7503 = vrot.lane.b32.xlu0 %v7017, 16
      %v7504 = vpop.permute.xlu0 %7503
      %7505 = vrot.lane.b32.xlu0 %v7153, 16
      %v7506 = vpop.permute.xlu0 %7505
      %7507 = vrot.lane.b32.xlu0 %v7212, 16
      %v7508 = vpop.permute.xlu0 %7507
      %7547 = vrot.lane.b32.xlu0 %v4842, 20
      %v7548 = vpop.permute.xlu0 %7547
      %7549 = vrot.lane.b32.xlu0 %v4978, 20
      %v7550 = vpop.permute.xlu0 %7549
      %7551 = vrot.lane.b32.xlu0 %v5114, 20
      %v7552 = vpop.permute.xlu0 %7551
      %7553 = vrot.lane.b32.xlu0 %v5250, 20
      %v7554 = vpop.permute.xlu0 %7553
      %7555 = vrot.lane.b32.xlu0 %v5386, 20
      %v7556 = vpop.permute.xlu0 %7555
      %7557 = vrot.lane.b32.xlu0 %v5522, 20
      %v7558 = vpop.permute.xlu0 %7557
      %7559 = vrot.lane.b32.xlu0 %v5658, 20
      %v7560 = vpop.permute.xlu0 %7559
      %7561 = vrot.lane.b32.xlu0 %v5794, 20
      %v7562 = vpop.permute.xlu0 %7561
      %7563 = vrot.lane.b32.xlu0 %v5930, 20
      %v7564 = vpop.permute.xlu0 %7563
      %7565 = vrot.lane.b32.xlu0 %v6066, 20
      %v7566 = vpop.permute.xlu0 %7565
      %7567 = vrot.lane.b32.xlu0 %v6202, 20
      %v7568 = vpop.permute.xlu0 %7567
      %7569 = vrot.lane.b32.xlu0 %v6338, 20
      %v7570 = vpop.permute.xlu0 %7569
      %7571 = vrot.lane.b32.xlu0 %v6474, 20
      %v7572 = vpop.permute.xlu0 %7571
      %7573 = vrot.lane.b32.xlu0 %v6610, 20
      %v7574 = vpop.permute.xlu0 %7573
      %7575 = vrot.lane.b32.xlu0 %v6746, 20
      %v7576 = vpop.permute.xlu0 %7575
      %7577 = vrot.lane.b32.xlu0 %v6882, 20
      %v7578 = vpop.permute.xlu0 %7577
      %7579 = vrot.lane.b32.xlu0 %v7018, 20
      %v7580 = vpop.permute.xlu0 %7579
      %7581 = vrot.lane.b32.xlu0 %v7154, 20
      %v7582 = vpop.permute.xlu0 %7581
      %7583 = vrot.lane.b32.xlu0 %v7222, 20
      %v7584 = vpop.permute.xlu0 %7583
      %7623 = vrot.lane.b32.xlu0 %v4843, 24
      %v7624 = vpop.permute.xlu0 %7623
      %7625 = vrot.lane.b32.xlu0 %v4979, 24
      %v7626 = vpop.permute.xlu0 %7625
      %7627 = vrot.lane.b32.xlu0 %v5115, 24
      %v7628 = vpop.permute.xlu0 %7627
      %7629 = vrot.lane.b32.xlu0 %v5251, 24
      %v7630 = vpop.permute.xlu0 %7629
      %7631 = vrot.lane.b32.xlu0 %v5387, 24
      %v7632 = vpop.permute.xlu0 %7631
      %7633 = vrot.lane.b32.xlu0 %v5523, 24
      %v7634 = vpop.permute.xlu0 %7633
      %7635 = vrot.lane.b32.xlu0 %v5659, 24
      %v7636 = vpop.permute.xlu0 %7635
      %7637 = vrot.lane.b32.xlu0 %v5795, 24
      %v7638 = vpop.permute.xlu0 %7637
      %7639 = vrot.lane.b32.xlu0 %v5931, 24
      %v7640 = vpop.permute.xlu0 %7639
      %7641 = vrot.lane.b32.xlu0 %v6067, 24
      %v7642 = vpop.permute.xlu0 %7641
      %7643 = vrot.lane.b32.xlu0 %v6203, 24
      %v7644 = vpop.permute.xlu0 %7643
      %7645 = vrot.lane.b32.xlu0 %v6339, 24
      %v7646 = vpop.permute.xlu0 %7645
      %7647 = vrot.lane.b32.xlu0 %v6475, 24
      %v7648 = vpop.permute.xlu0 %7647
      %7649 = vrot.lane.b32.xlu0 %v6611, 24
      %v7650 = vpop.permute.xlu0 %7649
      %7651 = vrot.lane.b32.xlu0 %v6747, 24
      %v7652 = vpop.permute.xlu0 %7651
      %7653 = vrot.lane.b32.xlu0 %v6883, 24
      %v7654 = vpop.permute.xlu0 %7653
      %7655 = vrot.lane.b32.xlu0 %v7019, 24
      %v7656 = vpop.permute.xlu0 %7655
      %7657 = vrot.lane.b32.xlu0 %v7155, 24
      %v7658 = vpop.permute.xlu0 %7657
      %7659 = vrot.lane.b32.xlu0 %v7219, 24
      %v7660 = vpop.permute.xlu0 %7659
      %7699 = vrot.lane.b32.xlu0 %v4844, 28
      %v7700 = vpop.permute.xlu0 %7699
      %7701 = vrot.lane.b32.xlu0 %v4980, 28
      %v7702 = vpop.permute.xlu0 %7701
      %7703 = vrot.lane.b32.xlu0 %v5116, 28
      %v7704 = vpop.permute.xlu0 %7703
      %7705 = vrot.lane.b32.xlu0 %v5252, 28
      %v7706 = vpop.permute.xlu0 %7705
      %7707 = vrot.lane.b32.xlu0 %v5388, 28
      %v7708 = vpop.permute.xlu0 %7707
      %7709 = vrot.lane.b32.xlu0 %v5524, 28
      %v7710 = vpop.permute.xlu0 %7709
      %7711 = vrot.lane.b32.xlu0 %v5660, 28
      %v7712 = vpop.permute.xlu0 %7711
      %7713 = vrot.lane.b32.xlu0 %v5796, 28
      %v7714 = vpop.permute.xlu0 %7713
      %7715 = vrot.lane.b32.xlu0 %v5932, 28
      %v7716 = vpop.permute.xlu0 %7715
      %7717 = vrot.lane.b32.xlu0 %v6068, 28
      %v7718 = vpop.permute.xlu0 %7717
      %7719 = vrot.lane.b32.xlu0 %v6204, 28
      %v7720 = vpop.permute.xlu0 %7719
      %7721 = vrot.lane.b32.xlu0 %v6340, 28
      %v7722 = vpop.permute.xlu0 %7721
      %7723 = vrot.lane.b32.xlu0 %v6476, 28
      %v7724 = vpop.permute.xlu0 %7723
      %7725 = vrot.lane.b32.xlu0 %v6612, 28
      %v7726 = vpop.permute.xlu0 %7725
      %7727 = vrot.lane.b32.xlu0 %v6748, 28
      %v7728 = vpop.permute.xlu0 %7727
      %7729 = vrot.lane.b32.xlu0 %v6884, 28
      %v7730 = vpop.permute.xlu0 %7729
      %7731 = vrot.lane.b32.xlu0 %v7020, 28
      %v7732 = vpop.permute.xlu0 %7731
      %7733 = vrot.lane.b32.xlu0 %v7156, 28
      %v7734 = vpop.permute.xlu0 %7733
      %7735 = vrot.lane.b32.xlu0 %v7223, 28
      %v7736 = vpop.permute.xlu0 %7735
      %v7756 = vsel %vm4065, %v4837, %v7244
      %v7757 = vsel %vm4065, %v4973, %v7246
      %v7758 = vsel %vm4065, %v5109, %v7248
      %v7759 = vsel %vm4065, %v5245, %v7250
      %v7760 = vsel %vm4065, %v5381, %v7252
      %v7761 = vsel %vm4065, %v5517, %v7254
      %v7762 = vsel %vm4065, %v5653, %v7256
      %v7763 = vsel %vm4065, %v5789, %v7258
      %v7764 = vsel %vm4065, %v5925, %v7260
      %v7765 = vsel %vm4065, %v6061, %v7262
      %v7766 = vsel %vm4065, %v6197, %v7264
      %v7767 = vsel %vm4065, %v6333, %v7266
      %v7768 = vsel %vm4065, %v6469, %v7268
      %v7769 = vsel %vm4065, %v6605, %v7270
      %v7770 = vsel %vm4065, %v6741, %v7272
      %v7771 = vsel %vm4065, %v6877, %v7274
      %v7772 = vsel %vm4065, %v7013, %v7276
      %v7773 = vsel %vm4065, %v7149, %v7278
      %v7774 = vsel %vm4065, %v7196, %v7280
      %v7775 = vsel %vm4085, %v7756, %v7320
      %v7776 = vsel %vm4085, %v7757, %v7322
      %v7777 = vsel %vm4085, %v7758, %v7324
      %v7778 = vsel %vm4085, %v7759, %v7326
      %v7779 = vsel %vm4085, %v7760, %v7328
      %v7780 = vsel %vm4085, %v7761, %v7330
      %v7781 = vsel %vm4085, %v7762, %v7332
      %v7782 = vsel %vm4085, %v7763, %v7334
      %v7783 = vsel %vm4085, %v7764, %v7336
      %v7784 = vsel %vm4085, %v7765, %v7338
      %v7785 = vsel %vm4085, %v7766, %v7340
      %v7786 = vsel %vm4085, %v7767, %v7342
      %v7787 = vsel %vm4085, %v7768, %v7344
      %v7788 = vsel %vm4085, %v7769, %v7346
      %v7789 = vsel %vm4085, %v7770, %v7348
      %v7790 = vsel %vm4085, %v7771, %v7350
      %v7791 = vsel %vm4085, %v7772, %v7352
      %v7792 = vsel %vm4085, %v7773, %v7354
      %v7793 = vsel %vm4085, %v7774, %v7356
      %v7794 = vsel %vm4105, %v7775, %v7396
      %v7795 = vsel %vm4105, %v7776, %v7398
      %v7796 = vsel %vm4105, %v7777, %v7400
      %v7797 = vsel %vm4105, %v7778, %v7402
      %v7798 = vsel %vm4105, %v7779, %v7404
      %v7799 = vsel %vm4105, %v7780, %v7406
      %v7800 = vsel %vm4105, %v7781, %v7408
      %v7801 = vsel %vm4105, %v7782, %v7410
      %v7802 = vsel %vm4105, %v7783, %v7412
      %v7803 = vsel %vm4105, %v7784, %v7414
      %v7804 = vsel %vm4105, %v7785, %v7416
      %v7805 = vsel %vm4105, %v7786, %v7418
      %v7806 = vsel %vm4105, %v7787, %v7420
      %v7807 = vsel %vm4105, %v7788, %v7422
      %v7808 = vsel %vm4105, %v7789, %v7424
      %v7809 = vsel %vm4105, %v7790, %v7426
      %v7810 = vsel %vm4105, %v7791, %v7428
      %v7811 = vsel %vm4105, %v7792, %v7430
      %v7812 = vsel %vm4105, %v7793, %v7432
      %v7813 = vsel %vm4125, %v7794, %v7472
      %v7814 = vsel %vm4125, %v7795, %v7474
      %v7815 = vsel %vm4125, %v7796, %v7476
      %v7816 = vsel %vm4125, %v7797, %v7478
      %v7817 = vsel %vm4125, %v7798, %v7480
      %v7818 = vsel %vm4125, %v7799, %v7482
      %v7819 = vsel %vm4125, %v7800, %v7484
      %v7820 = vsel %vm4125, %v7801, %v7486
      %v7821 = vsel %vm4125, %v7802, %v7488
      %v7822 = vsel %vm4125, %v7803, %v7490
      %v7823 = vsel %vm4125, %v7804, %v7492
      %v7824 = vsel %vm4125, %v7805, %v7494
      %v7825 = vsel %vm4125, %v7806, %v7496
      %v7826 = vsel %vm4125, %v7807, %v7498
      %v7827 = vsel %vm4125, %v7808, %v7500
      %v7828 = vsel %vm4125, %v7809, %v7502
      %v7829 = vsel %vm4125, %v7810, %v7504
      %v7830 = vsel %vm4125, %v7811, %v7506
      %v7831 = vsel %vm4125, %v7812, %v7508
      %v7832 = vsel %vm4145, %v7813, %v7548
      %v7833 = vsel %vm4145, %v7814, %v7550
      %v7834 = vsel %vm4145, %v7815, %v7552
      %v7835 = vsel %vm4145, %v7816, %v7554
      %v7836 = vsel %vm4145, %v7817, %v7556
      %v7837 = vsel %vm4145, %v7818, %v7558
      %v7838 = vsel %vm4145, %v7819, %v7560
      %v7839 = vsel %vm4145, %v7820, %v7562
      %v7840 = vsel %vm4145, %v7821, %v7564
      %v7841 = vsel %vm4145, %v7822, %v7566
      %v7842 = vsel %vm4145, %v7823, %v7568
      %v7843 = vsel %vm4145, %v7824, %v7570
      %v7844 = vsel %vm4145, %v7825, %v7572
      %v7845 = vsel %vm4145, %v7826, %v7574
      %v7846 = vsel %vm4145, %v7827, %v7576
      %v7847 = vsel %vm4145, %v7828, %v7578
      %v7848 = vsel %vm4145, %v7829, %v7580
      %v7849 = vsel %vm4145, %v7830, %v7582
      %v7850 = vsel %vm4145, %v7831, %v7584
      %v7851 = vsel %vm4165, %v7832, %v7624
      %v7852 = vsel %vm4165, %v7833, %v7626
      %v7853 = vsel %vm4165, %v7834, %v7628
      %v7854 = vsel %vm4165, %v7835, %v7630
      %v7855 = vsel %vm4165, %v7836, %v7632
      %v7856 = vsel %vm4165, %v7837, %v7634
      %v7857 = vsel %vm4165, %v7838, %v7636
      %v7858 = vsel %vm4165, %v7839, %v7638
      %v7859 = vsel %vm4165, %v7840, %v7640
      %v7860 = vsel %vm4165, %v7841, %v7642
      %v7861 = vsel %vm4165, %v7842, %v7644
      %v7862 = vsel %vm4165, %v7843, %v7646
      %v7863 = vsel %vm4165, %v7844, %v7648
      %v7864 = vsel %vm4165, %v7845, %v7650
      %v7865 = vsel %vm4165, %v7846, %v7652
      %v7866 = vsel %vm4165, %v7847, %v7654
      %v7867 = vsel %vm4165, %v7848, %v7656
      %v7868 = vsel %vm4165, %v7849, %v7658
      %v7869 = vsel %vm4165, %v7850, %v7660
      %v7870 = vsel %vm4185, %v7851, %v7700
      %v7871 = vsel %vm4185, %v7852, %v7702
      %v7872 = vsel %vm4185, %v7853, %v7704
      %v7873 = vsel %vm4185, %v7854, %v7706
      %v7874 = vsel %vm4185, %v7855, %v7708
      %v7875 = vsel %vm4185, %v7856, %v7710
      %v7876 = vsel %vm4185, %v7857, %v7712
      %v7877 = vsel %vm4185, %v7858, %v7714
      %v7878 = vsel %vm4185, %v7859, %v7716
      %v7879 = vsel %vm4185, %v7860, %v7718
      %v7880 = vsel %vm4185, %v7861, %v7720
      %v7881 = vsel %vm4185, %v7862, %v7722
      %v7882 = vsel %vm4185, %v7863, %v7724
      %v7883 = vsel %vm4185, %v7864, %v7726
      %v7884 = vsel %vm4185, %v7865, %v7728
      %v7885 = vsel %vm4185, %v7866, %v7730
      %v7886 = vsel %vm4185, %v7867, %v7732
      %v7887 = vsel %vm4185, %v7868, %v7734
      %v7888 = vsel %vm4185, %v7869, %v7736
      %v7889 = vpack.c.bf16 %v7871, %v7870
      %v7890 = vpack.c.bf16 %v7873, %v7872
      %v7891 = vpack.c.bf16 %v7875, %v7874
      %v7892 = vpack.c.bf16 %v7877, %v7876
      %v7893 = vpack.c.bf16 %v7879, %v7878
      %v7894 = vpack.c.bf16 %v7881, %v7880
      %v7895 = vpack.c.bf16 %v7883, %v7882
      %v7896 = vpack.c.bf16 %v7885, %v7884
      %v7897 = vpack.c.bf16 %v7887, %v7886
      %v7898 = vpack.c.bf16 %v7888, %v7888
      %7899 = vxpose.xlu0.c.b16.start [1/8] %v7889, 128
      %7900 = vxpose.xlu0.c.b16.cont [2/8] %v7890, 128
      %7901 = vxpose.xlu0.c.b16.cont [3/8] %v7891, 128
      %7902 = vxpose.xlu0.c.b16.cont [4/8] %v7892, 128
      %7903 = vxpose.xlu0.c.b16.cont [5/8] %v7893, 128
      %7904 = vxpose.xlu0.c.b16.cont [6/8] %v7894, 128
      %7905 = vxpose.xlu0.c.b16.cont [7/8] %v7895, 128
      %7906 = vxpose.xlu0.c.b16.end [8/8] %v7896, 128
      %v7907 = vpop.trf.xlu0
      %v7908 = vpop.trf.xlu0
      %v7909 = vpop.trf.xlu0
      %v7910 = vpop.trf.xlu0
      %v7911 = vpop.trf.xlu0
      %v7912 = vpop.trf.xlu0
      %v7913 = vpop.trf.xlu0
      %v7914 = vpop.trf.xlu0
      %7915 = vxpose.xlu0.c.b16.start [1/8] %v7897, 128
      %7916 = vxpose.xlu0.c.b16.cont [2/8] %v7898, 128
      %7917 = vxpose.xlu0.c.b16.cont [3/8] 0, 128
      %7918 = vxpose.xlu0.c.b16.cont [4/8] 0, 128
      %7919 = vxpose.xlu0.c.b16.cont [5/8] 0, 128
      %7920 = vxpose.xlu0.c.b16.cont [6/8] 0, 128
      %7921 = vxpose.xlu0.c.b16.cont [7/8] 0, 128
      %7922 = vxpose.xlu0.c.b16.end [8/8] 0, 128
      %v7923 = vpop.trf.xlu0
      %v7924 = vpop.trf.xlu0
      %v7925 = vpop.trf.xlu0
      %v7926 = vpop.trf.xlu0
      %v7927 = vpop.trf.xlu0
      %v7928 = vpop.trf.xlu0
      %v7929 = vpop.trf.xlu0
      %v7930 = vpop.trf.xlu0
      %v7932 = vsel %vm4330, %v7923, 0
      %v7935 = vsel %vm4330, %v7924, 0
      %7937 = vmatprep.subr.bf16.mxu0 0
      %7938 = vmatpush1.bf16.msra.mxu0 %v4318
      %7939 = vmatprep.subr.bf16.mxu0 0
      %7940 = vmatpush1.bf16.msra.mxu0 %v4317
      %7941 = vmatprep.subr.bf16.mxu0 0
      %7942 = vmatpush1.bf16.msra.mxu0 %v4316
      %7943 = vmatprep.subr.bf16.mxu0 0
      %7944 = vmatpush1.bf16.msra.mxu0 %v4315
      %7945 = vmatprep.subr.bf16.mxu0 0
      %7946 = vmatpush1.bf16.msra.mxu0 %v4314
      %7947 = vmatprep.subr.bf16.mxu0 0
      %7948 = vmatpush1.bf16.msra.mxu0 %v4313
      %7949 = vmatprep.subr.bf16.mxu0 0
      %7950 = vmatpush1.bf16.msra.mxu0 %v4312
      %7951 = vmatprep.subr.bf16.mxu0 0
      %7952 = vmatpush1.bf16.msra.mxu0 %v4311
      %7953 = vmatprep.subr.bf16.mxu0 0
      %7954 = vmatpush2.bf16.msra.mxu0 0
      %7955 = vmatprep.subr.bf16.mxu0 0
      %7956 = vmatpush2.bf16.msra.mxu0 0
      %7957 = vmatprep.subr.bf16.mxu0 0
      %7958 = vmatpush2.bf16.msra.mxu0 0
      %7959 = vmatprep.subr.bf16.mxu0 0
      %7960 = vmatpush2.bf16.msra.mxu0 0
      %7961 = vmatprep.subr.bf16.mxu0 0
      %7962 = vmatpush2.bf16.msra.mxu0 0
      %7963 = vmatprep.subr.bf16.mxu0 0
      %7964 = vmatpush2.bf16.msra.mxu0 0
      %7965 = vmatprep.subr.bf16.mxu0 0
      %7966 = vmatpush2.bf16.msra.mxu0 %v4342
      %7967 = vmatprep.subr.bf16.mxu0 0
      %7968 = vmatpush2.bf16.msra.mxu0 %v4319
      %7969 = vmatprep.mubr.bf16.mxu0 %v7932
      %7970 = vmatmul.mubr.bf16.gmra.mxu0 %v7907
      %v7971 = vpop.f32.mrf.mxu0
      %v7972 = vadd.f32 %v4239, %v7971
      %v7973 = vpop.f32.mrf.mxu0
      %v7974 = vpop.f32.mrf.mxu0
      %v7975 = vadd.f32 %v4239, %v7974
      %v7976 = vpop.f32.mrf.mxu0
      %7977 = vmatprep.mubr.bf16.mxu0 %v7935
      %7978 = vmatmul.mubr.bf16.gmra.mxu0 %v7908
      %v7979 = vpop.f32.mrf.mxu0
      %v7980 = vadd.f32 %v4239, %v7979
      %v7981 = vpop.f32.mrf.mxu0
      %v7982 = vpop.f32.mrf.mxu0
      %v7983 = vadd.f32 %v4239, %v7982
      %v7984 = vpop.f32.mrf.mxu0
      %7985 = vdwg.mxu0
      %v7986 = vmax.f32 %v7972, 0.0
      %v7987 = vmax.f32 %v7975, 0.0
      %v7988 = vmax.f32 %v7980, 0.0
      %v7989 = vmax.f32 %v7983, 0.0
      %v7994 = vcombine.high %v7986, %v7986
      %v7995 = vcombine.high %v7987, %v7987
      %v7996 = vcombine.high %v7988, %v7988
      %v7997 = vcombine.high %v7989, %v7989
      %7998 = vrot.lane.b32.xlu0 %v7986, 64
      %v7999 = vpop.permute.xlu0 %7998
      %8000 = vrot.lane.b32.xlu0 %v7994, 64
      %v8001 = vpop.permute.xlu0 %8000
      %8002 = vrot.lane.b32.xlu0 %v7987, 64
      %v8003 = vpop.permute.xlu0 %8002
      %8004 = vrot.lane.b32.xlu0 %v7995, 64
      %v8005 = vpop.permute.xlu0 %8004
      %8006 = vrot.lane.b32.xlu0 %v7988, 64
      %v8007 = vpop.permute.xlu0 %8006
      %8008 = vrot.lane.b32.xlu0 %v7996, 64
      %v8009 = vpop.permute.xlu0 %8008
      %8010 = vrot.lane.b32.xlu0 %v7989, 64
      %v8011 = vpop.permute.xlu0 %8010
      %8012 = vrot.lane.b32.xlu0 %v7997, 64
      %v8013 = vpop.permute.xlu0 %8012
      %vm8022 = vcmask 523264
      %v8023 = vsel %vm8022, %v4393, %v7999
      %v8024 = vsel %vm8022, %v4401, %v8001
      %v8025 = vsel %vm8022, %v4394, %v8003
      %v8026 = vsel %vm8022, %v4402, %v8005
      %v8027 = vsel %vm8022, %v4395, %v8007
      %v8028 = vsel %vm8022, %v4403, %v8009
      %v8029 = vsel %vm8022, %v4396, %v8011
      %v8030 = vsel %vm8022, %v4404, %v8013
      %8031 = vst [vmem:[%s521] sm:$0xf] %v8023
      %8032 = vst [vmem:[%s521 + $0x4] sm:$0xf] %v8024
      %8033 = vst [vmem:[%s521 + $0x8] sm:$0xf] %v8025
      %8034 = vst [vmem:[%s521 + $0xc] sm:$0xf] %v8026
      %8035 = vst [vmem:[%s521 + $0x10] sm:$0xf] %v8027
      %8036 = vst [vmem:[%s521 + $0x14] sm:$0xf] %v8028
      %8037 = vst [vmem:[%s521 + $0x18] sm:$0xf] %v8029
      %8038 = vst [vmem:[%s521 + $0x1c] sm:$0xf] %v8030
      %s8039 = smul.u32 8, %s26
      %p8040 = scmp.lt.s32.totalorder %s25, 1
      %s8041 = scalar_select %p8040, %s25, 1
      %p8042 = scmp.lt.s32.totalorder %s8039, 7
      %s8043 = scalar_select %p8042, %s8039, 7
      %s8044 = smul.addr %s8041, 8
      %s8045 = sadd.s32 %s8043, %s8044
      %s8046 = smul.addr %s8045, 4
      %s8047 = scalar_lea.vmem %s10, %s8046
      // Predicated region
      $region61: #{thermal_module_forward.2} parent=59 // pred_check
        %p8048 = pneg %p303
      $region62: #{thermal_module_forward.2} parent=59 // pred_check_branch
        %8050 = sbr.rel (%p8048) target = $region64
      $region63: #{thermal_module_forward.2} parent=59 // pred_region
        %s8051 = smul.u32 8, %s26
      $region64: #{thermal_module_forward.2} parent=59 // pred_fallthru
        _
    $region60: #{thermal_module_forward.2} parent=5 // pred_fallthru
      _
    %p8052 = scmp.le.s32.totalorder 2, %s16
    // Predicated region
    $region65: #{thermal_module_forward.2} parent=5 // pred_check
      %p8053 = pneg %p8052
    $region66: #{thermal_module_forward.2} parent=5 // pred_check_branch
      %8055 = sbr.rel (%p8053) target = $region68
    $region67: #{thermal_module_forward.2} parent=5 // pred_region
      %s8056 = ssub.s32 %s16, 2
      // Predicated region
      $region69: #{thermal_module_forward.2} parent=67 // pred_check
        %p8057 = pneg %p309
      $region70: #{thermal_module_forward.2} parent=67 // pred_check_branch
        %8059 = sbr.rel (%p8057) target = $region72
      $region71: #{thermal_module_forward.2} parent=67 // pred_region
        %s8060 = smul.u32 8, %s28
        %p8061 = scmp.lt.s32.totalorder %s27, 1
        %s8062 = scalar_select %p8061, %s27, 1
        %p8063 = scmp.lt.s32.totalorder %s8060, 7
        %s8064 = scalar_select %p8063, %s8060, 7
        %s8065 = smul.addr %s8062, 8
        %s8066 = sadd.s32 %s8064, %s8065
        %s8067 = smul.addr %s8066, 4
        %s8068 = scalar_lea.vmem %s10, %s8067
      $region72: #{thermal_module_forward.2} parent=67 // pred_fallthru
        _
    $region68: #{thermal_module_forward.2} parent=5 // pred_fallthru
      _
  $region6: #{thermal_module_forward.2} parent=0 // loop_footer
    %s20 = sadd.s32 1, %s16
  $region7: #{thermal_module_forward.2} parent=0 // loop_footer_branch
    %15 = sbr.rel target = $region3
  $region8: #{thermal_module_forward.2} parent=0 // loop_exit
    _

</llo_original>
